<compile_context>
chip_gen: v5e
topology: v5e:2x2
jax: 0.10.0
libtpu: 0.0.40
codegen_flags: <defaults>
</compile_context>

<pallas_src>
import functools

import jax
import jax.numpy as jnp
from jax.experimental import pallas as pl
from jax.experimental.pallas import tpu as pltpu


# --------------------------- model configuration --------------------------- #

VOCAB = 50
MAX_POS = 64
HIDDEN = 32
N_HEADS = 2
HEAD_DIM = HIDDEN // N_HEADS
FFN = 64
N_LAYERS = 2
NUM_LABELS = 3
NUM_VIRTUAL_TOKENS = 4
PAD_N = 128            # lane-dense classifier output slab; real logits sliced in wrapper
LN_EPS = 1e-12


def _num_grid_steps(batch: int) -> int:
    """2 parallel steps on v7x (two TensorCores), 1 step on single-TC chips (v5e/v6e)."""
    kind = jax.devices()[0].device_kind.lower()
    if batch % 2 == 0 and ("v7" in kind or "7x" in kind):
        return 2
    return 1


# ------------------------------ fused kernel ------------------------------- #

def _fused_kernel(ids_ref, mask_ref, emb_ref, qkv_w_ref, o_w_ref, ff1_w_ref,
                  ff2_w_ref, cls_w_ref, vec_ref, bias_ref, out_ref, x_sc,
                  *, n_layers, n_heads, hidden, ffn, eps,
                  b_chunk, s_text, s_pad, nvt, vocab):
    """One grid step = B_chunk batch elements through embeddings + encoder + classifier."""
    dh = hidden // n_heads
    scale = 1.0 / float(dh) ** 0.5
    seq = nvt + s_text
    m_rows = b_chunk * s_pad
    step = pl.program_id(0)

    def layernorm(y, g, b):
        mu = jnp.mean(y, axis=-1, keepdims=True)
        d = y - mu
        var = jnp.mean(d * d, axis=-1, keepdims=True)
        return d * jax.lax.rsqrt(var + eps) * g + b

    # ---- fused embedding build: [prompt ; word_emb[ids] ; zero-pad] per batch element ----
    x_sc[...] = jnp.zeros((m_rows, hidden), jnp.float32)       # keeps pad rows finite
    prompt = emb_ref[vocab:vocab + nvt, :]                      # (nvt, H)
    for b in range(b_chunk):
        base = b * s_pad
        x_sc[base:base + nvt, :] = prompt
        gb = step * b_chunk + b                                 # global batch index
        for t in range(s_text):
            tok = ids_ref[gb, t]                                # SMEM scalar read
            x_sc[base + nvt + t: base + nvt + t + 1, :] = emb_ref[pl.ds(tok, 1), :]

    pos = emb_ref[vocab + nvt: vocab + nvt + s_pad, :]          # (s_pad, H); pad rows masked
    x = x_sc[...] + jnp.concatenate([pos] * b_chunk, axis=0)    # (m_rows, H)
    x = layernorm(x, vec_ref[0:1, :], vec_ref[1:2, :])

    # ---- additive key bias, hoisted out of the layer/head loops ----
    mask_txt = mask_ref[0]                                      # (b_chunk, s_text)
    pieces = [jnp.zeros((b_chunk, nvt), jnp.float32),
              jnp.where(mask_txt > 0.0, 0.0, -1e9).astype(jnp.float32)]
    if s_pad > seq:
        pieces.append(jnp.full((b_chunk, s_pad - seq), -1e9, jnp.float32))
    key_bias = jnp.concatenate(pieces, axis=-1)                 # (b_chunk, s_pad)

    for l in range(n_layers):                                   # static unroll
        # ---- fused QKV projection over the whole batch-chunk row block ----
        qkv = jnp.dot(x.astype(jnp.bfloat16), qkv_w_ref[l],
                      preferred_element_type=jnp.float32)
        qkv = qkv + bias_ref[l:l + 1, :3 * hidden]              # (m_rows, 3H)

        attn = jnp.zeros((m_rows, hidden), jnp.float32)
        for h in range(n_heads):
            q = qkv[:, h * dh:(h + 1) * dh] * scale
            k = qkv[:, hidden + h * dh: hidden + (h + 1) * dh]
            v = qkv[:, 2 * hidden + h * dh: 2 * hidden + (h + 1) * dh]
            ctx_parts = []
            for b in range(b_chunk):                            # per-sequence softmax
                r0, r1 = b * s_pad, (b + 1) * s_pad
                s = jax.lax.dot_general(q[r0:r1], k[r0:r1], (((1,), (1,)), ((), ())),
                                        preferred_element_type=jnp.float32)
                s = s + key_bias[b:b + 1, :]
                s = s - jnp.max(s, axis=-1, keepdims=True)
                p = jnp.exp(s)
                p = p * pl.reciprocal(jnp.sum(p, axis=-1, keepdims=True), approx=True)
                ctx_parts.append(jnp.dot(p, v[r0:r1], preferred_element_type=jnp.float32))
            ctx = jnp.concatenate(ctx_parts, axis=0)            # (m_rows, dh)
            # per-head output projection accumulate (no lane-axis head concat)
            attn = attn + jnp.dot(ctx.astype(jnp.bfloat16),
                                  o_w_ref[l, h * dh:(h + 1) * dh, :],
                                  preferred_element_type=jnp.float32)

        r = 2 + 6 * l                                           # rows in the vector slab
        o_b, sa_g, sa_b = vec_ref[r:r + 1, :], vec_ref[r + 1:r + 2, :], vec_ref[r + 2:r + 3, :]
        ff2_b, out_g, out_b = vec_ref[r + 3:r + 4, :], vec_ref[r + 4:r + 5, :], vec_ref[r + 5:r + 6, :]

        h1 = layernorm(x + attn + o_b, sa_g, sa_b)

        # ---- FFN (GELU) + residual + LN ----
        f = jnp.dot(h1.astype(jnp.bfloat16), ff1_w_ref[l],
                    preferred_element_type=jnp.float32)
        f = f + bias_ref[n_layers + l: n_layers + l + 1, :ffn]
        # TODO(synk): HF DistilBERT uses exact erf-GELU; tanh approximation used here.
        f = 0.5 * f * (1.0 + jnp.tanh(0.7978845608028654 * (f + 0.044715 * f * f * f)))
        f2 = jnp.dot(f.astype(jnp.bfloat16), ff2_w_ref[l],
                     preferred_element_type=jnp.float32) + ff2_b
        x = layernorm(h1 + f2, out_g, out_b)

    # ---- CLS pooling (row 0 of each sequence block); dropout(eval) = identity ----
    # TODO(synk): training-mode dropout not implemented (eval forward only).
    pooled = jnp.concatenate([x[b * s_pad: b * s_pad + 1, :] for b in range(b_chunk)], axis=0)
    logits = jnp.dot(pooled.astype(jnp.bfloat16), cls_w_ref[...],
                     preferred_element_type=jnp.float32)
    logits = logits + bias_ref[2 * n_layers: 2 * n_layers + 1, :]     # (b_chunk, PAD_N)
    out_ref[0] = logits.astype(out_ref.dtype)


# ------------------------------- parameters -------------------------------- #

def init_params(key):
    def nrm(k, shape, s=0.02):
        return jax.random.normal(k, shape, jnp.float32) * s

    keys = iter(jax.random.split(key, 64))
    params = {
        "word_emb": nrm(next(keys), (VOCAB, HIDDEN)),
        "pos_emb": nrm(next(keys), (MAX_POS, HIDDEN)),
        "emb_ln_g": jnp.ones((HIDDEN,), jnp.float32),
        "emb_ln_b": jnp.zeros((HIDDEN,), jnp.float32),
        "cls_w": nrm(next(keys), (HIDDEN, NUM_LABELS)),
        "cls_b": jnp.zeros((NUM_LABELS,), jnp.float32),
        "layers": [],
    }
    for _ in range(N_LAYERS):
        params["layers"].append({
            "q_w": nrm(next(keys), (HIDDEN, HIDDEN)), "q_b": jnp.zeros((HIDDEN,)),
            "k_w": nrm(next(keys), (HIDDEN, HIDDEN)), "k_b": jnp.zeros((HIDDEN,)),
            "v_w": nrm(next(keys), (HIDDEN, HIDDEN)), "v_b": jnp.zeros((HIDDEN,)),
            "o_w": nrm(next(keys), (HIDDEN, HIDDEN)), "o_b": jnp.zeros((HIDDEN,)),
            "sa_ln_g": jnp.ones((HIDDEN,)), "sa_ln_b": jnp.zeros((HIDDEN,)),
            "ff1_w": nrm(next(keys), (HIDDEN, FFN)), "ff1_b": jnp.zeros((FFN,)),
            "ff2_w": nrm(next(keys), (FFN, HIDDEN)), "ff2_b": jnp.zeros((HIDDEN,)),
            "out_ln_g": jnp.ones((HIDDEN,)), "out_ln_b": jnp.zeros((HIDDEN,)),
        })
    # prompt embeddings: sampled real-token embeddings + small noise (_init_prompt_embeddings)
    idx_key, noise_key = jax.random.split(next(keys))
    rand_idx = jax.random.randint(idx_key, (NUM_VIRTUAL_TOKENS,), 0, VOCAB)
    params["prompt_emb"] = (params["word_emb"][rand_idx]
                            + jax.random.normal(noise_key,
                                                (NUM_VIRTUAL_TOKENS, HIDDEN)) * 0.01)
    return params


def pack_params(p):
    """Consolidate parameters into a few VMEM-resident slabs for the fused kernel."""
    L, H = N_LAYERS, HIDDEN

    def bf(w):
        return w.astype(jnp.bfloat16)

    # one embedding slab: rows [0:VOCAB)=word, [VOCAB:VOCAB+NVT)=prompt, then positions
    emb_slab = jnp.concatenate(
        [p["word_emb"], p["prompt_emb"], p["pos_emb"]], axis=0).astype(jnp.float32)

    qkv_w = jnp.stack([jnp.concatenate([l["q_w"], l["k_w"], l["v_w"]], axis=1)
                       for l in p["layers"]])                       # (L, H, 3H)
    o_w = jnp.stack([l["o_w"] for l in p["layers"]])                # (L, H, H)
    ff1_w = jnp.stack([l["ff1_w"] for l in p["layers"]])            # (L, H, FFN)
    ff2_w = jnp.stack([l["ff2_w"] for l in p["layers"]])            # (L, FFN, H)
    cls_w = jnp.zeros((H, PAD_N), jnp.float32).at[:, :NUM_LABELS].set(p["cls_w"])

    # (2 + 6L, H) slab of every H-wide vector: emb LN, then per layer
    # [o_b, sa_ln_g, sa_ln_b, ff2_b, out_ln_g, out_ln_b]
    vec_rows = [p["emb_ln_g"], p["emb_ln_b"]]
    for l in p["layers"]:
        vec_rows += [l["o_b"], l["sa_ln_g"], l["sa_ln_b"],
                     l["ff2_b"], l["out_ln_g"], l["out_ln_b"]]
    vecs = jnp.stack([v.astype(jnp.float32) for v in vec_rows])     # (2+6L, H)

    # (2L+1, 128) wide-bias slab: rows [0:L)=qkv_b, [L:2L)=ff1_b, row 2L = cls_b
    bias_slab = jnp.zeros((2 * L + 1, PAD_N), jnp.float32)
    for i, l in enumerate(p["layers"]):
        qkv_b = jnp.concatenate([l["q_b"], l["k_b"], l["v_b"]])
        bias_slab = bias_slab.at[i, :3 * H].set(qkv_b)
        bias_slab = bias_slab.at[L + i, :FFN].set(l["ff1_b"])
    bias_slab = bias_slab.at[2 * L, :NUM_LABELS].set(p["cls_b"])

    return {
        "emb_slab": emb_slab,
        "qkv_w": bf(qkv_w), "o_w": bf(o_w),
        "ff1_w": bf(ff1_w), "ff2_w": bf(ff2_w), "cls_w": bf(cls_w),
        "vecs": vecs, "bias_slab": bias_slab,
    }


# ------------------------------ forward pass ------------------------------- #

def prompt_tuning_forward(packed, input_ids, attention_mask, labels=None):
    B, s_text = input_ids.shape
    seq = NUM_VIRTUAL_TOKENS + s_text
    s_pad = ((seq + 7) // 8) * 8                    # sublane-aligned per-sequence block
    assert s_pad <= MAX_POS

    num_steps = _num_grid_steps(B)
    b_chunk = B // num_steps
    m_rows = b_chunk * s_pad

    ids = input_ids.astype(jnp.int32)
    mask3 = attention_mask.astype(jnp.float32).reshape(num_steps, b_chunk, s_text)

    kernel = functools.partial(
        _fused_kernel, n_layers=N_LAYERS, n_heads=N_HEADS, hidden=HIDDEN, ffn=FFN,
        eps=LN_EPS, b_chunk=b_chunk, s_text=s_text, s_pad=s_pad,
        nvt=NUM_VIRTUAL_TOKENS, vocab=VOCAB)

    grid_spec = pltpu.PrefetchScalarGridSpec(
        num_scalar_prefetch=1,                       # input_ids -> SMEM
        grid=(num_steps,),
        in_specs=[
            pl.BlockSpec((1, b_chunk, s_text), lambda i, _ids: (i, 0, 0)),   # mask chunk
            pl.BlockSpec(packed["emb_slab"].shape, lambda i, _ids: (0, 0)),  # word|prompt|pos
            pl.BlockSpec(packed["qkv_w"].shape, lambda i, _ids: (0, 0, 0)),
            pl.BlockSpec(packed["o_w"].shape, lambda i, _ids: (0, 0, 0)),
            pl.BlockSpec(packed["ff1_w"].shape, lambda i, _ids: (0, 0, 0)),
            pl.BlockSpec(packed["ff2_w"].shape, lambda i, _ids: (0, 0, 0)),
            pl.BlockSpec(packed["cls_w"].shape, lambda i, _ids: (0, 0)),
            pl.BlockSpec(packed["vecs"].shape, lambda i, _ids: (0, 0)),
            pl.BlockSpec(packed["bias_slab"].shape, lambda i, _ids: (0, 0)),
        ],
        out_specs=pl.BlockSpec((1, b_chunk, PAD_N), lambda i, _ids: (i, 0, 0)),
        scratch_shapes=[pltpu.VMEM((m_rows, HIDDEN), jnp.float32)],
    )

    out = pl.pallas_call(
        kernel,
        out_shape=jax.ShapeDtypeStruct((num_steps, b_chunk, PAD_N), jnp.float32),
        grid_spec=grid_spec,
        compiler_params=pltpu.CompilerParams(dimension_semantics=("parallel",)),
    )(ids, mask3, packed["emb_slab"], packed["qkv_w"], packed["o_w"],
      packed["ff1_w"], packed["ff2_w"], packed["cls_w"],
      packed["vecs"], packed["bias_slab"])

    logits = out.reshape(B, PAD_N)[:, :NUM_LABELS]

    loss = None
    if labels is not None:
        logp = jax.nn.log_softmax(logits, axis=-1)
        loss = -jnp.mean(jnp.take_along_axis(logp, labels[:, None], axis=-1))
    return {"loss": loss, "logits": logits}


# ----------------------------------- main ----------------------------------- #

if __name__ == "__main__":
    root = jax.random.PRNGKey(0)
    p_key, id_key = jax.random.split(root)
    params = init_params(p_key)
    packed = pack_params(params)

    B, S_TEXT = 8, 8
    input_ids = jax.random.randint(id_key, (B, S_TEXT), 0, VOCAB, dtype=jnp.int32)
    attention_mask = jnp.ones((B, S_TEXT), jnp.float32)
    attention_mask = attention_mask.at[1, -2:].set(0.0)            # exercise masking
    attention_mask = attention_mask.at[5, -3:].set(0.0)

    fwd = jax.jit(lambda ids, mask: prompt_tuning_forward(packed, ids, mask)["logits"])
    logits = fwd(input_ids, attention_mask)
    jax.block_until_ready(logits)
    assert logits.shape == (B, NUM_LABELS)
    assert bool(jnp.all(jnp.isfinite(logits)))
    print("KERNEL_OK")
</pallas_src>

<mosaic_0001>
module attributes {stable_mosaic.version = 11 : i64} {
  func.func @_fused_kernel(%arg0: i32, %arg1: memref<8x8xi32, #tpu.memory_space<smem>>, %arg2: memref<1x8x8xf32, #tpu.memory_space<vmem>>, %arg3: memref<118x32xf32, #tpu.memory_space<vmem>>, %arg4: memref<2x32x96xbf16, #tpu.memory_space<vmem>>, %arg5: memref<2x32x32xbf16, #tpu.memory_space<vmem>>, %arg6: memref<2x32x64xbf16, #tpu.memory_space<vmem>>, %arg7: memref<2x64x32xbf16, #tpu.memory_space<vmem>>, %arg8: memref<32x128xbf16, #tpu.memory_space<vmem>>, %arg9: memref<14x32xf32, #tpu.memory_space<vmem>>, %arg10: memref<5x128xf32, #tpu.memory_space<vmem>>, %arg11: memref<1x8x128xf32, #tpu.memory_space<vmem>>, %arg12: memref<128x32xf32, #tpu.memory_space<vmem>>) attributes {dimension_semantics = [#tpu.dimension_semantics<parallel>], iteration_bounds = array<i64: 1>, scalar_prefetch = 1 : i64, scratch_operands = 1 : i64, tpu.core_type = #tpu.core_type<tc>, window_params = [{transform_indices = @transform_0, window_bounds = array<i64: 1, 8, 8>}, {pipeline_mode = #tpu.pipeline_mode<synchronous>, transform_indices = @transform_1, window_bounds = array<i64: 118, 32>}, {pipeline_mode = #tpu.pipeline_mode<synchronous>, transform_indices = @transform_2, window_bounds = array<i64: 2, 32, 96>}, {pipeline_mode = #tpu.pipeline_mode<synchronous>, transform_indices = @transform_3, window_bounds = array<i64: 2, 32, 32>}, {pipeline_mode = #tpu.pipeline_mode<synchronous>, transform_indices = @transform_4, window_bounds = array<i64: 2, 32, 64>}, {pipeline_mode = #tpu.pipeline_mode<synchronous>, transform_indices = @transform_5, window_bounds = array<i64: 2, 64, 32>}, {pipeline_mode = #tpu.pipeline_mode<synchronous>, transform_indices = @transform_6, window_bounds = array<i64: 32, 128>}, {pipeline_mode = #tpu.pipeline_mode<synchronous>, transform_indices = @transform_7, window_bounds = array<i64: 14, 32>}, {pipeline_mode = #tpu.pipeline_mode<synchronous>, transform_indices = @transform_8, window_bounds = array<i64: 5, 128>}, {transform_indices = @transform_9, window_bounds = array<i64: 1, 8, 128>}]} {
    %cst = arith.constant 0.000000e+00 : f32
    %0 = vector.broadcast %cst : f32 to vector<128x32xf32>
    %c0 = arith.constant 0 : index
    %c0_0 = arith.constant 0 : index
    %1 = vector.load %arg12[%c0, %c0_0] : memref<128x32xf32, #tpu.memory_space<vmem>>, vector<128x32xf32>
    tpu.vector_store %arg12[%c0, %c0_0], %0 {strides = array<i32>} : memref<128x32xf32, #tpu.memory_space<vmem>>, vector<128x32xf32>,
    %c50 = arith.constant 50 : index
    %c0_1 = arith.constant 0 : index
    %2 = vector.load %arg3[%c50, %c0_1] : memref<118x32xf32, #tpu.memory_space<vmem>>, vector<4x32xf32>
    %c0_2 = arith.constant 0 : index
    %c0_3 = arith.constant 0 : index
    %3 = vector.load %arg12[%c0_2, %c0_3] : memref<128x32xf32, #tpu.memory_space<vmem>>, vector<4x32xf32>
    tpu.vector_store %arg12[%c0_2, %c0_3], %2 {strides = array<i32>} : memref<128x32xf32, #tpu.memory_space<vmem>>, vector<4x32xf32>,
    %c8_i32 = arith.constant 8 : i32
    %4 = arith.muli %arg0, %c8_i32 : i32
    %c0_i32 = arith.constant 0 : i32
    %5 = arith.addi %4, %c0_i32 : i32
    %6 = arith.index_cast %5 : i32 to index
    %c0_4 = arith.constant 0 : index
    %7 = memref.load %arg1[%6, %c0_4] : memref<8x8xi32, #tpu.memory_space<smem>>
    %8 = arith.index_cast %7 : i32 to index
    %c0_5 = arith.constant 0 : index
    %9 = vector.load %arg3[%8, %c0_5] : memref<118x32xf32, #tpu.memory_space<vmem>>, vector<1x32xf32>
    %c4 = arith.constant 4 : index
    %c0_6 = arith.constant 0 : index
    %10 = vector.load %arg12[%c4, %c0_6] : memref<128x32xf32, #tpu.memory_space<vmem>>, vector<1x32xf32>
    tpu.vector_store %arg12[%c4, %c0_6], %9 {strides = array<i32>} : memref<128x32xf32, #tpu.memory_space<vmem>>, vector<1x32xf32>,
    %11 = arith.index_cast %5 : i32 to index
    %c1 = arith.constant 1 : index
    %12 = memref.load %arg1[%11, %c1] : memref<8x8xi32, #tpu.memory_space<smem>>
    %13 = arith.index_cast %12 : i32 to index
    %c0_7 = arith.constant 0 : index
    %14 = vector.load %arg3[%13, %c0_7] : memref<118x32xf32, #tpu.memory_space<vmem>>, vector<1x32xf32>
    %c5 = arith.constant 5 : index
    %c0_8 = arith.constant 0 : index
    %15 = vector.load %arg12[%c5, %c0_8] : memref<128x32xf32, #tpu.memory_space<vmem>>, vector<1x32xf32>
    tpu.vector_store %arg12[%c5, %c0_8], %14 {strides = array<i32>} : memref<128x32xf32, #tpu.memory_space<vmem>>, vector<1x32xf32>,
    %16 = arith.index_cast %5 : i32 to index
    %c2 = arith.constant 2 : index
    %17 = memref.load %arg1[%16, %c2] : memref<8x8xi32, #tpu.memory_space<smem>>
    %18 = arith.index_cast %17 : i32 to index
    %c0_9 = arith.constant 0 : index
    %19 = vector.load %arg3[%18, %c0_9] : memref<118x32xf32, #tpu.memory_space<vmem>>, vector<1x32xf32>
    %c6 = arith.constant 6 : index
    %c0_10 = arith.constant 0 : index
    %20 = vector.load %arg12[%c6, %c0_10] : memref<128x32xf32, #tpu.memory_space<vmem>>, vector<1x32xf32>
    tpu.vector_store %arg12[%c6, %c0_10], %19 {strides = array<i32>} : memref<128x32xf32, #tpu.memory_space<vmem>>, vector<1x32xf32>,
    %21 = arith.index_cast %5 : i32 to index
    %c3 = arith.constant 3 : index
    %22 = memref.load %arg1[%21, %c3] : memref<8x8xi32, #tpu.memory_space<smem>>
    %23 = arith.index_cast %22 : i32 to index
    %c0_11 = arith.constant 0 : index
    %24 = vector.load %arg3[%23, %c0_11] : memref<118x32xf32, #tpu.memory_space<vmem>>, vector<1x32xf32>
    %c7 = arith.constant 7 : index
    %c0_12 = arith.constant 0 : index
    %25 = vector.load %arg12[%c7, %c0_12] : memref<128x32xf32, #tpu.memory_space<vmem>>, vector<1x32xf32>
    tpu.vector_store %arg12[%c7, %c0_12], %24 {strides = array<i32>} : memref<128x32xf32, #tpu.memory_space<vmem>>, vector<1x32xf32>,
    %26 = arith.index_cast %5 : i32 to index
    %c4_13 = arith.constant 4 : index
    %27 = memref.load %arg1[%26, %c4_13] : memref<8x8xi32, #tpu.memory_space<smem>>
    %28 = arith.index_cast %27 : i32 to index
    %c0_14 = arith.constant 0 : index
    %29 = vector.load %arg3[%28, %c0_14] : memref<118x32xf32, #tpu.memory_space<vmem>>, vector<1x32xf32>
    %c8 = arith.constant 8 : index
    %c0_15 = arith.constant 0 : index
    %30 = vector.load %arg12[%c8, %c0_15] : memref<128x32xf32, #tpu.memory_space<vmem>>, vector<1x32xf32>
    tpu.vector_store %arg12[%c8, %c0_15], %29 {strides = array<i32>} : memref<128x32xf32, #tpu.memory_space<vmem>>, vector<1x32xf32>,
    %31 = arith.index_cast %5 : i32 to index
    %c5_16 = arith.constant 5 : index
    %32 = memref.load %arg1[%31, %c5_16] : memref<8x8xi32, #tpu.memory_space<smem>>
    %33 = arith.index_cast %32 : i32 to index
    %c0_17 = arith.constant 0 : index
    %34 = vector.load %arg3[%33, %c0_17] : memref<118x32xf32, #tpu.memory_space<vmem>>, vector<1x32xf32>
    %c9 = arith.constant 9 : index
    %c0_18 = arith.constant 0 : index
    %35 = vector.load %arg12[%c9, %c0_18] : memref<128x32xf32, #tpu.memory_space<vmem>>, vector<1x32xf32>
    tpu.vector_store %arg12[%c9, %c0_18], %34 {strides = array<i32>} : memref<128x32xf32, #tpu.memory_space<vmem>>, vector<1x32xf32>,
    %36 = arith.index_cast %5 : i32 to index
    %c6_19 = arith.constant 6 : index
    %37 = memref.load %arg1[%36, %c6_19] : memref<8x8xi32, #tpu.memory_space<smem>>
    %38 = arith.index_cast %37 : i32 to index
    %c0_20 = arith.constant 0 : index
    %39 = vector.load %arg3[%38, %c0_20] : memref<118x32xf32, #tpu.memory_space<vmem>>, vector<1x32xf32>
    %c10 = arith.constant 10 : index
    %c0_21 = arith.constant 0 : index
    %40 = vector.load %arg12[%c10, %c0_21] : memref<128x32xf32, #tpu.memory_space<vmem>>, vector<1x32xf32>
    tpu.vector_store %arg12[%c10, %c0_21], %39 {strides = array<i32>} : memref<128x32xf32, #tpu.memory_space<vmem>>, vector<1x32xf32>,
    %41 = arith.index_cast %5 : i32 to index
    %c7_22 = arith.constant 7 : index
    %42 = memref.load %arg1[%41, %c7_22] : memref<8x8xi32, #tpu.memory_space<smem>>
    %43 = arith.index_cast %42 : i32 to index
    %c0_23 = arith.constant 0 : index
    %44 = vector.load %arg3[%43, %c0_23] : memref<118x32xf32, #tpu.memory_space<vmem>>, vector<1x32xf32>
    %c11 = arith.constant 11 : index
    %c0_24 = arith.constant 0 : index
    %45 = vector.load %arg12[%c11, %c0_24] : memref<128x32xf32, #tpu.memory_space<vmem>>, vector<1x32xf32>
    tpu.vector_store %arg12[%c11, %c0_24], %44 {strides = array<i32>} : memref<128x32xf32, #tpu.memory_space<vmem>>, vector<1x32xf32>,
    %c16 = arith.constant 16 : index
    %c0_25 = arith.constant 0 : index
    %46 = vector.load %arg12[%c16, %c0_25] : memref<128x32xf32, #tpu.memory_space<vmem>>, vector<4x32xf32>
    tpu.vector_store %arg12[%c16, %c0_25], %2 {strides = array<i32>} : memref<128x32xf32, #tpu.memory_space<vmem>>, vector<4x32xf32>,
    %c8_i32_26 = arith.constant 8 : i32
    %47 = arith.muli %arg0, %c8_i32_26 : i32
    %c1_i32 = arith.constant 1 : i32
    %48 = arith.addi %47, %c1_i32 : i32
    %49 = arith.index_cast %48 : i32 to index
    %c0_27 = arith.constant 0 : index
    %50 = memref.load %arg1[%49, %c0_27] : memref<8x8xi32, #tpu.memory_space<smem>>
    %51 = arith.index_cast %50 : i32 to index
    %c0_28 = arith.constant 0 : index
    %52 = vector.load %arg3[%51, %c0_28] : memref<118x32xf32, #tpu.memory_space<vmem>>, vector<1x32xf32>
    %c20 = arith.constant 20 : index
    %c0_29 = arith.constant 0 : index
    %53 = vector.load %arg12[%c20, %c0_29] : memref<128x32xf32, #tpu.memory_space<vmem>>, vector<1x32xf32>
    tpu.vector_store %arg12[%c20, %c0_29], %52 {strides = array<i32>} : memref<128x32xf32, #tpu.memory_space<vmem>>, vector<1x32xf32>,
    %54 = arith.index_cast %48 : i32 to index
    %c1_30 = arith.constant 1 : index
    %55 = memref.load %arg1[%54, %c1_30] : memref<8x8xi32, #tpu.memory_space<smem>>
    %56 = arith.index_cast %55 : i32 to index
    %c0_31 = arith.constant 0 : index
    %57 = vector.load %arg3[%56, %c0_31] : memref<118x32xf32, #tpu.memory_space<vmem>>, vector<1x32xf32>
    %c21 = arith.constant 21 : index
    %c0_32 = arith.constant 0 : index
    %58 = vector.load %arg12[%c21, %c0_32] : memref<128x32xf32, #tpu.memory_space<vmem>>, vector<1x32xf32>
    tpu.vector_store %arg12[%c21, %c0_32], %57 {strides = array<i32>} : memref<128x32xf32, #tpu.memory_space<vmem>>, vector<1x32xf32>,
    %59 = arith.index_cast %48 : i32 to index
    %c2_33 = arith.constant 2 : index
    %60 = memref.load %arg1[%59, %c2_33] : memref<8x8xi32, #tpu.memory_space<smem>>
    %61 = arith.index_cast %60 : i32 to index
    %c0_34 = arith.constant 0 : index
    %62 = vector.load %arg3[%61, %c0_34] : memref<118x32xf32, #tpu.memory_space<vmem>>, vector<1x32xf32>
    %c22 = arith.constant 22 : index
    %c0_35 = arith.constant 0 : index
    %63 = vector.load %arg12[%c22, %c0_35] : memref<128x32xf32, #tpu.memory_space<vmem>>, vector<1x32xf32>
    tpu.vector_store %arg12[%c22, %c0_35], %62 {strides = array<i32>} : memref<128x32xf32, #tpu.memory_space<vmem>>, vector<1x32xf32>,
    %64 = arith.index_cast %48 : i32 to index
    %c3_36 = arith.constant 3 : index
    %65 = memref.load %arg1[%64, %c3_36] : memref<8x8xi32, #tpu.memory_space<smem>>
    %66 = arith.index_cast %65 : i32 to index
    %c0_37 = arith.constant 0 : index
    %67 = vector.load %arg3[%66, %c0_37] : memref<118x32xf32, #tpu.memory_space<vmem>>, vector<1x32xf32>
    %c23 = arith.constant 23 : index
    %c0_38 = arith.constant 0 : index
    %68 = vector.load %arg12[%c23, %c0_38] : memref<128x32xf32, #tpu.memory_space<vmem>>, vector<1x32xf32>
    tpu.vector_store %arg12[%c23, %c0_38], %67 {strides = array<i32>} : memref<128x32xf32, #tpu.memory_space<vmem>>, vector<1x32xf32>,
    %69 = arith.index_cast %48 : i32 to index
    %c4_39 = arith.constant 4 : index
    %70 = memref.load %arg1[%69, %c4_39] : memref<8x8xi32, #tpu.memory_space<smem>>
    %71 = arith.index_cast %70 : i32 to index
    %c0_40 = arith.constant 0 : index
    %72 = vector.load %arg3[%71, %c0_40] : memref<118x32xf32, #tpu.memory_space<vmem>>, vector<1x32xf32>
    %c24 = arith.constant 24 : index
    %c0_41 = arith.constant 0 : index
    %73 = vector.load %arg12[%c24, %c0_41] : memref<128x32xf32, #tpu.memory_space<vmem>>, vector<1x32xf32>
    tpu.vector_store %arg12[%c24, %c0_41], %72 {strides = array<i32>} : memref<128x32xf32, #tpu.memory_space<vmem>>, vector<1x32xf32>,
    %74 = arith.index_cast %48 : i32 to index
    %c5_42 = arith.constant 5 : index
    %75 = memref.load %arg1[%74, %c5_42] : memref<8x8xi32, #tpu.memory_space<smem>>
    %76 = arith.index_cast %75 : i32 to index
    %c0_43 = arith.constant 0 : index
    %77 = vector.load %arg3[%76, %c0_43] : memref<118x32xf32, #tpu.memory_space<vmem>>, vector<1x32xf32>
    %c25 = arith.constant 25 : index
    %c0_44 = arith.constant 0 : index
    %78 = vector.load %arg12[%c25, %c0_44] : memref<128x32xf32, #tpu.memory_space<vmem>>, vector<1x32xf32>
    tpu.vector_store %arg12[%c25, %c0_44], %77 {strides = array<i32>} : memref<128x32xf32, #tpu.memory_space<vmem>>, vector<1x32xf32>,
    %79 = arith.index_cast %48 : i32 to index
    %c6_45 = arith.constant 6 : index
    %80 = memref.load %arg1[%79, %c6_45] : memref<8x8xi32, #tpu.memory_space<smem>>
    %81 = arith.index_cast %80 : i32 to index
    %c0_46 = arith.constant 0 : index
    %82 = vector.load %arg3[%81, %c0_46] : memref<118x32xf32, #tpu.memory_space<vmem>>, vector<1x32xf32>
    %c26 = arith.constant 26 : index
    %c0_47 = arith.constant 0 : index
    %83 = vector.load %arg12[%c26, %c0_47] : memref<128x32xf32, #tpu.memory_space<vmem>>, vector<1x32xf32>
    tpu.vector_store %arg12[%c26, %c0_47], %82 {strides = array<i32>} : memref<128x32xf32, #tpu.memory_space<vmem>>, vector<1x32xf32>,
    %84 = arith.index_cast %48 : i32 to index
    %c7_48 = arith.constant 7 : index
    %85 = memref.load %arg1[%84, %c7_48] : memref<8x8xi32, #tpu.memory_space<smem>>
    %86 = arith.index_cast %85 : i32 to index
    %c0_49 = arith.constant 0 : index
    %87 = vector.load %arg3[%86, %c0_49] : memref<118x32xf32, #tpu.memory_space<vmem>>, vector<1x32xf32>
    %c27 = arith.constant 27 : index
    %c0_50 = arith.constant 0 : index
    %88 = vector.load %arg12[%c27, %c0_50] : memref<128x32xf32, #tpu.memory_space<vmem>>, vector<1x32xf32>
    tpu.vector_store %arg12[%c27, %c0_50], %87 {strides = array<i32>} : memref<128x32xf32, #tpu.memory_space<vmem>>, vector<1x32xf32>,
    %c32 = arith.constant 32 : index
    %c0_51 = arith.constant 0 : index
    %89 = vector.load %arg12[%c32, %c0_51] : memref<128x32xf32, #tpu.memory_space<vmem>>, vector<4x32xf32>
    tpu.vector_store %arg12[%c32, %c0_51], %2 {strides = array<i32>} : memref<128x32xf32, #tpu.memory_space<vmem>>, vector<4x32xf32>,
    %c8_i32_52 = arith.constant 8 : i32
    %90 = arith.muli %arg0, %c8_i32_52 : i32
    %c2_i32 = arith.constant 2 : i32
    %91 = arith.addi %90, %c2_i32 : i32
    %92 = arith.index_cast %91 : i32 to index
    %c0_53 = arith.constant 0 : index
    %93 = memref.load %arg1[%92, %c0_53] : memref<8x8xi32, #tpu.memory_space<smem>>
    %94 = arith.index_cast %93 : i32 to index
    %c0_54 = arith.constant 0 : index
    %95 = vector.load %arg3[%94, %c0_54] : memref<118x32xf32, #tpu.memory_space<vmem>>, vector<1x32xf32>
    %c36 = arith.constant 36 : index
    %c0_55 = arith.constant 0 : index
    %96 = vector.load %arg12[%c36, %c0_55] : memref<128x32xf32, #tpu.memory_space<vmem>>, vector<1x32xf32>
    tpu.vector_store %arg12[%c36, %c0_55], %95 {strides = array<i32>} : memref<128x32xf32, #tpu.memory_space<vmem>>, vector<1x32xf32>,
    %97 = arith.index_cast %91 : i32 to index
    %c1_56 = arith.constant 1 : index
    %98 = memref.load %arg1[%97, %c1_56] : memref<8x8xi32, #tpu.memory_space<smem>>
    %99 = arith.index_cast %98 : i32 to index
    %c0_57 = arith.constant 0 : index
    %100 = vector.load %arg3[%99, %c0_57] : memref<118x32xf32, #tpu.memory_space<vmem>>, vector<1x32xf32>
    %c37 = arith.constant 37 : index
    %c0_58 = arith.constant 0 : index
    %101 = vector.load %arg12[%c37, %c0_58] : memref<128x32xf32, #tpu.memory_space<vmem>>, vector<1x32xf32>
    tpu.vector_store %arg12[%c37, %c0_58], %100 {strides = array<i32>} : memref<128x32xf32, #tpu.memory_space<vmem>>, vector<1x32xf32>,
    %102 = arith.index_cast %91 : i32 to index
    %c2_59 = arith.constant 2 : index
    %103 = memref.load %arg1[%102, %c2_59] : memref<8x8xi32, #tpu.memory_space<smem>>
    %104 = arith.index_cast %103 : i32 to index
    %c0_60 = arith.constant 0 : index
    %105 = vector.load %arg3[%104, %c0_60] : memref<118x32xf32, #tpu.memory_space<vmem>>, vector<1x32xf32>
    %c38 = arith.constant 38 : index
    %c0_61 = arith.constant 0 : index
    %106 = vector.load %arg12[%c38, %c0_61] : memref<128x32xf32, #tpu.memory_space<vmem>>, vector<1x32xf32>
    tpu.vector_store %arg12[%c38, %c0_61], %105 {strides = array<i32>} : memref<128x32xf32, #tpu.memory_space<vmem>>, vector<1x32xf32>,
    %107 = arith.index_cast %91 : i32 to index
    %c3_62 = arith.constant 3 : index
    %108 = memref.load %arg1[%107, %c3_62] : memref<8x8xi32, #tpu.memory_space<smem>>
    %109 = arith.index_cast %108 : i32 to index
    %c0_63 = arith.constant 0 : index
    %110 = vector.load %arg3[%109, %c0_63] : memref<118x32xf32, #tpu.memory_space<vmem>>, vector<1x32xf32>
    %c39 = arith.constant 39 : index
    %c0_64 = arith.constant 0 : index
    %111 = vector.load %arg12[%c39, %c0_64] : memref<128x32xf32, #tpu.memory_space<vmem>>, vector<1x32xf32>
    tpu.vector_store %arg12[%c39, %c0_64], %110 {strides = array<i32>} : memref<128x32xf32, #tpu.memory_space<vmem>>, vector<1x32xf32>,
    %112 = arith.index_cast %91 : i32 to index
    %c4_65 = arith.constant 4 : index
    %113 = memref.load %arg1[%112, %c4_65] : memref<8x8xi32, #tpu.memory_space<smem>>
    %114 = arith.index_cast %113 : i32 to index
    %c0_66 = arith.constant 0 : index
    %115 = vector.load %arg3[%114, %c0_66] : memref<118x32xf32, #tpu.memory_space<vmem>>, vector<1x32xf32>
    %c40 = arith.constant 40 : index
    %c0_67 = arith.constant 0 : index
    %116 = vector.load %arg12[%c40, %c0_67] : memref<128x32xf32, #tpu.memory_space<vmem>>, vector<1x32xf32>
    tpu.vector_store %arg12[%c40, %c0_67], %115 {strides = array<i32>} : memref<128x32xf32, #tpu.memory_space<vmem>>, vector<1x32xf32>,
    %117 = arith.index_cast %91 : i32 to index
    %c5_68 = arith.constant 5 : index
    %118 = memref.load %arg1[%117, %c5_68] : memref<8x8xi32, #tpu.memory_space<smem>>
    %119 = arith.index_cast %118 : i32 to index
    %c0_69 = arith.constant 0 : index
    %120 = vector.load %arg3[%119, %c0_69] : memref<118x32xf32, #tpu.memory_space<vmem>>, vector<1x32xf32>
    %c41 = arith.constant 41 : index
    %c0_70 = arith.constant 0 : index
    %121 = vector.load %arg12[%c41, %c0_70] : memref<128x32xf32, #tpu.memory_space<vmem>>, vector<1x32xf32>
    tpu.vector_store %arg12[%c41, %c0_70], %120 {strides = array<i32>} : memref<128x32xf32, #tpu.memory_space<vmem>>, vector<1x32xf32>,
    %122 = arith.index_cast %91 : i32 to index
    %c6_71 = arith.constant 6 : index
    %123 = memref.load %arg1[%122, %c6_71] : memref<8x8xi32, #tpu.memory_space<smem>>
    %124 = arith.index_cast %123 : i32 to index
    %c0_72 = arith.constant 0 : index
    %125 = vector.load %arg3[%124, %c0_72] : memref<118x32xf32, #tpu.memory_space<vmem>>, vector<1x32xf32>
    %c42 = arith.constant 42 : index
    %c0_73 = arith.constant 0 : index
    %126 = vector.load %arg12[%c42, %c0_73] : memref<128x32xf32, #tpu.memory_space<vmem>>, vector<1x32xf32>
    tpu.vector_store %arg12[%c42, %c0_73], %125 {strides = array<i32>} : memref<128x32xf32, #tpu.memory_space<vmem>>, vector<1x32xf32>,
    %127 = arith.index_cast %91 : i32 to index
    %c7_74 = arith.constant 7 : index
    %128 = memref.load %arg1[%127, %c7_74] : memref<8x8xi32, #tpu.memory_space<smem>>
    %129 = arith.index_cast %128 : i32 to index
    %c0_75 = arith.constant 0 : index
    %130 = vector.load %arg3[%129, %c0_75] : memref<118x32xf32, #tpu.memory_space<vmem>>, vector<1x32xf32>
    %c43 = arith.constant 43 : index
    %c0_76 = arith.constant 0 : index
    %131 = vector.load %arg12[%c43, %c0_76] : memref<128x32xf32, #tpu.memory_space<vmem>>, vector<1x32xf32>
    tpu.vector_store %arg12[%c43, %c0_76], %130 {strides = array<i32>} : memref<128x32xf32, #tpu.memory_space<vmem>>, vector<1x32xf32>,
    %c48 = arith.constant 48 : index
    %c0_77 = arith.constant 0 : index
    %132 = vector.load %arg12[%c48, %c0_77] : memref<128x32xf32, #tpu.memory_space<vmem>>, vector<4x32xf32>
    tpu.vector_store %arg12[%c48, %c0_77], %2 {strides = array<i32>} : memref<128x32xf32, #tpu.memory_space<vmem>>, vector<4x32xf32>,
    %c8_i32_78 = arith.constant 8 : i32
    %133 = arith.muli %arg0, %c8_i32_78 : i32
    %c3_i32 = arith.constant 3 : i32
    %134 = arith.addi %133, %c3_i32 : i32
    %135 = arith.index_cast %134 : i32 to index
    %c0_79 = arith.constant 0 : index
    %136 = memref.load %arg1[%135, %c0_79] : memref<8x8xi32, #tpu.memory_space<smem>>
    %137 = arith.index_cast %136 : i32 to index
    %c0_80 = arith.constant 0 : index
    %138 = vector.load %arg3[%137, %c0_80] : memref<118x32xf32, #tpu.memory_space<vmem>>, vector<1x32xf32>
    %c52 = arith.constant 52 : index
    %c0_81 = arith.constant 0 : index
    %139 = vector.load %arg12[%c52, %c0_81] : memref<128x32xf32, #tpu.memory_space<vmem>>, vector<1x32xf32>
    tpu.vector_store %arg12[%c52, %c0_81], %138 {strides = array<i32>} : memref<128x32xf32, #tpu.memory_space<vmem>>, vector<1x32xf32>,
    %140 = arith.index_cast %134 : i32 to index
    %c1_82 = arith.constant 1 : index
    %141 = memref.load %arg1[%140, %c1_82] : memref<8x8xi32, #tpu.memory_space<smem>>
    %142 = arith.index_cast %141 : i32 to index
    %c0_83 = arith.constant 0 : index
    %143 = vector.load %arg3[%142, %c0_83] : memref<118x32xf32, #tpu.memory_space<vmem>>, vector<1x32xf32>
    %c53 = arith.constant 53 : index
    %c0_84 = arith.constant 0 : index
    %144 = vector.load %arg12[%c53, %c0_84] : memref<128x32xf32, #tpu.memory_space<vmem>>, vector<1x32xf32>
    tpu.vector_store %arg12[%c53, %c0_84], %143 {strides = array<i32>} : memref<128x32xf32, #tpu.memory_space<vmem>>, vector<1x32xf32>,
    %145 = arith.index_cast %134 : i32 to index
    %c2_85 = arith.constant 2 : index
    %146 = memref.load %arg1[%145, %c2_85] : memref<8x8xi32, #tpu.memory_space<smem>>
    %147 = arith.index_cast %146 : i32 to index
    %c0_86 = arith.constant 0 : index
    %148 = vector.load %arg3[%147, %c0_86] : memref<118x32xf32, #tpu.memory_space<vmem>>, vector<1x32xf32>
    %c54 = arith.constant 54 : index
    %c0_87 = arith.constant 0 : index
    %149 = vector.load %arg12[%c54, %c0_87] : memref<128x32xf32, #tpu.memory_space<vmem>>, vector<1x32xf32>
    tpu.vector_store %arg12[%c54, %c0_87], %148 {strides = array<i32>} : memref<128x32xf32, #tpu.memory_space<vmem>>, vector<1x32xf32>,
    %150 = arith.index_cast %134 : i32 to index
    %c3_88 = arith.constant 3 : index
    %151 = memref.load %arg1[%150, %c3_88] : memref<8x8xi32, #tpu.memory_space<smem>>
    %152 = arith.index_cast %151 : i32 to index
    %c0_89 = arith.constant 0 : index
    %153 = vector.load %arg3[%152, %c0_89] : memref<118x32xf32, #tpu.memory_space<vmem>>, vector<1x32xf32>
    %c55 = arith.constant 55 : index
    %c0_90 = arith.constant 0 : index
    %154 = vector.load %arg12[%c55, %c0_90] : memref<128x32xf32, #tpu.memory_space<vmem>>, vector<1x32xf32>
    tpu.vector_store %arg12[%c55, %c0_90], %153 {strides = array<i32>} : memref<128x32xf32, #tpu.memory_space<vmem>>, vector<1x32xf32>,
    %155 = arith.index_cast %134 : i32 to index
    %c4_91 = arith.constant 4 : index
    %156 = memref.load %arg1[%155, %c4_91] : memref<8x8xi32, #tpu.memory_space<smem>>
    %157 = arith.index_cast %156 : i32 to index
    %c0_92 = arith.constant 0 : index
    %158 = vector.load %arg3[%157, %c0_92] : memref<118x32xf32, #tpu.memory_space<vmem>>, vector<1x32xf32>
    %c56 = arith.constant 56 : index
    %c0_93 = arith.constant 0 : index
    %159 = vector.load %arg12[%c56, %c0_93] : memref<128x32xf32, #tpu.memory_space<vmem>>, vector<1x32xf32>
    tpu.vector_store %arg12[%c56, %c0_93], %158 {strides = array<i32>} : memref<128x32xf32, #tpu.memory_space<vmem>>, vector<1x32xf32>,
    %160 = arith.index_cast %134 : i32 to index
    %c5_94 = arith.constant 5 : index
    %161 = memref.load %arg1[%160, %c5_94] : memref<8x8xi32, #tpu.memory_space<smem>>
    %162 = arith.index_cast %161 : i32 to index
    %c0_95 = arith.constant 0 : index
    %163 = vector.load %arg3[%162, %c0_95] : memref<118x32xf32, #tpu.memory_space<vmem>>, vector<1x32xf32>
    %c57 = arith.constant 57 : index
    %c0_96 = arith.constant 0 : index
    %164 = vector.load %arg12[%c57, %c0_96] : memref<128x32xf32, #tpu.memory_space<vmem>>, vector<1x32xf32>
    tpu.vector_store %arg12[%c57, %c0_96], %163 {strides = array<i32>} : memref<128x32xf32, #tpu.memory_space<vmem>>, vector<1x32xf32>,
    %165 = arith.index_cast %134 : i32 to index
    %c6_97 = arith.constant 6 : index
    %166 = memref.load %arg1[%165, %c6_97] : memref<8x8xi32, #tpu.memory_space<smem>>
    %167 = arith.index_cast %166 : i32 to index
    %c0_98 = arith.constant 0 : index
    %168 = vector.load %arg3[%167, %c0_98] : memref<118x32xf32, #tpu.memory_space<vmem>>, vector<1x32xf32>
    %c58 = arith.constant 58 : index
    %c0_99 = arith.constant 0 : index
    %169 = vector.load %arg12[%c58, %c0_99] : memref<128x32xf32, #tpu.memory_space<vmem>>, vector<1x32xf32>
    tpu.vector_store %arg12[%c58, %c0_99], %168 {strides = array<i32>} : memref<128x32xf32, #tpu.memory_space<vmem>>, vector<1x32xf32>,
    %170 = arith.index_cast %134 : i32 to index
    %c7_100 = arith.constant 7 : index
    %171 = memref.load %arg1[%170, %c7_100] : memref<8x8xi32, #tpu.memory_space<smem>>
    %172 = arith.index_cast %171 : i32 to index
    %c0_101 = arith.constant 0 : index
    %173 = vector.load %arg3[%172, %c0_101] : memref<118x32xf32, #tpu.memory_space<vmem>>, vector<1x32xf32>
    %c59 = arith.constant 59 : index
    %c0_102 = arith.constant 0 : index
    %174 = vector.load %arg12[%c59, %c0_102] : memref<128x32xf32, #tpu.memory_space<vmem>>, vector<1x32xf32>
    tpu.vector_store %arg12[%c59, %c0_102], %173 {strides = array<i32>} : memref<128x32xf32, #tpu.memory_space<vmem>>, vector<1x32xf32>,
    %c64 = arith.constant 64 : index
    %c0_103 = arith.constant 0 : index
    %175 = vector.load %arg12[%c64, %c0_103] : memref<128x32xf32, #tpu.memory_space<vmem>>, vector<4x32xf32>
    tpu.vector_store %arg12[%c64, %c0_103], %2 {strides = array<i32>} : memref<128x32xf32, #tpu.memory_space<vmem>>, vector<4x32xf32>,
    %c8_i32_104 = arith.constant 8 : i32
    %176 = arith.muli %arg0, %c8_i32_104 : i32
    %c4_i32 = arith.constant 4 : i32
    %177 = arith.addi %176, %c4_i32 : i32
    %178 = arith.index_cast %177 : i32 to index
    %c0_105 = arith.constant 0 : index
    %179 = memref.load %arg1[%178, %c0_105] : memref<8x8xi32, #tpu.memory_space<smem>>
    %180 = arith.index_cast %179 : i32 to index
    %c0_106 = arith.constant 0 : index
    %181 = vector.load %arg3[%180, %c0_106] : memref<118x32xf32, #tpu.memory_space<vmem>>, vector<1x32xf32>
    %c68 = arith.constant 68 : index
    %c0_107 = arith.constant 0 : index
    %182 = vector.load %arg12[%c68, %c0_107] : memref<128x32xf32, #tpu.memory_space<vmem>>, vector<1x32xf32>
    tpu.vector_store %arg12[%c68, %c0_107], %181 {strides = array<i32>} : memref<128x32xf32, #tpu.memory_space<vmem>>, vector<1x32xf32>,
    %183 = arith.index_cast %177 : i32 to index
    %c1_108 = arith.constant 1 : index
    %184 = memref.load %arg1[%183, %c1_108] : memref<8x8xi32, #tpu.memory_space<smem>>
    %185 = arith.index_cast %184 : i32 to index
    %c0_109 = arith.constant 0 : index
    %186 = vector.load %arg3[%185, %c0_109] : memref<118x32xf32, #tpu.memory_space<vmem>>, vector<1x32xf32>
    %c69 = arith.constant 69 : index
    %c0_110 = arith.constant 0 : index
    %187 = vector.load %arg12[%c69, %c0_110] : memref<128x32xf32, #tpu.memory_space<vmem>>, vector<1x32xf32>
    tpu.vector_store %arg12[%c69, %c0_110], %186 {strides = array<i32>} : memref<128x32xf32, #tpu.memory_space<vmem>>, vector<1x32xf32>,
    %188 = arith.index_cast %177 : i32 to index
    %c2_111 = arith.constant 2 : index
    %189 = memref.load %arg1[%188, %c2_111] : memref<8x8xi32, #tpu.memory_space<smem>>
    %190 = arith.index_cast %189 : i32 to index
    %c0_112 = arith.constant 0 : index
    %191 = vector.load %arg3[%190, %c0_112] : memref<118x32xf32, #tpu.memory_space<vmem>>, vector<1x32xf32>
    %c70 = arith.constant 70 : index
    %c0_113 = arith.constant 0 : index
    %192 = vector.load %arg12[%c70, %c0_113] : memref<128x32xf32, #tpu.memory_space<vmem>>, vector<1x32xf32>
    tpu.vector_store %arg12[%c70, %c0_113], %191 {strides = array<i32>} : memref<128x32xf32, #tpu.memory_space<vmem>>, vector<1x32xf32>,
    %193 = arith.index_cast %177 : i32 to index
    %c3_114 = arith.constant 3 : index
    %194 = memref.load %arg1[%193, %c3_114] : memref<8x8xi32, #tpu.memory_space<smem>>
    %195 = arith.index_cast %194 : i32 to index
    %c0_115 = arith.constant 0 : index
    %196 = vector.load %arg3[%195, %c0_115] : memref<118x32xf32, #tpu.memory_space<vmem>>, vector<1x32xf32>
    %c71 = arith.constant 71 : index
    %c0_116 = arith.constant 0 : index
    %197 = vector.load %arg12[%c71, %c0_116] : memref<128x32xf32, #tpu.memory_space<vmem>>, vector<1x32xf32>
    tpu.vector_store %arg12[%c71, %c0_116], %196 {strides = array<i32>} : memref<128x32xf32, #tpu.memory_space<vmem>>, vector<1x32xf32>,
    %198 = arith.index_cast %177 : i32 to index
    %c4_117 = arith.constant 4 : index
    %199 = memref.load %arg1[%198, %c4_117] : memref<8x8xi32, #tpu.memory_space<smem>>
    %200 = arith.index_cast %199 : i32 to index
    %c0_118 = arith.constant 0 : index
    %201 = vector.load %arg3[%200, %c0_118] : memref<118x32xf32, #tpu.memory_space<vmem>>, vector<1x32xf32>
    %c72 = arith.constant 72 : index
    %c0_119 = arith.constant 0 : index
    %202 = vector.load %arg12[%c72, %c0_119] : memref<128x32xf32, #tpu.memory_space<vmem>>, vector<1x32xf32>
    tpu.vector_store %arg12[%c72, %c0_119], %201 {strides = array<i32>} : memref<128x32xf32, #tpu.memory_space<vmem>>, vector<1x32xf32>,
    %203 = arith.index_cast %177 : i32 to index
    %c5_120 = arith.constant 5 : index
    %204 = memref.load %arg1[%203, %c5_120] : memref<8x8xi32, #tpu.memory_space<smem>>
    %205 = arith.index_cast %204 : i32 to index
    %c0_121 = arith.constant 0 : index
    %206 = vector.load %arg3[%205, %c0_121] : memref<118x32xf32, #tpu.memory_space<vmem>>, vector<1x32xf32>
    %c73 = arith.constant 73 : index
    %c0_122 = arith.constant 0 : index
    %207 = vector.load %arg12[%c73, %c0_122] : memref<128x32xf32, #tpu.memory_space<vmem>>, vector<1x32xf32>
    tpu.vector_store %arg12[%c73, %c0_122], %206 {strides = array<i32>} : memref<128x32xf32, #tpu.memory_space<vmem>>, vector<1x32xf32>,
    %208 = arith.index_cast %177 : i32 to index
    %c6_123 = arith.constant 6 : index
    %209 = memref.load %arg1[%208, %c6_123] : memref<8x8xi32, #tpu.memory_space<smem>>
    %210 = arith.index_cast %209 : i32 to index
    %c0_124 = arith.constant 0 : index
    %211 = vector.load %arg3[%210, %c0_124] : memref<118x32xf32, #tpu.memory_space<vmem>>, vector<1x32xf32>
    %c74 = arith.constant 74 : index
    %c0_125 = arith.constant 0 : index
    %212 = vector.load %arg12[%c74, %c0_125] : memref<128x32xf32, #tpu.memory_space<vmem>>, vector<1x32xf32>
    tpu.vector_store %arg12[%c74, %c0_125], %211 {strides = array<i32>} : memref<128x32xf32, #tpu.memory_space<vmem>>, vector<1x32xf32>,
    %213 = arith.index_cast %177 : i32 to index
    %c7_126 = arith.constant 7 : index
    %214 = memref.load %arg1[%213, %c7_126] : memref<8x8xi32, #tpu.memory_space<smem>>
    %215 = arith.index_cast %214 : i32 to index
    %c0_127 = arith.constant 0 : index
    %216 = vector.load %arg3[%215, %c0_127] : memref<118x32xf32, #tpu.memory_space<vmem>>, vector<1x32xf32>
    %c75 = arith.constant 75 : index
    %c0_128 = arith.constant 0 : index
    %217 = vector.load %arg12[%c75, %c0_128] : memref<128x32xf32, #tpu.memory_space<vmem>>, vector<1x32xf32>
    tpu.vector_store %arg12[%c75, %c0_128], %216 {strides = array<i32>} : memref<128x32xf32, #tpu.memory_space<vmem>>, vector<1x32xf32>,
    %c80 = arith.constant 80 : index
    %c0_129 = arith.constant 0 : index
    %218 = vector.load %arg12[%c80, %c0_129] : memref<128x32xf32, #tpu.memory_space<vmem>>, vector<4x32xf32>
    tpu.vector_store %arg12[%c80, %c0_129], %2 {strides = array<i32>} : memref<128x32xf32, #tpu.memory_space<vmem>>, vector<4x32xf32>,
    %c8_i32_130 = arith.constant 8 : i32
    %219 = arith.muli %arg0, %c8_i32_130 : i32
    %c5_i32 = arith.constant 5 : i32
    %220 = arith.addi %219, %c5_i32 : i32
    %221 = arith.index_cast %220 : i32 to index
    %c0_131 = arith.constant 0 : index
    %222 = memref.load %arg1[%221, %c0_131] : memref<8x8xi32, #tpu.memory_space<smem>>
    %223 = arith.index_cast %222 : i32 to index
    %c0_132 = arith.constant 0 : index
    %224 = vector.load %arg3[%223, %c0_132] : memref<118x32xf32, #tpu.memory_space<vmem>>, vector<1x32xf32>
    %c84 = arith.constant 84 : index
    %c0_133 = arith.constant 0 : index
    %225 = vector.load %arg12[%c84, %c0_133] : memref<128x32xf32, #tpu.memory_space<vmem>>, vector<1x32xf32>
    tpu.vector_store %arg12[%c84, %c0_133], %224 {strides = array<i32>} : memref<128x32xf32, #tpu.memory_space<vmem>>, vector<1x32xf32>,
    %226 = arith.index_cast %220 : i32 to index
    %c1_134 = arith.constant 1 : index
    %227 = memref.load %arg1[%226, %c1_134] : memref<8x8xi32, #tpu.memory_space<smem>>
    %228 = arith.index_cast %227 : i32 to index
    %c0_135 = arith.constant 0 : index
    %229 = vector.load %arg3[%228, %c0_135] : memref<118x32xf32, #tpu.memory_space<vmem>>, vector<1x32xf32>
    %c85 = arith.constant 85 : index
    %c0_136 = arith.constant 0 : index
    %230 = vector.load %arg12[%c85, %c0_136] : memref<128x32xf32, #tpu.memory_space<vmem>>, vector<1x32xf32>
    tpu.vector_store %arg12[%c85, %c0_136], %229 {strides = array<i32>} : memref<128x32xf32, #tpu.memory_space<vmem>>, vector<1x32xf32>,
    %231 = arith.index_cast %220 : i32 to index
    %c2_137 = arith.constant 2 : index
    %232 = memref.load %arg1[%231, %c2_137] : memref<8x8xi32, #tpu.memory_space<smem>>
    %233 = arith.index_cast %232 : i32 to index
    %c0_138 = arith.constant 0 : index
    %234 = vector.load %arg3[%233, %c0_138] : memref<118x32xf32, #tpu.memory_space<vmem>>, vector<1x32xf32>
    %c86 = arith.constant 86 : index
    %c0_139 = arith.constant 0 : index
    %235 = vector.load %arg12[%c86, %c0_139] : memref<128x32xf32, #tpu.memory_space<vmem>>, vector<1x32xf32>
    tpu.vector_store %arg12[%c86, %c0_139], %234 {strides = array<i32>} : memref<128x32xf32, #tpu.memory_space<vmem>>, vector<1x32xf32>,
    %236 = arith.index_cast %220 : i32 to index
    %c3_140 = arith.constant 3 : index
    %237 = memref.load %arg1[%236, %c3_140] : memref<8x8xi32, #tpu.memory_space<smem>>
    %238 = arith.index_cast %237 : i32 to index
    %c0_141 = arith.constant 0 : index
    %239 = vector.load %arg3[%238, %c0_141] : memref<118x32xf32, #tpu.memory_space<vmem>>, vector<1x32xf32>
    %c87 = arith.constant 87 : index
    %c0_142 = arith.constant 0 : index
    %240 = vector.load %arg12[%c87, %c0_142] : memref<128x32xf32, #tpu.memory_space<vmem>>, vector<1x32xf32>
    tpu.vector_store %arg12[%c87, %c0_142], %239 {strides = array<i32>} : memref<128x32xf32, #tpu.memory_space<vmem>>, vector<1x32xf32>,
    %241 = arith.index_cast %220 : i32 to index
    %c4_143 = arith.constant 4 : index
    %242 = memref.load %arg1[%241, %c4_143] : memref<8x8xi32, #tpu.memory_space<smem>>
    %243 = arith.index_cast %242 : i32 to index
    %c0_144 = arith.constant 0 : index
    %244 = vector.load %arg3[%243, %c0_144] : memref<118x32xf32, #tpu.memory_space<vmem>>, vector<1x32xf32>
    %c88 = arith.constant 88 : index
    %c0_145 = arith.constant 0 : index
    %245 = vector.load %arg12[%c88, %c0_145] : memref<128x32xf32, #tpu.memory_space<vmem>>, vector<1x32xf32>
    tpu.vector_store %arg12[%c88, %c0_145], %244 {strides = array<i32>} : memref<128x32xf32, #tpu.memory_space<vmem>>, vector<1x32xf32>,
    %246 = arith.index_cast %220 : i32 to index
    %c5_146 = arith.constant 5 : index
    %247 = memref.load %arg1[%246, %c5_146] : memref<8x8xi32, #tpu.memory_space<smem>>
    %248 = arith.index_cast %247 : i32 to index
    %c0_147 = arith.constant 0 : index
    %249 = vector.load %arg3[%248, %c0_147] : memref<118x32xf32, #tpu.memory_space<vmem>>, vector<1x32xf32>
    %c89 = arith.constant 89 : index
    %c0_148 = arith.constant 0 : index
    %250 = vector.load %arg12[%c89, %c0_148] : memref<128x32xf32, #tpu.memory_space<vmem>>, vector<1x32xf32>
    tpu.vector_store %arg12[%c89, %c0_148], %249 {strides = array<i32>} : memref<128x32xf32, #tpu.memory_space<vmem>>, vector<1x32xf32>,
    %251 = arith.index_cast %220 : i32 to index
    %c6_149 = arith.constant 6 : index
    %252 = memref.load %arg1[%251, %c6_149] : memref<8x8xi32, #tpu.memory_space<smem>>
    %253 = arith.index_cast %252 : i32 to index
    %c0_150 = arith.constant 0 : index
    %254 = vector.load %arg3[%253, %c0_150] : memref<118x32xf32, #tpu.memory_space<vmem>>, vector<1x32xf32>
    %c90 = arith.constant 90 : index
    %c0_151 = arith.constant 0 : index
    %255 = vector.load %arg12[%c90, %c0_151] : memref<128x32xf32, #tpu.memory_space<vmem>>, vector<1x32xf32>
    tpu.vector_store %arg12[%c90, %c0_151], %254 {strides = array<i32>} : memref<128x32xf32, #tpu.memory_space<vmem>>, vector<1x32xf32>,
    %256 = arith.index_cast %220 : i32 to index
    %c7_152 = arith.constant 7 : index
    %257 = memref.load %arg1[%256, %c7_152] : memref<8x8xi32, #tpu.memory_space<smem>>
    %258 = arith.index_cast %257 : i32 to index
    %c0_153 = arith.constant 0 : index
    %259 = vector.load %arg3[%258, %c0_153] : memref<118x32xf32, #tpu.memory_space<vmem>>, vector<1x32xf32>
    %c91 = arith.constant 91 : index
    %c0_154 = arith.constant 0 : index
    %260 = vector.load %arg12[%c91, %c0_154] : memref<128x32xf32, #tpu.memory_space<vmem>>, vector<1x32xf32>
    tpu.vector_store %arg12[%c91, %c0_154], %259 {strides = array<i32>} : memref<128x32xf32, #tpu.memory_space<vmem>>, vector<1x32xf32>,
    %c96 = arith.constant 96 : index
    %c0_155 = arith.constant 0 : index
    %261 = vector.load %arg12[%c96, %c0_155] : memref<128x32xf32, #tpu.memory_space<vmem>>, vector<4x32xf32>
    tpu.vector_store %arg12[%c96, %c0_155], %2 {strides = array<i32>} : memref<128x32xf32, #tpu.memory_space<vmem>>, vector<4x32xf32>,
    %c8_i32_156 = arith.constant 8 : i32
    %262 = arith.muli %arg0, %c8_i32_156 : i32
    %c6_i32 = arith.constant 6 : i32
    %263 = arith.addi %262, %c6_i32 : i32
    %264 = arith.index_cast %263 : i32 to index
    %c0_157 = arith.constant 0 : index
    %265 = memref.load %arg1[%264, %c0_157] : memref<8x8xi32, #tpu.memory_space<smem>>
    %266 = arith.index_cast %265 : i32 to index
    %c0_158 = arith.constant 0 : index
    %267 = vector.load %arg3[%266, %c0_158] : memref<118x32xf32, #tpu.memory_space<vmem>>, vector<1x32xf32>
    %c100 = arith.constant 100 : index
    %c0_159 = arith.constant 0 : index
    %268 = vector.load %arg12[%c100, %c0_159] : memref<128x32xf32, #tpu.memory_space<vmem>>, vector<1x32xf32>
    tpu.vector_store %arg12[%c100, %c0_159], %267 {strides = array<i32>} : memref<128x32xf32, #tpu.memory_space<vmem>>, vector<1x32xf32>,
    %269 = arith.index_cast %263 : i32 to index
    %c1_160 = arith.constant 1 : index
    %270 = memref.load %arg1[%269, %c1_160] : memref<8x8xi32, #tpu.memory_space<smem>>
    %271 = arith.index_cast %270 : i32 to index
    %c0_161 = arith.constant 0 : index
    %272 = vector.load %arg3[%271, %c0_161] : memref<118x32xf32, #tpu.memory_space<vmem>>, vector<1x32xf32>
    %c101 = arith.constant 101 : index
    %c0_162 = arith.constant 0 : index
    %273 = vector.load %arg12[%c101, %c0_162] : memref<128x32xf32, #tpu.memory_space<vmem>>, vector<1x32xf32>
    tpu.vector_store %arg12[%c101, %c0_162], %272 {strides = array<i32>} : memref<128x32xf32, #tpu.memory_space<vmem>>, vector<1x32xf32>,
    %274 = arith.index_cast %263 : i32 to index
    %c2_163 = arith.constant 2 : index
    %275 = memref.load %arg1[%274, %c2_163] : memref<8x8xi32, #tpu.memory_space<smem>>
    %276 = arith.index_cast %275 : i32 to index
    %c0_164 = arith.constant 0 : index
    %277 = vector.load %arg3[%276, %c0_164] : memref<118x32xf32, #tpu.memory_space<vmem>>, vector<1x32xf32>
    %c102 = arith.constant 102 : index
    %c0_165 = arith.constant 0 : index
    %278 = vector.load %arg12[%c102, %c0_165] : memref<128x32xf32, #tpu.memory_space<vmem>>, vector<1x32xf32>
    tpu.vector_store %arg12[%c102, %c0_165], %277 {strides = array<i32>} : memref<128x32xf32, #tpu.memory_space<vmem>>, vector<1x32xf32>,
    %279 = arith.index_cast %263 : i32 to index
    %c3_166 = arith.constant 3 : index
    %280 = memref.load %arg1[%279, %c3_166] : memref<8x8xi32, #tpu.memory_space<smem>>
    %281 = arith.index_cast %280 : i32 to index
    %c0_167 = arith.constant 0 : index
    %282 = vector.load %arg3[%281, %c0_167] : memref<118x32xf32, #tpu.memory_space<vmem>>, vector<1x32xf32>
    %c103 = arith.constant 103 : index
    %c0_168 = arith.constant 0 : index
    %283 = vector.load %arg12[%c103, %c0_168] : memref<128x32xf32, #tpu.memory_space<vmem>>, vector<1x32xf32>
    tpu.vector_store %arg12[%c103, %c0_168], %282 {strides = array<i32>} : memref<128x32xf32, #tpu.memory_space<vmem>>, vector<1x32xf32>,
    %284 = arith.index_cast %263 : i32 to index
    %c4_169 = arith.constant 4 : index
    %285 = memref.load %arg1[%284, %c4_169] : memref<8x8xi32, #tpu.memory_space<smem>>
    %286 = arith.index_cast %285 : i32 to index
    %c0_170 = arith.constant 0 : index
    %287 = vector.load %arg3[%286, %c0_170] : memref<118x32xf32, #tpu.memory_space<vmem>>, vector<1x32xf32>
    %c104 = arith.constant 104 : index
    %c0_171 = arith.constant 0 : index
    %288 = vector.load %arg12[%c104, %c0_171] : memref<128x32xf32, #tpu.memory_space<vmem>>, vector<1x32xf32>
    tpu.vector_store %arg12[%c104, %c0_171], %287 {strides = array<i32>} : memref<128x32xf32, #tpu.memory_space<vmem>>, vector<1x32xf32>,
    %289 = arith.index_cast %263 : i32 to index
    %c5_172 = arith.constant 5 : index
    %290 = memref.load %arg1[%289, %c5_172] : memref<8x8xi32, #tpu.memory_space<smem>>
    %291 = arith.index_cast %290 : i32 to index
    %c0_173 = arith.constant 0 : index
    %292 = vector.load %arg3[%291, %c0_173] : memref<118x32xf32, #tpu.memory_space<vmem>>, vector<1x32xf32>
    %c105 = arith.constant 105 : index
    %c0_174 = arith.constant 0 : index
    %293 = vector.load %arg12[%c105, %c0_174] : memref<128x32xf32, #tpu.memory_space<vmem>>, vector<1x32xf32>
    tpu.vector_store %arg12[%c105, %c0_174], %292 {strides = array<i32>} : memref<128x32xf32, #tpu.memory_space<vmem>>, vector<1x32xf32>,
    %294 = arith.index_cast %263 : i32 to index
    %c6_175 = arith.constant 6 : index
    %295 = memref.load %arg1[%294, %c6_175] : memref<8x8xi32, #tpu.memory_space<smem>>
    %296 = arith.index_cast %295 : i32 to index
    %c0_176 = arith.constant 0 : index
    %297 = vector.load %arg3[%296, %c0_176] : memref<118x32xf32, #tpu.memory_space<vmem>>, vector<1x32xf32>
    %c106 = arith.constant 106 : index
    %c0_177 = arith.constant 0 : index
    %298 = vector.load %arg12[%c106, %c0_177] : memref<128x32xf32, #tpu.memory_space<vmem>>, vector<1x32xf32>
    tpu.vector_store %arg12[%c106, %c0_177], %297 {strides = array<i32>} : memref<128x32xf32, #tpu.memory_space<vmem>>, vector<1x32xf32>,
    %299 = arith.index_cast %263 : i32 to index
    %c7_178 = arith.constant 7 : index
    %300 = memref.load %arg1[%299, %c7_178] : memref<8x8xi32, #tpu.memory_space<smem>>
    %301 = arith.index_cast %300 : i32 to index
    %c0_179 = arith.constant 0 : index
    %302 = vector.load %arg3[%301, %c0_179] : memref<118x32xf32, #tpu.memory_space<vmem>>, vector<1x32xf32>
    %c107 = arith.constant 107 : index
    %c0_180 = arith.constant 0 : index
    %303 = vector.load %arg12[%c107, %c0_180] : memref<128x32xf32, #tpu.memory_space<vmem>>, vector<1x32xf32>
    tpu.vector_store %arg12[%c107, %c0_180], %302 {strides = array<i32>} : memref<128x32xf32, #tpu.memory_space<vmem>>, vector<1x32xf32>,
    %c112 = arith.constant 112 : index
    %c0_181 = arith.constant 0 : index
    %304 = vector.load %arg12[%c112, %c0_181] : memref<128x32xf32, #tpu.memory_space<vmem>>, vector<4x32xf32>
    tpu.vector_store %arg12[%c112, %c0_181], %2 {strides = array<i32>} : memref<128x32xf32, #tpu.memory_space<vmem>>, vector<4x32xf32>,
    %c8_i32_182 = arith.constant 8 : i32
    %305 = arith.muli %arg0, %c8_i32_182 : i32
    %c7_i32 = arith.constant 7 : i32
    %306 = arith.addi %305, %c7_i32 : i32
    %307 = arith.index_cast %306 : i32 to index
    %c0_183 = arith.constant 0 : index
    %308 = memref.load %arg1[%307, %c0_183] : memref<8x8xi32, #tpu.memory_space<smem>>
    %309 = arith.index_cast %308 : i32 to index
    %c0_184 = arith.constant 0 : index
    %310 = vector.load %arg3[%309, %c0_184] : memref<118x32xf32, #tpu.memory_space<vmem>>, vector<1x32xf32>
    %c116 = arith.constant 116 : index
    %c0_185 = arith.constant 0 : index
    %311 = vector.load %arg12[%c116, %c0_185] : memref<128x32xf32, #tpu.memory_space<vmem>>, vector<1x32xf32>
    tpu.vector_store %arg12[%c116, %c0_185], %310 {strides = array<i32>} : memref<128x32xf32, #tpu.memory_space<vmem>>, vector<1x32xf32>,
    %312 = arith.index_cast %306 : i32 to index
    %c1_186 = arith.constant 1 : index
    %313 = memref.load %arg1[%312, %c1_186] : memref<8x8xi32, #tpu.memory_space<smem>>
    %314 = arith.index_cast %313 : i32 to index
    %c0_187 = arith.constant 0 : index
    %315 = vector.load %arg3[%314, %c0_187] : memref<118x32xf32, #tpu.memory_space<vmem>>, vector<1x32xf32>
    %c117 = arith.constant 117 : index
    %c0_188 = arith.constant 0 : index
    %316 = vector.load %arg12[%c117, %c0_188] : memref<128x32xf32, #tpu.memory_space<vmem>>, vector<1x32xf32>
    tpu.vector_store %arg12[%c117, %c0_188], %315 {strides = array<i32>} : memref<128x32xf32, #tpu.memory_space<vmem>>, vector<1x32xf32>,
    %317 = arith.index_cast %306 : i32 to index
    %c2_189 = arith.constant 2 : index
    %318 = memref.load %arg1[%317, %c2_189] : memref<8x8xi32, #tpu.memory_space<smem>>
    %319 = arith.index_cast %318 : i32 to index
    %c0_190 = arith.constant 0 : index
    %320 = vector.load %arg3[%319, %c0_190] : memref<118x32xf32, #tpu.memory_space<vmem>>, vector<1x32xf32>
    %c118 = arith.constant 118 : index
    %c0_191 = arith.constant 0 : index
    %321 = vector.load %arg12[%c118, %c0_191] : memref<128x32xf32, #tpu.memory_space<vmem>>, vector<1x32xf32>
    tpu.vector_store %arg12[%c118, %c0_191], %320 {strides = array<i32>} : memref<128x32xf32, #tpu.memory_space<vmem>>, vector<1x32xf32>,
    %322 = arith.index_cast %306 : i32 to index
    %c3_192 = arith.constant 3 : index
    %323 = memref.load %arg1[%322, %c3_192] : memref<8x8xi32, #tpu.memory_space<smem>>
    %324 = arith.index_cast %323 : i32 to index
    %c0_193 = arith.constant 0 : index
    %325 = vector.load %arg3[%324, %c0_193] : memref<118x32xf32, #tpu.memory_space<vmem>>, vector<1x32xf32>
    %c119 = arith.constant 119 : index
    %c0_194 = arith.constant 0 : index
    %326 = vector.load %arg12[%c119, %c0_194] : memref<128x32xf32, #tpu.memory_space<vmem>>, vector<1x32xf32>
    tpu.vector_store %arg12[%c119, %c0_194], %325 {strides = array<i32>} : memref<128x32xf32, #tpu.memory_space<vmem>>, vector<1x32xf32>,
    %327 = arith.index_cast %306 : i32 to index
    %c4_195 = arith.constant 4 : index
    %328 = memref.load %arg1[%327, %c4_195] : memref<8x8xi32, #tpu.memory_space<smem>>
    %329 = arith.index_cast %328 : i32 to index
    %c0_196 = arith.constant 0 : index
    %330 = vector.load %arg3[%329, %c0_196] : memref<118x32xf32, #tpu.memory_space<vmem>>, vector<1x32xf32>
    %c120 = arith.constant 120 : index
    %c0_197 = arith.constant 0 : index
    %331 = vector.load %arg12[%c120, %c0_197] : memref<128x32xf32, #tpu.memory_space<vmem>>, vector<1x32xf32>
    tpu.vector_store %arg12[%c120, %c0_197], %330 {strides = array<i32>} : memref<128x32xf32, #tpu.memory_space<vmem>>, vector<1x32xf32>,
    %332 = arith.index_cast %306 : i32 to index
    %c5_198 = arith.constant 5 : index
    %333 = memref.load %arg1[%332, %c5_198] : memref<8x8xi32, #tpu.memory_space<smem>>
    %334 = arith.index_cast %333 : i32 to index
    %c0_199 = arith.constant 0 : index
    %335 = vector.load %arg3[%334, %c0_199] : memref<118x32xf32, #tpu.memory_space<vmem>>, vector<1x32xf32>
    %c121 = arith.constant 121 : index
    %c0_200 = arith.constant 0 : index
    %336 = vector.load %arg12[%c121, %c0_200] : memref<128x32xf32, #tpu.memory_space<vmem>>, vector<1x32xf32>
    tpu.vector_store %arg12[%c121, %c0_200], %335 {strides = array<i32>} : memref<128x32xf32, #tpu.memory_space<vmem>>, vector<1x32xf32>,
    %337 = arith.index_cast %306 : i32 to index
    %c6_201 = arith.constant 6 : index
    %338 = memref.load %arg1[%337, %c6_201] : memref<8x8xi32, #tpu.memory_space<smem>>
    %339 = arith.index_cast %338 : i32 to index
    %c0_202 = arith.constant 0 : index
    %340 = vector.load %arg3[%339, %c0_202] : memref<118x32xf32, #tpu.memory_space<vmem>>, vector<1x32xf32>
    %c122 = arith.constant 122 : index
    %c0_203 = arith.constant 0 : index
    %341 = vector.load %arg12[%c122, %c0_203] : memref<128x32xf32, #tpu.memory_space<vmem>>, vector<1x32xf32>
    tpu.vector_store %arg12[%c122, %c0_203], %340 {strides = array<i32>} : memref<128x32xf32, #tpu.memory_space<vmem>>, vector<1x32xf32>,
    %342 = arith.index_cast %306 : i32 to index
    %c7_204 = arith.constant 7 : index
    %343 = memref.load %arg1[%342, %c7_204] : memref<8x8xi32, #tpu.memory_space<smem>>
    %344 = arith.index_cast %343 : i32 to index
    %c0_205 = arith.constant 0 : index
    %345 = vector.load %arg3[%344, %c0_205] : memref<118x32xf32, #tpu.memory_space<vmem>>, vector<1x32xf32>
    %c123 = arith.constant 123 : index
    %c0_206 = arith.constant 0 : index
    %346 = vector.load %arg12[%c123, %c0_206] : memref<128x32xf32, #tpu.memory_space<vmem>>, vector<1x32xf32>
    tpu.vector_store %arg12[%c123, %c0_206], %345 {strides = array<i32>} : memref<128x32xf32, #tpu.memory_space<vmem>>, vector<1x32xf32>,
    %c54_207 = arith.constant 54 : index
    %c0_208 = arith.constant 0 : index
    %347 = vector.load %arg3[%c54_207, %c0_208] : memref<118x32xf32, #tpu.memory_space<vmem>>, vector<16x32xf32>
    %c0_209 = arith.constant 0 : index
    %c0_210 = arith.constant 0 : index
    %348 = vector.load %arg12[%c0_209, %c0_210] : memref<128x32xf32, #tpu.memory_space<vmem>>, vector<128x32xf32>
    %349 = tpu.concatenate %347, %347, %347, %347, %347, %347, %347, %347 in 0 : vector<16x32xf32>, vector<16x32xf32>, vector<16x32xf32>, vector<16x32xf32>, vector<16x32xf32>, vector<16x32xf32>, vector<16x32xf32>, vector<16x32xf32> -> vector<128x32xf32>
    %350 = arith.addf %348, %349 : vector<128x32xf32>
    %c0_211 = arith.constant 0 : index
    %c0_212 = arith.constant 0 : index
    %351 = vector.load %arg9[%c0_211, %c0_212] : memref<14x32xf32, #tpu.memory_space<vmem>>, vector<1x32xf32>
    %c1_213 = arith.constant 1 : index
    %c0_214 = arith.constant 0 : index
    %352 = vector.load %arg9[%c1_213, %c0_214] : memref<14x32xf32, #tpu.memory_space<vmem>>, vector<1x32xf32>
    %cst_215 = arith.constant dense<0.000000e+00> : vector<128xf32>
    %353 = vector.multi_reduction <add>, %350, %cst_215 [1] : vector<128x32xf32> to vector<128xf32>
    %354 = vector.shape_cast %353 : vector<128xf32> to vector<128x1xf32>
    %cst_216 = arith.constant 3.200000e+01 : f32
    %355 = vector.broadcast %cst_216 : f32 to vector<128x1xf32>
    %356 = arith.divf %354, %355 : vector<128x1xf32>
    %357 = vector.broadcast %356 : vector<128x1xf32> to vector<128x32xf32>
    %358 = arith.subf %350, %357 : vector<128x32xf32>
    %359 = arith.mulf %358, %358 : vector<128x32xf32>
    %cst_217 = arith.constant dense<0.000000e+00> : vector<128xf32>
    %360 = vector.multi_reduction <add>, %359, %cst_217 [1] : vector<128x32xf32> to vector<128xf32>
    %361 = vector.shape_cast %360 : vector<128xf32> to vector<128x1xf32>
    %cst_218 = arith.constant 3.200000e+01 : f32
    %362 = vector.broadcast %cst_218 : f32 to vector<128x1xf32>
    %363 = arith.divf %361, %362 : vector<128x1xf32>
    %cst_219 = arith.constant 9.99999996E-13 : f32
    %364 = vector.broadcast %cst_219 : f32 to vector<128x1xf32>
    %365 = arith.addf %363, %364 : vector<128x1xf32>
    %366 = math.rsqrt %365 : vector<128x1xf32>
    %367 = vector.broadcast %366 : vector<128x1xf32> to vector<128x32xf32>
    %368 = arith.mulf %358, %367 : vector<128x32xf32>
    %369 = vector.broadcast %351 : vector<1x32xf32> to vector<128x32xf32>
    %370 = arith.mulf %368, %369 : vector<128x32xf32>
    %371 = vector.broadcast %352 : vector<1x32xf32> to vector<128x32xf32>
    %372 = arith.addf %370, %371 : vector<128x32xf32>
    %c0_220 = arith.constant 0 : index
    %c0_221 = arith.constant 0 : index
    %c0_222 = arith.constant 0 : index
    %373 = vector.load %arg2[%c0_220, %c0_221, %c0_222] : memref<1x8x8xf32, #tpu.memory_space<vmem>>, vector<1x8x8xf32>
    %374 = vector.shape_cast %373 : vector<1x8x8xf32> to vector<8x8xf32>
    %cst_223 = arith.constant 0.000000e+00 : f32
    %375 = vector.broadcast %cst_223 : f32 to vector<8x4xf32>
    %cst_224 = arith.constant 0.000000e+00 : f32
    %376 = vector.broadcast %cst_224 : f32 to vector<8x8xf32>
    %377 = arith.cmpf ogt, %374, %376 : vector<8x8xf32>
    %cst_225 = arith.constant 0.000000e+00 : f32
    %cst_226 = arith.constant -1.000000e+09 : f32
    %378 = vector.broadcast %cst_225 : f32 to vector<8x8xf32>
    %379 = vector.broadcast %cst_226 : f32 to vector<8x8xf32>
    %380 = arith.select %377, %378, %379 : vector<8x8xi1>, vector<8x8xf32>
    %cst_227 = arith.constant -1.000000e+09 : f32
    %381 = vector.broadcast %cst_227 : f32 to vector<8x4xf32>
    %382 = tpu.concatenate %375, %380, %381 in 1 : vector<8x4xf32>, vector<8x8xf32>, vector<8x4xf32> -> vector<8x16xf32>
    %383 = arith.truncf %372 : vector<128x32xf32> to vector<128x32xbf16>
    %c0_228 = arith.constant 0 : index
    %c0_229 = arith.constant 0 : index
    %c0_230 = arith.constant 0 : index
    %384 = vector.load %arg4[%c0_228, %c0_229, %c0_230] : memref<2x32x96xbf16, #tpu.memory_space<vmem>>, vector<1x32x96xbf16>
    %385 = vector.shape_cast %384 : vector<1x32x96xbf16> to vector<32x96xbf16>
    %cst_231 = arith.constant dense<0.000000e+00> : vector<128x96xf32>
    %386 = tpu.matmul %383, %385, %cst_231 {dimension_numbers = #tpu.dot_dimension_numbers<[1], [0], [0], [1], [0, 0, 1, 1], [], []>} : vector<128x32xbf16>, vector<32x96xbf16>, vector<128x96xf32> -> vector<128x96xf32>
    %c0_232 = arith.constant 0 : index
    %c0_233 = arith.constant 0 : index
    %387 = vector.load %arg10[%c0_232, %c0_233] : memref<5x128xf32, #tpu.memory_space<vmem>>, vector<1x96xf32>
    %388 = vector.broadcast %387 : vector<1x96xf32> to vector<128x96xf32>
    %389 = arith.addf %386, %388 : vector<128x96xf32>
    %cst_234 = arith.constant 0.000000e+00 : f32
    %390 = vector.broadcast %cst_234 : f32 to vector<128x32xf32>
    %391 = vector.extract_strided_slice %389 {offsets = [0, 0], sizes = [128, 16], strides = [1, 1]} : vector<128x96xf32> to vector<128x16xf32>
    %cst_235 = arith.constant 2.500000e-01 : f32
    %392 = vector.broadcast %cst_235 : f32 to vector<128x16xf32>
    %393 = arith.mulf %391, %392 : vector<128x16xf32>
    %394 = vector.extract_strided_slice %389 {offsets = [0, 32], sizes = [128, 16], strides = [1, 1]} : vector<128x96xf32> to vector<128x16xf32>
    %395 = vector.extract_strided_slice %389 {offsets = [0, 64], sizes = [128, 16], strides = [1, 1]} : vector<128x96xf32> to vector<128x16xf32>
    %396 = vector.extract_strided_slice %393 {offsets = [0, 0], sizes = [16, 16], strides = [1, 1]} : vector<128x16xf32> to vector<16x16xf32>
    %397 = vector.extract_strided_slice %394 {offsets = [0, 0], sizes = [16, 16], strides = [1, 1]} : vector<128x16xf32> to vector<16x16xf32>
    %cst_236 = arith.constant dense<0.000000e+00> : vector<16x16xf32>
    %398 = tpu.matmul %396, %397, %cst_236 {dimension_numbers = #tpu.dot_dimension_numbers<[1], [1], [0], [0], [0, 0, 1, 0], [], []>} : vector<16x16xf32>, vector<16x16xf32>, vector<16x16xf32> -> vector<16x16xf32>
    %399 = vector.extract_strided_slice %382 {offsets = [0, 0], sizes = [1, 16], strides = [1, 1]} : vector<8x16xf32> to vector<1x16xf32>
    %400 = vector.broadcast %399 : vector<1x16xf32> to vector<16x16xf32>
    %401 = arith.addf %398, %400 : vector<16x16xf32>
    %cst_237 = arith.constant dense<0xFF800000> : vector<16xf32>
    %402 = vector.multi_reduction <maximumf>, %401, %cst_237 [1] : vector<16x16xf32> to vector<16xf32>
    %403 = vector.shape_cast %402 : vector<16xf32> to vector<16x1xf32>
    %404 = vector.broadcast %403 : vector<16x1xf32> to vector<16x16xf32>
    %405 = arith.subf %401, %404 : vector<16x16xf32>
    %406 = math.exp %405 : vector<16x16xf32>
    %cst_238 = arith.constant dense<0.000000e+00> : vector<16xf32>
    %407 = vector.multi_reduction <add>, %406, %cst_238 [1] : vector<16x16xf32> to vector<16xf32>
    %408 = vector.shape_cast %407 : vector<16xf32> to vector<16x1xf32>
    %409 = tpu.reciprocal %408 {approx = true} : vector<16x1xf32> -> vector<16x1xf32>
    %410 = vector.broadcast %409 : vector<16x1xf32> to vector<16x16xf32>
    %411 = arith.mulf %406, %410 : vector<16x16xf32>
    %412 = vector.extract_strided_slice %395 {offsets = [0, 0], sizes = [16, 16], strides = [1, 1]} : vector<128x16xf32> to vector<16x16xf32>
    %cst_239 = arith.constant dense<0.000000e+00> : vector<16x16xf32>
    %413 = tpu.matmul %411, %412, %cst_239 {dimension_numbers = #tpu.dot_dimension_numbers<[1], [0], [0], [1], [0, 0, 1, 1], [], []>} : vector<16x16xf32>, vector<16x16xf32>, vector<16x16xf32> -> vector<16x16xf32>
    %414 = vector.extract_strided_slice %393 {offsets = [16, 0], sizes = [16, 16], strides = [1, 1]} : vector<128x16xf32> to vector<16x16xf32>
    %415 = vector.extract_strided_slice %394 {offsets = [16, 0], sizes = [16, 16], strides = [1, 1]} : vector<128x16xf32> to vector<16x16xf32>
    %cst_240 = arith.constant dense<0.000000e+00> : vector<16x16xf32>
    %416 = tpu.matmul %414, %415, %cst_240 {dimension_numbers = #tpu.dot_dimension_numbers<[1], [1], [0], [0], [0, 0, 1, 0], [], []>} : vector<16x16xf32>, vector<16x16xf32>, vector<16x16xf32> -> vector<16x16xf32>
    %417 = vector.extract_strided_slice %382 {offsets = [1, 0], sizes = [1, 16], strides = [1, 1]} : vector<8x16xf32> to vector<1x16xf32>
    %418 = vector.broadcast %417 : vector<1x16xf32> to vector<16x16xf32>
    %419 = arith.addf %416, %418 : vector<16x16xf32>
    %cst_241 = arith.constant dense<0xFF800000> : vector<16xf32>
    %420 = vector.multi_reduction <maximumf>, %419, %cst_241 [1] : vector<16x16xf32> to vector<16xf32>
    %421 = vector.shape_cast %420 : vector<16xf32> to vector<16x1xf32>
    %422 = vector.broadcast %421 : vector<16x1xf32> to vector<16x16xf32>
    %423 = arith.subf %419, %422 : vector<16x16xf32>
    %424 = math.exp %423 : vector<16x16xf32>
    %cst_242 = arith.constant dense<0.000000e+00> : vector<16xf32>
    %425 = vector.multi_reduction <add>, %424, %cst_242 [1] : vector<16x16xf32> to vector<16xf32>
    %426 = vector.shape_cast %425 : vector<16xf32> to vector<16x1xf32>
    %427 = tpu.reciprocal %426 {approx = true} : vector<16x1xf32> -> vector<16x1xf32>
    %428 = vector.broadcast %427 : vector<16x1xf32> to vector<16x16xf32>
    %429 = arith.mulf %424, %428 : vector<16x16xf32>
    %430 = vector.extract_strided_slice %395 {offsets = [16, 0], sizes = [16, 16], strides = [1, 1]} : vector<128x16xf32> to vector<16x16xf32>
    %cst_243 = arith.constant dense<0.000000e+00> : vector<16x16xf32>
    %431 = tpu.matmul %429, %430, %cst_243 {dimension_numbers = #tpu.dot_dimension_numbers<[1], [0], [0], [1], [0, 0, 1, 1], [], []>} : vector<16x16xf32>, vector<16x16xf32>, vector<16x16xf32> -> vector<16x16xf32>
    %432 = vector.extract_strided_slice %393 {offsets = [32, 0], sizes = [16, 16], strides = [1, 1]} : vector<128x16xf32> to vector<16x16xf32>
    %433 = vector.extract_strided_slice %394 {offsets = [32, 0], sizes = [16, 16], strides = [1, 1]} : vector<128x16xf32> to vector<16x16xf32>
    %cst_244 = arith.constant dense<0.000000e+00> : vector<16x16xf32>
    %434 = tpu.matmul %432, %433, %cst_244 {dimension_numbers = #tpu.dot_dimension_numbers<[1], [1], [0], [0], [0, 0, 1, 0], [], []>} : vector<16x16xf32>, vector<16x16xf32>, vector<16x16xf32> -> vector<16x16xf32>
    %435 = vector.extract_strided_slice %382 {offsets = [2, 0], sizes = [1, 16], strides = [1, 1]} : vector<8x16xf32> to vector<1x16xf32>
    %436 = vector.broadcast %435 : vector<1x16xf32> to vector<16x16xf32>
    %437 = arith.addf %434, %436 : vector<16x16xf32>
    %cst_245 = arith.constant dense<0xFF800000> : vector<16xf32>
    %438 = vector.multi_reduction <maximumf>, %437, %cst_245 [1] : vector<16x16xf32> to vector<16xf32>
    %439 = vector.shape_cast %438 : vector<16xf32> to vector<16x1xf32>
    %440 = vector.broadcast %439 : vector<16x1xf32> to vector<16x16xf32>
    %441 = arith.subf %437, %440 : vector<16x16xf32>
    %442 = math.exp %441 : vector<16x16xf32>
    %cst_246 = arith.constant dense<0.000000e+00> : vector<16xf32>
    %443 = vector.multi_reduction <add>, %442, %cst_246 [1] : vector<16x16xf32> to vector<16xf32>
    %444 = vector.shape_cast %443 : vector<16xf32> to vector<16x1xf32>
    %445 = tpu.reciprocal %444 {approx = true} : vector<16x1xf32> -> vector<16x1xf32>
    %446 = vector.broadcast %445 : vector<16x1xf32> to vector<16x16xf32>
    %447 = arith.mulf %442, %446 : vector<16x16xf32>
    %448 = vector.extract_strided_slice %395 {offsets = [32, 0], sizes = [16, 16], strides = [1, 1]} : vector<128x16xf32> to vector<16x16xf32>
    %cst_247 = arith.constant dense<0.000000e+00> : vector<16x16xf32>
    %449 = tpu.matmul %447, %448, %cst_247 {dimension_numbers = #tpu.dot_dimension_numbers<[1], [0], [0], [1], [0, 0, 1, 1], [], []>} : vector<16x16xf32>, vector<16x16xf32>, vector<16x16xf32> -> vector<16x16xf32>
    %450 = vector.extract_strided_slice %393 {offsets = [48, 0], sizes = [16, 16], strides = [1, 1]} : vector<128x16xf32> to vector<16x16xf32>
    %451 = vector.extract_strided_slice %394 {offsets = [48, 0], sizes = [16, 16], strides = [1, 1]} : vector<128x16xf32> to vector<16x16xf32>
    %cst_248 = arith.constant dense<0.000000e+00> : vector<16x16xf32>
    %452 = tpu.matmul %450, %451, %cst_248 {dimension_numbers = #tpu.dot_dimension_numbers<[1], [1], [0], [0], [0, 0, 1, 0], [], []>} : vector<16x16xf32>, vector<16x16xf32>, vector<16x16xf32> -> vector<16x16xf32>
    %453 = vector.extract_strided_slice %382 {offsets = [3, 0], sizes = [1, 16], strides = [1, 1]} : vector<8x16xf32> to vector<1x16xf32>
    %454 = vector.broadcast %453 : vector<1x16xf32> to vector<16x16xf32>
    %455 = arith.addf %452, %454 : vector<16x16xf32>
    %cst_249 = arith.constant dense<0xFF800000> : vector<16xf32>
    %456 = vector.multi_reduction <maximumf>, %455, %cst_249 [1] : vector<16x16xf32> to vector<16xf32>
    %457 = vector.shape_cast %456 : vector<16xf32> to vector<16x1xf32>
    %458 = vector.broadcast %457 : vector<16x1xf32> to vector<16x16xf32>
    %459 = arith.subf %455, %458 : vector<16x16xf32>
    %460 = math.exp %459 : vector<16x16xf32>
    %cst_250 = arith.constant dense<0.000000e+00> : vector<16xf32>
    %461 = vector.multi_reduction <add>, %460, %cst_250 [1] : vector<16x16xf32> to vector<16xf32>
    %462 = vector.shape_cast %461 : vector<16xf32> to vector<16x1xf32>
    %463 = tpu.reciprocal %462 {approx = true} : vector<16x1xf32> -> vector<16x1xf32>
    %464 = vector.broadcast %463 : vector<16x1xf32> to vector<16x16xf32>
    %465 = arith.mulf %460, %464 : vector<16x16xf32>
    %466 = vector.extract_strided_slice %395 {offsets = [48, 0], sizes = [16, 16], strides = [1, 1]} : vector<128x16xf32> to vector<16x16xf32>
    %cst_251 = arith.constant dense<0.000000e+00> : vector<16x16xf32>
    %467 = tpu.matmul %465, %466, %cst_251 {dimension_numbers = #tpu.dot_dimension_numbers<[1], [0], [0], [1], [0, 0, 1, 1], [], []>} : vector<16x16xf32>, vector<16x16xf32>, vector<16x16xf32> -> vector<16x16xf32>
    %468 = vector.extract_strided_slice %393 {offsets = [64, 0], sizes = [16, 16], strides = [1, 1]} : vector<128x16xf32> to vector<16x16xf32>
    %469 = vector.extract_strided_slice %394 {offsets = [64, 0], sizes = [16, 16], strides = [1, 1]} : vector<128x16xf32> to vector<16x16xf32>
    %cst_252 = arith.constant dense<0.000000e+00> : vector<16x16xf32>
    %470 = tpu.matmul %468, %469, %cst_252 {dimension_numbers = #tpu.dot_dimension_numbers<[1], [1], [0], [0], [0, 0, 1, 0], [], []>} : vector<16x16xf32>, vector<16x16xf32>, vector<16x16xf32> -> vector<16x16xf32>
    %471 = vector.extract_strided_slice %382 {offsets = [4, 0], sizes = [1, 16], strides = [1, 1]} : vector<8x16xf32> to vector<1x16xf32>
    %472 = vector.broadcast %471 : vector<1x16xf32> to vector<16x16xf32>
    %473 = arith.addf %470, %472 : vector<16x16xf32>
    %cst_253 = arith.constant dense<0xFF800000> : vector<16xf32>
    %474 = vector.multi_reduction <maximumf>, %473, %cst_253 [1] : vector<16x16xf32> to vector<16xf32>
    %475 = vector.shape_cast %474 : vector<16xf32> to vector<16x1xf32>
    %476 = vector.broadcast %475 : vector<16x1xf32> to vector<16x16xf32>
    %477 = arith.subf %473, %476 : vector<16x16xf32>
    %478 = math.exp %477 : vector<16x16xf32>
    %cst_254 = arith.constant dense<0.000000e+00> : vector<16xf32>
    %479 = vector.multi_reduction <add>, %478, %cst_254 [1] : vector<16x16xf32> to vector<16xf32>
    %480 = vector.shape_cast %479 : vector<16xf32> to vector<16x1xf32>
    %481 = tpu.reciprocal %480 {approx = true} : vector<16x1xf32> -> vector<16x1xf32>
    %482 = vector.broadcast %481 : vector<16x1xf32> to vector<16x16xf32>
    %483 = arith.mulf %478, %482 : vector<16x16xf32>
    %484 = vector.extract_strided_slice %395 {offsets = [64, 0], sizes = [16, 16], strides = [1, 1]} : vector<128x16xf32> to vector<16x16xf32>
    %cst_255 = arith.constant dense<0.000000e+00> : vector<16x16xf32>
    %485 = tpu.matmul %483, %484, %cst_255 {dimension_numbers = #tpu.dot_dimension_numbers<[1], [0], [0], [1], [0, 0, 1, 1], [], []>} : vector<16x16xf32>, vector<16x16xf32>, vector<16x16xf32> -> vector<16x16xf32>
    %486 = vector.extract_strided_slice %393 {offsets = [80, 0], sizes = [16, 16], strides = [1, 1]} : vector<128x16xf32> to vector<16x16xf32>
    %487 = vector.extract_strided_slice %394 {offsets = [80, 0], sizes = [16, 16], strides = [1, 1]} : vector<128x16xf32> to vector<16x16xf32>
    %cst_256 = arith.constant dense<0.000000e+00> : vector<16x16xf32>
    %488 = tpu.matmul %486, %487, %cst_256 {dimension_numbers = #tpu.dot_dimension_numbers<[1], [1], [0], [0], [0, 0, 1, 0], [], []>} : vector<16x16xf32>, vector<16x16xf32>, vector<16x16xf32> -> vector<16x16xf32>
    %489 = vector.extract_strided_slice %382 {offsets = [5, 0], sizes = [1, 16], strides = [1, 1]} : vector<8x16xf32> to vector<1x16xf32>
    %490 = vector.broadcast %489 : vector<1x16xf32> to vector<16x16xf32>
    %491 = arith.addf %488, %490 : vector<16x16xf32>
    %cst_257 = arith.constant dense<0xFF800000> : vector<16xf32>
    %492 = vector.multi_reduction <maximumf>, %491, %cst_257 [1] : vector<16x16xf32> to vector<16xf32>
    %493 = vector.shape_cast %492 : vector<16xf32> to vector<16x1xf32>
    %494 = vector.broadcast %493 : vector<16x1xf32> to vector<16x16xf32>
    %495 = arith.subf %491, %494 : vector<16x16xf32>
    %496 = math.exp %495 : vector<16x16xf32>
    %cst_258 = arith.constant dense<0.000000e+00> : vector<16xf32>
    %497 = vector.multi_reduction <add>, %496, %cst_258 [1] : vector<16x16xf32> to vector<16xf32>
    %498 = vector.shape_cast %497 : vector<16xf32> to vector<16x1xf32>
    %499 = tpu.reciprocal %498 {approx = true} : vector<16x1xf32> -> vector<16x1xf32>
    %500 = vector.broadcast %499 : vector<16x1xf32> to vector<16x16xf32>
    %501 = arith.mulf %496, %500 : vector<16x16xf32>
    %502 = vector.extract_strided_slice %395 {offsets = [80, 0], sizes = [16, 16], strides = [1, 1]} : vector<128x16xf32> to vector<16x16xf32>
    %cst_259 = arith.constant dense<0.000000e+00> : vector<16x16xf32>
    %503 = tpu.matmul %501, %502, %cst_259 {dimension_numbers = #tpu.dot_dimension_numbers<[1], [0], [0], [1], [0, 0, 1, 1], [], []>} : vector<16x16xf32>, vector<16x16xf32>, vector<16x16xf32> -> vector<16x16xf32>
    %504 = vector.extract_strided_slice %393 {offsets = [96, 0], sizes = [16, 16], strides = [1, 1]} : vector<128x16xf32> to vector<16x16xf32>
    %505 = vector.extract_strided_slice %394 {offsets = [96, 0], sizes = [16, 16], strides = [1, 1]} : vector<128x16xf32> to vector<16x16xf32>
    %cst_260 = arith.constant dense<0.000000e+00> : vector<16x16xf32>
    %506 = tpu.matmul %504, %505, %cst_260 {dimension_numbers = #tpu.dot_dimension_numbers<[1], [1], [0], [0], [0, 0, 1, 0], [], []>} : vector<16x16xf32>, vector<16x16xf32>, vector<16x16xf32> -> vector<16x16xf32>
    %507 = vector.extract_strided_slice %382 {offsets = [6, 0], sizes = [1, 16], strides = [1, 1]} : vector<8x16xf32> to vector<1x16xf32>
    %508 = vector.broadcast %507 : vector<1x16xf32> to vector<16x16xf32>
    %509 = arith.addf %506, %508 : vector<16x16xf32>
    %cst_261 = arith.constant dense<0xFF800000> : vector<16xf32>
    %510 = vector.multi_reduction <maximumf>, %509, %cst_261 [1] : vector<16x16xf32> to vector<16xf32>
    %511 = vector.shape_cast %510 : vector<16xf32> to vector<16x1xf32>
    %512 = vector.broadcast %511 : vector<16x1xf32> to vector<16x16xf32>
    %513 = arith.subf %509, %512 : vector<16x16xf32>
    %514 = math.exp %513 : vector<16x16xf32>
    %cst_262 = arith.constant dense<0.000000e+00> : vector<16xf32>
    %515 = vector.multi_reduction <add>, %514, %cst_262 [1] : vector<16x16xf32> to vector<16xf32>
    %516 = vector.shape_cast %515 : vector<16xf32> to vector<16x1xf32>
    %517 = tpu.reciprocal %516 {approx = true} : vector<16x1xf32> -> vector<16x1xf32>
    %518 = vector.broadcast %517 : vector<16x1xf32> to vector<16x16xf32>
    %519 = arith.mulf %514, %518 : vector<16x16xf32>
    %520 = vector.extract_strided_slice %395 {offsets = [96, 0], sizes = [16, 16], strides = [1, 1]} : vector<128x16xf32> to vector<16x16xf32>
    %cst_263 = arith.constant dense<0.000000e+00> : vector<16x16xf32>
    %521 = tpu.matmul %519, %520, %cst_263 {dimension_numbers = #tpu.dot_dimension_numbers<[1], [0], [0], [1], [0, 0, 1, 1], [], []>} : vector<16x16xf32>, vector<16x16xf32>, vector<16x16xf32> -> vector<16x16xf32>
    %522 = vector.extract_strided_slice %393 {offsets = [112, 0], sizes = [16, 16], strides = [1, 1]} : vector<128x16xf32> to vector<16x16xf32>
    %523 = vector.extract_strided_slice %394 {offsets = [112, 0], sizes = [16, 16], strides = [1, 1]} : vector<128x16xf32> to vector<16x16xf32>
    %cst_264 = arith.constant dense<0.000000e+00> : vector<16x16xf32>
    %524 = tpu.matmul %522, %523, %cst_264 {dimension_numbers = #tpu.dot_dimension_numbers<[1], [1], [0], [0], [0, 0, 1, 0], [], []>} : vector<16x16xf32>, vector<16x16xf32>, vector<16x16xf32> -> vector<16x16xf32>
    %525 = vector.extract_strided_slice %382 {offsets = [7, 0], sizes = [1, 16], strides = [1, 1]} : vector<8x16xf32> to vector<1x16xf32>
    %526 = vector.broadcast %525 : vector<1x16xf32> to vector<16x16xf32>
    %527 = arith.addf %524, %526 : vector<16x16xf32>
    %cst_265 = arith.constant dense<0xFF800000> : vector<16xf32>
    %528 = vector.multi_reduction <maximumf>, %527, %cst_265 [1] : vector<16x16xf32> to vector<16xf32>
    %529 = vector.shape_cast %528 : vector<16xf32> to vector<16x1xf32>
    %530 = vector.broadcast %529 : vector<16x1xf32> to vector<16x16xf32>
    %531 = arith.subf %527, %530 : vector<16x16xf32>
    %532 = math.exp %531 : vector<16x16xf32>
    %cst_266 = arith.constant dense<0.000000e+00> : vector<16xf32>
    %533 = vector.multi_reduction <add>, %532, %cst_266 [1] : vector<16x16xf32> to vector<16xf32>
    %534 = vector.shape_cast %533 : vector<16xf32> to vector<16x1xf32>
    %535 = tpu.reciprocal %534 {approx = true} : vector<16x1xf32> -> vector<16x1xf32>
    %536 = vector.broadcast %535 : vector<16x1xf32> to vector<16x16xf32>
    %537 = arith.mulf %532, %536 : vector<16x16xf32>
    %538 = vector.extract_strided_slice %395 {offsets = [112, 0], sizes = [16, 16], strides = [1, 1]} : vector<128x16xf32> to vector<16x16xf32>
    %cst_267 = arith.constant dense<0.000000e+00> : vector<16x16xf32>
    %539 = tpu.matmul %537, %538, %cst_267 {dimension_numbers = #tpu.dot_dimension_numbers<[1], [0], [0], [1], [0, 0, 1, 1], [], []>} : vector<16x16xf32>, vector<16x16xf32>, vector<16x16xf32> -> vector<16x16xf32>
    %540 = tpu.concatenate %413, %431, %449, %467, %485, %503, %521, %539 in 0 : vector<16x16xf32>, vector<16x16xf32>, vector<16x16xf32>, vector<16x16xf32>, vector<16x16xf32>, vector<16x16xf32>, vector<16x16xf32>, vector<16x16xf32> -> vector<128x16xf32>
    %541 = arith.truncf %540 : vector<128x16xf32> to vector<128x16xbf16>
    %c0_268 = arith.constant 0 : index
    %c0_269 = arith.constant 0 : index
    %c0_270 = arith.constant 0 : index
    %542 = vector.load %arg5[%c0_268, %c0_269, %c0_270] : memref<2x32x32xbf16, #tpu.memory_space<vmem>>, vector<1x16x32xbf16>
    %543 = vector.shape_cast %542 : vector<1x16x32xbf16> to vector<16x32xbf16>
    %cst_271 = arith.constant dense<0.000000e+00> : vector<128x32xf32>
    %544 = tpu.matmul %541, %543, %cst_271 {dimension_numbers = #tpu.dot_dimension_numbers<[1], [0], [0], [1], [0, 0, 1, 1], [], []>} : vector<128x16xbf16>, vector<16x32xbf16>, vector<128x32xf32> -> vector<128x32xf32>
    %545 = arith.addf %390, %544 : vector<128x32xf32>
    %546 = vector.extract_strided_slice %389 {offsets = [0, 16], sizes = [128, 16], strides = [1, 1]} : vector<128x96xf32> to vector<128x16xf32>
    %cst_272 = arith.constant 2.500000e-01 : f32
    %547 = vector.broadcast %cst_272 : f32 to vector<128x16xf32>
    %548 = arith.mulf %546, %547 : vector<128x16xf32>
    %549 = vector.extract_strided_slice %389 {offsets = [0, 48], sizes = [128, 16], strides = [1, 1]} : vector<128x96xf32> to vector<128x16xf32>
    %550 = vector.extract_strided_slice %389 {offsets = [0, 80], sizes = [128, 16], strides = [1, 1]} : vector<128x96xf32> to vector<128x16xf32>
    %551 = vector.extract_strided_slice %548 {offsets = [0, 0], sizes = [16, 16], strides = [1, 1]} : vector<128x16xf32> to vector<16x16xf32>
    %552 = vector.extract_strided_slice %549 {offsets = [0, 0], sizes = [16, 16], strides = [1, 1]} : vector<128x16xf32> to vector<16x16xf32>
    %cst_273 = arith.constant dense<0.000000e+00> : vector<16x16xf32>
    %553 = tpu.matmul %551, %552, %cst_273 {dimension_numbers = #tpu.dot_dimension_numbers<[1], [1], [0], [0], [0, 0, 1, 0], [], []>} : vector<16x16xf32>, vector<16x16xf32>, vector<16x16xf32> -> vector<16x16xf32>
    %554 = vector.extract_strided_slice %382 {offsets = [0, 0], sizes = [1, 16], strides = [1, 1]} : vector<8x16xf32> to vector<1x16xf32>
    %555 = vector.broadcast %554 : vector<1x16xf32> to vector<16x16xf32>
    %556 = arith.addf %553, %555 : vector<16x16xf32>
    %cst_274 = arith.constant dense<0xFF800000> : vector<16xf32>
    %557 = vector.multi_reduction <maximumf>, %556, %cst_274 [1] : vector<16x16xf32> to vector<16xf32>
    %558 = vector.shape_cast %557 : vector<16xf32> to vector<16x1xf32>
    %559 = vector.broadcast %558 : vector<16x1xf32> to vector<16x16xf32>
    %560 = arith.subf %556, %559 : vector<16x16xf32>
    %561 = math.exp %560 : vector<16x16xf32>
    %cst_275 = arith.constant dense<0.000000e+00> : vector<16xf32>
    %562 = vector.multi_reduction <add>, %561, %cst_275 [1] : vector<16x16xf32> to vector<16xf32>
    %563 = vector.shape_cast %562 : vector<16xf32> to vector<16x1xf32>
    %564 = tpu.reciprocal %563 {approx = true} : vector<16x1xf32> -> vector<16x1xf32>
    %565 = vector.broadcast %564 : vector<16x1xf32> to vector<16x16xf32>
    %566 = arith.mulf %561, %565 : vector<16x16xf32>
    %567 = vector.extract_strided_slice %550 {offsets = [0, 0], sizes = [16, 16], strides = [1, 1]} : vector<128x16xf32> to vector<16x16xf32>
    %cst_276 = arith.constant dense<0.000000e+00> : vector<16x16xf32>
    %568 = tpu.matmul %566, %567, %cst_276 {dimension_numbers = #tpu.dot_dimension_numbers<[1], [0], [0], [1], [0, 0, 1, 1], [], []>} : vector<16x16xf32>, vector<16x16xf32>, vector<16x16xf32> -> vector<16x16xf32>
    %569 = vector.extract_strided_slice %548 {offsets = [16, 0], sizes = [16, 16], strides = [1, 1]} : vector<128x16xf32> to vector<16x16xf32>
    %570 = vector.extract_strided_slice %549 {offsets = [16, 0], sizes = [16, 16], strides = [1, 1]} : vector<128x16xf32> to vector<16x16xf32>
    %cst_277 = arith.constant dense<0.000000e+00> : vector<16x16xf32>
    %571 = tpu.matmul %569, %570, %cst_277 {dimension_numbers = #tpu.dot_dimension_numbers<[1], [1], [0], [0], [0, 0, 1, 0], [], []>} : vector<16x16xf32>, vector<16x16xf32>, vector<16x16xf32> -> vector<16x16xf32>
    %572 = vector.extract_strided_slice %382 {offsets = [1, 0], sizes = [1, 16], strides = [1, 1]} : vector<8x16xf32> to vector<1x16xf32>
    %573 = vector.broadcast %572 : vector<1x16xf32> to vector<16x16xf32>
    %574 = arith.addf %571, %573 : vector<16x16xf32>
    %cst_278 = arith.constant dense<0xFF800000> : vector<16xf32>
    %575 = vector.multi_reduction <maximumf>, %574, %cst_278 [1] : vector<16x16xf32> to vector<16xf32>
    %576 = vector.shape_cast %575 : vector<16xf32> to vector<16x1xf32>
    %577 = vector.broadcast %576 : vector<16x1xf32> to vector<16x16xf32>
    %578 = arith.subf %574, %577 : vector<16x16xf32>
    %579 = math.exp %578 : vector<16x16xf32>
    %cst_279 = arith.constant dense<0.000000e+00> : vector<16xf32>
    %580 = vector.multi_reduction <add>, %579, %cst_279 [1] : vector<16x16xf32> to vector<16xf32>
    %581 = vector.shape_cast %580 : vector<16xf32> to vector<16x1xf32>
    %582 = tpu.reciprocal %581 {approx = true} : vector<16x1xf32> -> vector<16x1xf32>
    %583 = vector.broadcast %582 : vector<16x1xf32> to vector<16x16xf32>
    %584 = arith.mulf %579, %583 : vector<16x16xf32>
    %585 = vector.extract_strided_slice %550 {offsets = [16, 0], sizes = [16, 16], strides = [1, 1]} : vector<128x16xf32> to vector<16x16xf32>
    %cst_280 = arith.constant dense<0.000000e+00> : vector<16x16xf32>
    %586 = tpu.matmul %584, %585, %cst_280 {dimension_numbers = #tpu.dot_dimension_numbers<[1], [0], [0], [1], [0, 0, 1, 1], [], []>} : vector<16x16xf32>, vector<16x16xf32>, vector<16x16xf32> -> vector<16x16xf32>
    %587 = vector.extract_strided_slice %548 {offsets = [32, 0], sizes = [16, 16], strides = [1, 1]} : vector<128x16xf32> to vector<16x16xf32>
    %588 = vector.extract_strided_slice %549 {offsets = [32, 0], sizes = [16, 16], strides = [1, 1]} : vector<128x16xf32> to vector<16x16xf32>
    %cst_281 = arith.constant dense<0.000000e+00> : vector<16x16xf32>
    %589 = tpu.matmul %587, %588, %cst_281 {dimension_numbers = #tpu.dot_dimension_numbers<[1], [1], [0], [0], [0, 0, 1, 0], [], []>} : vector<16x16xf32>, vector<16x16xf32>, vector<16x16xf32> -> vector<16x16xf32>
    %590 = vector.extract_strided_slice %382 {offsets = [2, 0], sizes = [1, 16], strides = [1, 1]} : vector<8x16xf32> to vector<1x16xf32>
    %591 = vector.broadcast %590 : vector<1x16xf32> to vector<16x16xf32>
    %592 = arith.addf %589, %591 : vector<16x16xf32>
    %cst_282 = arith.constant dense<0xFF800000> : vector<16xf32>
    %593 = vector.multi_reduction <maximumf>, %592, %cst_282 [1] : vector<16x16xf32> to vector<16xf32>
    %594 = vector.shape_cast %593 : vector<16xf32> to vector<16x1xf32>
    %595 = vector.broadcast %594 : vector<16x1xf32> to vector<16x16xf32>
    %596 = arith.subf %592, %595 : vector<16x16xf32>
    %597 = math.exp %596 : vector<16x16xf32>
    %cst_283 = arith.constant dense<0.000000e+00> : vector<16xf32>
    %598 = vector.multi_reduction <add>, %597, %cst_283 [1] : vector<16x16xf32> to vector<16xf32>
    %599 = vector.shape_cast %598 : vector<16xf32> to vector<16x1xf32>
    %600 = tpu.reciprocal %599 {approx = true} : vector<16x1xf32> -> vector<16x1xf32>
    %601 = vector.broadcast %600 : vector<16x1xf32> to vector<16x16xf32>
    %602 = arith.mulf %597, %601 : vector<16x16xf32>
    %603 = vector.extract_strided_slice %550 {offsets = [32, 0], sizes = [16, 16], strides = [1, 1]} : vector<128x16xf32> to vector<16x16xf32>
    %cst_284 = arith.constant dense<0.000000e+00> : vector<16x16xf32>
    %604 = tpu.matmul %602, %603, %cst_284 {dimension_numbers = #tpu.dot_dimension_numbers<[1], [0], [0], [1], [0, 0, 1, 1], [], []>} : vector<16x16xf32>, vector<16x16xf32>, vector<16x16xf32> -> vector<16x16xf32>
    %605 = vector.extract_strided_slice %548 {offsets = [48, 0], sizes = [16, 16], strides = [1, 1]} : vector<128x16xf32> to vector<16x16xf32>
    %606 = vector.extract_strided_slice %549 {offsets = [48, 0], sizes = [16, 16], strides = [1, 1]} : vector<128x16xf32> to vector<16x16xf32>
    %cst_285 = arith.constant dense<0.000000e+00> : vector<16x16xf32>
    %607 = tpu.matmul %605, %606, %cst_285 {dimension_numbers = #tpu.dot_dimension_numbers<[1], [1], [0], [0], [0, 0, 1, 0], [], []>} : vector<16x16xf32>, vector<16x16xf32>, vector<16x16xf32> -> vector<16x16xf32>
    %608 = vector.extract_strided_slice %382 {offsets = [3, 0], sizes = [1, 16], strides = [1, 1]} : vector<8x16xf32> to vector<1x16xf32>
    %609 = vector.broadcast %608 : vector<1x16xf32> to vector<16x16xf32>
    %610 = arith.addf %607, %609 : vector<16x16xf32>
    %cst_286 = arith.constant dense<0xFF800000> : vector<16xf32>
    %611 = vector.multi_reduction <maximumf>, %610, %cst_286 [1] : vector<16x16xf32> to vector<16xf32>
    %612 = vector.shape_cast %611 : vector<16xf32> to vector<16x1xf32>
    %613 = vector.broadcast %612 : vector<16x1xf32> to vector<16x16xf32>
    %614 = arith.subf %610, %613 : vector<16x16xf32>
    %615 = math.exp %614 : vector<16x16xf32>
    %cst_287 = arith.constant dense<0.000000e+00> : vector<16xf32>
    %616 = vector.multi_reduction <add>, %615, %cst_287 [1] : vector<16x16xf32> to vector<16xf32>
    %617 = vector.shape_cast %616 : vector<16xf32> to vector<16x1xf32>
    %618 = tpu.reciprocal %617 {approx = true} : vector<16x1xf32> -> vector<16x1xf32>
    %619 = vector.broadcast %618 : vector<16x1xf32> to vector<16x16xf32>
    %620 = arith.mulf %615, %619 : vector<16x16xf32>
    %621 = vector.extract_strided_slice %550 {offsets = [48, 0], sizes = [16, 16], strides = [1, 1]} : vector<128x16xf32> to vector<16x16xf32>
    %cst_288 = arith.constant dense<0.000000e+00> : vector<16x16xf32>
    %622 = tpu.matmul %620, %621, %cst_288 {dimension_numbers = #tpu.dot_dimension_numbers<[1], [0], [0], [1], [0, 0, 1, 1], [], []>} : vector<16x16xf32>, vector<16x16xf32>, vector<16x16xf32> -> vector<16x16xf32>
    %623 = vector.extract_strided_slice %548 {offsets = [64, 0], sizes = [16, 16], strides = [1, 1]} : vector<128x16xf32> to vector<16x16xf32>
    %624 = vector.extract_strided_slice %549 {offsets = [64, 0], sizes = [16, 16], strides = [1, 1]} : vector<128x16xf32> to vector<16x16xf32>
    %cst_289 = arith.constant dense<0.000000e+00> : vector<16x16xf32>
    %625 = tpu.matmul %623, %624, %cst_289 {dimension_numbers = #tpu.dot_dimension_numbers<[1], [1], [0], [0], [0, 0, 1, 0], [], []>} : vector<16x16xf32>, vector<16x16xf32>, vector<16x16xf32> -> vector<16x16xf32>
    %626 = vector.extract_strided_slice %382 {offsets = [4, 0], sizes = [1, 16], strides = [1, 1]} : vector<8x16xf32> to vector<1x16xf32>
    %627 = vector.broadcast %626 : vector<1x16xf32> to vector<16x16xf32>
    %628 = arith.addf %625, %627 : vector<16x16xf32>
    %cst_290 = arith.constant dense<0xFF800000> : vector<16xf32>
    %629 = vector.multi_reduction <maximumf>, %628, %cst_290 [1] : vector<16x16xf32> to vector<16xf32>
    %630 = vector.shape_cast %629 : vector<16xf32> to vector<16x1xf32>
    %631 = vector.broadcast %630 : vector<16x1xf32> to vector<16x16xf32>
    %632 = arith.subf %628, %631 : vector<16x16xf32>
    %633 = math.exp %632 : vector<16x16xf32>
    %cst_291 = arith.constant dense<0.000000e+00> : vector<16xf32>
    %634 = vector.multi_reduction <add>, %633, %cst_291 [1] : vector<16x16xf32> to vector<16xf32>
    %635 = vector.shape_cast %634 : vector<16xf32> to vector<16x1xf32>
    %636 = tpu.reciprocal %635 {approx = true} : vector<16x1xf32> -> vector<16x1xf32>
    %637 = vector.broadcast %636 : vector<16x1xf32> to vector<16x16xf32>
    %638 = arith.mulf %633, %637 : vector<16x16xf32>
    %639 = vector.extract_strided_slice %550 {offsets = [64, 0], sizes = [16, 16], strides = [1, 1]} : vector<128x16xf32> to vector<16x16xf32>
    %cst_292 = arith.constant dense<0.000000e+00> : vector<16x16xf32>
    %640 = tpu.matmul %638, %639, %cst_292 {dimension_numbers = #tpu.dot_dimension_numbers<[1], [0], [0], [1], [0, 0, 1, 1], [], []>} : vector<16x16xf32>, vector<16x16xf32>, vector<16x16xf32> -> vector<16x16xf32>
    %641 = vector.extract_strided_slice %548 {offsets = [80, 0], sizes = [16, 16], strides = [1, 1]} : vector<128x16xf32> to vector<16x16xf32>
    %642 = vector.extract_strided_slice %549 {offsets = [80, 0], sizes = [16, 16], strides = [1, 1]} : vector<128x16xf32> to vector<16x16xf32>
    %cst_293 = arith.constant dense<0.000000e+00> : vector<16x16xf32>
    %643 = tpu.matmul %641, %642, %cst_293 {dimension_numbers = #tpu.dot_dimension_numbers<[1], [1], [0], [0], [0, 0, 1, 0], [], []>} : vector<16x16xf32>, vector<16x16xf32>, vector<16x16xf32> -> vector<16x16xf32>
    %644 = vector.extract_strided_slice %382 {offsets = [5, 0], sizes = [1, 16], strides = [1, 1]} : vector<8x16xf32> to vector<1x16xf32>
    %645 = vector.broadcast %644 : vector<1x16xf32> to vector<16x16xf32>
    %646 = arith.addf %643, %645 : vector<16x16xf32>
    %cst_294 = arith.constant dense<0xFF800000> : vector<16xf32>
    %647 = vector.multi_reduction <maximumf>, %646, %cst_294 [1] : vector<16x16xf32> to vector<16xf32>
    %648 = vector.shape_cast %647 : vector<16xf32> to vector<16x1xf32>
    %649 = vector.broadcast %648 : vector<16x1xf32> to vector<16x16xf32>
    %650 = arith.subf %646, %649 : vector<16x16xf32>
    %651 = math.exp %650 : vector<16x16xf32>
    %cst_295 = arith.constant dense<0.000000e+00> : vector<16xf32>
    %652 = vector.multi_reduction <add>, %651, %cst_295 [1] : vector<16x16xf32> to vector<16xf32>
    %653 = vector.shape_cast %652 : vector<16xf32> to vector<16x1xf32>
    %654 = tpu.reciprocal %653 {approx = true} : vector<16x1xf32> -> vector<16x1xf32>
    %655 = vector.broadcast %654 : vector<16x1xf32> to vector<16x16xf32>
    %656 = arith.mulf %651, %655 : vector<16x16xf32>
    %657 = vector.extract_strided_slice %550 {offsets = [80, 0], sizes = [16, 16], strides = [1, 1]} : vector<128x16xf32> to vector<16x16xf32>
    %cst_296 = arith.constant dense<0.000000e+00> : vector<16x16xf32>
    %658 = tpu.matmul %656, %657, %cst_296 {dimension_numbers = #tpu.dot_dimension_numbers<[1], [0], [0], [1], [0, 0, 1, 1], [], []>} : vector<16x16xf32>, vector<16x16xf32>, vector<16x16xf32> -> vector<16x16xf32>
    %659 = vector.extract_strided_slice %548 {offsets = [96, 0], sizes = [16, 16], strides = [1, 1]} : vector<128x16xf32> to vector<16x16xf32>
    %660 = vector.extract_strided_slice %549 {offsets = [96, 0], sizes = [16, 16], strides = [1, 1]} : vector<128x16xf32> to vector<16x16xf32>
    %cst_297 = arith.constant dense<0.000000e+00> : vector<16x16xf32>
    %661 = tpu.matmul %659, %660, %cst_297 {dimension_numbers = #tpu.dot_dimension_numbers<[1], [1], [0], [0], [0, 0, 1, 0], [], []>} : vector<16x16xf32>, vector<16x16xf32>, vector<16x16xf32> -> vector<16x16xf32>
    %662 = vector.extract_strided_slice %382 {offsets = [6, 0], sizes = [1, 16], strides = [1, 1]} : vector<8x16xf32> to vector<1x16xf32>
    %663 = vector.broadcast %662 : vector<1x16xf32> to vector<16x16xf32>
    %664 = arith.addf %661, %663 : vector<16x16xf32>
    %cst_298 = arith.constant dense<0xFF800000> : vector<16xf32>
    %665 = vector.multi_reduction <maximumf>, %664, %cst_298 [1] : vector<16x16xf32> to vector<16xf32>
    %666 = vector.shape_cast %665 : vector<16xf32> to vector<16x1xf32>
    %667 = vector.broadcast %666 : vector<16x1xf32> to vector<16x16xf32>
    %668 = arith.subf %664, %667 : vector<16x16xf32>
    %669 = math.exp %668 : vector<16x16xf32>
    %cst_299 = arith.constant dense<0.000000e+00> : vector<16xf32>
    %670 = vector.multi_reduction <add>, %669, %cst_299 [1] : vector<16x16xf32> to vector<16xf32>
    %671 = vector.shape_cast %670 : vector<16xf32> to vector<16x1xf32>
    %672 = tpu.reciprocal %671 {approx = true} : vector<16x1xf32> -> vector<16x1xf32>
    %673 = vector.broadcast %672 : vector<16x1xf32> to vector<16x16xf32>
    %674 = arith.mulf %669, %673 : vector<16x16xf32>
    %675 = vector.extract_strided_slice %550 {offsets = [96, 0], sizes = [16, 16], strides = [1, 1]} : vector<128x16xf32> to vector<16x16xf32>
    %cst_300 = arith.constant dense<0.000000e+00> : vector<16x16xf32>
    %676 = tpu.matmul %674, %675, %cst_300 {dimension_numbers = #tpu.dot_dimension_numbers<[1], [0], [0], [1], [0, 0, 1, 1], [], []>} : vector<16x16xf32>, vector<16x16xf32>, vector<16x16xf32> -> vector<16x16xf32>
    %677 = vector.extract_strided_slice %548 {offsets = [112, 0], sizes = [16, 16], strides = [1, 1]} : vector<128x16xf32> to vector<16x16xf32>
    %678 = vector.extract_strided_slice %549 {offsets = [112, 0], sizes = [16, 16], strides = [1, 1]} : vector<128x16xf32> to vector<16x16xf32>
    %cst_301 = arith.constant dense<0.000000e+00> : vector<16x16xf32>
    %679 = tpu.matmul %677, %678, %cst_301 {dimension_numbers = #tpu.dot_dimension_numbers<[1], [1], [0], [0], [0, 0, 1, 0], [], []>} : vector<16x16xf32>, vector<16x16xf32>, vector<16x16xf32> -> vector<16x16xf32>
    %680 = vector.extract_strided_slice %382 {offsets = [7, 0], sizes = [1, 16], strides = [1, 1]} : vector<8x16xf32> to vector<1x16xf32>
    %681 = vector.broadcast %680 : vector<1x16xf32> to vector<16x16xf32>
    %682 = arith.addf %679, %681 : vector<16x16xf32>
    %cst_302 = arith.constant dense<0xFF800000> : vector<16xf32>
    %683 = vector.multi_reduction <maximumf>, %682, %cst_302 [1] : vector<16x16xf32> to vector<16xf32>
    %684 = vector.shape_cast %683 : vector<16xf32> to vector<16x1xf32>
    %685 = vector.broadcast %684 : vector<16x1xf32> to vector<16x16xf32>
    %686 = arith.subf %682, %685 : vector<16x16xf32>
    %687 = math.exp %686 : vector<16x16xf32>
    %cst_303 = arith.constant dense<0.000000e+00> : vector<16xf32>
    %688 = vector.multi_reduction <add>, %687, %cst_303 [1] : vector<16x16xf32> to vector<16xf32>
    %689 = vector.shape_cast %688 : vector<16xf32> to vector<16x1xf32>
    %690 = tpu.reciprocal %689 {approx = true} : vector<16x1xf32> -> vector<16x1xf32>
    %691 = vector.broadcast %690 : vector<16x1xf32> to vector<16x16xf32>
    %692 = arith.mulf %687, %691 : vector<16x16xf32>
    %693 = vector.extract_strided_slice %550 {offsets = [112, 0], sizes = [16, 16], strides = [1, 1]} : vector<128x16xf32> to vector<16x16xf32>
    %cst_304 = arith.constant dense<0.000000e+00> : vector<16x16xf32>
    %694 = tpu.matmul %692, %693, %cst_304 {dimension_numbers = #tpu.dot_dimension_numbers<[1], [0], [0], [1], [0, 0, 1, 1], [], []>} : vector<16x16xf32>, vector<16x16xf32>, vector<16x16xf32> -> vector<16x16xf32>
    %695 = tpu.concatenate %568, %586, %604, %622, %640, %658, %676, %694 in 0 : vector<16x16xf32>, vector<16x16xf32>, vector<16x16xf32>, vector<16x16xf32>, vector<16x16xf32>, vector<16x16xf32>, vector<16x16xf32>, vector<16x16xf32> -> vector<128x16xf32>
    %696 = arith.truncf %695 : vector<128x16xf32> to vector<128x16xbf16>
    %c0_305 = arith.constant 0 : index
    %c16_306 = arith.constant 16 : index
    %c0_307 = arith.constant 0 : index
    %697 = vector.load %arg5[%c0_305, %c16_306, %c0_307] : memref<2x32x32xbf16, #tpu.memory_space<vmem>>, vector<1x16x32xbf16>
    %698 = vector.shape_cast %697 : vector<1x16x32xbf16> to vector<16x32xbf16>
    %cst_308 = arith.constant dense<0.000000e+00> : vector<128x32xf32>
    %699 = tpu.matmul %696, %698, %cst_308 {dimension_numbers = #tpu.dot_dimension_numbers<[1], [0], [0], [1], [0, 0, 1, 1], [], []>} : vector<128x16xbf16>, vector<16x32xbf16>, vector<128x32xf32> -> vector<128x32xf32>
    %700 = arith.addf %545, %699 : vector<128x32xf32>
    %c2_309 = arith.constant 2 : index
    %c0_310 = arith.constant 0 : index
    %701 = vector.load %arg9[%c2_309, %c0_310] : memref<14x32xf32, #tpu.memory_space<vmem>>, vector<1x32xf32>
    %c3_311 = arith.constant 3 : index
    %c0_312 = arith.constant 0 : index
    %702 = vector.load %arg9[%c3_311, %c0_312] : memref<14x32xf32, #tpu.memory_space<vmem>>, vector<1x32xf32>
    %c4_313 = arith.constant 4 : index
    %c0_314 = arith.constant 0 : index
    %703 = vector.load %arg9[%c4_313, %c0_314] : memref<14x32xf32, #tpu.memory_space<vmem>>, vector<1x32xf32>
    %c5_315 = arith.constant 5 : index
    %c0_316 = arith.constant 0 : index
    %704 = vector.load %arg9[%c5_315, %c0_316] : memref<14x32xf32, #tpu.memory_space<vmem>>, vector<1x32xf32>
    %c6_317 = arith.constant 6 : index
    %c0_318 = arith.constant 0 : index
    %705 = vector.load %arg9[%c6_317, %c0_318] : memref<14x32xf32, #tpu.memory_space<vmem>>, vector<1x32xf32>
    %c7_319 = arith.constant 7 : index
    %c0_320 = arith.constant 0 : index
    %706 = vector.load %arg9[%c7_319, %c0_320] : memref<14x32xf32, #tpu.memory_space<vmem>>, vector<1x32xf32>
    %707 = arith.addf %372, %700 : vector<128x32xf32>
    %708 = vector.broadcast %701 : vector<1x32xf32> to vector<128x32xf32>
    %709 = arith.addf %707, %708 : vector<128x32xf32>
    %cst_321 = arith.constant dense<0.000000e+00> : vector<128xf32>
    %710 = vector.multi_reduction <add>, %709, %cst_321 [1] : vector<128x32xf32> to vector<128xf32>
    %711 = vector.shape_cast %710 : vector<128xf32> to vector<128x1xf32>
    %cst_322 = arith.constant 3.200000e+01 : f32
    %712 = vector.broadcast %cst_322 : f32 to vector<128x1xf32>
    %713 = arith.divf %711, %712 : vector<128x1xf32>
    %714 = vector.broadcast %713 : vector<128x1xf32> to vector<128x32xf32>
    %715 = arith.subf %709, %714 : vector<128x32xf32>
    %716 = arith.mulf %715, %715 : vector<128x32xf32>
    %cst_323 = arith.constant dense<0.000000e+00> : vector<128xf32>
    %717 = vector.multi_reduction <add>, %716, %cst_323 [1] : vector<128x32xf32> to vector<128xf32>
    %718 = vector.shape_cast %717 : vector<128xf32> to vector<128x1xf32>
    %cst_324 = arith.constant 3.200000e+01 : f32
    %719 = vector.broadcast %cst_324 : f32 to vector<128x1xf32>
    %720 = arith.divf %718, %719 : vector<128x1xf32>
    %cst_325 = arith.constant 9.99999996E-13 : f32
    %721 = vector.broadcast %cst_325 : f32 to vector<128x1xf32>
    %722 = arith.addf %720, %721 : vector<128x1xf32>
    %723 = math.rsqrt %722 : vector<128x1xf32>
    %724 = vector.broadcast %723 : vector<128x1xf32> to vector<128x32xf32>
    %725 = arith.mulf %715, %724 : vector<128x32xf32>
    %726 = vector.broadcast %702 : vector<1x32xf32> to vector<128x32xf32>
    %727 = arith.mulf %725, %726 : vector<128x32xf32>
    %728 = vector.broadcast %703 : vector<1x32xf32> to vector<128x32xf32>
    %729 = arith.addf %727, %728 : vector<128x32xf32>
    %730 = arith.truncf %729 : vector<128x32xf32> to vector<128x32xbf16>
    %c0_326 = arith.constant 0 : index
    %c0_327 = arith.constant 0 : index
    %c0_328 = arith.constant 0 : index
    %731 = vector.load %arg6[%c0_326, %c0_327, %c0_328] : memref<2x32x64xbf16, #tpu.memory_space<vmem>>, vector<1x32x64xbf16>
    %732 = vector.shape_cast %731 : vector<1x32x64xbf16> to vector<32x64xbf16>
    %cst_329 = arith.constant dense<0.000000e+00> : vector<128x64xf32>
    %733 = tpu.matmul %730, %732, %cst_329 {dimension_numbers = #tpu.dot_dimension_numbers<[1], [0], [0], [1], [0, 0, 1, 1], [], []>} : vector<128x32xbf16>, vector<32x64xbf16>, vector<128x64xf32> -> vector<128x64xf32>
    %c2_330 = arith.constant 2 : index
    %c0_331 = arith.constant 0 : index
    %734 = vector.load %arg10[%c2_330, %c0_331] : memref<5x128xf32, #tpu.memory_space<vmem>>, vector<1x64xf32>
    %735 = vector.broadcast %734 : vector<1x64xf32> to vector<128x64xf32>
    %736 = arith.addf %733, %735 : vector<128x64xf32>
    %cst_332 = arith.constant 5.000000e-01 : f32
    %737 = vector.broadcast %cst_332 : f32 to vector<128x64xf32>
    %738 = arith.mulf %737, %736 : vector<128x64xf32>
    %cst_333 = arith.constant 4.471500e-02 : f32
    %739 = vector.broadcast %cst_333 : f32 to vector<128x64xf32>
    %740 = arith.mulf %739, %736 : vector<128x64xf32>
    %741 = arith.mulf %740, %736 : vector<128x64xf32>
    %742 = arith.mulf %741, %736 : vector<128x64xf32>
    %743 = arith.addf %736, %742 : vector<128x64xf32>
    %cst_334 = arith.constant 0.797884583 : f32
    %744 = vector.broadcast %cst_334 : f32 to vector<128x64xf32>
    %745 = arith.mulf %744, %743 : vector<128x64xf32>
    %746 = math.tanh %745 : vector<128x64xf32>
    %cst_335 = arith.constant 1.000000e+00 : f32
    %747 = vector.broadcast %cst_335 : f32 to vector<128x64xf32>
    %748 = arith.addf %747, %746 : vector<128x64xf32>
    %749 = arith.mulf %738, %748 : vector<128x64xf32>
    %750 = arith.truncf %749 : vector<128x64xf32> to vector<128x64xbf16>
    %c0_336 = arith.constant 0 : index
    %c0_337 = arith.constant 0 : index
    %c0_338 = arith.constant 0 : index
    %751 = vector.load %arg7[%c0_336, %c0_337, %c0_338] : memref<2x64x32xbf16, #tpu.memory_space<vmem>>, vector<1x64x32xbf16>
    %752 = vector.shape_cast %751 : vector<1x64x32xbf16> to vector<64x32xbf16>
    %cst_339 = arith.constant dense<0.000000e+00> : vector<128x32xf32>
    %753 = tpu.matmul %750, %752, %cst_339 {dimension_numbers = #tpu.dot_dimension_numbers<[1], [0], [0], [1], [0, 0, 1, 1], [], []>} : vector<128x64xbf16>, vector<64x32xbf16>, vector<128x32xf32> -> vector<128x32xf32>
    %754 = vector.broadcast %704 : vector<1x32xf32> to vector<128x32xf32>
    %755 = arith.addf %753, %754 : vector<128x32xf32>
    %756 = arith.addf %729, %755 : vector<128x32xf32>
    %cst_340 = arith.constant dense<0.000000e+00> : vector<128xf32>
    %757 = vector.multi_reduction <add>, %756, %cst_340 [1] : vector<128x32xf32> to vector<128xf32>
    %758 = vector.shape_cast %757 : vector<128xf32> to vector<128x1xf32>
    %cst_341 = arith.constant 3.200000e+01 : f32
    %759 = vector.broadcast %cst_341 : f32 to vector<128x1xf32>
    %760 = arith.divf %758, %759 : vector<128x1xf32>
    %761 = vector.broadcast %760 : vector<128x1xf32> to vector<128x32xf32>
    %762 = arith.subf %756, %761 : vector<128x32xf32>
    %763 = arith.mulf %762, %762 : vector<128x32xf32>
    %cst_342 = arith.constant dense<0.000000e+00> : vector<128xf32>
    %764 = vector.multi_reduction <add>, %763, %cst_342 [1] : vector<128x32xf32> to vector<128xf32>
    %765 = vector.shape_cast %764 : vector<128xf32> to vector<128x1xf32>
    %cst_343 = arith.constant 3.200000e+01 : f32
    %766 = vector.broadcast %cst_343 : f32 to vector<128x1xf32>
    %767 = arith.divf %765, %766 : vector<128x1xf32>
    %cst_344 = arith.constant 9.99999996E-13 : f32
    %768 = vector.broadcast %cst_344 : f32 to vector<128x1xf32>
    %769 = arith.addf %767, %768 : vector<128x1xf32>
    %770 = math.rsqrt %769 : vector<128x1xf32>
    %771 = vector.broadcast %770 : vector<128x1xf32> to vector<128x32xf32>
    %772 = arith.mulf %762, %771 : vector<128x32xf32>
    %773 = vector.broadcast %705 : vector<1x32xf32> to vector<128x32xf32>
    %774 = arith.mulf %772, %773 : vector<128x32xf32>
    %775 = vector.broadcast %706 : vector<1x32xf32> to vector<128x32xf32>
    %776 = arith.addf %774, %775 : vector<128x32xf32>
    %777 = arith.truncf %776 : vector<128x32xf32> to vector<128x32xbf16>
    %c1_345 = arith.constant 1 : index
    %c0_346 = arith.constant 0 : index
    %c0_347 = arith.constant 0 : index
    %778 = vector.load %arg4[%c1_345, %c0_346, %c0_347] : memref<2x32x96xbf16, #tpu.memory_space<vmem>>, vector<1x32x96xbf16>
    %779 = vector.shape_cast %778 : vector<1x32x96xbf16> to vector<32x96xbf16>
    %cst_348 = arith.constant dense<0.000000e+00> : vector<128x96xf32>
    %780 = tpu.matmul %777, %779, %cst_348 {dimension_numbers = #tpu.dot_dimension_numbers<[1], [0], [0], [1], [0, 0, 1, 1], [], []>} : vector<128x32xbf16>, vector<32x96xbf16>, vector<128x96xf32> -> vector<128x96xf32>
    %c1_349 = arith.constant 1 : index
    %c0_350 = arith.constant 0 : index
    %781 = vector.load %arg10[%c1_349, %c0_350] : memref<5x128xf32, #tpu.memory_space<vmem>>, vector<1x96xf32>
    %782 = vector.broadcast %781 : vector<1x96xf32> to vector<128x96xf32>
    %783 = arith.addf %780, %782 : vector<128x96xf32>
    %cst_351 = arith.constant 0.000000e+00 : f32
    %784 = vector.broadcast %cst_351 : f32 to vector<128x32xf32>
    %785 = vector.extract_strided_slice %783 {offsets = [0, 0], sizes = [128, 16], strides = [1, 1]} : vector<128x96xf32> to vector<128x16xf32>
    %cst_352 = arith.constant 2.500000e-01 : f32
    %786 = vector.broadcast %cst_352 : f32 to vector<128x16xf32>
    %787 = arith.mulf %785, %786 : vector<128x16xf32>
    %788 = vector.extract_strided_slice %783 {offsets = [0, 32], sizes = [128, 16], strides = [1, 1]} : vector<128x96xf32> to vector<128x16xf32>
    %789 = vector.extract_strided_slice %783 {offsets = [0, 64], sizes = [128, 16], strides = [1, 1]} : vector<128x96xf32> to vector<128x16xf32>
    %790 = vector.extract_strided_slice %787 {offsets = [0, 0], sizes = [16, 16], strides = [1, 1]} : vector<128x16xf32> to vector<16x16xf32>
    %791 = vector.extract_strided_slice %788 {offsets = [0, 0], sizes = [16, 16], strides = [1, 1]} : vector<128x16xf32> to vector<16x16xf32>
    %cst_353 = arith.constant dense<0.000000e+00> : vector<16x16xf32>
    %792 = tpu.matmul %790, %791, %cst_353 {dimension_numbers = #tpu.dot_dimension_numbers<[1], [1], [0], [0], [0, 0, 1, 0], [], []>} : vector<16x16xf32>, vector<16x16xf32>, vector<16x16xf32> -> vector<16x16xf32>
    %793 = vector.extract_strided_slice %382 {offsets = [0, 0], sizes = [1, 16], strides = [1, 1]} : vector<8x16xf32> to vector<1x16xf32>
    %794 = vector.broadcast %793 : vector<1x16xf32> to vector<16x16xf32>
    %795 = arith.addf %792, %794 : vector<16x16xf32>
    %cst_354 = arith.constant dense<0xFF800000> : vector<16xf32>
    %796 = vector.multi_reduction <maximumf>, %795, %cst_354 [1] : vector<16x16xf32> to vector<16xf32>
    %797 = vector.shape_cast %796 : vector<16xf32> to vector<16x1xf32>
    %798 = vector.broadcast %797 : vector<16x1xf32> to vector<16x16xf32>
    %799 = arith.subf %795, %798 : vector<16x16xf32>
    %800 = math.exp %799 : vector<16x16xf32>
    %cst_355 = arith.constant dense<0.000000e+00> : vector<16xf32>
    %801 = vector.multi_reduction <add>, %800, %cst_355 [1] : vector<16x16xf32> to vector<16xf32>
    %802 = vector.shape_cast %801 : vector<16xf32> to vector<16x1xf32>
    %803 = tpu.reciprocal %802 {approx = true} : vector<16x1xf32> -> vector<16x1xf32>
    %804 = vector.broadcast %803 : vector<16x1xf32> to vector<16x16xf32>
    %805 = arith.mulf %800, %804 : vector<16x16xf32>
    %806 = vector.extract_strided_slice %789 {offsets = [0, 0], sizes = [16, 16], strides = [1, 1]} : vector<128x16xf32> to vector<16x16xf32>
    %cst_356 = arith.constant dense<0.000000e+00> : vector<16x16xf32>
    %807 = tpu.matmul %805, %806, %cst_356 {dimension_numbers = #tpu.dot_dimension_numbers<[1], [0], [0], [1], [0, 0, 1, 1], [], []>} : vector<16x16xf32>, vector<16x16xf32>, vector<16x16xf32> -> vector<16x16xf32>
    %808 = vector.extract_strided_slice %787 {offsets = [16, 0], sizes = [16, 16], strides = [1, 1]} : vector<128x16xf32> to vector<16x16xf32>
    %809 = vector.extract_strided_slice %788 {offsets = [16, 0], sizes = [16, 16], strides = [1, 1]} : vector<128x16xf32> to vector<16x16xf32>
    %cst_357 = arith.constant dense<0.000000e+00> : vector<16x16xf32>
    %810 = tpu.matmul %808, %809, %cst_357 {dimension_numbers = #tpu.dot_dimension_numbers<[1], [1], [0], [0], [0, 0, 1, 0], [], []>} : vector<16x16xf32>, vector<16x16xf32>, vector<16x16xf32> -> vector<16x16xf32>
    %811 = vector.extract_strided_slice %382 {offsets = [1, 0], sizes = [1, 16], strides = [1, 1]} : vector<8x16xf32> to vector<1x16xf32>
    %812 = vector.broadcast %811 : vector<1x16xf32> to vector<16x16xf32>
    %813 = arith.addf %810, %812 : vector<16x16xf32>
    %cst_358 = arith.constant dense<0xFF800000> : vector<16xf32>
    %814 = vector.multi_reduction <maximumf>, %813, %cst_358 [1] : vector<16x16xf32> to vector<16xf32>
    %815 = vector.shape_cast %814 : vector<16xf32> to vector<16x1xf32>
    %816 = vector.broadcast %815 : vector<16x1xf32> to vector<16x16xf32>
    %817 = arith.subf %813, %816 : vector<16x16xf32>
    %818 = math.exp %817 : vector<16x16xf32>
    %cst_359 = arith.constant dense<0.000000e+00> : vector<16xf32>
    %819 = vector.multi_reduction <add>, %818, %cst_359 [1] : vector<16x16xf32> to vector<16xf32>
    %820 = vector.shape_cast %819 : vector<16xf32> to vector<16x1xf32>
    %821 = tpu.reciprocal %820 {approx = true} : vector<16x1xf32> -> vector<16x1xf32>
    %822 = vector.broadcast %821 : vector<16x1xf32> to vector<16x16xf32>
    %823 = arith.mulf %818, %822 : vector<16x16xf32>
    %824 = vector.extract_strided_slice %789 {offsets = [16, 0], sizes = [16, 16], strides = [1, 1]} : vector<128x16xf32> to vector<16x16xf32>
    %cst_360 = arith.constant dense<0.000000e+00> : vector<16x16xf32>
    %825 = tpu.matmul %823, %824, %cst_360 {dimension_numbers = #tpu.dot_dimension_numbers<[1], [0], [0], [1], [0, 0, 1, 1], [], []>} : vector<16x16xf32>, vector<16x16xf32>, vector<16x16xf32> -> vector<16x16xf32>
    %826 = vector.extract_strided_slice %787 {offsets = [32, 0], sizes = [16, 16], strides = [1, 1]} : vector<128x16xf32> to vector<16x16xf32>
    %827 = vector.extract_strided_slice %788 {offsets = [32, 0], sizes = [16, 16], strides = [1, 1]} : vector<128x16xf32> to vector<16x16xf32>
    %cst_361 = arith.constant dense<0.000000e+00> : vector<16x16xf32>
    %828 = tpu.matmul %826, %827, %cst_361 {dimension_numbers = #tpu.dot_dimension_numbers<[1], [1], [0], [0], [0, 0, 1, 0], [], []>} : vector<16x16xf32>, vector<16x16xf32>, vector<16x16xf32> -> vector<16x16xf32>
    %829 = vector.extract_strided_slice %382 {offsets = [2, 0], sizes = [1, 16], strides = [1, 1]} : vector<8x16xf32> to vector<1x16xf32>
    %830 = vector.broadcast %829 : vector<1x16xf32> to vector<16x16xf32>
    %831 = arith.addf %828, %830 : vector<16x16xf32>
    %cst_362 = arith.constant dense<0xFF800000> : vector<16xf32>
    %832 = vector.multi_reduction <maximumf>, %831, %cst_362 [1] : vector<16x16xf32> to vector<16xf32>
    %833 = vector.shape_cast %832 : vector<16xf32> to vector<16x1xf32>
    %834 = vector.broadcast %833 : vector<16x1xf32> to vector<16x16xf32>
    %835 = arith.subf %831, %834 : vector<16x16xf32>
    %836 = math.exp %835 : vector<16x16xf32>
    %cst_363 = arith.constant dense<0.000000e+00> : vector<16xf32>
    %837 = vector.multi_reduction <add>, %836, %cst_363 [1] : vector<16x16xf32> to vector<16xf32>
    %838 = vector.shape_cast %837 : vector<16xf32> to vector<16x1xf32>
    %839 = tpu.reciprocal %838 {approx = true} : vector<16x1xf32> -> vector<16x1xf32>
    %840 = vector.broadcast %839 : vector<16x1xf32> to vector<16x16xf32>
    %841 = arith.mulf %836, %840 : vector<16x16xf32>
    %842 = vector.extract_strided_slice %789 {offsets = [32, 0], sizes = [16, 16], strides = [1, 1]} : vector<128x16xf32> to vector<16x16xf32>
    %cst_364 = arith.constant dense<0.000000e+00> : vector<16x16xf32>
    %843 = tpu.matmul %841, %842, %cst_364 {dimension_numbers = #tpu.dot_dimension_numbers<[1], [0], [0], [1], [0, 0, 1, 1], [], []>} : vector<16x16xf32>, vector<16x16xf32>, vector<16x16xf32> -> vector<16x16xf32>
    %844 = vector.extract_strided_slice %787 {offsets = [48, 0], sizes = [16, 16], strides = [1, 1]} : vector<128x16xf32> to vector<16x16xf32>
    %845 = vector.extract_strided_slice %788 {offsets = [48, 0], sizes = [16, 16], strides = [1, 1]} : vector<128x16xf32> to vector<16x16xf32>
    %cst_365 = arith.constant dense<0.000000e+00> : vector<16x16xf32>
    %846 = tpu.matmul %844, %845, %cst_365 {dimension_numbers = #tpu.dot_dimension_numbers<[1], [1], [0], [0], [0, 0, 1, 0], [], []>} : vector<16x16xf32>, vector<16x16xf32>, vector<16x16xf32> -> vector<16x16xf32>
    %847 = vector.extract_strided_slice %382 {offsets = [3, 0], sizes = [1, 16], strides = [1, 1]} : vector<8x16xf32> to vector<1x16xf32>
    %848 = vector.broadcast %847 : vector<1x16xf32> to vector<16x16xf32>
    %849 = arith.addf %846, %848 : vector<16x16xf32>
    %cst_366 = arith.constant dense<0xFF800000> : vector<16xf32>
    %850 = vector.multi_reduction <maximumf>, %849, %cst_366 [1] : vector<16x16xf32> to vector<16xf32>
    %851 = vector.shape_cast %850 : vector<16xf32> to vector<16x1xf32>
    %852 = vector.broadcast %851 : vector<16x1xf32> to vector<16x16xf32>
    %853 = arith.subf %849, %852 : vector<16x16xf32>
    %854 = math.exp %853 : vector<16x16xf32>
    %cst_367 = arith.constant dense<0.000000e+00> : vector<16xf32>
    %855 = vector.multi_reduction <add>, %854, %cst_367 [1] : vector<16x16xf32> to vector<16xf32>
    %856 = vector.shape_cast %855 : vector<16xf32> to vector<16x1xf32>
    %857 = tpu.reciprocal %856 {approx = true} : vector<16x1xf32> -> vector<16x1xf32>
    %858 = vector.broadcast %857 : vector<16x1xf32> to vector<16x16xf32>
    %859 = arith.mulf %854, %858 : vector<16x16xf32>
    %860 = vector.extract_strided_slice %789 {offsets = [48, 0], sizes = [16, 16], strides = [1, 1]} : vector<128x16xf32> to vector<16x16xf32>
    %cst_368 = arith.constant dense<0.000000e+00> : vector<16x16xf32>
    %861 = tpu.matmul %859, %860, %cst_368 {dimension_numbers = #tpu.dot_dimension_numbers<[1], [0], [0], [1], [0, 0, 1, 1], [], []>} : vector<16x16xf32>, vector<16x16xf32>, vector<16x16xf32> -> vector<16x16xf32>
    %862 = vector.extract_strided_slice %787 {offsets = [64, 0], sizes = [16, 16], strides = [1, 1]} : vector<128x16xf32> to vector<16x16xf32>
    %863 = vector.extract_strided_slice %788 {offsets = [64, 0], sizes = [16, 16], strides = [1, 1]} : vector<128x16xf32> to vector<16x16xf32>
    %cst_369 = arith.constant dense<0.000000e+00> : vector<16x16xf32>
    %864 = tpu.matmul %862, %863, %cst_369 {dimension_numbers = #tpu.dot_dimension_numbers<[1], [1], [0], [0], [0, 0, 1, 0], [], []>} : vector<16x16xf32>, vector<16x16xf32>, vector<16x16xf32> -> vector<16x16xf32>
    %865 = vector.extract_strided_slice %382 {offsets = [4, 0], sizes = [1, 16], strides = [1, 1]} : vector<8x16xf32> to vector<1x16xf32>
    %866 = vector.broadcast %865 : vector<1x16xf32> to vector<16x16xf32>
    %867 = arith.addf %864, %866 : vector<16x16xf32>
    %cst_370 = arith.constant dense<0xFF800000> : vector<16xf32>
    %868 = vector.multi_reduction <maximumf>, %867, %cst_370 [1] : vector<16x16xf32> to vector<16xf32>
    %869 = vector.shape_cast %868 : vector<16xf32> to vector<16x1xf32>
    %870 = vector.broadcast %869 : vector<16x1xf32> to vector<16x16xf32>
    %871 = arith.subf %867, %870 : vector<16x16xf32>
    %872 = math.exp %871 : vector<16x16xf32>
    %cst_371 = arith.constant dense<0.000000e+00> : vector<16xf32>
    %873 = vector.multi_reduction <add>, %872, %cst_371 [1] : vector<16x16xf32> to vector<16xf32>
    %874 = vector.shape_cast %873 : vector<16xf32> to vector<16x1xf32>
    %875 = tpu.reciprocal %874 {approx = true} : vector<16x1xf32> -> vector<16x1xf32>
    %876 = vector.broadcast %875 : vector<16x1xf32> to vector<16x16xf32>
    %877 = arith.mulf %872, %876 : vector<16x16xf32>
    %878 = vector.extract_strided_slice %789 {offsets = [64, 0], sizes = [16, 16], strides = [1, 1]} : vector<128x16xf32> to vector<16x16xf32>
    %cst_372 = arith.constant dense<0.000000e+00> : vector<16x16xf32>
    %879 = tpu.matmul %877, %878, %cst_372 {dimension_numbers = #tpu.dot_dimension_numbers<[1], [0], [0], [1], [0, 0, 1, 1], [], []>} : vector<16x16xf32>, vector<16x16xf32>, vector<16x16xf32> -> vector<16x16xf32>
    %880 = vector.extract_strided_slice %787 {offsets = [80, 0], sizes = [16, 16], strides = [1, 1]} : vector<128x16xf32> to vector<16x16xf32>
    %881 = vector.extract_strided_slice %788 {offsets = [80, 0], sizes = [16, 16], strides = [1, 1]} : vector<128x16xf32> to vector<16x16xf32>
    %cst_373 = arith.constant dense<0.000000e+00> : vector<16x16xf32>
    %882 = tpu.matmul %880, %881, %cst_373 {dimension_numbers = #tpu.dot_dimension_numbers<[1], [1], [0], [0], [0, 0, 1, 0], [], []>} : vector<16x16xf32>, vector<16x16xf32>, vector<16x16xf32> -> vector<16x16xf32>
    %883 = vector.extract_strided_slice %382 {offsets = [5, 0], sizes = [1, 16], strides = [1, 1]} : vector<8x16xf32> to vector<1x16xf32>
    %884 = vector.broadcast %883 : vector<1x16xf32> to vector<16x16xf32>
    %885 = arith.addf %882, %884 : vector<16x16xf32>
    %cst_374 = arith.constant dense<0xFF800000> : vector<16xf32>
    %886 = vector.multi_reduction <maximumf>, %885, %cst_374 [1] : vector<16x16xf32> to vector<16xf32>
    %887 = vector.shape_cast %886 : vector<16xf32> to vector<16x1xf32>
    %888 = vector.broadcast %887 : vector<16x1xf32> to vector<16x16xf32>
    %889 = arith.subf %885, %888 : vector<16x16xf32>
    %890 = math.exp %889 : vector<16x16xf32>
    %cst_375 = arith.constant dense<0.000000e+00> : vector<16xf32>
    %891 = vector.multi_reduction <add>, %890, %cst_375 [1] : vector<16x16xf32> to vector<16xf32>
    %892 = vector.shape_cast %891 : vector<16xf32> to vector<16x1xf32>
    %893 = tpu.reciprocal %892 {approx = true} : vector<16x1xf32> -> vector<16x1xf32>
    %894 = vector.broadcast %893 : vector<16x1xf32> to vector<16x16xf32>
    %895 = arith.mulf %890, %894 : vector<16x16xf32>
    %896 = vector.extract_strided_slice %789 {offsets = [80, 0], sizes = [16, 16], strides = [1, 1]} : vector<128x16xf32> to vector<16x16xf32>
    %cst_376 = arith.constant dense<0.000000e+00> : vector<16x16xf32>
    %897 = tpu.matmul %895, %896, %cst_376 {dimension_numbers = #tpu.dot_dimension_numbers<[1], [0], [0], [1], [0, 0, 1, 1], [], []>} : vector<16x16xf32>, vector<16x16xf32>, vector<16x16xf32> -> vector<16x16xf32>
    %898 = vector.extract_strided_slice %787 {offsets = [96, 0], sizes = [16, 16], strides = [1, 1]} : vector<128x16xf32> to vector<16x16xf32>
    %899 = vector.extract_strided_slice %788 {offsets = [96, 0], sizes = [16, 16], strides = [1, 1]} : vector<128x16xf32> to vector<16x16xf32>
    %cst_377 = arith.constant dense<0.000000e+00> : vector<16x16xf32>
    %900 = tpu.matmul %898, %899, %cst_377 {dimension_numbers = #tpu.dot_dimension_numbers<[1], [1], [0], [0], [0, 0, 1, 0], [], []>} : vector<16x16xf32>, vector<16x16xf32>, vector<16x16xf32> -> vector<16x16xf32>
    %901 = vector.extract_strided_slice %382 {offsets = [6, 0], sizes = [1, 16], strides = [1, 1]} : vector<8x16xf32> to vector<1x16xf32>
    %902 = vector.broadcast %901 : vector<1x16xf32> to vector<16x16xf32>
    %903 = arith.addf %900, %902 : vector<16x16xf32>
    %cst_378 = arith.constant dense<0xFF800000> : vector<16xf32>
    %904 = vector.multi_reduction <maximumf>, %903, %cst_378 [1] : vector<16x16xf32> to vector<16xf32>
    %905 = vector.shape_cast %904 : vector<16xf32> to vector<16x1xf32>
    %906 = vector.broadcast %905 : vector<16x1xf32> to vector<16x16xf32>
    %907 = arith.subf %903, %906 : vector<16x16xf32>
    %908 = math.exp %907 : vector<16x16xf32>
    %cst_379 = arith.constant dense<0.000000e+00> : vector<16xf32>
    %909 = vector.multi_reduction <add>, %908, %cst_379 [1] : vector<16x16xf32> to vector<16xf32>
    %910 = vector.shape_cast %909 : vector<16xf32> to vector<16x1xf32>
    %911 = tpu.reciprocal %910 {approx = true} : vector<16x1xf32> -> vector<16x1xf32>
    %912 = vector.broadcast %911 : vector<16x1xf32> to vector<16x16xf32>
    %913 = arith.mulf %908, %912 : vector<16x16xf32>
    %914 = vector.extract_strided_slice %789 {offsets = [96, 0], sizes = [16, 16], strides = [1, 1]} : vector<128x16xf32> to vector<16x16xf32>
    %cst_380 = arith.constant dense<0.000000e+00> : vector<16x16xf32>
    %915 = tpu.matmul %913, %914, %cst_380 {dimension_numbers = #tpu.dot_dimension_numbers<[1], [0], [0], [1], [0, 0, 1, 1], [], []>} : vector<16x16xf32>, vector<16x16xf32>, vector<16x16xf32> -> vector<16x16xf32>
    %916 = vector.extract_strided_slice %787 {offsets = [112, 0], sizes = [16, 16], strides = [1, 1]} : vector<128x16xf32> to vector<16x16xf32>
    %917 = vector.extract_strided_slice %788 {offsets = [112, 0], sizes = [16, 16], strides = [1, 1]} : vector<128x16xf32> to vector<16x16xf32>
    %cst_381 = arith.constant dense<0.000000e+00> : vector<16x16xf32>
    %918 = tpu.matmul %916, %917, %cst_381 {dimension_numbers = #tpu.dot_dimension_numbers<[1], [1], [0], [0], [0, 0, 1, 0], [], []>} : vector<16x16xf32>, vector<16x16xf32>, vector<16x16xf32> -> vector<16x16xf32>
    %919 = vector.extract_strided_slice %382 {offsets = [7, 0], sizes = [1, 16], strides = [1, 1]} : vector<8x16xf32> to vector<1x16xf32>
    %920 = vector.broadcast %919 : vector<1x16xf32> to vector<16x16xf32>
    %921 = arith.addf %918, %920 : vector<16x16xf32>
    %cst_382 = arith.constant dense<0xFF800000> : vector<16xf32>
    %922 = vector.multi_reduction <maximumf>, %921, %cst_382 [1] : vector<16x16xf32> to vector<16xf32>
    %923 = vector.shape_cast %922 : vector<16xf32> to vector<16x1xf32>
    %924 = vector.broadcast %923 : vector<16x1xf32> to vector<16x16xf32>
    %925 = arith.subf %921, %924 : vector<16x16xf32>
    %926 = math.exp %925 : vector<16x16xf32>
    %cst_383 = arith.constant dense<0.000000e+00> : vector<16xf32>
    %927 = vector.multi_reduction <add>, %926, %cst_383 [1] : vector<16x16xf32> to vector<16xf32>
    %928 = vector.shape_cast %927 : vector<16xf32> to vector<16x1xf32>
    %929 = tpu.reciprocal %928 {approx = true} : vector<16x1xf32> -> vector<16x1xf32>
    %930 = vector.broadcast %929 : vector<16x1xf32> to vector<16x16xf32>
    %931 = arith.mulf %926, %930 : vector<16x16xf32>
    %932 = vector.extract_strided_slice %789 {offsets = [112, 0], sizes = [16, 16], strides = [1, 1]} : vector<128x16xf32> to vector<16x16xf32>
    %cst_384 = arith.constant dense<0.000000e+00> : vector<16x16xf32>
    %933 = tpu.matmul %931, %932, %cst_384 {dimension_numbers = #tpu.dot_dimension_numbers<[1], [0], [0], [1], [0, 0, 1, 1], [], []>} : vector<16x16xf32>, vector<16x16xf32>, vector<16x16xf32> -> vector<16x16xf32>
    %934 = tpu.concatenate %807, %825, %843, %861, %879, %897, %915, %933 in 0 : vector<16x16xf32>, vector<16x16xf32>, vector<16x16xf32>, vector<16x16xf32>, vector<16x16xf32>, vector<16x16xf32>, vector<16x16xf32>, vector<16x16xf32> -> vector<128x16xf32>
    %935 = arith.truncf %934 : vector<128x16xf32> to vector<128x16xbf16>
    %c1_385 = arith.constant 1 : index
    %c0_386 = arith.constant 0 : index
    %c0_387 = arith.constant 0 : index
    %936 = vector.load %arg5[%c1_385, %c0_386, %c0_387] : memref<2x32x32xbf16, #tpu.memory_space<vmem>>, vector<1x16x32xbf16>
    %937 = vector.shape_cast %936 : vector<1x16x32xbf16> to vector<16x32xbf16>
    %cst_388 = arith.constant dense<0.000000e+00> : vector<128x32xf32>
    %938 = tpu.matmul %935, %937, %cst_388 {dimension_numbers = #tpu.dot_dimension_numbers<[1], [0], [0], [1], [0, 0, 1, 1], [], []>} : vector<128x16xbf16>, vector<16x32xbf16>, vector<128x32xf32> -> vector<128x32xf32>
    %939 = arith.addf %784, %938 : vector<128x32xf32>
    %940 = vector.extract_strided_slice %783 {offsets = [0, 16], sizes = [128, 16], strides = [1, 1]} : vector<128x96xf32> to vector<128x16xf32>
    %cst_389 = arith.constant 2.500000e-01 : f32
    %941 = vector.broadcast %cst_389 : f32 to vector<128x16xf32>
    %942 = arith.mulf %940, %941 : vector<128x16xf32>
    %943 = vector.extract_strided_slice %783 {offsets = [0, 48], sizes = [128, 16], strides = [1, 1]} : vector<128x96xf32> to vector<128x16xf32>
    %944 = vector.extract_strided_slice %783 {offsets = [0, 80], sizes = [128, 16], strides = [1, 1]} : vector<128x96xf32> to vector<128x16xf32>
    %945 = vector.extract_strided_slice %942 {offsets = [0, 0], sizes = [16, 16], strides = [1, 1]} : vector<128x16xf32> to vector<16x16xf32>
    %946 = vector.extract_strided_slice %943 {offsets = [0, 0], sizes = [16, 16], strides = [1, 1]} : vector<128x16xf32> to vector<16x16xf32>
    %cst_390 = arith.constant dense<0.000000e+00> : vector<16x16xf32>
    %947 = tpu.matmul %945, %946, %cst_390 {dimension_numbers = #tpu.dot_dimension_numbers<[1], [1], [0], [0], [0, 0, 1, 0], [], []>} : vector<16x16xf32>, vector<16x16xf32>, vector<16x16xf32> -> vector<16x16xf32>
    %948 = vector.extract_strided_slice %382 {offsets = [0, 0], sizes = [1, 16], strides = [1, 1]} : vector<8x16xf32> to vector<1x16xf32>
    %949 = vector.broadcast %948 : vector<1x16xf32> to vector<16x16xf32>
    %950 = arith.addf %947, %949 : vector<16x16xf32>
    %cst_391 = arith.constant dense<0xFF800000> : vector<16xf32>
    %951 = vector.multi_reduction <maximumf>, %950, %cst_391 [1] : vector<16x16xf32> to vector<16xf32>
    %952 = vector.shape_cast %951 : vector<16xf32> to vector<16x1xf32>
    %953 = vector.broadcast %952 : vector<16x1xf32> to vector<16x16xf32>
    %954 = arith.subf %950, %953 : vector<16x16xf32>
    %955 = math.exp %954 : vector<16x16xf32>
    %cst_392 = arith.constant dense<0.000000e+00> : vector<16xf32>
    %956 = vector.multi_reduction <add>, %955, %cst_392 [1] : vector<16x16xf32> to vector<16xf32>
    %957 = vector.shape_cast %956 : vector<16xf32> to vector<16x1xf32>
    %958 = tpu.reciprocal %957 {approx = true} : vector<16x1xf32> -> vector<16x1xf32>
    %959 = vector.broadcast %958 : vector<16x1xf32> to vector<16x16xf32>
    %960 = arith.mulf %955, %959 : vector<16x16xf32>
    %961 = vector.extract_strided_slice %944 {offsets = [0, 0], sizes = [16, 16], strides = [1, 1]} : vector<128x16xf32> to vector<16x16xf32>
    %cst_393 = arith.constant dense<0.000000e+00> : vector<16x16xf32>
    %962 = tpu.matmul %960, %961, %cst_393 {dimension_numbers = #tpu.dot_dimension_numbers<[1], [0], [0], [1], [0, 0, 1, 1], [], []>} : vector<16x16xf32>, vector<16x16xf32>, vector<16x16xf32> -> vector<16x16xf32>
    %963 = vector.extract_strided_slice %942 {offsets = [16, 0], sizes = [16, 16], strides = [1, 1]} : vector<128x16xf32> to vector<16x16xf32>
    %964 = vector.extract_strided_slice %943 {offsets = [16, 0], sizes = [16, 16], strides = [1, 1]} : vector<128x16xf32> to vector<16x16xf32>
    %cst_394 = arith.constant dense<0.000000e+00> : vector<16x16xf32>
    %965 = tpu.matmul %963, %964, %cst_394 {dimension_numbers = #tpu.dot_dimension_numbers<[1], [1], [0], [0], [0, 0, 1, 0], [], []>} : vector<16x16xf32>, vector<16x16xf32>, vector<16x16xf32> -> vector<16x16xf32>
    %966 = vector.extract_strided_slice %382 {offsets = [1, 0], sizes = [1, 16], strides = [1, 1]} : vector<8x16xf32> to vector<1x16xf32>
    %967 = vector.broadcast %966 : vector<1x16xf32> to vector<16x16xf32>
    %968 = arith.addf %965, %967 : vector<16x16xf32>
    %cst_395 = arith.constant dense<0xFF800000> : vector<16xf32>
    %969 = vector.multi_reduction <maximumf>, %968, %cst_395 [1] : vector<16x16xf32> to vector<16xf32>
    %970 = vector.shape_cast %969 : vector<16xf32> to vector<16x1xf32>
    %971 = vector.broadcast %970 : vector<16x1xf32> to vector<16x16xf32>
    %972 = arith.subf %968, %971 : vector<16x16xf32>
    %973 = math.exp %972 : vector<16x16xf32>
    %cst_396 = arith.constant dense<0.000000e+00> : vector<16xf32>
    %974 = vector.multi_reduction <add>, %973, %cst_396 [1] : vector<16x16xf32> to vector<16xf32>
    %975 = vector.shape_cast %974 : vector<16xf32> to vector<16x1xf32>
    %976 = tpu.reciprocal %975 {approx = true} : vector<16x1xf32> -> vector<16x1xf32>
    %977 = vector.broadcast %976 : vector<16x1xf32> to vector<16x16xf32>
    %978 = arith.mulf %973, %977 : vector<16x16xf32>
    %979 = vector.extract_strided_slice %944 {offsets = [16, 0], sizes = [16, 16], strides = [1, 1]} : vector<128x16xf32> to vector<16x16xf32>
    %cst_397 = arith.constant dense<0.000000e+00> : vector<16x16xf32>
    %980 = tpu.matmul %978, %979, %cst_397 {dimension_numbers = #tpu.dot_dimension_numbers<[1], [0], [0], [1], [0, 0, 1, 1], [], []>} : vector<16x16xf32>, vector<16x16xf32>, vector<16x16xf32> -> vector<16x16xf32>
    %981 = vector.extract_strided_slice %942 {offsets = [32, 0], sizes = [16, 16], strides = [1, 1]} : vector<128x16xf32> to vector<16x16xf32>
    %982 = vector.extract_strided_slice %943 {offsets = [32, 0], sizes = [16, 16], strides = [1, 1]} : vector<128x16xf32> to vector<16x16xf32>
    %cst_398 = arith.constant dense<0.000000e+00> : vector<16x16xf32>
    %983 = tpu.matmul %981, %982, %cst_398 {dimension_numbers = #tpu.dot_dimension_numbers<[1], [1], [0], [0], [0, 0, 1, 0], [], []>} : vector<16x16xf32>, vector<16x16xf32>, vector<16x16xf32> -> vector<16x16xf32>
    %984 = vector.extract_strided_slice %382 {offsets = [2, 0], sizes = [1, 16], strides = [1, 1]} : vector<8x16xf32> to vector<1x16xf32>
    %985 = vector.broadcast %984 : vector<1x16xf32> to vector<16x16xf32>
    %986 = arith.addf %983, %985 : vector<16x16xf32>
    %cst_399 = arith.constant dense<0xFF800000> : vector<16xf32>
    %987 = vector.multi_reduction <maximumf>, %986, %cst_399 [1] : vector<16x16xf32> to vector<16xf32>
    %988 = vector.shape_cast %987 : vector<16xf32> to vector<16x1xf32>
    %989 = vector.broadcast %988 : vector<16x1xf32> to vector<16x16xf32>
    %990 = arith.subf %986, %989 : vector<16x16xf32>
    %991 = math.exp %990 : vector<16x16xf32>
    %cst_400 = arith.constant dense<0.000000e+00> : vector<16xf32>
    %992 = vector.multi_reduction <add>, %991, %cst_400 [1] : vector<16x16xf32> to vector<16xf32>
    %993 = vector.shape_cast %992 : vector<16xf32> to vector<16x1xf32>
    %994 = tpu.reciprocal %993 {approx = true} : vector<16x1xf32> -> vector<16x1xf32>
    %995 = vector.broadcast %994 : vector<16x1xf32> to vector<16x16xf32>
    %996 = arith.mulf %991, %995 : vector<16x16xf32>
    %997 = vector.extract_strided_slice %944 {offsets = [32, 0], sizes = [16, 16], strides = [1, 1]} : vector<128x16xf32> to vector<16x16xf32>
    %cst_401 = arith.constant dense<0.000000e+00> : vector<16x16xf32>
    %998 = tpu.matmul %996, %997, %cst_401 {dimension_numbers = #tpu.dot_dimension_numbers<[1], [0], [0], [1], [0, 0, 1, 1], [], []>} : vector<16x16xf32>, vector<16x16xf32>, vector<16x16xf32> -> vector<16x16xf32>
    %999 = vector.extract_strided_slice %942 {offsets = [48, 0], sizes = [16, 16], strides = [1, 1]} : vector<128x16xf32> to vector<16x16xf32>
    %1000 = vector.extract_strided_slice %943 {offsets = [48, 0], sizes = [16, 16], strides = [1, 1]} : vector<128x16xf32> to vector<16x16xf32>
    %cst_402 = arith.constant dense<0.000000e+00> : vector<16x16xf32>
    %1001 = tpu.matmul %999, %1000, %cst_402 {dimension_numbers = #tpu.dot_dimension_numbers<[1], [1], [0], [0], [0, 0, 1, 0], [], []>} : vector<16x16xf32>, vector<16x16xf32>, vector<16x16xf32> -> vector<16x16xf32>
    %1002 = vector.extract_strided_slice %382 {offsets = [3, 0], sizes = [1, 16], strides = [1, 1]} : vector<8x16xf32> to vector<1x16xf32>
    %1003 = vector.broadcast %1002 : vector<1x16xf32> to vector<16x16xf32>
    %1004 = arith.addf %1001, %1003 : vector<16x16xf32>
    %cst_403 = arith.constant dense<0xFF800000> : vector<16xf32>
    %1005 = vector.multi_reduction <maximumf>, %1004, %cst_403 [1] : vector<16x16xf32> to vector<16xf32>
    %1006 = vector.shape_cast %1005 : vector<16xf32> to vector<16x1xf32>
    %1007 = vector.broadcast %1006 : vector<16x1xf32> to vector<16x16xf32>
    %1008 = arith.subf %1004, %1007 : vector<16x16xf32>
    %1009 = math.exp %1008 : vector<16x16xf32>
    %cst_404 = arith.constant dense<0.000000e+00> : vector<16xf32>
    %1010 = vector.multi_reduction <add>, %1009, %cst_404 [1] : vector<16x16xf32> to vector<16xf32>
    %1011 = vector.shape_cast %1010 : vector<16xf32> to vector<16x1xf32>
    %1012 = tpu.reciprocal %1011 {approx = true} : vector<16x1xf32> -> vector<16x1xf32>
    %1013 = vector.broadcast %1012 : vector<16x1xf32> to vector<16x16xf32>
    %1014 = arith.mulf %1009, %1013 : vector<16x16xf32>
    %1015 = vector.extract_strided_slice %944 {offsets = [48, 0], sizes = [16, 16], strides = [1, 1]} : vector<128x16xf32> to vector<16x16xf32>
    %cst_405 = arith.constant dense<0.000000e+00> : vector<16x16xf32>
    %1016 = tpu.matmul %1014, %1015, %cst_405 {dimension_numbers = #tpu.dot_dimension_numbers<[1], [0], [0], [1], [0, 0, 1, 1], [], []>} : vector<16x16xf32>, vector<16x16xf32>, vector<16x16xf32> -> vector<16x16xf32>
    %1017 = vector.extract_strided_slice %942 {offsets = [64, 0], sizes = [16, 16], strides = [1, 1]} : vector<128x16xf32> to vector<16x16xf32>
    %1018 = vector.extract_strided_slice %943 {offsets = [64, 0], sizes = [16, 16], strides = [1, 1]} : vector<128x16xf32> to vector<16x16xf32>
    %cst_406 = arith.constant dense<0.000000e+00> : vector<16x16xf32>
    %1019 = tpu.matmul %1017, %1018, %cst_406 {dimension_numbers = #tpu.dot_dimension_numbers<[1], [1], [0], [0], [0, 0, 1, 0], [], []>} : vector<16x16xf32>, vector<16x16xf32>, vector<16x16xf32> -> vector<16x16xf32>
    %1020 = vector.extract_strided_slice %382 {offsets = [4, 0], sizes = [1, 16], strides = [1, 1]} : vector<8x16xf32> to vector<1x16xf32>
    %1021 = vector.broadcast %1020 : vector<1x16xf32> to vector<16x16xf32>
    %1022 = arith.addf %1019, %1021 : vector<16x16xf32>
    %cst_407 = arith.constant dense<0xFF800000> : vector<16xf32>
    %1023 = vector.multi_reduction <maximumf>, %1022, %cst_407 [1] : vector<16x16xf32> to vector<16xf32>
    %1024 = vector.shape_cast %1023 : vector<16xf32> to vector<16x1xf32>
    %1025 = vector.broadcast %1024 : vector<16x1xf32> to vector<16x16xf32>
    %1026 = arith.subf %1022, %1025 : vector<16x16xf32>
    %1027 = math.exp %1026 : vector<16x16xf32>
    %cst_408 = arith.constant dense<0.000000e+00> : vector<16xf32>
    %1028 = vector.multi_reduction <add>, %1027, %cst_408 [1] : vector<16x16xf32> to vector<16xf32>
    %1029 = vector.shape_cast %1028 : vector<16xf32> to vector<16x1xf32>
    %1030 = tpu.reciprocal %1029 {approx = true} : vector<16x1xf32> -> vector<16x1xf32>
    %1031 = vector.broadcast %1030 : vector<16x1xf32> to vector<16x16xf32>
    %1032 = arith.mulf %1027, %1031 : vector<16x16xf32>
    %1033 = vector.extract_strided_slice %944 {offsets = [64, 0], sizes = [16, 16], strides = [1, 1]} : vector<128x16xf32> to vector<16x16xf32>
    %cst_409 = arith.constant dense<0.000000e+00> : vector<16x16xf32>
    %1034 = tpu.matmul %1032, %1033, %cst_409 {dimension_numbers = #tpu.dot_dimension_numbers<[1], [0], [0], [1], [0, 0, 1, 1], [], []>} : vector<16x16xf32>, vector<16x16xf32>, vector<16x16xf32> -> vector<16x16xf32>
    %1035 = vector.extract_strided_slice %942 {offsets = [80, 0], sizes = [16, 16], strides = [1, 1]} : vector<128x16xf32> to vector<16x16xf32>
    %1036 = vector.extract_strided_slice %943 {offsets = [80, 0], sizes = [16, 16], strides = [1, 1]} : vector<128x16xf32> to vector<16x16xf32>
    %cst_410 = arith.constant dense<0.000000e+00> : vector<16x16xf32>
    %1037 = tpu.matmul %1035, %1036, %cst_410 {dimension_numbers = #tpu.dot_dimension_numbers<[1], [1], [0], [0], [0, 0, 1, 0], [], []>} : vector<16x16xf32>, vector<16x16xf32>, vector<16x16xf32> -> vector<16x16xf32>
    %1038 = vector.extract_strided_slice %382 {offsets = [5, 0], sizes = [1, 16], strides = [1, 1]} : vector<8x16xf32> to vector<1x16xf32>
    %1039 = vector.broadcast %1038 : vector<1x16xf32> to vector<16x16xf32>
    %1040 = arith.addf %1037, %1039 : vector<16x16xf32>
    %cst_411 = arith.constant dense<0xFF800000> : vector<16xf32>
    %1041 = vector.multi_reduction <maximumf>, %1040, %cst_411 [1] : vector<16x16xf32> to vector<16xf32>
    %1042 = vector.shape_cast %1041 : vector<16xf32> to vector<16x1xf32>
    %1043 = vector.broadcast %1042 : vector<16x1xf32> to vector<16x16xf32>
    %1044 = arith.subf %1040, %1043 : vector<16x16xf32>
    %1045 = math.exp %1044 : vector<16x16xf32>
    %cst_412 = arith.constant dense<0.000000e+00> : vector<16xf32>
    %1046 = vector.multi_reduction <add>, %1045, %cst_412 [1] : vector<16x16xf32> to vector<16xf32>
    %1047 = vector.shape_cast %1046 : vector<16xf32> to vector<16x1xf32>
    %1048 = tpu.reciprocal %1047 {approx = true} : vector<16x1xf32> -> vector<16x1xf32>
    %1049 = vector.broadcast %1048 : vector<16x1xf32> to vector<16x16xf32>
    %1050 = arith.mulf %1045, %1049 : vector<16x16xf32>
    %1051 = vector.extract_strided_slice %944 {offsets = [80, 0], sizes = [16, 16], strides = [1, 1]} : vector<128x16xf32> to vector<16x16xf32>
    %cst_413 = arith.constant dense<0.000000e+00> : vector<16x16xf32>
    %1052 = tpu.matmul %1050, %1051, %cst_413 {dimension_numbers = #tpu.dot_dimension_numbers<[1], [0], [0], [1], [0, 0, 1, 1], [], []>} : vector<16x16xf32>, vector<16x16xf32>, vector<16x16xf32> -> vector<16x16xf32>
    %1053 = vector.extract_strided_slice %942 {offsets = [96, 0], sizes = [16, 16], strides = [1, 1]} : vector<128x16xf32> to vector<16x16xf32>
    %1054 = vector.extract_strided_slice %943 {offsets = [96, 0], sizes = [16, 16], strides = [1, 1]} : vector<128x16xf32> to vector<16x16xf32>
    %cst_414 = arith.constant dense<0.000000e+00> : vector<16x16xf32>
    %1055 = tpu.matmul %1053, %1054, %cst_414 {dimension_numbers = #tpu.dot_dimension_numbers<[1], [1], [0], [0], [0, 0, 1, 0], [], []>} : vector<16x16xf32>, vector<16x16xf32>, vector<16x16xf32> -> vector<16x16xf32>
    %1056 = vector.extract_strided_slice %382 {offsets = [6, 0], sizes = [1, 16], strides = [1, 1]} : vector<8x16xf32> to vector<1x16xf32>
    %1057 = vector.broadcast %1056 : vector<1x16xf32> to vector<16x16xf32>
    %1058 = arith.addf %1055, %1057 : vector<16x16xf32>
    %cst_415 = arith.constant dense<0xFF800000> : vector<16xf32>
    %1059 = vector.multi_reduction <maximumf>, %1058, %cst_415 [1] : vector<16x16xf32> to vector<16xf32>
    %1060 = vector.shape_cast %1059 : vector<16xf32> to vector<16x1xf32>
    %1061 = vector.broadcast %1060 : vector<16x1xf32> to vector<16x16xf32>
    %1062 = arith.subf %1058, %1061 : vector<16x16xf32>
    %1063 = math.exp %1062 : vector<16x16xf32>
    %cst_416 = arith.constant dense<0.000000e+00> : vector<16xf32>
    %1064 = vector.multi_reduction <add>, %1063, %cst_416 [1] : vector<16x16xf32> to vector<16xf32>
    %1065 = vector.shape_cast %1064 : vector<16xf32> to vector<16x1xf32>
    %1066 = tpu.reciprocal %1065 {approx = true} : vector<16x1xf32> -> vector<16x1xf32>
    %1067 = vector.broadcast %1066 : vector<16x1xf32> to vector<16x16xf32>
    %1068 = arith.mulf %1063, %1067 : vector<16x16xf32>
    %1069 = vector.extract_strided_slice %944 {offsets = [96, 0], sizes = [16, 16], strides = [1, 1]} : vector<128x16xf32> to vector<16x16xf32>
    %cst_417 = arith.constant dense<0.000000e+00> : vector<16x16xf32>
    %1070 = tpu.matmul %1068, %1069, %cst_417 {dimension_numbers = #tpu.dot_dimension_numbers<[1], [0], [0], [1], [0, 0, 1, 1], [], []>} : vector<16x16xf32>, vector<16x16xf32>, vector<16x16xf32> -> vector<16x16xf32>
    %1071 = vector.extract_strided_slice %942 {offsets = [112, 0], sizes = [16, 16], strides = [1, 1]} : vector<128x16xf32> to vector<16x16xf32>
    %1072 = vector.extract_strided_slice %943 {offsets = [112, 0], sizes = [16, 16], strides = [1, 1]} : vector<128x16xf32> to vector<16x16xf32>
    %cst_418 = arith.constant dense<0.000000e+00> : vector<16x16xf32>
    %1073 = tpu.matmul %1071, %1072, %cst_418 {dimension_numbers = #tpu.dot_dimension_numbers<[1], [1], [0], [0], [0, 0, 1, 0], [], []>} : vector<16x16xf32>, vector<16x16xf32>, vector<16x16xf32> -> vector<16x16xf32>
    %1074 = vector.extract_strided_slice %382 {offsets = [7, 0], sizes = [1, 16], strides = [1, 1]} : vector<8x16xf32> to vector<1x16xf32>
    %1075 = vector.broadcast %1074 : vector<1x16xf32> to vector<16x16xf32>
    %1076 = arith.addf %1073, %1075 : vector<16x16xf32>
    %cst_419 = arith.constant dense<0xFF800000> : vector<16xf32>
    %1077 = vector.multi_reduction <maximumf>, %1076, %cst_419 [1] : vector<16x16xf32> to vector<16xf32>
    %1078 = vector.shape_cast %1077 : vector<16xf32> to vector<16x1xf32>
    %1079 = vector.broadcast %1078 : vector<16x1xf32> to vector<16x16xf32>
    %1080 = arith.subf %1076, %1079 : vector<16x16xf32>
    %1081 = math.exp %1080 : vector<16x16xf32>
    %cst_420 = arith.constant dense<0.000000e+00> : vector<16xf32>
    %1082 = vector.multi_reduction <add>, %1081, %cst_420 [1] : vector<16x16xf32> to vector<16xf32>
    %1083 = vector.shape_cast %1082 : vector<16xf32> to vector<16x1xf32>
    %1084 = tpu.reciprocal %1083 {approx = true} : vector<16x1xf32> -> vector<16x1xf32>
    %1085 = vector.broadcast %1084 : vector<16x1xf32> to vector<16x16xf32>
    %1086 = arith.mulf %1081, %1085 : vector<16x16xf32>
    %1087 = vector.extract_strided_slice %944 {offsets = [112, 0], sizes = [16, 16], strides = [1, 1]} : vector<128x16xf32> to vector<16x16xf32>
    %cst_421 = arith.constant dense<0.000000e+00> : vector<16x16xf32>
    %1088 = tpu.matmul %1086, %1087, %cst_421 {dimension_numbers = #tpu.dot_dimension_numbers<[1], [0], [0], [1], [0, 0, 1, 1], [], []>} : vector<16x16xf32>, vector<16x16xf32>, vector<16x16xf32> -> vector<16x16xf32>
    %1089 = tpu.concatenate %962, %980, %998, %1016, %1034, %1052, %1070, %1088 in 0 : vector<16x16xf32>, vector<16x16xf32>, vector<16x16xf32>, vector<16x16xf32>, vector<16x16xf32>, vector<16x16xf32>, vector<16x16xf32>, vector<16x16xf32> -> vector<128x16xf32>
    %1090 = arith.truncf %1089 : vector<128x16xf32> to vector<128x16xbf16>
    %c1_422 = arith.constant 1 : index
    %c16_423 = arith.constant 16 : index
    %c0_424 = arith.constant 0 : index
    %1091 = vector.load %arg5[%c1_422, %c16_423, %c0_424] : memref<2x32x32xbf16, #tpu.memory_space<vmem>>, vector<1x16x32xbf16>
    %1092 = vector.shape_cast %1091 : vector<1x16x32xbf16> to vector<16x32xbf16>
    %cst_425 = arith.constant dense<0.000000e+00> : vector<128x32xf32>
    %1093 = tpu.matmul %1090, %1092, %cst_425 {dimension_numbers = #tpu.dot_dimension_numbers<[1], [0], [0], [1], [0, 0, 1, 1], [], []>} : vector<128x16xbf16>, vector<16x32xbf16>, vector<128x32xf32> -> vector<128x32xf32>
    %1094 = arith.addf %939, %1093 : vector<128x32xf32>
    %c8_426 = arith.constant 8 : index
    %c0_427 = arith.constant 0 : index
    %1095 = vector.load %arg9[%c8_426, %c0_427] : memref<14x32xf32, #tpu.memory_space<vmem>>, vector<1x32xf32>
    %c9_428 = arith.constant 9 : index
    %c0_429 = arith.constant 0 : index
    %1096 = vector.load %arg9[%c9_428, %c0_429] : memref<14x32xf32, #tpu.memory_space<vmem>>, vector<1x32xf32>
    %c10_430 = arith.constant 10 : index
    %c0_431 = arith.constant 0 : index
    %1097 = vector.load %arg9[%c10_430, %c0_431] : memref<14x32xf32, #tpu.memory_space<vmem>>, vector<1x32xf32>
    %c11_432 = arith.constant 11 : index
    %c0_433 = arith.constant 0 : index
    %1098 = vector.load %arg9[%c11_432, %c0_433] : memref<14x32xf32, #tpu.memory_space<vmem>>, vector<1x32xf32>
    %c12 = arith.constant 12 : index
    %c0_434 = arith.constant 0 : index
    %1099 = vector.load %arg9[%c12, %c0_434] : memref<14x32xf32, #tpu.memory_space<vmem>>, vector<1x32xf32>
    %c13 = arith.constant 13 : index
    %c0_435 = arith.constant 0 : index
    %1100 = vector.load %arg9[%c13, %c0_435] : memref<14x32xf32, #tpu.memory_space<vmem>>, vector<1x32xf32>
    %1101 = arith.addf %776, %1094 : vector<128x32xf32>
    %1102 = vector.broadcast %1095 : vector<1x32xf32> to vector<128x32xf32>
    %1103 = arith.addf %1101, %1102 : vector<128x32xf32>
    %cst_436 = arith.constant dense<0.000000e+00> : vector<128xf32>
    %1104 = vector.multi_reduction <add>, %1103, %cst_436 [1] : vector<128x32xf32> to vector<128xf32>
    %1105 = vector.shape_cast %1104 : vector<128xf32> to vector<128x1xf32>
    %cst_437 = arith.constant 3.200000e+01 : f32
    %1106 = vector.broadcast %cst_437 : f32 to vector<128x1xf32>
    %1107 = arith.divf %1105, %1106 : vector<128x1xf32>
    %1108 = vector.broadcast %1107 : vector<128x1xf32> to vector<128x32xf32>
    %1109 = arith.subf %1103, %1108 : vector<128x32xf32>
    %1110 = arith.mulf %1109, %1109 : vector<128x32xf32>
    %cst_438 = arith.constant dense<0.000000e+00> : vector<128xf32>
    %1111 = vector.multi_reduction <add>, %1110, %cst_438 [1] : vector<128x32xf32> to vector<128xf32>
    %1112 = vector.shape_cast %1111 : vector<128xf32> to vector<128x1xf32>
    %cst_439 = arith.constant 3.200000e+01 : f32
    %1113 = vector.broadcast %cst_439 : f32 to vector<128x1xf32>
    %1114 = arith.divf %1112, %1113 : vector<128x1xf32>
    %cst_440 = arith.constant 9.99999996E-13 : f32
    %1115 = vector.broadcast %cst_440 : f32 to vector<128x1xf32>
    %1116 = arith.addf %1114, %1115 : vector<128x1xf32>
    %1117 = math.rsqrt %1116 : vector<128x1xf32>
    %1118 = vector.broadcast %1117 : vector<128x1xf32> to vector<128x32xf32>
    %1119 = arith.mulf %1109, %1118 : vector<128x32xf32>
    %1120 = vector.broadcast %1096 : vector<1x32xf32> to vector<128x32xf32>
    %1121 = arith.mulf %1119, %1120 : vector<128x32xf32>
    %1122 = vector.broadcast %1097 : vector<1x32xf32> to vector<128x32xf32>
    %1123 = arith.addf %1121, %1122 : vector<128x32xf32>
    %1124 = arith.truncf %1123 : vector<128x32xf32> to vector<128x32xbf16>
    %c1_441 = arith.constant 1 : index
    %c0_442 = arith.constant 0 : index
    %c0_443 = arith.constant 0 : index
    %1125 = vector.load %arg6[%c1_441, %c0_442, %c0_443] : memref<2x32x64xbf16, #tpu.memory_space<vmem>>, vector<1x32x64xbf16>
    %1126 = vector.shape_cast %1125 : vector<1x32x64xbf16> to vector<32x64xbf16>
    %cst_444 = arith.constant dense<0.000000e+00> : vector<128x64xf32>
    %1127 = tpu.matmul %1124, %1126, %cst_444 {dimension_numbers = #tpu.dot_dimension_numbers<[1], [0], [0], [1], [0, 0, 1, 1], [], []>} : vector<128x32xbf16>, vector<32x64xbf16>, vector<128x64xf32> -> vector<128x64xf32>
    %c3_445 = arith.constant 3 : index
    %c0_446 = arith.constant 0 : index
    %1128 = vector.load %arg10[%c3_445, %c0_446] : memref<5x128xf32, #tpu.memory_space<vmem>>, vector<1x64xf32>
    %1129 = vector.broadcast %1128 : vector<1x64xf32> to vector<128x64xf32>
    %1130 = arith.addf %1127, %1129 : vector<128x64xf32>
    %cst_447 = arith.constant 5.000000e-01 : f32
    %1131 = vector.broadcast %cst_447 : f32 to vector<128x64xf32>
    %1132 = arith.mulf %1131, %1130 : vector<128x64xf32>
    %cst_448 = arith.constant 4.471500e-02 : f32
    %1133 = vector.broadcast %cst_448 : f32 to vector<128x64xf32>
    %1134 = arith.mulf %1133, %1130 : vector<128x64xf32>
    %1135 = arith.mulf %1134, %1130 : vector<128x64xf32>
    %1136 = arith.mulf %1135, %1130 : vector<128x64xf32>
    %1137 = arith.addf %1130, %1136 : vector<128x64xf32>
    %cst_449 = arith.constant 0.797884583 : f32
    %1138 = vector.broadcast %cst_449 : f32 to vector<128x64xf32>
    %1139 = arith.mulf %1138, %1137 : vector<128x64xf32>
    %1140 = math.tanh %1139 : vector<128x64xf32>
    %cst_450 = arith.constant 1.000000e+00 : f32
    %1141 = vector.broadcast %cst_450 : f32 to vector<128x64xf32>
    %1142 = arith.addf %1141, %1140 : vector<128x64xf32>
    %1143 = arith.mulf %1132, %1142 : vector<128x64xf32>
    %1144 = arith.truncf %1143 : vector<128x64xf32> to vector<128x64xbf16>
    %c1_451 = arith.constant 1 : index
    %c0_452 = arith.constant 0 : index
    %c0_453 = arith.constant 0 : index
    %1145 = vector.load %arg7[%c1_451, %c0_452, %c0_453] : memref<2x64x32xbf16, #tpu.memory_space<vmem>>, vector<1x64x32xbf16>
    %1146 = vector.shape_cast %1145 : vector<1x64x32xbf16> to vector<64x32xbf16>
    %cst_454 = arith.constant dense<0.000000e+00> : vector<128x32xf32>
    %1147 = tpu.matmul %1144, %1146, %cst_454 {dimension_numbers = #tpu.dot_dimension_numbers<[1], [0], [0], [1], [0, 0, 1, 1], [], []>} : vector<128x64xbf16>, vector<64x32xbf16>, vector<128x32xf32> -> vector<128x32xf32>
    %1148 = vector.broadcast %1098 : vector<1x32xf32> to vector<128x32xf32>
    %1149 = arith.addf %1147, %1148 : vector<128x32xf32>
    %1150 = arith.addf %1123, %1149 : vector<128x32xf32>
    %cst_455 = arith.constant dense<0.000000e+00> : vector<128xf32>
    %1151 = vector.multi_reduction <add>, %1150, %cst_455 [1] : vector<128x32xf32> to vector<128xf32>
    %1152 = vector.shape_cast %1151 : vector<128xf32> to vector<128x1xf32>
    %cst_456 = arith.constant 3.200000e+01 : f32
    %1153 = vector.broadcast %cst_456 : f32 to vector<128x1xf32>
    %1154 = arith.divf %1152, %1153 : vector<128x1xf32>
    %1155 = vector.broadcast %1154 : vector<128x1xf32> to vector<128x32xf32>
    %1156 = arith.subf %1150, %1155 : vector<128x32xf32>
    %1157 = arith.mulf %1156, %1156 : vector<128x32xf32>
    %cst_457 = arith.constant dense<0.000000e+00> : vector<128xf32>
    %1158 = vector.multi_reduction <add>, %1157, %cst_457 [1] : vector<128x32xf32> to vector<128xf32>
    %1159 = vector.shape_cast %1158 : vector<128xf32> to vector<128x1xf32>
    %cst_458 = arith.constant 3.200000e+01 : f32
    %1160 = vector.broadcast %cst_458 : f32 to vector<128x1xf32>
    %1161 = arith.divf %1159, %1160 : vector<128x1xf32>
    %cst_459 = arith.constant 9.99999996E-13 : f32
    %1162 = vector.broadcast %cst_459 : f32 to vector<128x1xf32>
    %1163 = arith.addf %1161, %1162 : vector<128x1xf32>
    %1164 = math.rsqrt %1163 : vector<128x1xf32>
    %1165 = vector.broadcast %1164 : vector<128x1xf32> to vector<128x32xf32>
    %1166 = arith.mulf %1156, %1165 : vector<128x32xf32>
    %1167 = vector.broadcast %1099 : vector<1x32xf32> to vector<128x32xf32>
    %1168 = arith.mulf %1166, %1167 : vector<128x32xf32>
    %1169 = vector.broadcast %1100 : vector<1x32xf32> to vector<128x32xf32>
    %1170 = arith.addf %1168, %1169 : vector<128x32xf32>
    %1171 = vector.extract_strided_slice %1170 {offsets = [0, 0], sizes = [1, 32], strides = [1, 1]} : vector<128x32xf32> to vector<1x32xf32>
    %1172 = vector.extract_strided_slice %1170 {offsets = [16, 0], sizes = [1, 32], strides = [1, 1]} : vector<128x32xf32> to vector<1x32xf32>
    %1173 = vector.extract_strided_slice %1170 {offsets = [32, 0], sizes = [1, 32], strides = [1, 1]} : vector<128x32xf32> to vector<1x32xf32>
    %1174 = vector.extract_strided_slice %1170 {offsets = [48, 0], sizes = [1, 32], strides = [1, 1]} : vector<128x32xf32> to vector<1x32xf32>
    %1175 = vector.extract_strided_slice %1170 {offsets = [64, 0], sizes = [1, 32], strides = [1, 1]} : vector<128x32xf32> to vector<1x32xf32>
    %1176 = vector.extract_strided_slice %1170 {offsets = [80, 0], sizes = [1, 32], strides = [1, 1]} : vector<128x32xf32> to vector<1x32xf32>
    %1177 = vector.extract_strided_slice %1170 {offsets = [96, 0], sizes = [1, 32], strides = [1, 1]} : vector<128x32xf32> to vector<1x32xf32>
    %1178 = vector.extract_strided_slice %1170 {offsets = [112, 0], sizes = [1, 32], strides = [1, 1]} : vector<128x32xf32> to vector<1x32xf32>
    %1179 = tpu.concatenate %1171, %1172, %1173, %1174, %1175, %1176, %1177, %1178 in 0 : vector<1x32xf32>, vector<1x32xf32>, vector<1x32xf32>, vector<1x32xf32>, vector<1x32xf32>, vector<1x32xf32>, vector<1x32xf32>, vector<1x32xf32> -> vector<8x32xf32>
    %1180 = arith.truncf %1179 : vector<8x32xf32> to vector<8x32xbf16>
    %c0_460 = arith.constant 0 : index
    %c0_461 = arith.constant 0 : index
    %1181 = vector.load %arg8[%c0_460, %c0_461] : memref<32x128xbf16, #tpu.memory_space<vmem>>, vector<32x128xbf16>
    %cst_462 = arith.constant dense<0.000000e+00> : vector<8x128xf32>
    %1182 = tpu.matmul %1180, %1181, %cst_462 {dimension_numbers = #tpu.dot_dimension_numbers<[1], [0], [0], [1], [0, 0, 1, 1], [], []>} : vector<8x32xbf16>, vector<32x128xbf16>, vector<8x128xf32> -> vector<8x128xf32>
    %c4_463 = arith.constant 4 : index
    %c0_464 = arith.constant 0 : index
    %1183 = vector.load %arg10[%c4_463, %c0_464] : memref<5x128xf32, #tpu.memory_space<vmem>>, vector<1x128xf32>
    %1184 = vector.broadcast %1183 : vector<1x128xf32> to vector<8x128xf32>
    %1185 = arith.addf %1182, %1184 : vector<8x128xf32>
    %c0_465 = arith.constant 0 : index
    %c0_466 = arith.constant 0 : index
    %c0_467 = arith.constant 0 : index
    %1186 = vector.load %arg11[%c0_465, %c0_466, %c0_467] : memref<1x8x128xf32, #tpu.memory_space<vmem>>, vector<1x8x128xf32>
    %1187 = vector.shape_cast %1186 : vector<1x8x128xf32> to vector<8x128xf32>
    %1188 = vector.shape_cast %1185 : vector<8x128xf32> to vector<1x8x128xf32>
    tpu.vector_store %arg11[%c0_465, %c0_466, %c0_467], %1188 {strides = array<i32>} : memref<1x8x128xf32, #tpu.memory_space<vmem>>, vector<1x8x128xf32>,
    return
  }
  func.func @transform_0(%arg0: i32, %arg1: memref<8x8xi32, #tpu.memory_space<smem>>) -> (i32, i32, i32) {
    %c0_i32 = arith.constant 0 : i32
    %c0_i32_0 = arith.constant 0 : i32
    %c0_i32_1 = arith.constant 0 : i32
    return %arg0, %c0_i32, %c0_i32_0 : i32, i32, i32
  }
  func.func @transform_1(%arg0: i32, %arg1: memref<8x8xi32, #tpu.memory_space<smem>>) -> (i32, i32) {
    %c0_i32 = arith.constant 0 : i32
    %c0_i32_0 = arith.constant 0 : i32
    %c0_i32_1 = arith.constant 0 : i32
    return %c0_i32, %c0_i32_0 : i32, i32
  }
  func.func @transform_2(%arg0: i32, %arg1: memref<8x8xi32, #tpu.memory_space<smem>>) -> (i32, i32, i32) {
    %c0_i32 = arith.constant 0 : i32
    %c0_i32_0 = arith.constant 0 : i32
    %c0_i32_1 = arith.constant 0 : i32
    %c0_i32_2 = arith.constant 0 : i32
    return %c0_i32, %c0_i32_0, %c0_i32_1 : i32, i32, i32
  }
  func.func @transform_3(%arg0: i32, %arg1: memref<8x8xi32, #tpu.memory_space<smem>>) -> (i32, i32, i32) {
    %c0_i32 = arith.constant 0 : i32
    %c0_i32_0 = arith.constant 0 : i32
    %c0_i32_1 = arith.constant 0 : i32
    %c0_i32_2 = arith.constant 0 : i32
    return %c0_i32, %c0_i32_0, %c0_i32_1 : i32, i32, i32
  }
  func.func @transform_4(%arg0: i32, %arg1: memref<8x8xi32, #tpu.memory_space<smem>>) -> (i32, i32, i32) {
    %c0_i32 = arith.constant 0 : i32
    %c0_i32_0 = arith.constant 0 : i32
    %c0_i32_1 = arith.constant 0 : i32
    %c0_i32_2 = arith.constant 0 : i32
    return %c0_i32, %c0_i32_0, %c0_i32_1 : i32, i32, i32
  }
  func.func @transform_5(%arg0: i32, %arg1: memref<8x8xi32, #tpu.memory_space<smem>>) -> (i32, i32, i32) {
    %c0_i32 = arith.constant 0 : i32
    %c0_i32_0 = arith.constant 0 : i32
    %c0_i32_1 = arith.constant 0 : i32
    %c0_i32_2 = arith.constant 0 : i32
    return %c0_i32, %c0_i32_0, %c0_i32_1 : i32, i32, i32
  }
  func.func @transform_6(%arg0: i32, %arg1: memref<8x8xi32, #tpu.memory_space<smem>>) -> (i32, i32) {
    %c0_i32 = arith.constant 0 : i32
    %c0_i32_0 = arith.constant 0 : i32
    %c0_i32_1 = arith.constant 0 : i32
    return %c0_i32, %c0_i32_0 : i32, i32
  }
  func.func @transform_7(%arg0: i32, %arg1: memref<8x8xi32, #tpu.memory_space<smem>>) -> (i32, i32) {
    %c0_i32 = arith.constant 0 : i32
    %c0_i32_0 = arith.constant 0 : i32
    %c0_i32_1 = arith.constant 0 : i32
    return %c0_i32, %c0_i32_0 : i32, i32
  }
  func.func @transform_8(%arg0: i32, %arg1: memref<8x8xi32, #tpu.memory_space<smem>>) -> (i32, i32) {
    %c0_i32 = arith.constant 0 : i32
    %c0_i32_0 = arith.constant 0 : i32
    %c0_i32_1 = arith.constant 0 : i32
    return %c0_i32, %c0_i32_0 : i32, i32
  }
  func.func @transform_9(%arg0: i32, %arg1: memref<8x8xi32, #tpu.memory_space<smem>>) -> (i32, i32, i32) {
    %c0_i32 = arith.constant 0 : i32
    %c0_i32_0 = arith.constant 0 : i32
    %c0_i32_1 = arith.constant 0 : i32
    return %arg0, %c0_i32, %c0_i32_0 : i32, i32, i32
  }
}

</mosaic_0001>

<llo_original>
// kernel: _lambda_.1
$region0: #{_lambda_.1}
  #allocation0 [shape = 'u32[]', space=smem, size = 0x4, offset = 0x4, fixed_abs, tag = 'smem constant byte address 0x4 - core index']
  #allocation1 [shape = 'u32[72,128]{1,0:T(1,128)}', space=vmem, size = 0x9000, scoped, tag = 'internal scratch']
  #allocation2 [shape = 'f32[128,32]{1,0:T(8,128)}', space=vmem, size = 0x10000, scoped, tag = 'scratch operand']
  #allocation3 [shape = 's32[1]{0}', space=sflag, size = 0x4, scoped, tag = 'scoped memory for _lambda_.1']
  #allocation4 [shape = 'u8[4096]{0}', space=smem, size = 0x1000, scoped, tag = 'prefetched SMEM operand 0']
  %s0 = inlined_call_operand.hbm [shape: s32[8,8], index: 0, kind: input, shape index: {}]
  %s1 = inlined_call_operand.hbm [shape: f32[1,8,8], index: 1, kind: input, shape index: {}]
  %s2 = inlined_call_operand.hbm [shape: f32[118,32], index: 2, kind: input, shape index: {}]
  %s3 = inlined_call_operand.hbm [shape: bf16[2,32,96], index: 3, kind: input, shape index: {}]
  %s4 = inlined_call_operand.hbm [shape: bf16[2,32,32], index: 4, kind: input, shape index: {}]
  %s5 = inlined_call_operand.hbm [shape: bf16[2,32,64], index: 5, kind: input, shape index: {}]
  %s6 = inlined_call_operand.hbm [shape: bf16[2,64,32], index: 6, kind: input, shape index: {}]
  %s7 = inlined_call_operand.hbm [shape: bf16[32,128], index: 7, kind: input, shape index: {}]
  %s8 = inlined_call_operand.vmem [shape: f32[14,32], index: 8, kind: input, shape index: {}]
  %s9 = inlined_call_operand.vmem [shape: f32[5,128], index: 9, kind: input, shape index: {}]
  %s10 = inlined_call_operand.vmem [shape: f32[1,8,128], index: 10, kind: output, shape index: {}]
  %s11 = sld [smem:[#allocation0]]
  $region74: #{_lambda_.1} parent=0
    _
  %s13 = ssub.s32 1, %s11
  %s14 = scalar_select 0, %s13, %s11
  %s16 = sshll.u32 %s0, 4
  %s17 = int_to_ptr.hbm [resolvable:$true] %s16
  %19 = dma.hbm_to_smem %s17, 128, [#allocation4], [#allocation3]
  %21 = dma.done [#allocation3], 128
  %22 = sfence
  $region1: #{_lambda_.1} parent=0
    #allocation5 [shape = 'u8[4096]{0}', space=vmem, size = 0x1000, scoped, tag = 'input window, operand 1, single buffered']
    #allocation6 [shape = 's32[1]{0}', space=sflag, size = 0x4, scoped, tag = 'scoped memory for _lambda_.1']
    #allocation7 [shape = 'u8[61440]{0}', space=vmem, size = 0xf000, scoped, tag = 'input window, operand 2, single buffered']
    #allocation8 [shape = 's32[1]{0}', space=sflag, size = 0x4, scoped, tag = 'scoped memory for _lambda_.1']
    #allocation9 [shape = 'u8[16384]{0}', space=vmem, size = 0x4000, scoped, tag = 'input window, operand 3, single buffered']
    #allocation10 [shape = 'u8[16384]{0}', space=vmem, size = 0x4000, scoped, tag = 'input window, operand 4, single buffered']
    #allocation11 [shape = 's32[1]{0}', space=sflag, size = 0x4, scoped, tag = 'scoped memory for _lambda_.1']
    #allocation12 [shape = 'u8[16384]{0}', space=vmem, size = 0x4000, scoped, tag = 'input window, operand 5, single buffered']
    #allocation13 [shape = 'u8[32768]{0}', space=vmem, size = 0x8000, scoped, tag = 'input window, operand 6, single buffered']
    #allocation14 [shape = 's32[1]{0}', space=sflag, size = 0x4, scoped, tag = 'scoped memory for _lambda_.1']
    #allocation15 [shape = 'u8[8192]{0}', space=vmem, size = 0x2000, scoped, tag = 'input window, operand 7, single buffered']
    %23 = vsyncpa [#allocation6], 0
    %24 = vsyncpa [#allocation8], 0
    %25 = vsyncpa [#allocation11], 0
    %26 = vsyncpa [#allocation14], 0
    // Predicated region
    $region2: #{_lambda_.1} parent=1 // pred_check
      _
    $region3: #{_lambda_.1} parent=1 // pred_check_branch
      %28 = sbr.rel (0) target = $region5
    $region4: #{_lambda_.1} parent=1 // pred_region
      %30 = vsyncadd [#allocation6], 0
      %s32 = sshll.u32 %s1, 4
      %s33 = int_to_ptr.hbm [resolvable:$true] %s32
      %s34 = sshll.u32 [#allocation5], 4
      %s35 = int_to_ptr.vmem [resolvable:$true] %s34
      %37 = dma.hbm_to_vmem [thread:$0]  %s33, 128, %s35, [#allocation6]
    $region5: #{_lambda_.1} parent=1 // pred_fallthru
      _
    // Predicated region
    $region6: #{_lambda_.1} parent=1 // pred_check
      _
    $region7: #{_lambda_.1} parent=1 // pred_check_branch
      %39 = sbr.rel (0) target = $region9
    $region8: #{_lambda_.1} parent=1 // pred_region
      %41 = vsyncadd [#allocation8], 0
      %s42 = sshll.u32 %s2, 4
      %s43 = int_to_ptr.hbm [resolvable:$true] %s42
      %s44 = sshll.u32 [#allocation7], 4
      %s45 = int_to_ptr.vmem [resolvable:$true] %s44
      %50 = dma.hbm_to_vmem [thread:$0]  %s43, 1920, %s45, [#allocation8], 128, 128, 8
    $region9: #{_lambda_.1} parent=1 // pred_fallthru
      _
    // Predicated region
    $region10: #{_lambda_.1} parent=1 // pred_check
      _
    $region11: #{_lambda_.1} parent=1 // pred_check_branch
      %52 = sbr.rel (0) target = $region13
    $region12: #{_lambda_.1} parent=1 // pred_region
      %54 = vsyncadd [#allocation8], 0
      %s55 = sshll.u32 %s3, 4
      %s56 = int_to_ptr.hbm [resolvable:$true] %s55
      %s57 = sshll.u32 [#allocation9], 4
      %s58 = int_to_ptr.vmem [resolvable:$true] %s57
      %63 = dma.hbm_to_vmem [thread:$0]  %s56, 512, %s58, [#allocation8], 64, 64, 4
    $region13: #{_lambda_.1} parent=1 // pred_fallthru
      _
    // Predicated region
    $region14: #{_lambda_.1} parent=1 // pred_check
      _
    $region15: #{_lambda_.1} parent=1 // pred_check_branch
      %65 = sbr.rel (0) target = $region17
    $region16: #{_lambda_.1} parent=1 // pred_region
      %67 = vsyncadd [#allocation11], 0
      %s68 = sshll.u32 %s4, 4
      %s69 = int_to_ptr.hbm [resolvable:$true] %s68
      %s70 = sshll.u32 [#allocation10], 4
      %s71 = int_to_ptr.vmem [resolvable:$true] %s70
      %76 = dma.hbm_to_vmem [thread:$0]  %s69, 512, %s71, [#allocation11], 64, 64, 4
    $region17: #{_lambda_.1} parent=1 // pred_fallthru
      _
    // Predicated region
    $region18: #{_lambda_.1} parent=1 // pred_check
      _
    $region19: #{_lambda_.1} parent=1 // pred_check_branch
      %78 = sbr.rel (0) target = $region21
    $region20: #{_lambda_.1} parent=1 // pred_region
      %80 = vsyncadd [#allocation11], 0
      %s81 = sshll.u32 %s5, 4
      %s82 = int_to_ptr.hbm [resolvable:$true] %s81
      %s83 = sshll.u32 [#allocation12], 4
      %s84 = int_to_ptr.vmem [resolvable:$true] %s83
      %89 = dma.hbm_to_vmem [thread:$0]  %s82, 512, %s84, [#allocation11], 64, 64, 4
    $region21: #{_lambda_.1} parent=1 // pred_fallthru
      _
    // Predicated region
    $region22: #{_lambda_.1} parent=1 // pred_check
      _
    $region23: #{_lambda_.1} parent=1 // pred_check_branch
      %91 = sbr.rel (0) target = $region25
    $region24: #{_lambda_.1} parent=1 // pred_region
      %93 = vsyncadd [#allocation14], 0
      %s94 = sshll.u32 %s6, 4
      %s95 = int_to_ptr.hbm [resolvable:$true] %s94
      %s96 = sshll.u32 [#allocation13], 4
      %s97 = int_to_ptr.vmem [resolvable:$true] %s96
      %102 = dma.hbm_to_vmem [thread:$0]  %s95, 1024, %s97, [#allocation14], 64, 64, 4
    $region25: #{_lambda_.1} parent=1 // pred_fallthru
      _
    // Predicated region
    $region26: #{_lambda_.1} parent=1 // pred_check
      _
    $region27: #{_lambda_.1} parent=1 // pred_check_branch
      %104 = sbr.rel (0) target = $region29
    $region28: #{_lambda_.1} parent=1 // pred_region
      %106 = vsyncadd [#allocation14], 0
      %s107 = sshll.u32 %s7, 4
      %s108 = int_to_ptr.hbm [resolvable:$true] %s107
      %s109 = sshll.u32 [#allocation15], 4
      %s110 = int_to_ptr.vmem [resolvable:$true] %s109
      %115 = dma.hbm_to_vmem [thread:$0]  %s108, 256, %s110, [#allocation14], 64, 64, 4
    $region29: #{_lambda_.1} parent=1 // pred_fallthru
      _
    // Predicated region
    $region30: #{_lambda_.1} parent=1 // pred_check
      _
    $region31: #{_lambda_.1} parent=1 // pred_check_branch
      %117 = sbr.rel (0) target = $region33
    $region32: #{_lambda_.1} parent=1 // pred_region
      _
    $region33: #{_lambda_.1} parent=1 // pred_fallthru
      _
    // Predicated region
    $region34: #{_lambda_.1} parent=1 // pred_check
      _
    $region35: #{_lambda_.1} parent=1 // pred_check_branch
      %119 = sbr.rel (0) target = $region37
    $region36: #{_lambda_.1} parent=1 // pred_region
      _
    $region37: #{_lambda_.1} parent=1 // pred_fallthru
      _
    // Predicated region
    $region38: #{_lambda_.1} parent=1 // pred_check
      _
    $region39: #{_lambda_.1} parent=1 // pred_check_branch
      %121 = sbr.rel (0) target = $region41
    $region40: #{_lambda_.1} parent=1 // pred_region
      %123 = dma.done [#allocation6], 128
    $region41: #{_lambda_.1} parent=1 // pred_fallthru
      _
    // Predicated region
    $region42: #{_lambda_.1} parent=1 // pred_check
      _
    $region43: #{_lambda_.1} parent=1 // pred_check_branch
      %125 = sbr.rel (0) target = $region45
    $region44: #{_lambda_.1} parent=1 // pred_region
      %127 = dma.done [#allocation8], 1920
    $region45: #{_lambda_.1} parent=1 // pred_fallthru
      _
    // Predicated region
    $region46: #{_lambda_.1} parent=1 // pred_check
      _
    $region47: #{_lambda_.1} parent=1 // pred_check_branch
      %129 = sbr.rel (0) target = $region49
    $region48: #{_lambda_.1} parent=1 // pred_region
      %131 = dma.done [#allocation8], 512
    $region49: #{_lambda_.1} parent=1 // pred_fallthru
      _
    // Predicated region
    $region50: #{_lambda_.1} parent=1 // pred_check
      _
    $region51: #{_lambda_.1} parent=1 // pred_check_branch
      %133 = sbr.rel (0) target = $region53
    $region52: #{_lambda_.1} parent=1 // pred_region
      %135 = dma.done [#allocation11], 512
    $region53: #{_lambda_.1} parent=1 // pred_fallthru
      _
    // Predicated region
    $region54: #{_lambda_.1} parent=1 // pred_check
      _
    $region55: #{_lambda_.1} parent=1 // pred_check_branch
      %137 = sbr.rel (0) target = $region57
    $region56: #{_lambda_.1} parent=1 // pred_region
      %139 = dma.done [#allocation11], 512
    $region57: #{_lambda_.1} parent=1 // pred_fallthru
      _
    // Predicated region
    $region58: #{_lambda_.1} parent=1 // pred_check
      _
    $region59: #{_lambda_.1} parent=1 // pred_check_branch
      %141 = sbr.rel (0) target = $region61
    $region60: #{_lambda_.1} parent=1 // pred_region
      %143 = dma.done [#allocation14], 1024
    $region61: #{_lambda_.1} parent=1 // pred_fallthru
      _
    // Predicated region
    $region62: #{_lambda_.1} parent=1 // pred_check
      _
    $region63: #{_lambda_.1} parent=1 // pred_check_branch
      %145 = sbr.rel (0) target = $region65
    $region64: #{_lambda_.1} parent=1 // pred_region
      %147 = dma.done [#allocation14], 256
    $region65: #{_lambda_.1} parent=1 // pred_fallthru
      _
    %vm149 = vcmask 261120
    %150 = vst.msk [vmem:[#allocation2] sm:$0xff] %vm149, 0.0
    %151 = vst.msk [vmem:[#allocation2 + $0x8] sm:$0xff] %vm149, 0.0
    %152 = vst.msk [vmem:[#allocation2 + $0x10] sm:$0xff] %vm149, 0.0
    %153 = vst.msk [vmem:[#allocation2 + $0x18] sm:$0xff] %vm149, 0.0
    %154 = vst.msk [vmem:[#allocation2 + $0x20] sm:$0xff] %vm149, 0.0
    %155 = vst.msk [vmem:[#allocation2 + $0x28] sm:$0xff] %vm149, 0.0
    %156 = vst.msk [vmem:[#allocation2 + $0x30] sm:$0xff] %vm149, 0.0
    %157 = vst.msk [vmem:[#allocation2 + $0x38] sm:$0xff] %vm149, 0.0
    %158 = vst.msk [vmem:[#allocation2 + $0x40] sm:$0xff] %vm149, 0.0
    %159 = vst.msk [vmem:[#allocation2 + $0x48] sm:$0xff] %vm149, 0.0
    %160 = vst.msk [vmem:[#allocation2 + $0x50] sm:$0xff] %vm149, 0.0
    %161 = vst.msk [vmem:[#allocation2 + $0x58] sm:$0xff] %vm149, 0.0
    %162 = vst.msk [vmem:[#allocation2 + $0x60] sm:$0xff] %vm149, 0.0
    %163 = vst.msk [vmem:[#allocation2 + $0x68] sm:$0xff] %vm149, 0.0
    %164 = vst.msk [vmem:[#allocation2 + $0x70] sm:$0xff] %vm149, 0.0
    %165 = vst.msk [vmem:[#allocation2 + $0x78] sm:$0xff] %vm149, 0.0
    %v166 = vld [vmem:[#allocation7 + $0x32] sm:$0xf]
    %vm167 = vcmask 257024
    %168 = vst.msk [vmem:[#allocation2] sm:$0xf] %vm167, %v166
    %s169 = smul.u32 0, 8
    %s170 = smul.u32 %s169, 128
    %s171 = sld [smem:[#allocation4 + %s170]]
    %s172 = scalar_lea.vmem [#allocation7], %s171
    %v173 = vld [vmem:[%s172] sm:$0x1]
    %vm174 = vcmask 253952
    %175 = vst.msk [vmem:[#allocation2 + $0x4] sm:$0x1] %vm174, %v173
    %s176 = sadd.s32 %s170, 1
    %s177 = sld [smem:[#allocation4 + %s176]]
    %s178 = scalar_lea.vmem [#allocation7], %s177
    %v179 = vld [vmem:[%s178] sm:$0x1]
    %180 = vst.msk [vmem:[#allocation2 + $0x5] sm:$0x1] %vm174, %v179
    %s181 = sadd.s32 %s170, 2
    %s182 = sld [smem:[#allocation4 + %s181]]
    %s183 = scalar_lea.vmem [#allocation7], %s182
    %v184 = vld [vmem:[%s183] sm:$0x1]
    %185 = vst.msk [vmem:[#allocation2 + $0x6] sm:$0x1] %vm174, %v184
    %s186 = sadd.s32 %s170, 3
    %s187 = sld [smem:[#allocation4 + %s186]]
    %s188 = scalar_lea.vmem [#allocation7], %s187
    %v189 = vld [vmem:[%s188] sm:$0x1]
    %190 = vst.msk [vmem:[#allocation2 + $0x7] sm:$0x1] %vm174, %v189
    %s191 = sadd.s32 %s170, 4
    %s192 = sld [smem:[#allocation4 + %s191]]
    %s193 = scalar_lea.vmem [#allocation7], %s192
    %v194 = vld [vmem:[%s193] sm:$0x1]
    %195 = vst.msk [vmem:[#allocation2 + $0x8] sm:$0x1] %vm174, %v194
    %s196 = sadd.s32 %s170, 5
    %s197 = sld [smem:[#allocation4 + %s196]]
    %s198 = scalar_lea.vmem [#allocation7], %s197
    %v199 = vld [vmem:[%s198] sm:$0x1]
    %200 = vst.msk [vmem:[#allocation2 + $0x9] sm:$0x1] %vm174, %v199
    %s201 = sadd.s32 %s170, 6
    %s202 = sld [smem:[#allocation4 + %s201]]
    %s203 = scalar_lea.vmem [#allocation7], %s202
    %v204 = vld [vmem:[%s203] sm:$0x1]
    %205 = vst.msk [vmem:[#allocation2 + $0xa] sm:$0x1] %vm174, %v204
    %s206 = sadd.s32 %s170, 7
    %s207 = sld [smem:[#allocation4 + %s206]]
    %s208 = scalar_lea.vmem [#allocation7], %s207
    %v209 = vld [vmem:[%s208] sm:$0x1]
    %210 = vst.msk [vmem:[#allocation2 + $0xb] sm:$0x1] %vm174, %v209
    %211 = vst.msk [vmem:[#allocation2 + $0x10] sm:$0xf] %vm167, %v166
    %s212 = sadd.s32 %s169, 1
    %s213 = smul.u32 %s212, 128
    %s214 = sld [smem:[#allocation4 + %s213]]
    %s215 = scalar_lea.vmem [#allocation7], %s214
    %v216 = vld [vmem:[%s215] sm:$0x1]
    %217 = vst.msk [vmem:[#allocation2 + $0x14] sm:$0x1] %vm174, %v216
    %s218 = sadd.s32 %s213, 1
    %s219 = sld [smem:[#allocation4 + %s218]]
    %s220 = scalar_lea.vmem [#allocation7], %s219
    %v221 = vld [vmem:[%s220] sm:$0x1]
    %222 = vst.msk [vmem:[#allocation2 + $0x15] sm:$0x1] %vm174, %v221
    %s223 = sadd.s32 %s213, 2
    %s224 = sld [smem:[#allocation4 + %s223]]
    %s225 = scalar_lea.vmem [#allocation7], %s224
    %v226 = vld [vmem:[%s225] sm:$0x1]
    %227 = vst.msk [vmem:[#allocation2 + $0x16] sm:$0x1] %vm174, %v226
    %s228 = sadd.s32 %s213, 3
    %s229 = sld [smem:[#allocation4 + %s228]]
    %s230 = scalar_lea.vmem [#allocation7], %s229
    %v231 = vld [vmem:[%s230] sm:$0x1]
    %232 = vst.msk [vmem:[#allocation2 + $0x17] sm:$0x1] %vm174, %v231
    %s233 = sadd.s32 %s213, 4
    %s234 = sld [smem:[#allocation4 + %s233]]
    %s235 = scalar_lea.vmem [#allocation7], %s234
    %v236 = vld [vmem:[%s235] sm:$0x1]
    %237 = vst.msk [vmem:[#allocation2 + $0x18] sm:$0x1] %vm174, %v236
    %s238 = sadd.s32 %s213, 5
    %s239 = sld [smem:[#allocation4 + %s238]]
    %s240 = scalar_lea.vmem [#allocation7], %s239
    %v241 = vld [vmem:[%s240] sm:$0x1]
    %242 = vst.msk [vmem:[#allocation2 + $0x19] sm:$0x1] %vm174, %v241
    %s243 = sadd.s32 %s213, 6
    %s244 = sld [smem:[#allocation4 + %s243]]
    %s245 = scalar_lea.vmem [#allocation7], %s244
    %v246 = vld [vmem:[%s245] sm:$0x1]
    %247 = vst.msk [vmem:[#allocation2 + $0x1a] sm:$0x1] %vm174, %v246
    %s248 = sadd.s32 %s213, 7
    %s249 = sld [smem:[#allocation4 + %s248]]
    %s250 = scalar_lea.vmem [#allocation7], %s249
    %v251 = vld [vmem:[%s250] sm:$0x1]
    %252 = vst.msk [vmem:[#allocation2 + $0x1b] sm:$0x1] %vm174, %v251
    %253 = vst.msk [vmem:[#allocation2 + $0x20] sm:$0xf] %vm167, %v166
    %s254 = sadd.s32 %s169, 2
    %s255 = smul.u32 %s254, 128
    %s256 = sld [smem:[#allocation4 + %s255]]
    %s257 = scalar_lea.vmem [#allocation7], %s256
    %v258 = vld [vmem:[%s257] sm:$0x1]
    %259 = vst.msk [vmem:[#allocation2 + $0x24] sm:$0x1] %vm174, %v258
    %s260 = sadd.s32 %s255, 1
    %s261 = sld [smem:[#allocation4 + %s260]]
    %s262 = scalar_lea.vmem [#allocation7], %s261
    %v263 = vld [vmem:[%s262] sm:$0x1]
    %264 = vst.msk [vmem:[#allocation2 + $0x25] sm:$0x1] %vm174, %v263
    %s265 = sadd.s32 %s255, 2
    %s266 = sld [smem:[#allocation4 + %s265]]
    %s267 = scalar_lea.vmem [#allocation7], %s266
    %v268 = vld [vmem:[%s267] sm:$0x1]
    %269 = vst.msk [vmem:[#allocation2 + $0x26] sm:$0x1] %vm174, %v268
    %s270 = sadd.s32 %s255, 3
    %s271 = sld [smem:[#allocation4 + %s270]]
    %s272 = scalar_lea.vmem [#allocation7], %s271
    %v273 = vld [vmem:[%s272] sm:$0x1]
    %274 = vst.msk [vmem:[#allocation2 + $0x27] sm:$0x1] %vm174, %v273
    %s275 = sadd.s32 %s255, 4
    %s276 = sld [smem:[#allocation4 + %s275]]
    %s277 = scalar_lea.vmem [#allocation7], %s276
    %v278 = vld [vmem:[%s277] sm:$0x1]
    %279 = vst.msk [vmem:[#allocation2 + $0x28] sm:$0x1] %vm174, %v278
    %s280 = sadd.s32 %s255, 5
    %s281 = sld [smem:[#allocation4 + %s280]]
    %s282 = scalar_lea.vmem [#allocation7], %s281
    %v283 = vld [vmem:[%s282] sm:$0x1]
    %284 = vst.msk [vmem:[#allocation2 + $0x29] sm:$0x1] %vm174, %v283
    %s285 = sadd.s32 %s255, 6
    %s286 = sld [smem:[#allocation4 + %s285]]
    %s287 = scalar_lea.vmem [#allocation7], %s286
    %v288 = vld [vmem:[%s287] sm:$0x1]
    %289 = vst.msk [vmem:[#allocation2 + $0x2a] sm:$0x1] %vm174, %v288
    %s290 = sadd.s32 %s255, 7
    %s291 = sld [smem:[#allocation4 + %s290]]
    %s292 = scalar_lea.vmem [#allocation7], %s291
    %v293 = vld [vmem:[%s292] sm:$0x1]
    %294 = vst.msk [vmem:[#allocation2 + $0x2b] sm:$0x1] %vm174, %v293
    %295 = vst.msk [vmem:[#allocation2 + $0x30] sm:$0xf] %vm167, %v166
    %s296 = sadd.s32 %s169, 3
    %s297 = smul.u32 %s296, 128
    %s298 = sld [smem:[#allocation4 + %s297]]
    %s299 = scalar_lea.vmem [#allocation7], %s298
    %v300 = vld [vmem:[%s299] sm:$0x1]
    %301 = vst.msk [vmem:[#allocation2 + $0x34] sm:$0x1] %vm174, %v300
    %s302 = sadd.s32 %s297, 1
    %s303 = sld [smem:[#allocation4 + %s302]]
    %s304 = scalar_lea.vmem [#allocation7], %s303
    %v305 = vld [vmem:[%s304] sm:$0x1]
    %306 = vst.msk [vmem:[#allocation2 + $0x35] sm:$0x1] %vm174, %v305
    %s307 = sadd.s32 %s297, 2
    %s308 = sld [smem:[#allocation4 + %s307]]
    %s309 = scalar_lea.vmem [#allocation7], %s308
    %v310 = vld [vmem:[%s309] sm:$0x1]
    %311 = vst.msk [vmem:[#allocation2 + $0x36] sm:$0x1] %vm174, %v310
    %s312 = sadd.s32 %s297, 3
    %s313 = sld [smem:[#allocation4 + %s312]]
    %s314 = scalar_lea.vmem [#allocation7], %s313
    %v315 = vld [vmem:[%s314] sm:$0x1]
    %316 = vst.msk [vmem:[#allocation2 + $0x37] sm:$0x1] %vm174, %v315
    %s317 = sadd.s32 %s297, 4
    %s318 = sld [smem:[#allocation4 + %s317]]
    %s319 = scalar_lea.vmem [#allocation7], %s318
    %v320 = vld [vmem:[%s319] sm:$0x1]
    %321 = vst.msk [vmem:[#allocation2 + $0x38] sm:$0x1] %vm174, %v320
    %s322 = sadd.s32 %s297, 5
    %s323 = sld [smem:[#allocation4 + %s322]]
    %s324 = scalar_lea.vmem [#allocation7], %s323
    %v325 = vld [vmem:[%s324] sm:$0x1]
    %326 = vst.msk [vmem:[#allocation2 + $0x39] sm:$0x1] %vm174, %v325
    %s327 = sadd.s32 %s297, 6
    %s328 = sld [smem:[#allocation4 + %s327]]
    %s329 = scalar_lea.vmem [#allocation7], %s328
    %v330 = vld [vmem:[%s329] sm:$0x1]
    %331 = vst.msk [vmem:[#allocation2 + $0x3a] sm:$0x1] %vm174, %v330
    %s332 = sadd.s32 %s297, 7
    %s333 = sld [smem:[#allocation4 + %s332]]
    %s334 = scalar_lea.vmem [#allocation7], %s333
    %v335 = vld [vmem:[%s334] sm:$0x1]
    %336 = vst.msk [vmem:[#allocation2 + $0x3b] sm:$0x1] %vm174, %v335
    %337 = vst.msk [vmem:[#allocation2 + $0x40] sm:$0xf] %vm167, %v166
    %s338 = sadd.s32 %s169, 4
    %s339 = smul.u32 %s338, 128
    %s340 = sld [smem:[#allocation4 + %s339]]
    %s341 = scalar_lea.vmem [#allocation7], %s340
    %v342 = vld [vmem:[%s341] sm:$0x1]
    %343 = vst.msk [vmem:[#allocation2 + $0x44] sm:$0x1] %vm174, %v342
    %s344 = sadd.s32 %s339, 1
    %s345 = sld [smem:[#allocation4 + %s344]]
    %s346 = scalar_lea.vmem [#allocation7], %s345
    %v347 = vld [vmem:[%s346] sm:$0x1]
    %348 = vst.msk [vmem:[#allocation2 + $0x45] sm:$0x1] %vm174, %v347
    %s349 = sadd.s32 %s339, 2
    %s350 = sld [smem:[#allocation4 + %s349]]
    %s351 = scalar_lea.vmem [#allocation7], %s350
    %v352 = vld [vmem:[%s351] sm:$0x1]
    %353 = vst.msk [vmem:[#allocation2 + $0x46] sm:$0x1] %vm174, %v352
    %s354 = sadd.s32 %s339, 3
    %s355 = sld [smem:[#allocation4 + %s354]]
    %s356 = scalar_lea.vmem [#allocation7], %s355
    %v357 = vld [vmem:[%s356] sm:$0x1]
    %358 = vst.msk [vmem:[#allocation2 + $0x47] sm:$0x1] %vm174, %v357
    %s359 = sadd.s32 %s339, 4
    %s360 = sld [smem:[#allocation4 + %s359]]
    %s361 = scalar_lea.vmem [#allocation7], %s360
    %v362 = vld [vmem:[%s361] sm:$0x1]
    %363 = vst.msk [vmem:[#allocation2 + $0x48] sm:$0x1] %vm174, %v362
    %s364 = sadd.s32 %s339, 5
    %s365 = sld [smem:[#allocation4 + %s364]]
    %s366 = scalar_lea.vmem [#allocation7], %s365
    %v367 = vld [vmem:[%s366] sm:$0x1]
    %368 = vst.msk [vmem:[#allocation2 + $0x49] sm:$0x1] %vm174, %v367
    %s369 = sadd.s32 %s339, 6
    %s370 = sld [smem:[#allocation4 + %s369]]
    %s371 = scalar_lea.vmem [#allocation7], %s370
    %v372 = vld [vmem:[%s371] sm:$0x1]
    %373 = vst.msk [vmem:[#allocation2 + $0x4a] sm:$0x1] %vm174, %v372
    %s374 = sadd.s32 %s339, 7
    %s375 = sld [smem:[#allocation4 + %s374]]
    %s376 = scalar_lea.vmem [#allocation7], %s375
    %v377 = vld [vmem:[%s376] sm:$0x1]
    %378 = vst.msk [vmem:[#allocation2 + $0x4b] sm:$0x1] %vm174, %v377
    %379 = vst.msk [vmem:[#allocation2 + $0x50] sm:$0xf] %vm167, %v166
    %s380 = sadd.s32 %s169, 5
    %s381 = smul.u32 %s380, 128
    %s382 = sld [smem:[#allocation4 + %s381]]
    %s383 = scalar_lea.vmem [#allocation7], %s382
    %v384 = vld [vmem:[%s383] sm:$0x1]
    %385 = vst.msk [vmem:[#allocation2 + $0x54] sm:$0x1] %vm174, %v384
    %s386 = sadd.s32 %s381, 1
    %s387 = sld [smem:[#allocation4 + %s386]]
    %s388 = scalar_lea.vmem [#allocation7], %s387
    %v389 = vld [vmem:[%s388] sm:$0x1]
    %390 = vst.msk [vmem:[#allocation2 + $0x55] sm:$0x1] %vm174, %v389
    %s391 = sadd.s32 %s381, 2
    %s392 = sld [smem:[#allocation4 + %s391]]
    %s393 = scalar_lea.vmem [#allocation7], %s392
    %v394 = vld [vmem:[%s393] sm:$0x1]
    %395 = vst.msk [vmem:[#allocation2 + $0x56] sm:$0x1] %vm174, %v394
    %s396 = sadd.s32 %s381, 3
    %s397 = sld [smem:[#allocation4 + %s396]]
    %s398 = scalar_lea.vmem [#allocation7], %s397
    %v399 = vld [vmem:[%s398] sm:$0x1]
    %400 = vst.msk [vmem:[#allocation2 + $0x57] sm:$0x1] %vm174, %v399
    %s401 = sadd.s32 %s381, 4
    %s402 = sld [smem:[#allocation4 + %s401]]
    %s403 = scalar_lea.vmem [#allocation7], %s402
    %v404 = vld [vmem:[%s403] sm:$0x1]
    %405 = vst.msk [vmem:[#allocation2 + $0x58] sm:$0x1] %vm174, %v404
    %s406 = sadd.s32 %s381, 5
    %s407 = sld [smem:[#allocation4 + %s406]]
    %s408 = scalar_lea.vmem [#allocation7], %s407
    %v409 = vld [vmem:[%s408] sm:$0x1]
    %410 = vst.msk [vmem:[#allocation2 + $0x59] sm:$0x1] %vm174, %v409
    %s411 = sadd.s32 %s381, 6
    %s412 = sld [smem:[#allocation4 + %s411]]
    %s413 = scalar_lea.vmem [#allocation7], %s412
    %v414 = vld [vmem:[%s413] sm:$0x1]
    %415 = vst.msk [vmem:[#allocation2 + $0x5a] sm:$0x1] %vm174, %v414
    %s416 = sadd.s32 %s381, 7
    %s417 = sld [smem:[#allocation4 + %s416]]
    %s418 = scalar_lea.vmem [#allocation7], %s417
    %v419 = vld [vmem:[%s418] sm:$0x1]
    %420 = vst.msk [vmem:[#allocation2 + $0x5b] sm:$0x1] %vm174, %v419
    %421 = vst.msk [vmem:[#allocation2 + $0x60] sm:$0xf] %vm167, %v166
    %s422 = sadd.s32 %s169, 6
    %s423 = smul.u32 %s422, 128
    %s424 = sld [smem:[#allocation4 + %s423]]
    %s425 = scalar_lea.vmem [#allocation7], %s424
    %v426 = vld [vmem:[%s425] sm:$0x1]
    %427 = vst.msk [vmem:[#allocation2 + $0x64] sm:$0x1] %vm174, %v426
    %s428 = sadd.s32 %s423, 1
    %s429 = sld [smem:[#allocation4 + %s428]]
    %s430 = scalar_lea.vmem [#allocation7], %s429
    %v431 = vld [vmem:[%s430] sm:$0x1]
    %432 = vst.msk [vmem:[#allocation2 + $0x65] sm:$0x1] %vm174, %v431
    %s433 = sadd.s32 %s423, 2
    %s434 = sld [smem:[#allocation4 + %s433]]
    %s435 = scalar_lea.vmem [#allocation7], %s434
    %v436 = vld [vmem:[%s435] sm:$0x1]
    %437 = vst.msk [vmem:[#allocation2 + $0x66] sm:$0x1] %vm174, %v436
    %s438 = sadd.s32 %s423, 3
    %s439 = sld [smem:[#allocation4 + %s438]]
    %s440 = scalar_lea.vmem [#allocation7], %s439
    %v441 = vld [vmem:[%s440] sm:$0x1]
    %442 = vst.msk [vmem:[#allocation2 + $0x67] sm:$0x1] %vm174, %v441
    %s443 = sadd.s32 %s423, 4
    %s444 = sld [smem:[#allocation4 + %s443]]
    %s445 = scalar_lea.vmem [#allocation7], %s444
    %v446 = vld [vmem:[%s445] sm:$0x1]
    %447 = vst.msk [vmem:[#allocation2 + $0x68] sm:$0x1] %vm174, %v446
    %s448 = sadd.s32 %s423, 5
    %s449 = sld [smem:[#allocation4 + %s448]]
    %s450 = scalar_lea.vmem [#allocation7], %s449
    %v451 = vld [vmem:[%s450] sm:$0x1]
    %452 = vst.msk [vmem:[#allocation2 + $0x69] sm:$0x1] %vm174, %v451
    %s453 = sadd.s32 %s423, 6
    %s454 = sld [smem:[#allocation4 + %s453]]
    %s455 = scalar_lea.vmem [#allocation7], %s454
    %v456 = vld [vmem:[%s455] sm:$0x1]
    %457 = vst.msk [vmem:[#allocation2 + $0x6a] sm:$0x1] %vm174, %v456
    %s458 = sadd.s32 %s423, 7
    %s459 = sld [smem:[#allocation4 + %s458]]
    %s460 = scalar_lea.vmem [#allocation7], %s459
    %v461 = vld [vmem:[%s460] sm:$0x1]
    %462 = vst.msk [vmem:[#allocation2 + $0x6b] sm:$0x1] %vm174, %v461
    %463 = vst.msk [vmem:[#allocation2 + $0x70] sm:$0xf] %vm167, %v166
    %s464 = sadd.s32 %s169, 7
    %s465 = smul.u32 %s464, 128
    %s466 = sld [smem:[#allocation4 + %s465]]
    %s467 = scalar_lea.vmem [#allocation7], %s466
    %v468 = vld [vmem:[%s467] sm:$0x1]
    %469 = vst.msk [vmem:[#allocation2 + $0x74] sm:$0x1] %vm174, %v468
    %s470 = sadd.s32 %s465, 1
    %s471 = sld [smem:[#allocation4 + %s470]]
    %s472 = scalar_lea.vmem [#allocation7], %s471
    %v473 = vld [vmem:[%s472] sm:$0x1]
    %474 = vst.msk [vmem:[#allocation2 + $0x75] sm:$0x1] %vm174, %v473
    %s475 = sadd.s32 %s465, 2
    %s476 = sld [smem:[#allocation4 + %s475]]
    %s477 = scalar_lea.vmem [#allocation7], %s476
    %v478 = vld [vmem:[%s477] sm:$0x1]
    %479 = vst.msk [vmem:[#allocation2 + $0x76] sm:$0x1] %vm174, %v478
    %s480 = sadd.s32 %s465, 3
    %s481 = sld [smem:[#allocation4 + %s480]]
    %s482 = scalar_lea.vmem [#allocation7], %s481
    %v483 = vld [vmem:[%s482] sm:$0x1]
    %484 = vst.msk [vmem:[#allocation2 + $0x77] sm:$0x1] %vm174, %v483
    %s485 = sadd.s32 %s465, 4
    %s486 = sld [smem:[#allocation4 + %s485]]
    %s487 = scalar_lea.vmem [#allocation7], %s486
    %v488 = vld [vmem:[%s487] sm:$0x1]
    %489 = vst.msk [vmem:[#allocation2 + $0x78] sm:$0x1] %vm174, %v488
    %s490 = sadd.s32 %s465, 5
    %s491 = sld [smem:[#allocation4 + %s490]]
    %s492 = scalar_lea.vmem [#allocation7], %s491
    %v493 = vld [vmem:[%s492] sm:$0x1]
    %494 = vst.msk [vmem:[#allocation2 + $0x79] sm:$0x1] %vm174, %v493
    %s495 = sadd.s32 %s465, 6
    %s496 = sld [smem:[#allocation4 + %s495]]
    %s497 = scalar_lea.vmem [#allocation7], %s496
    %v498 = vld [vmem:[%s497] sm:$0x1]
    %499 = vst.msk [vmem:[#allocation2 + $0x7a] sm:$0x1] %vm174, %v498
    %s500 = sadd.s32 %s465, 7
    %s501 = sld [smem:[#allocation4 + %s500]]
    %s502 = scalar_lea.vmem [#allocation7], %s501
    %v503 = vld [vmem:[%s502] sm:$0x1]
    %504 = vst.msk [vmem:[#allocation2 + $0x7b] sm:$0x1] %vm174, %v503
    %v505 = vld [vmem:[#allocation7 + $0x36] sm:$0xff]
    %v506 = vld [vmem:[#allocation7 + $0x3e] sm:$0xff]
    %v507 = vld [vmem:[#allocation2] sm:$0xff]
    %v508 = vld [vmem:[#allocation2 + $0x8] sm:$0xff]
    %v509 = vld [vmem:[#allocation2 + $0x10] sm:$0xff]
    %v510 = vld [vmem:[#allocation2 + $0x18] sm:$0xff]
    %v511 = vld [vmem:[#allocation2 + $0x20] sm:$0xff]
    %v512 = vld [vmem:[#allocation2 + $0x28] sm:$0xff]
    %v513 = vld [vmem:[#allocation2 + $0x30] sm:$0xff]
    %v514 = vld [vmem:[#allocation2 + $0x38] sm:$0xff]
    %v515 = vld [vmem:[#allocation2 + $0x40] sm:$0xff]
    %v516 = vld [vmem:[#allocation2 + $0x48] sm:$0xff]
    %v517 = vld [vmem:[#allocation2 + $0x50] sm:$0xff]
    %v518 = vld [vmem:[#allocation2 + $0x58] sm:$0xff]
    %v519 = vld [vmem:[#allocation2 + $0x60] sm:$0xff]
    %v520 = vld [vmem:[#allocation2 + $0x68] sm:$0xff]
    %v521 = vld [vmem:[#allocation2 + $0x70] sm:$0xff]
    %v522 = vld [vmem:[#allocation2 + $0x78] sm:$0xff]
    %v523 = vadd.f32 %v507, %v505
    %v524 = vadd.f32 %v508, %v506
    %v525 = vadd.f32 %v509, %v505
    %v526 = vadd.f32 %v510, %v506
    %v527 = vadd.f32 %v511, %v505
    %v528 = vadd.f32 %v512, %v506
    %v529 = vadd.f32 %v513, %v505
    %v530 = vadd.f32 %v514, %v506
    %v531 = vadd.f32 %v515, %v505
    %v532 = vadd.f32 %v516, %v506
    %v533 = vadd.f32 %v517, %v505
    %v534 = vadd.f32 %v518, %v506
    %v535 = vadd.f32 %v519, %v505
    %v536 = vadd.f32 %v520, %v506
    %v537 = vadd.f32 %v521, %v505
    %v538 = vadd.f32 %v522, %v506
    %v539 = vld [vmem:[%s8] sm:$0x1]
    %v540 = vld [vmem:[%s8 + $0x1] sm:$0x1]
    %v541 = vsel %vm149, %v523, 0.0
    %542 = vadd.xlane.f32.xlu0 %v541
    %v543 = vpop.xlane.xlu0 %542
    %v544 = vsel %vm149, %v524, 0.0
    %545 = vadd.xlane.f32.xlu0 %v544
    %v546 = vpop.xlane.xlu0 %545
    %v547 = vsel %vm149, %v525, 0.0
    %548 = vadd.xlane.f32.xlu0 %v547
    %v549 = vpop.xlane.xlu0 %548
    %v550 = vsel %vm149, %v526, 0.0
    %551 = vadd.xlane.f32.xlu0 %v550
    %v552 = vpop.xlane.xlu0 %551
    %v553 = vsel %vm149, %v527, 0.0
    %554 = vadd.xlane.f32.xlu0 %v553
    %v555 = vpop.xlane.xlu0 %554
    %v556 = vsel %vm149, %v528, 0.0
    %557 = vadd.xlane.f32.xlu0 %v556
    %v558 = vpop.xlane.xlu0 %557
    %v559 = vsel %vm149, %v529, 0.0
    %560 = vadd.xlane.f32.xlu0 %v559
    %v561 = vpop.xlane.xlu0 %560
    %v562 = vsel %vm149, %v530, 0.0
    %563 = vadd.xlane.f32.xlu0 %v562
    %v564 = vpop.xlane.xlu0 %563
    %v565 = vsel %vm149, %v531, 0.0
    %566 = vadd.xlane.f32.xlu0 %v565
    %v567 = vpop.xlane.xlu0 %566
    %v568 = vsel %vm149, %v532, 0.0
    %569 = vadd.xlane.f32.xlu0 %v568
    %v570 = vpop.xlane.xlu0 %569
    %v571 = vsel %vm149, %v533, 0.0
    %572 = vadd.xlane.f32.xlu0 %v571
    %v573 = vpop.xlane.xlu0 %572
    %v574 = vsel %vm149, %v534, 0.0
    %575 = vadd.xlane.f32.xlu0 %v574
    %v576 = vpop.xlane.xlu0 %575
    %v577 = vsel %vm149, %v535, 0.0
    %578 = vadd.xlane.f32.xlu0 %v577
    %v579 = vpop.xlane.xlu0 %578
    %v580 = vsel %vm149, %v536, 0.0
    %581 = vadd.xlane.f32.xlu0 %v580
    %v582 = vpop.xlane.xlu0 %581
    %v583 = vsel %vm149, %v537, 0.0
    %584 = vadd.xlane.f32.xlu0 %v583
    %v585 = vpop.xlane.xlu0 %584
    %v586 = vsel %vm149, %v538, 0.0
    %587 = vadd.xlane.f32.xlu0 %v586
    %v588 = vpop.xlane.xlu0 %587
    %v589 = vrcp.pop 32.0
    %v590 = vmul.f32 32.0, %v589
    %v591 = vsub.f32 1.0, %v590
    %v592 = vmul.f32 %v589, %v591
    %v593 = vadd.f32 %v589, %v592
    %vm594 = vweird.f32 %v589
    %v595 = vsel %vm594, %v589, %v593
    %v596 = vmul.f32 %v543, %v595
    %v597 = vmul.f32 %v546, %v595
    %v598 = vmul.f32 %v549, %v595
    %v599 = vmul.f32 %v552, %v595
    %v600 = vmul.f32 %v555, %v595
    %v601 = vmul.f32 %v558, %v595
    %v602 = vmul.f32 %v561, %v595
    %v603 = vmul.f32 %v564, %v595
    %v604 = vmul.f32 %v567, %v595
    %v605 = vmul.f32 %v570, %v595
    %v606 = vmul.f32 %v573, %v595
    %v607 = vmul.f32 %v576, %v595
    %v608 = vmul.f32 %v579, %v595
    %v609 = vmul.f32 %v582, %v595
    %v610 = vmul.f32 %v585, %v595
    %v611 = vmul.f32 %v588, %v595
    %v612 = vsub.f32 %v523, %v596
    %v613 = vsub.f32 %v524, %v597
    %v614 = vsub.f32 %v525, %v598
    %v615 = vsub.f32 %v526, %v599
    %v616 = vsub.f32 %v527, %v600
    %v617 = vsub.f32 %v528, %v601
    %v618 = vsub.f32 %v529, %v602
    %v619 = vsub.f32 %v530, %v603
    %v620 = vsub.f32 %v531, %v604
    %v621 = vsub.f32 %v532, %v605
    %v622 = vsub.f32 %v533, %v606
    %v623 = vsub.f32 %v534, %v607
    %v624 = vsub.f32 %v535, %v608
    %v625 = vsub.f32 %v536, %v609
    %v626 = vsub.f32 %v537, %v610
    %v627 = vsub.f32 %v538, %v611
    %v628 = vmul.f32 %v612, %v612
    %v629 = vmul.f32 %v613, %v613
    %v630 = vmul.f32 %v614, %v614
    %v631 = vmul.f32 %v615, %v615
    %v632 = vmul.f32 %v616, %v616
    %v633 = vmul.f32 %v617, %v617
    %v634 = vmul.f32 %v618, %v618
    %v635 = vmul.f32 %v619, %v619
    %v636 = vmul.f32 %v620, %v620
    %v637 = vmul.f32 %v621, %v621
    %v638 = vmul.f32 %v622, %v622
    %v639 = vmul.f32 %v623, %v623
    %v640 = vmul.f32 %v624, %v624
    %v641 = vmul.f32 %v625, %v625
    %v642 = vmul.f32 %v626, %v626
    %v643 = vmul.f32 %v627, %v627
    %v644 = vsel %vm149, %v628, 0.0
    %645 = vadd.xlane.f32.xlu0 %v644
    %v646 = vpop.xlane.xlu0 %645
    %v647 = vsel %vm149, %v629, 0.0
    %648 = vadd.xlane.f32.xlu0 %v647
    %v649 = vpop.xlane.xlu0 %648
    %v650 = vsel %vm149, %v630, 0.0
    %651 = vadd.xlane.f32.xlu0 %v650
    %v652 = vpop.xlane.xlu0 %651
    %v653 = vsel %vm149, %v631, 0.0
    %654 = vadd.xlane.f32.xlu0 %v653
    %v655 = vpop.xlane.xlu0 %654
    %v656 = vsel %vm149, %v632, 0.0
    %657 = vadd.xlane.f32.xlu0 %v656
    %v658 = vpop.xlane.xlu0 %657
    %v659 = vsel %vm149, %v633, 0.0
    %660 = vadd.xlane.f32.xlu0 %v659
    %v661 = vpop.xlane.xlu0 %660
    %v662 = vsel %vm149, %v634, 0.0
    %663 = vadd.xlane.f32.xlu0 %v662
    %v664 = vpop.xlane.xlu0 %663
    %v665 = vsel %vm149, %v635, 0.0
    %666 = vadd.xlane.f32.xlu0 %v665
    %v667 = vpop.xlane.xlu0 %666
    %v668 = vsel %vm149, %v636, 0.0
    %669 = vadd.xlane.f32.xlu0 %v668
    %v670 = vpop.xlane.xlu0 %669
    %v671 = vsel %vm149, %v637, 0.0
    %672 = vadd.xlane.f32.xlu0 %v671
    %v673 = vpop.xlane.xlu0 %672
    %v674 = vsel %vm149, %v638, 0.0
    %675 = vadd.xlane.f32.xlu0 %v674
    %v676 = vpop.xlane.xlu0 %675
    %v677 = vsel %vm149, %v639, 0.0
    %678 = vadd.xlane.f32.xlu0 %v677
    %v679 = vpop.xlane.xlu0 %678
    %v680 = vsel %vm149, %v640, 0.0
    %681 = vadd.xlane.f32.xlu0 %v680
    %v682 = vpop.xlane.xlu0 %681
    %v683 = vsel %vm149, %v641, 0.0
    %684 = vadd.xlane.f32.xlu0 %v683
    %v685 = vpop.xlane.xlu0 %684
    %v686 = vsel %vm149, %v642, 0.0
    %687 = vadd.xlane.f32.xlu0 %v686
    %v688 = vpop.xlane.xlu0 %687
    %v689 = vsel %vm149, %v643, 0.0
    %690 = vadd.xlane.f32.xlu0 %v689
    %v691 = vpop.xlane.xlu0 %690
    %v692 = vmul.f32 %v646, %v595
    %v693 = vmul.f32 %v649, %v595
    %v694 = vmul.f32 %v652, %v595
    %v695 = vmul.f32 %v655, %v595
    %v696 = vmul.f32 %v658, %v595
    %v697 = vmul.f32 %v661, %v595
    %v698 = vmul.f32 %v664, %v595
    %v699 = vmul.f32 %v667, %v595
    %v700 = vmul.f32 %v670, %v595
    %v701 = vmul.f32 %v673, %v595
    %v702 = vmul.f32 %v676, %v595
    %v703 = vmul.f32 %v679, %v595
    %v704 = vmul.f32 %v682, %v595
    %v705 = vmul.f32 %v685, %v595
    %v706 = vmul.f32 %v688, %v595
    %v707 = vmul.f32 %v691, %v595
    %v708 = vadd.f32 %v692, 1e-12
    %v709 = vadd.f32 %v693, 1e-12
    %v710 = vadd.f32 %v694, 1e-12
    %v711 = vadd.f32 %v695, 1e-12
    %v712 = vadd.f32 %v696, 1e-12
    %v713 = vadd.f32 %v697, 1e-12
    %v714 = vadd.f32 %v698, 1e-12
    %v715 = vadd.f32 %v699, 1e-12
    %v716 = vadd.f32 %v700, 1e-12
    %v717 = vadd.f32 %v701, 1e-12
    %v718 = vadd.f32 %v702, 1e-12
    %v719 = vadd.f32 %v703, 1e-12
    %v720 = vadd.f32 %v704, 1e-12
    %v721 = vadd.f32 %v705, 1e-12
    %v722 = vadd.f32 %v706, 1e-12
    %v723 = vadd.f32 %v707, 1e-12
    %v724 = vrsqrt.pop %v708
    %v725 = vmul.f32 %v724, %v708
    %v726 = vmul.f32 %v725, %v724
    %v727 = vmul.f32 0.5, %v726
    %v728 = vsub.f32 1.5, %v727
    %v729 = vmul.f32 %v724, %v728
    %vm730 = vweird.f32 %v708
    %vm731 = vweird.f32 %v724
    %vm732 = vmor %vm730, %vm731
    %v733 = vsel %vm732, %v724, %v729
    %v734 = vrsqrt.pop %v709
    %v735 = vmul.f32 %v734, %v709
    %v736 = vmul.f32 %v735, %v734
    %v737 = vmul.f32 0.5, %v736
    %v738 = vsub.f32 1.5, %v737
    %v739 = vmul.f32 %v734, %v738
    %vm740 = vweird.f32 %v709
    %vm741 = vweird.f32 %v734
    %vm742 = vmor %vm740, %vm741
    %v743 = vsel %vm742, %v734, %v739
    %v744 = vrsqrt.pop %v710
    %v745 = vmul.f32 %v744, %v710
    %v746 = vmul.f32 %v745, %v744
    %v747 = vmul.f32 0.5, %v746
    %v748 = vsub.f32 1.5, %v747
    %v749 = vmul.f32 %v744, %v748
    %vm750 = vweird.f32 %v710
    %vm751 = vweird.f32 %v744
    %vm752 = vmor %vm750, %vm751
    %v753 = vsel %vm752, %v744, %v749
    %v754 = vrsqrt.pop %v711
    %v755 = vmul.f32 %v754, %v711
    %v756 = vmul.f32 %v755, %v754
    %v757 = vmul.f32 0.5, %v756
    %v758 = vsub.f32 1.5, %v757
    %v759 = vmul.f32 %v754, %v758
    %vm760 = vweird.f32 %v711
    %vm761 = vweird.f32 %v754
    %vm762 = vmor %vm760, %vm761
    %v763 = vsel %vm762, %v754, %v759
    %v764 = vrsqrt.pop %v712
    %v765 = vmul.f32 %v764, %v712
    %v766 = vmul.f32 %v765, %v764
    %v767 = vmul.f32 0.5, %v766
    %v768 = vsub.f32 1.5, %v767
    %v769 = vmul.f32 %v764, %v768
    %vm770 = vweird.f32 %v712
    %vm771 = vweird.f32 %v764
    %vm772 = vmor %vm770, %vm771
    %v773 = vsel %vm772, %v764, %v769
    %v774 = vrsqrt.pop %v713
    %v775 = vmul.f32 %v774, %v713
    %v776 = vmul.f32 %v775, %v774
    %v777 = vmul.f32 0.5, %v776
    %v778 = vsub.f32 1.5, %v777
    %v779 = vmul.f32 %v774, %v778
    %vm780 = vweird.f32 %v713
    %vm781 = vweird.f32 %v774
    %vm782 = vmor %vm780, %vm781
    %v783 = vsel %vm782, %v774, %v779
    %v784 = vrsqrt.pop %v714
    %v785 = vmul.f32 %v784, %v714
    %v786 = vmul.f32 %v785, %v784
    %v787 = vmul.f32 0.5, %v786
    %v788 = vsub.f32 1.5, %v787
    %v789 = vmul.f32 %v784, %v788
    %vm790 = vweird.f32 %v714
    %vm791 = vweird.f32 %v784
    %vm792 = vmor %vm790, %vm791
    %v793 = vsel %vm792, %v784, %v789
    %v794 = vrsqrt.pop %v715
    %v795 = vmul.f32 %v794, %v715
    %v796 = vmul.f32 %v795, %v794
    %v797 = vmul.f32 0.5, %v796
    %v798 = vsub.f32 1.5, %v797
    %v799 = vmul.f32 %v794, %v798
    %vm800 = vweird.f32 %v715
    %vm801 = vweird.f32 %v794
    %vm802 = vmor %vm800, %vm801
    %v803 = vsel %vm802, %v794, %v799
    %v804 = vrsqrt.pop %v716
    %v805 = vmul.f32 %v804, %v716
    %v806 = vmul.f32 %v805, %v804
    %v807 = vmul.f32 0.5, %v806
    %v808 = vsub.f32 1.5, %v807
    %v809 = vmul.f32 %v804, %v808
    %vm810 = vweird.f32 %v716
    %vm811 = vweird.f32 %v804
    %vm812 = vmor %vm810, %vm811
    %v813 = vsel %vm812, %v804, %v809
    %v814 = vrsqrt.pop %v717
    %v815 = vmul.f32 %v814, %v717
    %v816 = vmul.f32 %v815, %v814
    %v817 = vmul.f32 0.5, %v816
    %v818 = vsub.f32 1.5, %v817
    %v819 = vmul.f32 %v814, %v818
    %vm820 = vweird.f32 %v717
    %vm821 = vweird.f32 %v814
    %vm822 = vmor %vm820, %vm821
    %v823 = vsel %vm822, %v814, %v819
    %v824 = vrsqrt.pop %v718
    %v825 = vmul.f32 %v824, %v718
    %v826 = vmul.f32 %v825, %v824
    %v827 = vmul.f32 0.5, %v826
    %v828 = vsub.f32 1.5, %v827
    %v829 = vmul.f32 %v824, %v828
    %vm830 = vweird.f32 %v718
    %vm831 = vweird.f32 %v824
    %vm832 = vmor %vm830, %vm831
    %v833 = vsel %vm832, %v824, %v829
    %v834 = vrsqrt.pop %v719
    %v835 = vmul.f32 %v834, %v719
    %v836 = vmul.f32 %v835, %v834
    %v837 = vmul.f32 0.5, %v836
    %v838 = vsub.f32 1.5, %v837
    %v839 = vmul.f32 %v834, %v838
    %vm840 = vweird.f32 %v719
    %vm841 = vweird.f32 %v834
    %vm842 = vmor %vm840, %vm841
    %v843 = vsel %vm842, %v834, %v839
    %v844 = vrsqrt.pop %v720
    %v845 = vmul.f32 %v844, %v720
    %v846 = vmul.f32 %v845, %v844
    %v847 = vmul.f32 0.5, %v846
    %v848 = vsub.f32 1.5, %v847
    %v849 = vmul.f32 %v844, %v848
    %vm850 = vweird.f32 %v720
    %vm851 = vweird.f32 %v844
    %vm852 = vmor %vm850, %vm851
    %v853 = vsel %vm852, %v844, %v849
    %v854 = vrsqrt.pop %v721
    %v855 = vmul.f32 %v854, %v721
    %v856 = vmul.f32 %v855, %v854
    %v857 = vmul.f32 0.5, %v856
    %v858 = vsub.f32 1.5, %v857
    %v859 = vmul.f32 %v854, %v858
    %vm860 = vweird.f32 %v721
    %vm861 = vweird.f32 %v854
    %vm862 = vmor %vm860, %vm861
    %v863 = vsel %vm862, %v854, %v859
    %v864 = vrsqrt.pop %v722
    %v865 = vmul.f32 %v864, %v722
    %v866 = vmul.f32 %v865, %v864
    %v867 = vmul.f32 0.5, %v866
    %v868 = vsub.f32 1.5, %v867
    %v869 = vmul.f32 %v864, %v868
    %vm870 = vweird.f32 %v722
    %vm871 = vweird.f32 %v864
    %vm872 = vmor %vm870, %vm871
    %v873 = vsel %vm872, %v864, %v869
    %v874 = vrsqrt.pop %v723
    %v875 = vmul.f32 %v874, %v723
    %v876 = vmul.f32 %v875, %v874
    %v877 = vmul.f32 0.5, %v876
    %v878 = vsub.f32 1.5, %v877
    %v879 = vmul.f32 %v874, %v878
    %vm880 = vweird.f32 %v723
    %vm881 = vweird.f32 %v874
    %vm882 = vmor %vm880, %vm881
    %v883 = vsel %vm882, %v874, %v879
    %v884 = vmul.f32 %v612, %v733
    %v885 = vmul.f32 %v613, %v743
    %v886 = vmul.f32 %v614, %v753
    %v887 = vmul.f32 %v615, %v763
    %v888 = vmul.f32 %v616, %v773
    %v889 = vmul.f32 %v617, %v783
    %v890 = vmul.f32 %v618, %v793
    %v891 = vmul.f32 %v619, %v803
    %v892 = vmul.f32 %v620, %v813
    %v893 = vmul.f32 %v621, %v823
    %v894 = vmul.f32 %v622, %v833
    %v895 = vmul.f32 %v623, %v843
    %v896 = vmul.f32 %v624, %v853
    %v897 = vmul.f32 %v625, %v863
    %v898 = vmul.f32 %v626, %v873
    %v899 = vmul.f32 %v627, %v883
    %v900 = vperm.slane %v539, 0
    %v901 = vmul.f32 %v884, %v900
    %v902 = vmul.f32 %v885, %v900
    %v903 = vmul.f32 %v886, %v900
    %v904 = vmul.f32 %v887, %v900
    %v905 = vmul.f32 %v888, %v900
    %v906 = vmul.f32 %v889, %v900
    %v907 = vmul.f32 %v890, %v900
    %v908 = vmul.f32 %v891, %v900
    %v909 = vmul.f32 %v892, %v900
    %v910 = vmul.f32 %v893, %v900
    %v911 = vmul.f32 %v894, %v900
    %v912 = vmul.f32 %v895, %v900
    %v913 = vmul.f32 %v896, %v900
    %v914 = vmul.f32 %v897, %v900
    %v915 = vmul.f32 %v898, %v900
    %v916 = vmul.f32 %v899, %v900
    %v917 = vperm.slane %v540, 0
    %v918 = vadd.f32 %v901, %v917
    %v919 = vadd.f32 %v902, %v917
    %v920 = vadd.f32 %v903, %v917
    %v921 = vadd.f32 %v904, %v917
    %v922 = vadd.f32 %v905, %v917
    %v923 = vadd.f32 %v906, %v917
    %v924 = vadd.f32 %v907, %v917
    %v925 = vadd.f32 %v908, %v917
    %v926 = vadd.f32 %v909, %v917
    %v927 = vadd.f32 %v910, %v917
    %v928 = vadd.f32 %v911, %v917
    %v929 = vadd.f32 %v912, %v917
    %v930 = vadd.f32 %v913, %v917
    %v931 = vadd.f32 %v914, %v917
    %v932 = vadd.f32 %v915, %v917
    %v933 = vadd.f32 %v916, %v917
    %v934 = vld [vmem:[#allocation5] sm:$0xff]
    %vm935 = vcmp.gt.f32.partialorder %v934, 0.0
    %v936 = vsel %vm935, 0.0, -1e+09
    %938 = vrot.lane.b32.xlu0 %v936, 4
    %v939 = vpop.permute.xlu0 %938
    %vm941 = vcmask 31744
    %v942 = vsel %vm941, 0.0, %v939
    %vm943 = vcmask 97280
    %v944 = vsel %vm943, %v942, -1e+09
    %v945 = vpack.c.bf16 %v919, %v918
    %v946 = vpack.c.bf16 %v921, %v920
    %v947 = vpack.c.bf16 %v923, %v922
    %v948 = vpack.c.bf16 %v925, %v924
    %v949 = vpack.c.bf16 %v927, %v926
    %v950 = vpack.c.bf16 %v929, %v928
    %v951 = vpack.c.bf16 %v931, %v930
    %v952 = vpack.c.bf16 %v933, %v932
    %v953 = vld [vmem:[#allocation9] sm:$0xf]
    %v954 = vld [vmem:[#allocation9 + $0x4] sm:$0xf]
    %v955 = vld [vmem:[#allocation9 + $0x8] sm:$0xf]
    %v956 = vld [vmem:[#allocation9 + $0xc] sm:$0xf]
    %v957 = vld [vmem:[%s9] sm:$0x1]
    %v958 = vperm.slane %v957, 0
    %v963 = vunpack.c.l.b16 %v953
    %v964 = vunpack.c.l.b16 %v954
    %v965 = vunpack.c.l.b16 %v955
    %v966 = vunpack.c.l.b16 %v956
    %v967 = vpack.c.b16 %v964, %v963
    %v968 = vpack.c.b16 %v966, %v965
    %v972 = vsel %vm149, %v945, 0
    %v975 = vsel %vm149, %v946, 0
    %v978 = vsel %vm149, %v947, 0
    %v981 = vsel %vm149, %v948, 0
    %v984 = vsel %vm149, %v949, 0
    %v987 = vsel %vm149, %v950, 0
    %v990 = vsel %vm149, %v951, 0
    %v993 = vsel %vm149, %v952, 0
    %995 = vmatpush.bf16.msra.mxu0 0
    %996 = vmatpush.bf16.msra.mxu0 0
    %997 = vmatpush.bf16.msra.mxu0 0
    %998 = vmatpush.bf16.msra.mxu0 0
    %999 = vmatpush.bf16.msra.mxu0 0
    %1000 = vmatpush.bf16.msra.mxu0 0
    %1001 = vmatpush.bf16.msra.mxu0 %v968
    %1002 = vmatpush.bf16.msra.mxu0 %v967
    %1003 = vmatmul.bf16.gmra.mxu0 %v972
    %v1004 = vpop.f32.mrf.mxu0
    %v1005 = vadd.f32 %v958, %v1004
    %v1006 = vpop.f32.mrf.mxu0
    %v1007 = vadd.f32 %v958, %v1006
    %1008 = vmatmul.bf16.gmra.mxu0 %v975
    %v1009 = vpop.f32.mrf.mxu0
    %v1010 = vadd.f32 %v958, %v1009
    %v1011 = vpop.f32.mrf.mxu0
    %v1012 = vadd.f32 %v958, %v1011
    %1013 = vmatmul.bf16.gmra.mxu0 %v978
    %v1014 = vpop.f32.mrf.mxu0
    %v1015 = vadd.f32 %v958, %v1014
    %v1016 = vpop.f32.mrf.mxu0
    %v1017 = vadd.f32 %v958, %v1016
    %1018 = vmatmul.bf16.gmra.mxu0 %v981
    %v1019 = vpop.f32.mrf.mxu0
    %v1020 = vadd.f32 %v958, %v1019
    %v1021 = vpop.f32.mrf.mxu0
    %v1022 = vadd.f32 %v958, %v1021
    %1023 = vmatmul.bf16.gmra.mxu0 %v984
    %v1024 = vpop.f32.mrf.mxu0
    %v1025 = vadd.f32 %v958, %v1024
    %v1026 = vpop.f32.mrf.mxu0
    %v1027 = vadd.f32 %v958, %v1026
    %1028 = vmatmul.bf16.gmra.mxu0 %v987
    %v1029 = vpop.f32.mrf.mxu0
    %v1030 = vadd.f32 %v958, %v1029
    %v1031 = vpop.f32.mrf.mxu0
    %v1032 = vadd.f32 %v958, %v1031
    %1033 = vmatmul.bf16.gmra.mxu0 %v990
    %v1034 = vpop.f32.mrf.mxu0
    %v1035 = vadd.f32 %v958, %v1034
    %v1036 = vpop.f32.mrf.mxu0
    %v1037 = vadd.f32 %v958, %v1036
    %1038 = vmatmul.bf16.gmra.mxu0 %v993
    %v1039 = vpop.f32.mrf.mxu0
    %v1040 = vadd.f32 %v958, %v1039
    %v1041 = vpop.f32.mrf.mxu0
    %v1042 = vadd.f32 %v958, %v1041
    %1043 = vdwg.mxu0
    %v1044 = vmul.f32 %v1005, 0.25
    %v1045 = vmul.f32 %v1007, 0.25
    %v1046 = vmul.f32 %v1010, 0.25
    %v1047 = vmul.f32 %v1012, 0.25
    %v1048 = vmul.f32 %v1015, 0.25
    %v1049 = vmul.f32 %v1017, 0.25
    %v1050 = vmul.f32 %v1020, 0.25
    %v1051 = vmul.f32 %v1022, 0.25
    %v1052 = vmul.f32 %v1025, 0.25
    %v1053 = vmul.f32 %v1027, 0.25
    %v1054 = vmul.f32 %v1030, 0.25
    %v1055 = vmul.f32 %v1032, 0.25
    %v1056 = vmul.f32 %v1035, 0.25
    %v1057 = vmul.f32 %v1037, 0.25
    %v1058 = vmul.f32 %v1040, 0.25
    %v1059 = vmul.f32 %v1042, 0.25
    %v1060 = vperm.slane %v944, 0
    %1063 = vrot.lane.b32.xlu0 %v1005, 96
    %v1064 = vpop.permute.xlu0 %1063
    %1065 = vrot.lane.b32.xlu0 %v1007, 96
    %v1066 = vpop.permute.xlu0 %1065
    %vm1067 = vcmask 130048
    %v1069 = vsel %vm1067, %v1044, 0
    %v1072 = vsel %vm1067, %v1045, 0
    %v1074 = vsel %vm1067, %v1064, 0
    %v1076 = vsel %vm1067, %v1066, 0
    %1078 = vmatpush.xpose.msra.mxu0 0.0
    %1079 = vmatpush.xpose.msra.mxu0 0.0
    %1080 = vmatpush.xpose.msra.mxu0 0.0
    %1081 = vmatpush.xpose.msra.mxu0 0.0
    %1082 = vmatpush.xpose.msra.mxu0 0.0
    %1083 = vmatpush.xpose.msra.mxu0 0.0
    %1084 = vmatpush.xpose.msra.mxu0 0.0
    %1085 = vmatpush.xpose.msra.mxu0 0.0
    %1086 = vmatpush.xpose.msra.mxu0 0.0
    %1087 = vmatpush.xpose.msra.mxu0 0.0
    %1088 = vmatpush.xpose.msra.mxu0 0.0
    %1089 = vmatpush.xpose.msra.mxu0 0.0
    %1090 = vmatpush.xpose.msra.mxu0 0.0
    %1091 = vmatpush.xpose.msra.mxu0 0.0
    %1092 = vmatpush.xpose.msra.mxu0 %v1076
    %1093 = vmatpush.xpose.msra.mxu0 %v1074
    %1094 = vmatmul.f32.gmra.mxu0 %v1069
    %v1095 = vpop.f32.mrf.mxu0
    %v1096 = vadd.f32 %v1060, %v1095
    %1097 = vmatmul.f32.gmra.mxu0 %v1072
    %v1098 = vpop.f32.mrf.mxu0
    %v1099 = vadd.f32 %v1060, %v1098
    %1100 = vdwg.mxu0
    %v1101 = vsel %vm1067, %v1096, -inf
    %1102 = vmax.xlane.f32.xlu0 %v1101
    %v1103 = vpop.xlane.xlu0 %1102
    %v1104 = vsel %vm1067, %v1099, -inf
    %1105 = vmax.xlane.f32.xlu0 %v1104
    %v1106 = vpop.xlane.xlu0 %1105
    %v1107 = vsub.f32 %v1096, %v1103
    %v1108 = vsub.f32 %v1099, %v1106
    %v1109 = vmul.f32 %v1107, 1.442695
    %v1110 = vpow.pop %v1109
    %v1111 = vmul.f32 %v1108, 1.442695
    %v1112 = vpow.pop %v1111
    %v1113 = vsel %vm1067, %v1110, 0.0
    %1114 = vadd.xlane.f32.xlu0 %v1113
    %v1115 = vpop.xlane.xlu0 %1114
    %v1116 = vsel %vm1067, %v1112, 0.0
    %1117 = vadd.xlane.f32.xlu0 %v1116
    %v1118 = vpop.xlane.xlu0 %1117
    %v1119 = vrcp.pop %v1115
    %v1120 = vrcp.pop %v1118
    %v1121 = vmul.f32 %v1110, %v1119
    %v1122 = vmul.f32 %v1112, %v1120
    %1123 = vrot.lane.b32.xlu0 %v1005, 64
    %v1124 = vpop.permute.xlu0 %1123
    %1125 = vrot.lane.b32.xlu0 %v1007, 64
    %v1126 = vpop.permute.xlu0 %1125
    %v1130 = vsel %vm1067, %v1121, 0
    %v1133 = vsel %vm1067, %v1122, 0
    %1135 = vmatpush.msra.mxu0 0.0
    %1136 = vmatpush.msra.mxu0 0.0
    %1137 = vmatpush.msra.mxu0 0.0
    %1138 = vmatpush.msra.mxu0 0.0
    %1139 = vmatpush.msra.mxu0 0.0
    %1140 = vmatpush.msra.mxu0 0.0
    %1141 = vmatpush.msra.mxu0 0.0
    %1142 = vmatpush.msra.mxu0 0.0
    %1143 = vmatpush.msra.mxu0 0.0
    %1144 = vmatpush.msra.mxu0 0.0
    %1145 = vmatpush.msra.mxu0 0.0
    %1146 = vmatpush.msra.mxu0 0.0
    %1147 = vmatpush.msra.mxu0 0.0
    %1148 = vmatpush.msra.mxu0 0.0
    %1149 = vmatpush.msra.mxu0 %v1126
    %1150 = vmatpush.msra.mxu0 %v1124
    %1151 = vmatmul.f32.gmra.mxu0 %v1130
    %v1152 = vpop.f32.mrf.mxu0
    %v1153 = vadd.f32 0.0, %v1152
    %1154 = vmatmul.f32.gmra.mxu0 %v1133
    %v1155 = vpop.f32.mrf.mxu0
    %v1156 = vadd.f32 0.0, %v1155
    %1157 = vdwg.mxu0
    %v1158 = vperm.slane %v944, 1
    %1161 = vrot.lane.b32.xlu0 %v1010, 96
    %v1162 = vpop.permute.xlu0 %1161
    %1163 = vrot.lane.b32.xlu0 %v1012, 96
    %v1164 = vpop.permute.xlu0 %1163
    %v1166 = vsel %vm1067, %v1046, 0
    %v1169 = vsel %vm1067, %v1047, 0
    %v1171 = vsel %vm1067, %v1162, 0
    %v1173 = vsel %vm1067, %v1164, 0
    %1175 = vmatpush.xpose.msra.mxu0 0.0
    %1176 = vmatpush.xpose.msra.mxu0 0.0
    %1177 = vmatpush.xpose.msra.mxu0 0.0
    %1178 = vmatpush.xpose.msra.mxu0 0.0
    %1179 = vmatpush.xpose.msra.mxu0 0.0
    %1180 = vmatpush.xpose.msra.mxu0 0.0
    %1181 = vmatpush.xpose.msra.mxu0 0.0
    %1182 = vmatpush.xpose.msra.mxu0 0.0
    %1183 = vmatpush.xpose.msra.mxu0 0.0
    %1184 = vmatpush.xpose.msra.mxu0 0.0
    %1185 = vmatpush.xpose.msra.mxu0 0.0
    %1186 = vmatpush.xpose.msra.mxu0 0.0
    %1187 = vmatpush.xpose.msra.mxu0 0.0
    %1188 = vmatpush.xpose.msra.mxu0 0.0
    %1189 = vmatpush.xpose.msra.mxu0 %v1173
    %1190 = vmatpush.xpose.msra.mxu0 %v1171
    %1191 = vmatmul.f32.gmra.mxu0 %v1166
    %v1192 = vpop.f32.mrf.mxu0
    %v1193 = vadd.f32 %v1158, %v1192
    %1194 = vmatmul.f32.gmra.mxu0 %v1169
    %v1195 = vpop.f32.mrf.mxu0
    %v1196 = vadd.f32 %v1158, %v1195
    %1197 = vdwg.mxu0
    %v1198 = vsel %vm1067, %v1193, -inf
    %1199 = vmax.xlane.f32.xlu0 %v1198
    %v1200 = vpop.xlane.xlu0 %1199
    %v1201 = vsel %vm1067, %v1196, -inf
    %1202 = vmax.xlane.f32.xlu0 %v1201
    %v1203 = vpop.xlane.xlu0 %1202
    %v1204 = vsub.f32 %v1193, %v1200
    %v1205 = vsub.f32 %v1196, %v1203
    %v1206 = vmul.f32 %v1204, 1.442695
    %v1207 = vpow.pop %v1206
    %v1208 = vmul.f32 %v1205, 1.442695
    %v1209 = vpow.pop %v1208
    %v1210 = vsel %vm1067, %v1207, 0.0
    %1211 = vadd.xlane.f32.xlu0 %v1210
    %v1212 = vpop.xlane.xlu0 %1211
    %v1213 = vsel %vm1067, %v1209, 0.0
    %1214 = vadd.xlane.f32.xlu0 %v1213
    %v1215 = vpop.xlane.xlu0 %1214
    %v1216 = vrcp.pop %v1212
    %v1217 = vrcp.pop %v1215
    %v1218 = vmul.f32 %v1207, %v1216
    %v1219 = vmul.f32 %v1209, %v1217
    %1220 = vrot.lane.b32.xlu0 %v1010, 64
    %v1221 = vpop.permute.xlu0 %1220
    %1222 = vrot.lane.b32.xlu0 %v1012, 64
    %v1223 = vpop.permute.xlu0 %1222
    %v1227 = vsel %vm1067, %v1218, 0
    %v1230 = vsel %vm1067, %v1219, 0
    %1232 = vmatpush.msra.mxu0 0.0
    %1233 = vmatpush.msra.mxu0 0.0
    %1234 = vmatpush.msra.mxu0 0.0
    %1235 = vmatpush.msra.mxu0 0.0
    %1236 = vmatpush.msra.mxu0 0.0
    %1237 = vmatpush.msra.mxu0 0.0
    %1238 = vmatpush.msra.mxu0 0.0
    %1239 = vmatpush.msra.mxu0 0.0
    %1240 = vmatpush.msra.mxu0 0.0
    %1241 = vmatpush.msra.mxu0 0.0
    %1242 = vmatpush.msra.mxu0 0.0
    %1243 = vmatpush.msra.mxu0 0.0
    %1244 = vmatpush.msra.mxu0 0.0
    %1245 = vmatpush.msra.mxu0 0.0
    %1246 = vmatpush.msra.mxu0 %v1223
    %1247 = vmatpush.msra.mxu0 %v1221
    %1248 = vmatmul.f32.gmra.mxu0 %v1227
    %v1249 = vpop.f32.mrf.mxu0
    %v1250 = vadd.f32 0.0, %v1249
    %1251 = vmatmul.f32.gmra.mxu0 %v1230
    %v1252 = vpop.f32.mrf.mxu0
    %v1253 = vadd.f32 0.0, %v1252
    %1254 = vdwg.mxu0
    %v1255 = vperm.slane %v944, 2
    %1258 = vrot.lane.b32.xlu0 %v1015, 96
    %v1259 = vpop.permute.xlu0 %1258
    %1260 = vrot.lane.b32.xlu0 %v1017, 96
    %v1261 = vpop.permute.xlu0 %1260
    %v1263 = vsel %vm1067, %v1048, 0
    %v1266 = vsel %vm1067, %v1049, 0
    %v1268 = vsel %vm1067, %v1259, 0
    %v1270 = vsel %vm1067, %v1261, 0
    %1272 = vmatpush.xpose.msra.mxu0 0.0
    %1273 = vmatpush.xpose.msra.mxu0 0.0
    %1274 = vmatpush.xpose.msra.mxu0 0.0
    %1275 = vmatpush.xpose.msra.mxu0 0.0
    %1276 = vmatpush.xpose.msra.mxu0 0.0
    %1277 = vmatpush.xpose.msra.mxu0 0.0
    %1278 = vmatpush.xpose.msra.mxu0 0.0
    %1279 = vmatpush.xpose.msra.mxu0 0.0
    %1280 = vmatpush.xpose.msra.mxu0 0.0
    %1281 = vmatpush.xpose.msra.mxu0 0.0
    %1282 = vmatpush.xpose.msra.mxu0 0.0
    %1283 = vmatpush.xpose.msra.mxu0 0.0
    %1284 = vmatpush.xpose.msra.mxu0 0.0
    %1285 = vmatpush.xpose.msra.mxu0 0.0
    %1286 = vmatpush.xpose.msra.mxu0 %v1270
    %1287 = vmatpush.xpose.msra.mxu0 %v1268
    %1288 = vmatmul.f32.gmra.mxu0 %v1263
    %v1289 = vpop.f32.mrf.mxu0
    %v1290 = vadd.f32 %v1255, %v1289
    %1291 = vmatmul.f32.gmra.mxu0 %v1266
    %v1292 = vpop.f32.mrf.mxu0
    %v1293 = vadd.f32 %v1255, %v1292
    %1294 = vdwg.mxu0
    %v1295 = vsel %vm1067, %v1290, -inf
    %1296 = vmax.xlane.f32.xlu0 %v1295
    %v1297 = vpop.xlane.xlu0 %1296
    %v1298 = vsel %vm1067, %v1293, -inf
    %1299 = vmax.xlane.f32.xlu0 %v1298
    %v1300 = vpop.xlane.xlu0 %1299
    %v1301 = vsub.f32 %v1290, %v1297
    %v1302 = vsub.f32 %v1293, %v1300
    %v1303 = vmul.f32 %v1301, 1.442695
    %v1304 = vpow.pop %v1303
    %v1305 = vmul.f32 %v1302, 1.442695
    %v1306 = vpow.pop %v1305
    %v1307 = vsel %vm1067, %v1304, 0.0
    %1308 = vadd.xlane.f32.xlu0 %v1307
    %v1309 = vpop.xlane.xlu0 %1308
    %v1310 = vsel %vm1067, %v1306, 0.0
    %1311 = vadd.xlane.f32.xlu0 %v1310
    %v1312 = vpop.xlane.xlu0 %1311
    %v1313 = vrcp.pop %v1309
    %v1314 = vrcp.pop %v1312
    %v1315 = vmul.f32 %v1304, %v1313
    %v1316 = vmul.f32 %v1306, %v1314
    %1317 = vrot.lane.b32.xlu0 %v1015, 64
    %v1318 = vpop.permute.xlu0 %1317
    %1319 = vrot.lane.b32.xlu0 %v1017, 64
    %v1320 = vpop.permute.xlu0 %1319
    %v1324 = vsel %vm1067, %v1315, 0
    %v1327 = vsel %vm1067, %v1316, 0
    %1329 = vmatpush.msra.mxu0 0.0
    %1330 = vmatpush.msra.mxu0 0.0
    %1331 = vmatpush.msra.mxu0 0.0
    %1332 = vmatpush.msra.mxu0 0.0
    %1333 = vmatpush.msra.mxu0 0.0
    %1334 = vmatpush.msra.mxu0 0.0
    %1335 = vmatpush.msra.mxu0 0.0
    %1336 = vmatpush.msra.mxu0 0.0
    %1337 = vmatpush.msra.mxu0 0.0
    %1338 = vmatpush.msra.mxu0 0.0
    %1339 = vmatpush.msra.mxu0 0.0
    %1340 = vmatpush.msra.mxu0 0.0
    %1341 = vmatpush.msra.mxu0 0.0
    %1342 = vmatpush.msra.mxu0 0.0
    %1343 = vmatpush.msra.mxu0 %v1320
    %1344 = vmatpush.msra.mxu0 %v1318
    %1345 = vmatmul.f32.gmra.mxu0 %v1324
    %v1346 = vpop.f32.mrf.mxu0
    %v1347 = vadd.f32 0.0, %v1346
    %1348 = vmatmul.f32.gmra.mxu0 %v1327
    %v1349 = vpop.f32.mrf.mxu0
    %v1350 = vadd.f32 0.0, %v1349
    %1351 = vdwg.mxu0
    %v1352 = vperm.slane %v944, 3
    %1355 = vrot.lane.b32.xlu0 %v1020, 96
    %v1356 = vpop.permute.xlu0 %1355
    %1357 = vrot.lane.b32.xlu0 %v1022, 96
    %v1358 = vpop.permute.xlu0 %1357
    %v1360 = vsel %vm1067, %v1050, 0
    %v1363 = vsel %vm1067, %v1051, 0
    %v1365 = vsel %vm1067, %v1356, 0
    %v1367 = vsel %vm1067, %v1358, 0
    %1369 = vmatpush.xpose.msra.mxu0 0.0
    %1370 = vmatpush.xpose.msra.mxu0 0.0
    %1371 = vmatpush.xpose.msra.mxu0 0.0
    %1372 = vmatpush.xpose.msra.mxu0 0.0
    %1373 = vmatpush.xpose.msra.mxu0 0.0
    %1374 = vmatpush.xpose.msra.mxu0 0.0
    %1375 = vmatpush.xpose.msra.mxu0 0.0
    %1376 = vmatpush.xpose.msra.mxu0 0.0
    %1377 = vmatpush.xpose.msra.mxu0 0.0
    %1378 = vmatpush.xpose.msra.mxu0 0.0
    %1379 = vmatpush.xpose.msra.mxu0 0.0
    %1380 = vmatpush.xpose.msra.mxu0 0.0
    %1381 = vmatpush.xpose.msra.mxu0 0.0
    %1382 = vmatpush.xpose.msra.mxu0 0.0
    %1383 = vmatpush.xpose.msra.mxu0 %v1367
    %1384 = vmatpush.xpose.msra.mxu0 %v1365
    %1385 = vmatmul.f32.gmra.mxu0 %v1360
    %v1386 = vpop.f32.mrf.mxu0
    %v1387 = vadd.f32 %v1352, %v1386
    %1388 = vmatmul.f32.gmra.mxu0 %v1363
    %v1389 = vpop.f32.mrf.mxu0
    %v1390 = vadd.f32 %v1352, %v1389
    %1391 = vdwg.mxu0
    %v1392 = vsel %vm1067, %v1387, -inf
    %1393 = vmax.xlane.f32.xlu0 %v1392
    %v1394 = vpop.xlane.xlu0 %1393
    %v1395 = vsel %vm1067, %v1390, -inf
    %1396 = vmax.xlane.f32.xlu0 %v1395
    %v1397 = vpop.xlane.xlu0 %1396
    %v1398 = vsub.f32 %v1387, %v1394
    %v1399 = vsub.f32 %v1390, %v1397
    %v1400 = vmul.f32 %v1398, 1.442695
    %v1401 = vpow.pop %v1400
    %v1402 = vmul.f32 %v1399, 1.442695
    %v1403 = vpow.pop %v1402
    %v1404 = vsel %vm1067, %v1401, 0.0
    %1405 = vadd.xlane.f32.xlu0 %v1404
    %v1406 = vpop.xlane.xlu0 %1405
    %v1407 = vsel %vm1067, %v1403, 0.0
    %1408 = vadd.xlane.f32.xlu0 %v1407
    %v1409 = vpop.xlane.xlu0 %1408
    %v1410 = vrcp.pop %v1406
    %v1411 = vrcp.pop %v1409
    %v1412 = vmul.f32 %v1401, %v1410
    %v1413 = vmul.f32 %v1403, %v1411
    %1414 = vrot.lane.b32.xlu0 %v1020, 64
    %v1415 = vpop.permute.xlu0 %1414
    %1416 = vrot.lane.b32.xlu0 %v1022, 64
    %v1417 = vpop.permute.xlu0 %1416
    %v1421 = vsel %vm1067, %v1412, 0
    %v1424 = vsel %vm1067, %v1413, 0
    %1426 = vmatpush.msra.mxu0 0.0
    %1427 = vmatpush.msra.mxu0 0.0
    %1428 = vmatpush.msra.mxu0 0.0
    %1429 = vmatpush.msra.mxu0 0.0
    %1430 = vmatpush.msra.mxu0 0.0
    %1431 = vmatpush.msra.mxu0 0.0
    %1432 = vmatpush.msra.mxu0 0.0
    %1433 = vmatpush.msra.mxu0 0.0
    %1434 = vmatpush.msra.mxu0 0.0
    %1435 = vmatpush.msra.mxu0 0.0
    %1436 = vmatpush.msra.mxu0 0.0
    %1437 = vmatpush.msra.mxu0 0.0
    %1438 = vmatpush.msra.mxu0 0.0
    %1439 = vmatpush.msra.mxu0 0.0
    %1440 = vmatpush.msra.mxu0 %v1417
    %1441 = vmatpush.msra.mxu0 %v1415
    %1442 = vmatmul.f32.gmra.mxu0 %v1421
    %v1443 = vpop.f32.mrf.mxu0
    %v1444 = vadd.f32 0.0, %v1443
    %1445 = vmatmul.f32.gmra.mxu0 %v1424
    %v1446 = vpop.f32.mrf.mxu0
    %v1447 = vadd.f32 0.0, %v1446
    %1448 = vdwg.mxu0
    %v1449 = vperm.slane %v944, 4
    %1452 = vrot.lane.b32.xlu0 %v1025, 96
    %v1453 = vpop.permute.xlu0 %1452
    %1454 = vrot.lane.b32.xlu0 %v1027, 96
    %v1455 = vpop.permute.xlu0 %1454
    %v1457 = vsel %vm1067, %v1052, 0
    %v1460 = vsel %vm1067, %v1053, 0
    %v1462 = vsel %vm1067, %v1453, 0
    %v1464 = vsel %vm1067, %v1455, 0
    %1466 = vmatpush.xpose.msra.mxu0 0.0
    %1467 = vmatpush.xpose.msra.mxu0 0.0
    %1468 = vmatpush.xpose.msra.mxu0 0.0
    %1469 = vmatpush.xpose.msra.mxu0 0.0
    %1470 = vmatpush.xpose.msra.mxu0 0.0
    %1471 = vmatpush.xpose.msra.mxu0 0.0
    %1472 = vmatpush.xpose.msra.mxu0 0.0
    %1473 = vmatpush.xpose.msra.mxu0 0.0
    %1474 = vmatpush.xpose.msra.mxu0 0.0
    %1475 = vmatpush.xpose.msra.mxu0 0.0
    %1476 = vmatpush.xpose.msra.mxu0 0.0
    %1477 = vmatpush.xpose.msra.mxu0 0.0
    %1478 = vmatpush.xpose.msra.mxu0 0.0
    %1479 = vmatpush.xpose.msra.mxu0 0.0
    %1480 = vmatpush.xpose.msra.mxu0 %v1464
    %1481 = vmatpush.xpose.msra.mxu0 %v1462
    %1482 = vmatmul.f32.gmra.mxu0 %v1457
    %v1483 = vpop.f32.mrf.mxu0
    %v1484 = vadd.f32 %v1449, %v1483
    %1485 = vmatmul.f32.gmra.mxu0 %v1460
    %v1486 = vpop.f32.mrf.mxu0
    %v1487 = vadd.f32 %v1449, %v1486
    %1488 = vdwg.mxu0
    %v1489 = vsel %vm1067, %v1484, -inf
    %1490 = vmax.xlane.f32.xlu0 %v1489
    %v1491 = vpop.xlane.xlu0 %1490
    %v1492 = vsel %vm1067, %v1487, -inf
    %1493 = vmax.xlane.f32.xlu0 %v1492
    %v1494 = vpop.xlane.xlu0 %1493
    %v1495 = vsub.f32 %v1484, %v1491
    %v1496 = vsub.f32 %v1487, %v1494
    %v1497 = vmul.f32 %v1495, 1.442695
    %v1498 = vpow.pop %v1497
    %v1499 = vmul.f32 %v1496, 1.442695
    %v1500 = vpow.pop %v1499
    %v1501 = vsel %vm1067, %v1498, 0.0
    %1502 = vadd.xlane.f32.xlu0 %v1501
    %v1503 = vpop.xlane.xlu0 %1502
    %v1504 = vsel %vm1067, %v1500, 0.0
    %1505 = vadd.xlane.f32.xlu0 %v1504
    %v1506 = vpop.xlane.xlu0 %1505
    %v1507 = vrcp.pop %v1503
    %v1508 = vrcp.pop %v1506
    %v1509 = vmul.f32 %v1498, %v1507
    %v1510 = vmul.f32 %v1500, %v1508
    %1511 = vrot.lane.b32.xlu0 %v1025, 64
    %v1512 = vpop.permute.xlu0 %1511
    %1513 = vrot.lane.b32.xlu0 %v1027, 64
    %v1514 = vpop.permute.xlu0 %1513
    %v1518 = vsel %vm1067, %v1509, 0
    %v1521 = vsel %vm1067, %v1510, 0
    %1523 = vmatpush.msra.mxu0 0.0
    %1524 = vmatpush.msra.mxu0 0.0
    %1525 = vmatpush.msra.mxu0 0.0
    %1526 = vmatpush.msra.mxu0 0.0
    %1527 = vmatpush.msra.mxu0 0.0
    %1528 = vmatpush.msra.mxu0 0.0
    %1529 = vmatpush.msra.mxu0 0.0
    %1530 = vmatpush.msra.mxu0 0.0
    %1531 = vmatpush.msra.mxu0 0.0
    %1532 = vmatpush.msra.mxu0 0.0
    %1533 = vmatpush.msra.mxu0 0.0
    %1534 = vmatpush.msra.mxu0 0.0
    %1535 = vmatpush.msra.mxu0 0.0
    %1536 = vmatpush.msra.mxu0 0.0
    %1537 = vmatpush.msra.mxu0 %v1514
    %1538 = vmatpush.msra.mxu0 %v1512
    %1539 = vmatmul.f32.gmra.mxu0 %v1518
    %v1540 = vpop.f32.mrf.mxu0
    %v1541 = vadd.f32 0.0, %v1540
    %1542 = vmatmul.f32.gmra.mxu0 %v1521
    %v1543 = vpop.f32.mrf.mxu0
    %v1544 = vadd.f32 0.0, %v1543
    %1545 = vdwg.mxu0
    %v1546 = vperm.slane %v944, 5
    %1549 = vrot.lane.b32.xlu0 %v1030, 96
    %v1550 = vpop.permute.xlu0 %1549
    %1551 = vrot.lane.b32.xlu0 %v1032, 96
    %v1552 = vpop.permute.xlu0 %1551
    %v1554 = vsel %vm1067, %v1054, 0
    %v1557 = vsel %vm1067, %v1055, 0
    %v1559 = vsel %vm1067, %v1550, 0
    %v1561 = vsel %vm1067, %v1552, 0
    %1563 = vmatpush.xpose.msra.mxu0 0.0
    %1564 = vmatpush.xpose.msra.mxu0 0.0
    %1565 = vmatpush.xpose.msra.mxu0 0.0
    %1566 = vmatpush.xpose.msra.mxu0 0.0
    %1567 = vmatpush.xpose.msra.mxu0 0.0
    %1568 = vmatpush.xpose.msra.mxu0 0.0
    %1569 = vmatpush.xpose.msra.mxu0 0.0
    %1570 = vmatpush.xpose.msra.mxu0 0.0
    %1571 = vmatpush.xpose.msra.mxu0 0.0
    %1572 = vmatpush.xpose.msra.mxu0 0.0
    %1573 = vmatpush.xpose.msra.mxu0 0.0
    %1574 = vmatpush.xpose.msra.mxu0 0.0
    %1575 = vmatpush.xpose.msra.mxu0 0.0
    %1576 = vmatpush.xpose.msra.mxu0 0.0
    %1577 = vmatpush.xpose.msra.mxu0 %v1561
    %1578 = vmatpush.xpose.msra.mxu0 %v1559
    %1579 = vmatmul.f32.gmra.mxu0 %v1554
    %v1580 = vpop.f32.mrf.mxu0
    %v1581 = vadd.f32 %v1546, %v1580
    %1582 = vmatmul.f32.gmra.mxu0 %v1557
    %v1583 = vpop.f32.mrf.mxu0
    %v1584 = vadd.f32 %v1546, %v1583
    %1585 = vdwg.mxu0
    %v1586 = vsel %vm1067, %v1581, -inf
    %1587 = vmax.xlane.f32.xlu0 %v1586
    %v1588 = vpop.xlane.xlu0 %1587
    %v1589 = vsel %vm1067, %v1584, -inf
    %1590 = vmax.xlane.f32.xlu0 %v1589
    %v1591 = vpop.xlane.xlu0 %1590
    %v1592 = vsub.f32 %v1581, %v1588
    %v1593 = vsub.f32 %v1584, %v1591
    %v1594 = vmul.f32 %v1592, 1.442695
    %v1595 = vpow.pop %v1594
    %v1596 = vmul.f32 %v1593, 1.442695
    %v1597 = vpow.pop %v1596
    %v1598 = vsel %vm1067, %v1595, 0.0
    %1599 = vadd.xlane.f32.xlu0 %v1598
    %v1600 = vpop.xlane.xlu0 %1599
    %v1601 = vsel %vm1067, %v1597, 0.0
    %1602 = vadd.xlane.f32.xlu0 %v1601
    %v1603 = vpop.xlane.xlu0 %1602
    %v1604 = vrcp.pop %v1600
    %v1605 = vrcp.pop %v1603
    %v1606 = vmul.f32 %v1595, %v1604
    %v1607 = vmul.f32 %v1597, %v1605
    %1608 = vrot.lane.b32.xlu0 %v1030, 64
    %v1609 = vpop.permute.xlu0 %1608
    %1610 = vrot.lane.b32.xlu0 %v1032, 64
    %v1611 = vpop.permute.xlu0 %1610
    %v1615 = vsel %vm1067, %v1606, 0
    %v1618 = vsel %vm1067, %v1607, 0
    %1620 = vmatpush.msra.mxu0 0.0
    %1621 = vmatpush.msra.mxu0 0.0
    %1622 = vmatpush.msra.mxu0 0.0
    %1623 = vmatpush.msra.mxu0 0.0
    %1624 = vmatpush.msra.mxu0 0.0
    %1625 = vmatpush.msra.mxu0 0.0
    %1626 = vmatpush.msra.mxu0 0.0
    %1627 = vmatpush.msra.mxu0 0.0
    %1628 = vmatpush.msra.mxu0 0.0
    %1629 = vmatpush.msra.mxu0 0.0
    %1630 = vmatpush.msra.mxu0 0.0
    %1631 = vmatpush.msra.mxu0 0.0
    %1632 = vmatpush.msra.mxu0 0.0
    %1633 = vmatpush.msra.mxu0 0.0
    %1634 = vmatpush.msra.mxu0 %v1611
    %1635 = vmatpush.msra.mxu0 %v1609
    %1636 = vmatmul.f32.gmra.mxu0 %v1615
    %v1637 = vpop.f32.mrf.mxu0
    %v1638 = vadd.f32 0.0, %v1637
    %1639 = vmatmul.f32.gmra.mxu0 %v1618
    %v1640 = vpop.f32.mrf.mxu0
    %v1641 = vadd.f32 0.0, %v1640
    %1642 = vdwg.mxu0
    %v1643 = vperm.slane %v944, 6
    %1646 = vrot.lane.b32.xlu0 %v1035, 96
    %v1647 = vpop.permute.xlu0 %1646
    %1648 = vrot.lane.b32.xlu0 %v1037, 96
    %v1649 = vpop.permute.xlu0 %1648
    %v1651 = vsel %vm1067, %v1056, 0
    %v1654 = vsel %vm1067, %v1057, 0
    %v1656 = vsel %vm1067, %v1647, 0
    %v1658 = vsel %vm1067, %v1649, 0
    %1660 = vmatpush.xpose.msra.mxu0 0.0
    %1661 = vmatpush.xpose.msra.mxu0 0.0
    %1662 = vmatpush.xpose.msra.mxu0 0.0
    %1663 = vmatpush.xpose.msra.mxu0 0.0
    %1664 = vmatpush.xpose.msra.mxu0 0.0
    %1665 = vmatpush.xpose.msra.mxu0 0.0
    %1666 = vmatpush.xpose.msra.mxu0 0.0
    %1667 = vmatpush.xpose.msra.mxu0 0.0
    %1668 = vmatpush.xpose.msra.mxu0 0.0
    %1669 = vmatpush.xpose.msra.mxu0 0.0
    %1670 = vmatpush.xpose.msra.mxu0 0.0
    %1671 = vmatpush.xpose.msra.mxu0 0.0
    %1672 = vmatpush.xpose.msra.mxu0 0.0
    %1673 = vmatpush.xpose.msra.mxu0 0.0
    %1674 = vmatpush.xpose.msra.mxu0 %v1658
    %1675 = vmatpush.xpose.msra.mxu0 %v1656
    %1676 = vmatmul.f32.gmra.mxu0 %v1651
    %v1677 = vpop.f32.mrf.mxu0
    %v1678 = vadd.f32 %v1643, %v1677
    %1679 = vmatmul.f32.gmra.mxu0 %v1654
    %v1680 = vpop.f32.mrf.mxu0
    %v1681 = vadd.f32 %v1643, %v1680
    %1682 = vdwg.mxu0
    %v1683 = vsel %vm1067, %v1678, -inf
    %1684 = vmax.xlane.f32.xlu0 %v1683
    %v1685 = vpop.xlane.xlu0 %1684
    %v1686 = vsel %vm1067, %v1681, -inf
    %1687 = vmax.xlane.f32.xlu0 %v1686
    %v1688 = vpop.xlane.xlu0 %1687
    %v1689 = vsub.f32 %v1678, %v1685
    %v1690 = vsub.f32 %v1681, %v1688
    %v1691 = vmul.f32 %v1689, 1.442695
    %v1692 = vpow.pop %v1691
    %v1693 = vmul.f32 %v1690, 1.442695
    %v1694 = vpow.pop %v1693
    %v1695 = vsel %vm1067, %v1692, 0.0
    %1696 = vadd.xlane.f32.xlu0 %v1695
    %v1697 = vpop.xlane.xlu0 %1696
    %v1698 = vsel %vm1067, %v1694, 0.0
    %1699 = vadd.xlane.f32.xlu0 %v1698
    %v1700 = vpop.xlane.xlu0 %1699
    %v1701 = vrcp.pop %v1697
    %v1702 = vrcp.pop %v1700
    %v1703 = vmul.f32 %v1692, %v1701
    %v1704 = vmul.f32 %v1694, %v1702
    %1705 = vrot.lane.b32.xlu0 %v1035, 64
    %v1706 = vpop.permute.xlu0 %1705
    %1707 = vrot.lane.b32.xlu0 %v1037, 64
    %v1708 = vpop.permute.xlu0 %1707
    %v1712 = vsel %vm1067, %v1703, 0
    %v1715 = vsel %vm1067, %v1704, 0
    %1717 = vmatpush.msra.mxu0 0.0
    %1718 = vmatpush.msra.mxu0 0.0
    %1719 = vmatpush.msra.mxu0 0.0
    %1720 = vmatpush.msra.mxu0 0.0
    %1721 = vmatpush.msra.mxu0 0.0
    %1722 = vmatpush.msra.mxu0 0.0
    %1723 = vmatpush.msra.mxu0 0.0
    %1724 = vmatpush.msra.mxu0 0.0
    %1725 = vmatpush.msra.mxu0 0.0
    %1726 = vmatpush.msra.mxu0 0.0
    %1727 = vmatpush.msra.mxu0 0.0
    %1728 = vmatpush.msra.mxu0 0.0
    %1729 = vmatpush.msra.mxu0 0.0
    %1730 = vmatpush.msra.mxu0 0.0
    %1731 = vmatpush.msra.mxu0 %v1708
    %1732 = vmatpush.msra.mxu0 %v1706
    %1733 = vmatmul.f32.gmra.mxu0 %v1712
    %v1734 = vpop.f32.mrf.mxu0
    %v1735 = vadd.f32 0.0, %v1734
    %1736 = vmatmul.f32.gmra.mxu0 %v1715
    %v1737 = vpop.f32.mrf.mxu0
    %v1738 = vadd.f32 0.0, %v1737
    %1739 = vdwg.mxu0
    %v1740 = vperm.slane %v944, 7
    %1743 = vrot.lane.b32.xlu0 %v1040, 96
    %v1744 = vpop.permute.xlu0 %1743
    %1745 = vrot.lane.b32.xlu0 %v1042, 96
    %v1746 = vpop.permute.xlu0 %1745
    %v1748 = vsel %vm1067, %v1058, 0
    %v1751 = vsel %vm1067, %v1059, 0
    %v1753 = vsel %vm1067, %v1744, 0
    %v1755 = vsel %vm1067, %v1746, 0
    %1757 = vmatpush.xpose.msra.mxu0 0.0
    %1758 = vmatpush.xpose.msra.mxu0 0.0
    %1759 = vmatpush.xpose.msra.mxu0 0.0
    %1760 = vmatpush.xpose.msra.mxu0 0.0
    %1761 = vmatpush.xpose.msra.mxu0 0.0
    %1762 = vmatpush.xpose.msra.mxu0 0.0
    %1763 = vmatpush.xpose.msra.mxu0 0.0
    %1764 = vmatpush.xpose.msra.mxu0 0.0
    %1765 = vmatpush.xpose.msra.mxu0 0.0
    %1766 = vmatpush.xpose.msra.mxu0 0.0
    %1767 = vmatpush.xpose.msra.mxu0 0.0
    %1768 = vmatpush.xpose.msra.mxu0 0.0
    %1769 = vmatpush.xpose.msra.mxu0 0.0
    %1770 = vmatpush.xpose.msra.mxu0 0.0
    %1771 = vmatpush.xpose.msra.mxu0 %v1755
    %1772 = vmatpush.xpose.msra.mxu0 %v1753
    %1773 = vmatmul.f32.gmra.mxu0 %v1748
    %v1774 = vpop.f32.mrf.mxu0
    %v1775 = vadd.f32 %v1740, %v1774
    %1776 = vmatmul.f32.gmra.mxu0 %v1751
    %v1777 = vpop.f32.mrf.mxu0
    %v1778 = vadd.f32 %v1740, %v1777
    %1779 = vdwg.mxu0
    %v1780 = vsel %vm1067, %v1775, -inf
    %1781 = vmax.xlane.f32.xlu0 %v1780
    %v1782 = vpop.xlane.xlu0 %1781
    %v1783 = vsel %vm1067, %v1778, -inf
    %1784 = vmax.xlane.f32.xlu0 %v1783
    %v1785 = vpop.xlane.xlu0 %1784
    %v1786 = vsub.f32 %v1775, %v1782
    %v1787 = vsub.f32 %v1778, %v1785
    %v1788 = vmul.f32 %v1786, 1.442695
    %v1789 = vpow.pop %v1788
    %v1790 = vmul.f32 %v1787, 1.442695
    %v1791 = vpow.pop %v1790
    %v1792 = vsel %vm1067, %v1789, 0.0
    %1793 = vadd.xlane.f32.xlu0 %v1792
    %v1794 = vpop.xlane.xlu0 %1793
    %v1795 = vsel %vm1067, %v1791, 0.0
    %1796 = vadd.xlane.f32.xlu0 %v1795
    %v1797 = vpop.xlane.xlu0 %1796
    %v1798 = vrcp.pop %v1794
    %v1799 = vrcp.pop %v1797
    %v1800 = vmul.f32 %v1789, %v1798
    %v1801 = vmul.f32 %v1791, %v1799
    %1802 = vrot.lane.b32.xlu0 %v1040, 64
    %v1803 = vpop.permute.xlu0 %1802
    %1804 = vrot.lane.b32.xlu0 %v1042, 64
    %v1805 = vpop.permute.xlu0 %1804
    %v1809 = vsel %vm1067, %v1800, 0
    %v1812 = vsel %vm1067, %v1801, 0
    %1814 = vmatpush.msra.mxu0 0.0
    %1815 = vmatpush.msra.mxu0 0.0
    %1816 = vmatpush.msra.mxu0 0.0
    %1817 = vmatpush.msra.mxu0 0.0
    %1818 = vmatpush.msra.mxu0 0.0
    %1819 = vmatpush.msra.mxu0 0.0
    %1820 = vmatpush.msra.mxu0 0.0
    %1821 = vmatpush.msra.mxu0 0.0
    %1822 = vmatpush.msra.mxu0 0.0
    %1823 = vmatpush.msra.mxu0 0.0
    %1824 = vmatpush.msra.mxu0 0.0
    %1825 = vmatpush.msra.mxu0 0.0
    %1826 = vmatpush.msra.mxu0 0.0
    %1827 = vmatpush.msra.mxu0 0.0
    %1828 = vmatpush.msra.mxu0 %v1805
    %1829 = vmatpush.msra.mxu0 %v1803
    %1830 = vmatmul.f32.gmra.mxu0 %v1809
    %v1831 = vpop.f32.mrf.mxu0
    %v1832 = vadd.f32 0.0, %v1831
    %1833 = vmatmul.f32.gmra.mxu0 %v1812
    %v1834 = vpop.f32.mrf.mxu0
    %v1835 = vadd.f32 0.0, %v1834
    %1836 = vdwg.mxu0
    %v1837 = vpack.c.bf16 %v1156, %v1153
    %v1838 = vpack.c.bf16 %v1253, %v1250
    %v1839 = vpack.c.bf16 %v1350, %v1347
    %v1840 = vpack.c.bf16 %v1447, %v1444
    %v1841 = vpack.c.bf16 %v1544, %v1541
    %v1842 = vpack.c.bf16 %v1641, %v1638
    %v1843 = vpack.c.bf16 %v1738, %v1735
    %v1844 = vpack.c.bf16 %v1835, %v1832
    %v1845 = vld [vmem:[#allocation10] sm:$0xf]
    %v1846 = vld [vmem:[#allocation10 + $0x4] sm:$0xf]
    %1847 = vrot.lane.b32.xlu0 %v1044, 112
    %v1848 = vpop.permute.xlu0 %1847
    %1849 = vrot.lane.b32.xlu0 %v1045, 112
    %v1850 = vpop.permute.xlu0 %1849
    %1851 = vrot.lane.b32.xlu0 %v1005, 80
    %v1852 = vpop.permute.xlu0 %1851
    %1853 = vrot.lane.b32.xlu0 %v1007, 80
    %v1854 = vpop.permute.xlu0 %1853
    %v1855 = vsel %vm1067, %v1848, 0
    %v1857 = vsel %vm1067, %v1850, 0
    %v1859 = vsel %vm1067, %v1852, 0
    %v1861 = vsel %vm1067, %v1854, 0
    %1863 = vmatpush.xpose.msra.mxu0 0.0
    %1864 = vmatpush.xpose.msra.mxu0 0.0
    %1865 = vmatpush.xpose.msra.mxu0 0.0
    %1866 = vmatpush.xpose.msra.mxu0 0.0
    %1867 = vmatpush.xpose.msra.mxu0 0.0
    %1868 = vmatpush.xpose.msra.mxu0 0.0
    %1869 = vmatpush.xpose.msra.mxu0 0.0
    %1870 = vmatpush.xpose.msra.mxu0 0.0
    %1871 = vmatpush.xpose.msra.mxu0 0.0
    %1872 = vmatpush.xpose.msra.mxu0 0.0
    %1873 = vmatpush.xpose.msra.mxu0 0.0
    %1874 = vmatpush.xpose.msra.mxu0 0.0
    %1875 = vmatpush.xpose.msra.mxu0 0.0
    %1876 = vmatpush.xpose.msra.mxu0 0.0
    %1877 = vmatpush.xpose.msra.mxu0 %v1861
    %1878 = vmatpush.xpose.msra.mxu0 %v1859
    %1879 = vmatmul.f32.gmra.mxu0 %v1855
    %v1880 = vpop.f32.mrf.mxu0
    %v1881 = vadd.f32 %v1060, %v1880
    %1882 = vmatmul.f32.gmra.mxu0 %v1857
    %v1883 = vpop.f32.mrf.mxu0
    %v1884 = vadd.f32 %v1060, %v1883
    %1885 = vdwg.mxu0
    %v1886 = vsel %vm1067, %v1881, -inf
    %1887 = vmax.xlane.f32.xlu0 %v1886
    %v1888 = vpop.xlane.xlu0 %1887
    %v1889 = vsel %vm1067, %v1884, -inf
    %1890 = vmax.xlane.f32.xlu0 %v1889
    %v1891 = vpop.xlane.xlu0 %1890
    %v1892 = vsub.f32 %v1881, %v1888
    %v1893 = vsub.f32 %v1884, %v1891
    %v1894 = vmul.f32 %v1892, 1.442695
    %v1895 = vpow.pop %v1894
    %v1896 = vmul.f32 %v1893, 1.442695
    %v1897 = vpow.pop %v1896
    %v1898 = vsel %vm1067, %v1895, 0.0
    %1899 = vadd.xlane.f32.xlu0 %v1898
    %v1900 = vpop.xlane.xlu0 %1899
    %v1901 = vsel %vm1067, %v1897, 0.0
    %1902 = vadd.xlane.f32.xlu0 %v1901
    %v1903 = vpop.xlane.xlu0 %1902
    %v1904 = vrcp.pop %v1900
    %v1905 = vrcp.pop %v1903
    %v1906 = vmul.f32 %v1895, %v1904
    %v1907 = vmul.f32 %v1897, %v1905
    %1908 = vrot.lane.b32.xlu0 %v1005, 48
    %v1909 = vpop.permute.xlu0 %1908
    %1910 = vrot.lane.b32.xlu0 %v1007, 48
    %v1911 = vpop.permute.xlu0 %1910
    %v1915 = vsel %vm1067, %v1906, 0
    %v1918 = vsel %vm1067, %v1907, 0
    %1920 = vmatpush.msra.mxu0 0.0
    %1921 = vmatpush.msra.mxu0 0.0
    %1922 = vmatpush.msra.mxu0 0.0
    %1923 = vmatpush.msra.mxu0 0.0
    %1924 = vmatpush.msra.mxu0 0.0
    %1925 = vmatpush.msra.mxu0 0.0
    %1926 = vmatpush.msra.mxu0 0.0
    %1927 = vmatpush.msra.mxu0 0.0
    %1928 = vmatpush.msra.mxu0 0.0
    %1929 = vmatpush.msra.mxu0 0.0
    %1930 = vmatpush.msra.mxu0 0.0
    %1931 = vmatpush.msra.mxu0 0.0
    %1932 = vmatpush.msra.mxu0 0.0
    %1933 = vmatpush.msra.mxu0 0.0
    %1934 = vmatpush.msra.mxu0 %v1911
    %1935 = vmatpush.msra.mxu0 %v1909
    %1936 = vmatmul.f32.gmra.mxu0 %v1915
    %v1937 = vpop.f32.mrf.mxu0
    %v1938 = vadd.f32 0.0, %v1937
    %1939 = vmatmul.f32.gmra.mxu0 %v1918
    %v1940 = vpop.f32.mrf.mxu0
    %v1941 = vadd.f32 0.0, %v1940
    %1942 = vdwg.mxu0
    %1943 = vrot.lane.b32.xlu0 %v1046, 112
    %v1944 = vpop.permute.xlu0 %1943
    %1945 = vrot.lane.b32.xlu0 %v1047, 112
    %v1946 = vpop.permute.xlu0 %1945
    %1947 = vrot.lane.b32.xlu0 %v1010, 80
    %v1948 = vpop.permute.xlu0 %1947
    %1949 = vrot.lane.b32.xlu0 %v1012, 80
    %v1950 = vpop.permute.xlu0 %1949
    %v1951 = vsel %vm1067, %v1944, 0
    %v1953 = vsel %vm1067, %v1946, 0
    %v1955 = vsel %vm1067, %v1948, 0
    %v1957 = vsel %vm1067, %v1950, 0
    %1959 = vmatpush.xpose.msra.mxu0 0.0
    %1960 = vmatpush.xpose.msra.mxu0 0.0
    %1961 = vmatpush.xpose.msra.mxu0 0.0
    %1962 = vmatpush.xpose.msra.mxu0 0.0
    %1963 = vmatpush.xpose.msra.mxu0 0.0
    %1964 = vmatpush.xpose.msra.mxu0 0.0
    %1965 = vmatpush.xpose.msra.mxu0 0.0
    %1966 = vmatpush.xpose.msra.mxu0 0.0
    %1967 = vmatpush.xpose.msra.mxu0 0.0
    %1968 = vmatpush.xpose.msra.mxu0 0.0
    %1969 = vmatpush.xpose.msra.mxu0 0.0
    %1970 = vmatpush.xpose.msra.mxu0 0.0
    %1971 = vmatpush.xpose.msra.mxu0 0.0
    %1972 = vmatpush.xpose.msra.mxu0 0.0
    %1973 = vmatpush.xpose.msra.mxu0 %v1957
    %1974 = vmatpush.xpose.msra.mxu0 %v1955
    %1975 = vmatmul.f32.gmra.mxu0 %v1951
    %v1976 = vpop.f32.mrf.mxu0
    %v1977 = vadd.f32 %v1158, %v1976
    %1978 = vmatmul.f32.gmra.mxu0 %v1953
    %v1979 = vpop.f32.mrf.mxu0
    %v1980 = vadd.f32 %v1158, %v1979
    %1981 = vdwg.mxu0
    %v1982 = vsel %vm1067, %v1977, -inf
    %1983 = vmax.xlane.f32.xlu0 %v1982
    %v1984 = vpop.xlane.xlu0 %1983
    %v1985 = vsel %vm1067, %v1980, -inf
    %1986 = vmax.xlane.f32.xlu0 %v1985
    %v1987 = vpop.xlane.xlu0 %1986
    %v1988 = vsub.f32 %v1977, %v1984
    %v1989 = vsub.f32 %v1980, %v1987
    %v1990 = vmul.f32 %v1988, 1.442695
    %v1991 = vpow.pop %v1990
    %v1992 = vmul.f32 %v1989, 1.442695
    %v1993 = vpow.pop %v1992
    %v1994 = vsel %vm1067, %v1991, 0.0
    %1995 = vadd.xlane.f32.xlu0 %v1994
    %v1996 = vpop.xlane.xlu0 %1995
    %v1997 = vsel %vm1067, %v1993, 0.0
    %1998 = vadd.xlane.f32.xlu0 %v1997
    %v1999 = vpop.xlane.xlu0 %1998
    %v2000 = vrcp.pop %v1996
    %v2001 = vrcp.pop %v1999
    %v2002 = vmul.f32 %v1991, %v2000
    %v2003 = vmul.f32 %v1993, %v2001
    %2004 = vrot.lane.b32.xlu0 %v1010, 48
    %v2005 = vpop.permute.xlu0 %2004
    %2006 = vrot.lane.b32.xlu0 %v1012, 48
    %v2007 = vpop.permute.xlu0 %2006
    %v2011 = vsel %vm1067, %v2002, 0
    %v2014 = vsel %vm1067, %v2003, 0
    %2016 = vmatpush.msra.mxu0 0.0
    %2017 = vmatpush.msra.mxu0 0.0
    %2018 = vmatpush.msra.mxu0 0.0
    %2019 = vmatpush.msra.mxu0 0.0
    %2020 = vmatpush.msra.mxu0 0.0
    %2021 = vmatpush.msra.mxu0 0.0
    %2022 = vmatpush.msra.mxu0 0.0
    %2023 = vmatpush.msra.mxu0 0.0
    %2024 = vmatpush.msra.mxu0 0.0
    %2025 = vmatpush.msra.mxu0 0.0
    %2026 = vmatpush.msra.mxu0 0.0
    %2027 = vmatpush.msra.mxu0 0.0
    %2028 = vmatpush.msra.mxu0 0.0
    %2029 = vmatpush.msra.mxu0 0.0
    %2030 = vmatpush.msra.mxu0 %v2007
    %2031 = vmatpush.msra.mxu0 %v2005
    %2032 = vmatmul.f32.gmra.mxu0 %v2011
    %v2033 = vpop.f32.mrf.mxu0
    %v2034 = vadd.f32 0.0, %v2033
    %2035 = vmatmul.f32.gmra.mxu0 %v2014
    %v2036 = vpop.f32.mrf.mxu0
    %v2037 = vadd.f32 0.0, %v2036
    %2038 = vdwg.mxu0
    %2039 = vrot.lane.b32.xlu0 %v1048, 112
    %v2040 = vpop.permute.xlu0 %2039
    %2041 = vrot.lane.b32.xlu0 %v1049, 112
    %v2042 = vpop.permute.xlu0 %2041
    %2043 = vrot.lane.b32.xlu0 %v1015, 80
    %v2044 = vpop.permute.xlu0 %2043
    %2045 = vrot.lane.b32.xlu0 %v1017, 80
    %v2046 = vpop.permute.xlu0 %2045
    %v2047 = vsel %vm1067, %v2040, 0
    %v2049 = vsel %vm1067, %v2042, 0
    %v2051 = vsel %vm1067, %v2044, 0
    %v2053 = vsel %vm1067, %v2046, 0
    %2055 = vmatpush.xpose.msra.mxu0 0.0
    %2056 = vmatpush.xpose.msra.mxu0 0.0
    %2057 = vmatpush.xpose.msra.mxu0 0.0
    %2058 = vmatpush.xpose.msra.mxu0 0.0
    %2059 = vmatpush.xpose.msra.mxu0 0.0
    %2060 = vmatpush.xpose.msra.mxu0 0.0
    %2061 = vmatpush.xpose.msra.mxu0 0.0
    %2062 = vmatpush.xpose.msra.mxu0 0.0
    %2063 = vmatpush.xpose.msra.mxu0 0.0
    %2064 = vmatpush.xpose.msra.mxu0 0.0
    %2065 = vmatpush.xpose.msra.mxu0 0.0
    %2066 = vmatpush.xpose.msra.mxu0 0.0
    %2067 = vmatpush.xpose.msra.mxu0 0.0
    %2068 = vmatpush.xpose.msra.mxu0 0.0
    %2069 = vmatpush.xpose.msra.mxu0 %v2053
    %2070 = vmatpush.xpose.msra.mxu0 %v2051
    %2071 = vmatmul.f32.gmra.mxu0 %v2047
    %v2072 = vpop.f32.mrf.mxu0
    %v2073 = vadd.f32 %v1255, %v2072
    %2074 = vmatmul.f32.gmra.mxu0 %v2049
    %v2075 = vpop.f32.mrf.mxu0
    %v2076 = vadd.f32 %v1255, %v2075
    %2077 = vdwg.mxu0
    %v2078 = vsel %vm1067, %v2073, -inf
    %2079 = vmax.xlane.f32.xlu0 %v2078
    %v2080 = vpop.xlane.xlu0 %2079
    %v2081 = vsel %vm1067, %v2076, -inf
    %2082 = vmax.xlane.f32.xlu0 %v2081
    %v2083 = vpop.xlane.xlu0 %2082
    %v2084 = vsub.f32 %v2073, %v2080
    %v2085 = vsub.f32 %v2076, %v2083
    %v2086 = vmul.f32 %v2084, 1.442695
    %v2087 = vpow.pop %v2086
    %v2088 = vmul.f32 %v2085, 1.442695
    %v2089 = vpow.pop %v2088
    %v2090 = vsel %vm1067, %v2087, 0.0
    %2091 = vadd.xlane.f32.xlu0 %v2090
    %v2092 = vpop.xlane.xlu0 %2091
    %v2093 = vsel %vm1067, %v2089, 0.0
    %2094 = vadd.xlane.f32.xlu0 %v2093
    %v2095 = vpop.xlane.xlu0 %2094
    %v2096 = vrcp.pop %v2092
    %v2097 = vrcp.pop %v2095
    %v2098 = vmul.f32 %v2087, %v2096
    %v2099 = vmul.f32 %v2089, %v2097
    %2100 = vrot.lane.b32.xlu0 %v1015, 48
    %v2101 = vpop.permute.xlu0 %2100
    %2102 = vrot.lane.b32.xlu0 %v1017, 48
    %v2103 = vpop.permute.xlu0 %2102
    %v2107 = vsel %vm1067, %v2098, 0
    %v2110 = vsel %vm1067, %v2099, 0
    %2112 = vmatpush.msra.mxu0 0.0
    %2113 = vmatpush.msra.mxu0 0.0
    %2114 = vmatpush.msra.mxu0 0.0
    %2115 = vmatpush.msra.mxu0 0.0
    %2116 = vmatpush.msra.mxu0 0.0
    %2117 = vmatpush.msra.mxu0 0.0
    %2118 = vmatpush.msra.mxu0 0.0
    %2119 = vmatpush.msra.mxu0 0.0
    %2120 = vmatpush.msra.mxu0 0.0
    %2121 = vmatpush.msra.mxu0 0.0
    %2122 = vmatpush.msra.mxu0 0.0
    %2123 = vmatpush.msra.mxu0 0.0
    %2124 = vmatpush.msra.mxu0 0.0
    %2125 = vmatpush.msra.mxu0 0.0
    %2126 = vmatpush.msra.mxu0 %v2103
    %2127 = vmatpush.msra.mxu0 %v2101
    %2128 = vmatmul.f32.gmra.mxu0 %v2107
    %v2129 = vpop.f32.mrf.mxu0
    %v2130 = vadd.f32 0.0, %v2129
    %2131 = vmatmul.f32.gmra.mxu0 %v2110
    %v2132 = vpop.f32.mrf.mxu0
    %v2133 = vadd.f32 0.0, %v2132
    %2134 = vdwg.mxu0
    %2135 = vrot.lane.b32.xlu0 %v1050, 112
    %v2136 = vpop.permute.xlu0 %2135
    %2137 = vrot.lane.b32.xlu0 %v1051, 112
    %v2138 = vpop.permute.xlu0 %2137
    %2139 = vrot.lane.b32.xlu0 %v1020, 80
    %v2140 = vpop.permute.xlu0 %2139
    %2141 = vrot.lane.b32.xlu0 %v1022, 80
    %v2142 = vpop.permute.xlu0 %2141
    %v2143 = vsel %vm1067, %v2136, 0
    %v2145 = vsel %vm1067, %v2138, 0
    %v2147 = vsel %vm1067, %v2140, 0
    %v2149 = vsel %vm1067, %v2142, 0
    %2151 = vmatpush.xpose.msra.mxu0 0.0
    %2152 = vmatpush.xpose.msra.mxu0 0.0
    %2153 = vmatpush.xpose.msra.mxu0 0.0
    %2154 = vmatpush.xpose.msra.mxu0 0.0
    %2155 = vmatpush.xpose.msra.mxu0 0.0
    %2156 = vmatpush.xpose.msra.mxu0 0.0
    %2157 = vmatpush.xpose.msra.mxu0 0.0
    %2158 = vmatpush.xpose.msra.mxu0 0.0
    %2159 = vmatpush.xpose.msra.mxu0 0.0
    %2160 = vmatpush.xpose.msra.mxu0 0.0
    %2161 = vmatpush.xpose.msra.mxu0 0.0
    %2162 = vmatpush.xpose.msra.mxu0 0.0
    %2163 = vmatpush.xpose.msra.mxu0 0.0
    %2164 = vmatpush.xpose.msra.mxu0 0.0
    %2165 = vmatpush.xpose.msra.mxu0 %v2149
    %2166 = vmatpush.xpose.msra.mxu0 %v2147
    %2167 = vmatmul.f32.gmra.mxu0 %v2143
    %v2168 = vpop.f32.mrf.mxu0
    %v2169 = vadd.f32 %v1352, %v2168
    %2170 = vmatmul.f32.gmra.mxu0 %v2145
    %v2171 = vpop.f32.mrf.mxu0
    %v2172 = vadd.f32 %v1352, %v2171
    %2173 = vdwg.mxu0
    %v2174 = vsel %vm1067, %v2169, -inf
    %2175 = vmax.xlane.f32.xlu0 %v2174
    %v2176 = vpop.xlane.xlu0 %2175
    %v2177 = vsel %vm1067, %v2172, -inf
    %2178 = vmax.xlane.f32.xlu0 %v2177
    %v2179 = vpop.xlane.xlu0 %2178
    %v2180 = vsub.f32 %v2169, %v2176
    %v2181 = vsub.f32 %v2172, %v2179
    %v2182 = vmul.f32 %v2180, 1.442695
    %v2183 = vpow.pop %v2182
    %v2184 = vmul.f32 %v2181, 1.442695
    %v2185 = vpow.pop %v2184
    %v2186 = vsel %vm1067, %v2183, 0.0
    %2187 = vadd.xlane.f32.xlu0 %v2186
    %v2188 = vpop.xlane.xlu0 %2187
    %v2189 = vsel %vm1067, %v2185, 0.0
    %2190 = vadd.xlane.f32.xlu0 %v2189
    %v2191 = vpop.xlane.xlu0 %2190
    %v2192 = vrcp.pop %v2188
    %v2193 = vrcp.pop %v2191
    %v2194 = vmul.f32 %v2183, %v2192
    %v2195 = vmul.f32 %v2185, %v2193
    %2196 = vrot.lane.b32.xlu0 %v1020, 48
    %v2197 = vpop.permute.xlu0 %2196
    %2198 = vrot.lane.b32.xlu0 %v1022, 48
    %v2199 = vpop.permute.xlu0 %2198
    %v2203 = vsel %vm1067, %v2194, 0
    %v2206 = vsel %vm1067, %v2195, 0
    %2208 = vmatpush.msra.mxu0 0.0
    %2209 = vmatpush.msra.mxu0 0.0
    %2210 = vmatpush.msra.mxu0 0.0
    %2211 = vmatpush.msra.mxu0 0.0
    %2212 = vmatpush.msra.mxu0 0.0
    %2213 = vmatpush.msra.mxu0 0.0
    %2214 = vmatpush.msra.mxu0 0.0
    %2215 = vmatpush.msra.mxu0 0.0
    %2216 = vmatpush.msra.mxu0 0.0
    %2217 = vmatpush.msra.mxu0 0.0
    %2218 = vmatpush.msra.mxu0 0.0
    %2219 = vmatpush.msra.mxu0 0.0
    %2220 = vmatpush.msra.mxu0 0.0
    %2221 = vmatpush.msra.mxu0 0.0
    %2222 = vmatpush.msra.mxu0 %v2199
    %2223 = vmatpush.msra.mxu0 %v2197
    %2224 = vmatmul.f32.gmra.mxu0 %v2203
    %v2225 = vpop.f32.mrf.mxu0
    %v2226 = vadd.f32 0.0, %v2225
    %2227 = vmatmul.f32.gmra.mxu0 %v2206
    %v2228 = vpop.f32.mrf.mxu0
    %v2229 = vadd.f32 0.0, %v2228
    %2230 = vdwg.mxu0
    %2231 = vrot.lane.b32.xlu0 %v1052, 112
    %v2232 = vpop.permute.xlu0 %2231
    %2233 = vrot.lane.b32.xlu0 %v1053, 112
    %v2234 = vpop.permute.xlu0 %2233
    %2235 = vrot.lane.b32.xlu0 %v1025, 80
    %v2236 = vpop.permute.xlu0 %2235
    %2237 = vrot.lane.b32.xlu0 %v1027, 80
    %v2238 = vpop.permute.xlu0 %2237
    %v2239 = vsel %vm1067, %v2232, 0
    %v2241 = vsel %vm1067, %v2234, 0
    %v2243 = vsel %vm1067, %v2236, 0
    %v2245 = vsel %vm1067, %v2238, 0
    %2247 = vmatpush.xpose.msra.mxu0 0.0
    %2248 = vmatpush.xpose.msra.mxu0 0.0
    %2249 = vmatpush.xpose.msra.mxu0 0.0
    %2250 = vmatpush.xpose.msra.mxu0 0.0
    %2251 = vmatpush.xpose.msra.mxu0 0.0
    %2252 = vmatpush.xpose.msra.mxu0 0.0
    %2253 = vmatpush.xpose.msra.mxu0 0.0
    %2254 = vmatpush.xpose.msra.mxu0 0.0
    %2255 = vmatpush.xpose.msra.mxu0 0.0
    %2256 = vmatpush.xpose.msra.mxu0 0.0
    %2257 = vmatpush.xpose.msra.mxu0 0.0
    %2258 = vmatpush.xpose.msra.mxu0 0.0
    %2259 = vmatpush.xpose.msra.mxu0 0.0
    %2260 = vmatpush.xpose.msra.mxu0 0.0
    %2261 = vmatpush.xpose.msra.mxu0 %v2245
    %2262 = vmatpush.xpose.msra.mxu0 %v2243
    %2263 = vmatmul.f32.gmra.mxu0 %v2239
    %v2264 = vpop.f32.mrf.mxu0
    %v2265 = vadd.f32 %v1449, %v2264
    %2266 = vmatmul.f32.gmra.mxu0 %v2241
    %v2267 = vpop.f32.mrf.mxu0
    %v2268 = vadd.f32 %v1449, %v2267
    %2269 = vdwg.mxu0
    %v2270 = vsel %vm1067, %v2265, -inf
    %2271 = vmax.xlane.f32.xlu0 %v2270
    %v2272 = vpop.xlane.xlu0 %2271
    %v2273 = vsel %vm1067, %v2268, -inf
    %2274 = vmax.xlane.f32.xlu0 %v2273
    %v2275 = vpop.xlane.xlu0 %2274
    %v2276 = vsub.f32 %v2265, %v2272
    %v2277 = vsub.f32 %v2268, %v2275
    %v2278 = vmul.f32 %v2276, 1.442695
    %v2279 = vpow.pop %v2278
    %v2280 = vmul.f32 %v2277, 1.442695
    %v2281 = vpow.pop %v2280
    %v2282 = vsel %vm1067, %v2279, 0.0
    %2283 = vadd.xlane.f32.xlu0 %v2282
    %v2284 = vpop.xlane.xlu0 %2283
    %v2285 = vsel %vm1067, %v2281, 0.0
    %2286 = vadd.xlane.f32.xlu0 %v2285
    %v2287 = vpop.xlane.xlu0 %2286
    %v2288 = vrcp.pop %v2284
    %v2289 = vrcp.pop %v2287
    %v2290 = vmul.f32 %v2279, %v2288
    %v2291 = vmul.f32 %v2281, %v2289
    %2292 = vrot.lane.b32.xlu0 %v1025, 48
    %v2293 = vpop.permute.xlu0 %2292
    %2294 = vrot.lane.b32.xlu0 %v1027, 48
    %v2295 = vpop.permute.xlu0 %2294
    %v2299 = vsel %vm1067, %v2290, 0
    %v2302 = vsel %vm1067, %v2291, 0
    %2304 = vmatpush.msra.mxu0 0.0
    %2305 = vmatpush.msra.mxu0 0.0
    %2306 = vmatpush.msra.mxu0 0.0
    %2307 = vmatpush.msra.mxu0 0.0
    %2308 = vmatpush.msra.mxu0 0.0
    %2309 = vmatpush.msra.mxu0 0.0
    %2310 = vmatpush.msra.mxu0 0.0
    %2311 = vmatpush.msra.mxu0 0.0
    %2312 = vmatpush.msra.mxu0 0.0
    %2313 = vmatpush.msra.mxu0 0.0
    %2314 = vmatpush.msra.mxu0 0.0
    %2315 = vmatpush.msra.mxu0 0.0
    %2316 = vmatpush.msra.mxu0 0.0
    %2317 = vmatpush.msra.mxu0 0.0
    %2318 = vmatpush.msra.mxu0 %v2295
    %2319 = vmatpush.msra.mxu0 %v2293
    %2320 = vmatmul.f32.gmra.mxu0 %v2299
    %v2321 = vpop.f32.mrf.mxu0
    %v2322 = vadd.f32 0.0, %v2321
    %2323 = vmatmul.f32.gmra.mxu0 %v2302
    %v2324 = vpop.f32.mrf.mxu0
    %v2325 = vadd.f32 0.0, %v2324
    %2326 = vdwg.mxu0
    %2327 = vrot.lane.b32.xlu0 %v1054, 112
    %v2328 = vpop.permute.xlu0 %2327
    %2329 = vrot.lane.b32.xlu0 %v1055, 112
    %v2330 = vpop.permute.xlu0 %2329
    %2331 = vrot.lane.b32.xlu0 %v1030, 80
    %v2332 = vpop.permute.xlu0 %2331
    %2333 = vrot.lane.b32.xlu0 %v1032, 80
    %v2334 = vpop.permute.xlu0 %2333
    %v2335 = vsel %vm1067, %v2328, 0
    %v2337 = vsel %vm1067, %v2330, 0
    %v2339 = vsel %vm1067, %v2332, 0
    %v2341 = vsel %vm1067, %v2334, 0
    %2343 = vmatpush.xpose.msra.mxu0 0.0
    %2344 = vmatpush.xpose.msra.mxu0 0.0
    %2345 = vmatpush.xpose.msra.mxu0 0.0
    %2346 = vmatpush.xpose.msra.mxu0 0.0
    %2347 = vmatpush.xpose.msra.mxu0 0.0
    %2348 = vmatpush.xpose.msra.mxu0 0.0
    %2349 = vmatpush.xpose.msra.mxu0 0.0
    %2350 = vmatpush.xpose.msra.mxu0 0.0
    %2351 = vmatpush.xpose.msra.mxu0 0.0
    %2352 = vmatpush.xpose.msra.mxu0 0.0
    %2353 = vmatpush.xpose.msra.mxu0 0.0
    %2354 = vmatpush.xpose.msra.mxu0 0.0
    %2355 = vmatpush.xpose.msra.mxu0 0.0
    %2356 = vmatpush.xpose.msra.mxu0 0.0
    %2357 = vmatpush.xpose.msra.mxu0 %v2341
    %2358 = vmatpush.xpose.msra.mxu0 %v2339
    %2359 = vmatmul.f32.gmra.mxu0 %v2335
    %v2360 = vpop.f32.mrf.mxu0
    %v2361 = vadd.f32 %v1546, %v2360
    %2362 = vmatmul.f32.gmra.mxu0 %v2337
    %v2363 = vpop.f32.mrf.mxu0
    %v2364 = vadd.f32 %v1546, %v2363
    %2365 = vdwg.mxu0
    %v2366 = vsel %vm1067, %v2361, -inf
    %2367 = vmax.xlane.f32.xlu0 %v2366
    %v2368 = vpop.xlane.xlu0 %2367
    %v2369 = vsel %vm1067, %v2364, -inf
    %2370 = vmax.xlane.f32.xlu0 %v2369
    %v2371 = vpop.xlane.xlu0 %2370
    %v2372 = vsub.f32 %v2361, %v2368
    %v2373 = vsub.f32 %v2364, %v2371
    %v2374 = vmul.f32 %v2372, 1.442695
    %v2375 = vpow.pop %v2374
    %v2376 = vmul.f32 %v2373, 1.442695
    %v2377 = vpow.pop %v2376
    %v2378 = vsel %vm1067, %v2375, 0.0
    %2379 = vadd.xlane.f32.xlu0 %v2378
    %v2380 = vpop.xlane.xlu0 %2379
    %v2381 = vsel %vm1067, %v2377, 0.0
    %2382 = vadd.xlane.f32.xlu0 %v2381
    %v2383 = vpop.xlane.xlu0 %2382
    %v2384 = vrcp.pop %v2380
    %v2385 = vrcp.pop %v2383
    %v2386 = vmul.f32 %v2375, %v2384
    %v2387 = vmul.f32 %v2377, %v2385
    %2388 = vrot.lane.b32.xlu0 %v1030, 48
    %v2389 = vpop.permute.xlu0 %2388
    %2390 = vrot.lane.b32.xlu0 %v1032, 48
    %v2391 = vpop.permute.xlu0 %2390
    %v2395 = vsel %vm1067, %v2386, 0
    %v2398 = vsel %vm1067, %v2387, 0
    %2400 = vmatpush.msra.mxu0 0.0
    %2401 = vmatpush.msra.mxu0 0.0
    %2402 = vmatpush.msra.mxu0 0.0
    %2403 = vmatpush.msra.mxu0 0.0
    %2404 = vmatpush.msra.mxu0 0.0
    %2405 = vmatpush.msra.mxu0 0.0
    %2406 = vmatpush.msra.mxu0 0.0
    %2407 = vmatpush.msra.mxu0 0.0
    %2408 = vmatpush.msra.mxu0 0.0
    %2409 = vmatpush.msra.mxu0 0.0
    %2410 = vmatpush.msra.mxu0 0.0
    %2411 = vmatpush.msra.mxu0 0.0
    %2412 = vmatpush.msra.mxu0 0.0
    %2413 = vmatpush.msra.mxu0 0.0
    %2414 = vmatpush.msra.mxu0 %v2391
    %2415 = vmatpush.msra.mxu0 %v2389
    %2416 = vmatmul.f32.gmra.mxu0 %v2395
    %v2417 = vpop.f32.mrf.mxu0
    %v2418 = vadd.f32 0.0, %v2417
    %2419 = vmatmul.f32.gmra.mxu0 %v2398
    %v2420 = vpop.f32.mrf.mxu0
    %v2421 = vadd.f32 0.0, %v2420
    %2422 = vdwg.mxu0
    %2423 = vrot.lane.b32.xlu0 %v1056, 112
    %v2424 = vpop.permute.xlu0 %2423
    %2425 = vrot.lane.b32.xlu0 %v1057, 112
    %v2426 = vpop.permute.xlu0 %2425
    %2427 = vrot.lane.b32.xlu0 %v1035, 80
    %v2428 = vpop.permute.xlu0 %2427
    %2429 = vrot.lane.b32.xlu0 %v1037, 80
    %v2430 = vpop.permute.xlu0 %2429
    %v2431 = vsel %vm1067, %v2424, 0
    %v2433 = vsel %vm1067, %v2426, 0
    %v2435 = vsel %vm1067, %v2428, 0
    %v2437 = vsel %vm1067, %v2430, 0
    %2439 = vmatpush.xpose.msra.mxu0 0.0
    %2440 = vmatpush.xpose.msra.mxu0 0.0
    %2441 = vmatpush.xpose.msra.mxu0 0.0
    %2442 = vmatpush.xpose.msra.mxu0 0.0
    %2443 = vmatpush.xpose.msra.mxu0 0.0
    %2444 = vmatpush.xpose.msra.mxu0 0.0
    %2445 = vmatpush.xpose.msra.mxu0 0.0
    %2446 = vmatpush.xpose.msra.mxu0 0.0
    %2447 = vmatpush.xpose.msra.mxu0 0.0
    %2448 = vmatpush.xpose.msra.mxu0 0.0
    %2449 = vmatpush.xpose.msra.mxu0 0.0
    %2450 = vmatpush.xpose.msra.mxu0 0.0
    %2451 = vmatpush.xpose.msra.mxu0 0.0
    %2452 = vmatpush.xpose.msra.mxu0 0.0
    %2453 = vmatpush.xpose.msra.mxu0 %v2437
    %2454 = vmatpush.xpose.msra.mxu0 %v2435
    %2455 = vmatmul.f32.gmra.mxu0 %v2431
    %v2456 = vpop.f32.mrf.mxu0
    %v2457 = vadd.f32 %v1643, %v2456
    %2458 = vmatmul.f32.gmra.mxu0 %v2433
    %v2459 = vpop.f32.mrf.mxu0
    %v2460 = vadd.f32 %v1643, %v2459
    %2461 = vdwg.mxu0
    %v2462 = vsel %vm1067, %v2457, -inf
    %2463 = vmax.xlane.f32.xlu0 %v2462
    %v2464 = vpop.xlane.xlu0 %2463
    %v2465 = vsel %vm1067, %v2460, -inf
    %2466 = vmax.xlane.f32.xlu0 %v2465
    %v2467 = vpop.xlane.xlu0 %2466
    %v2468 = vsub.f32 %v2457, %v2464
    %v2469 = vsub.f32 %v2460, %v2467
    %v2470 = vmul.f32 %v2468, 1.442695
    %v2471 = vpow.pop %v2470
    %v2472 = vmul.f32 %v2469, 1.442695
    %v2473 = vpow.pop %v2472
    %v2474 = vsel %vm1067, %v2471, 0.0
    %2475 = vadd.xlane.f32.xlu0 %v2474
    %v2476 = vpop.xlane.xlu0 %2475
    %v2477 = vsel %vm1067, %v2473, 0.0
    %2478 = vadd.xlane.f32.xlu0 %v2477
    %v2479 = vpop.xlane.xlu0 %2478
    %v2480 = vrcp.pop %v2476
    %v2481 = vrcp.pop %v2479
    %v2482 = vmul.f32 %v2471, %v2480
    %v2483 = vmul.f32 %v2473, %v2481
    %2484 = vrot.lane.b32.xlu0 %v1035, 48
    %v2485 = vpop.permute.xlu0 %2484
    %2486 = vrot.lane.b32.xlu0 %v1037, 48
    %v2487 = vpop.permute.xlu0 %2486
    %v2491 = vsel %vm1067, %v2482, 0
    %v2494 = vsel %vm1067, %v2483, 0
    %2496 = vmatpush.msra.mxu0 0.0
    %2497 = vmatpush.msra.mxu0 0.0
    %2498 = vmatpush.msra.mxu0 0.0
    %2499 = vmatpush.msra.mxu0 0.0
    %2500 = vmatpush.msra.mxu0 0.0
    %2501 = vmatpush.msra.mxu0 0.0
    %2502 = vmatpush.msra.mxu0 0.0
    %2503 = vmatpush.msra.mxu0 0.0
    %2504 = vmatpush.msra.mxu0 0.0
    %2505 = vmatpush.msra.mxu0 0.0
    %2506 = vmatpush.msra.mxu0 0.0
    %2507 = vmatpush.msra.mxu0 0.0
    %2508 = vmatpush.msra.mxu0 0.0
    %2509 = vmatpush.msra.mxu0 0.0
    %2510 = vmatpush.msra.mxu0 %v2487
    %2511 = vmatpush.msra.mxu0 %v2485
    %2512 = vmatmul.f32.gmra.mxu0 %v2491
    %v2513 = vpop.f32.mrf.mxu0
    %v2514 = vadd.f32 0.0, %v2513
    %2515 = vmatmul.f32.gmra.mxu0 %v2494
    %v2516 = vpop.f32.mrf.mxu0
    %v2517 = vadd.f32 0.0, %v2516
    %2518 = vdwg.mxu0
    %2519 = vrot.lane.b32.xlu0 %v1058, 112
    %v2520 = vpop.permute.xlu0 %2519
    %2521 = vrot.lane.b32.xlu0 %v1059, 112
    %v2522 = vpop.permute.xlu0 %2521
    %2523 = vrot.lane.b32.xlu0 %v1040, 80
    %v2524 = vpop.permute.xlu0 %2523
    %2525 = vrot.lane.b32.xlu0 %v1042, 80
    %v2526 = vpop.permute.xlu0 %2525
    %v2527 = vsel %vm1067, %v2520, 0
    %v2529 = vsel %vm1067, %v2522, 0
    %v2531 = vsel %vm1067, %v2524, 0
    %v2533 = vsel %vm1067, %v2526, 0
    %2535 = vmatpush.xpose.msra.mxu0 0.0
    %2536 = vmatpush.xpose.msra.mxu0 0.0
    %2537 = vmatpush.xpose.msra.mxu0 0.0
    %2538 = vmatpush.xpose.msra.mxu0 0.0
    %2539 = vmatpush.xpose.msra.mxu0 0.0
    %2540 = vmatpush.xpose.msra.mxu0 0.0
    %2541 = vmatpush.xpose.msra.mxu0 0.0
    %2542 = vmatpush.xpose.msra.mxu0 0.0
    %2543 = vmatpush.xpose.msra.mxu0 0.0
    %2544 = vmatpush.xpose.msra.mxu0 0.0
    %2545 = vmatpush.xpose.msra.mxu0 0.0
    %2546 = vmatpush.xpose.msra.mxu0 0.0
    %2547 = vmatpush.xpose.msra.mxu0 0.0
    %2548 = vmatpush.xpose.msra.mxu0 0.0
    %2549 = vmatpush.xpose.msra.mxu0 %v2533
    %2550 = vmatpush.xpose.msra.mxu0 %v2531
    %2551 = vmatmul.f32.gmra.mxu0 %v2527
    %v2552 = vpop.f32.mrf.mxu0
    %v2553 = vadd.f32 %v1740, %v2552
    %2554 = vmatmul.f32.gmra.mxu0 %v2529
    %v2555 = vpop.f32.mrf.mxu0
    %v2556 = vadd.f32 %v1740, %v2555
    %2557 = vdwg.mxu0
    %v2558 = vsel %vm1067, %v2553, -inf
    %2559 = vmax.xlane.f32.xlu0 %v2558
    %v2560 = vpop.xlane.xlu0 %2559
    %v2561 = vsel %vm1067, %v2556, -inf
    %2562 = vmax.xlane.f32.xlu0 %v2561
    %v2563 = vpop.xlane.xlu0 %2562
    %v2564 = vsub.f32 %v2553, %v2560
    %v2565 = vsub.f32 %v2556, %v2563
    %v2566 = vmul.f32 %v2564, 1.442695
    %v2567 = vpow.pop %v2566
    %v2568 = vmul.f32 %v2565, 1.442695
    %v2569 = vpow.pop %v2568
    %v2570 = vsel %vm1067, %v2567, 0.0
    %2571 = vadd.xlane.f32.xlu0 %v2570
    %v2572 = vpop.xlane.xlu0 %2571
    %v2573 = vsel %vm1067, %v2569, 0.0
    %2574 = vadd.xlane.f32.xlu0 %v2573
    %v2575 = vpop.xlane.xlu0 %2574
    %v2576 = vrcp.pop %v2572
    %v2577 = vrcp.pop %v2575
    %v2578 = vmul.f32 %v2567, %v2576
    %v2579 = vmul.f32 %v2569, %v2577
    %2580 = vrot.lane.b32.xlu0 %v1040, 48
    %v2581 = vpop.permute.xlu0 %2580
    %2582 = vrot.lane.b32.xlu0 %v1042, 48
    %v2583 = vpop.permute.xlu0 %2582
    %v2587 = vsel %vm1067, %v2578, 0
    %v2590 = vsel %vm1067, %v2579, 0
    %2592 = vmatpush.msra.mxu0 0.0
    %2593 = vmatpush.msra.mxu0 0.0
    %2594 = vmatpush.msra.mxu0 0.0
    %2595 = vmatpush.msra.mxu0 0.0
    %2596 = vmatpush.msra.mxu0 0.0
    %2597 = vmatpush.msra.mxu0 0.0
    %2598 = vmatpush.msra.mxu0 0.0
    %2599 = vmatpush.msra.mxu0 0.0
    %2600 = vmatpush.msra.mxu0 0.0
    %2601 = vmatpush.msra.mxu0 0.0
    %2602 = vmatpush.msra.mxu0 0.0
    %2603 = vmatpush.msra.mxu0 0.0
    %2604 = vmatpush.msra.mxu0 0.0
    %2605 = vmatpush.msra.mxu0 0.0
    %2606 = vmatpush.msra.mxu0 %v2583
    %2607 = vmatpush.msra.mxu0 %v2581
    %2608 = vmatmul.f32.gmra.mxu0 %v2587
    %v2609 = vpop.f32.mrf.mxu0
    %v2610 = vadd.f32 0.0, %v2609
    %2611 = vmatmul.f32.gmra.mxu0 %v2590
    %v2612 = vpop.f32.mrf.mxu0
    %v2613 = vadd.f32 0.0, %v2612
    %2614 = vdwg.mxu0
    %v2615 = vpack.c.bf16 %v1941, %v1938
    %v2616 = vpack.c.bf16 %v2037, %v2034
    %v2617 = vpack.c.bf16 %v2133, %v2130
    %v2618 = vpack.c.bf16 %v2229, %v2226
    %v2619 = vpack.c.bf16 %v2325, %v2322
    %v2620 = vpack.c.bf16 %v2421, %v2418
    %v2621 = vpack.c.bf16 %v2517, %v2514
    %v2622 = vpack.c.bf16 %v2613, %v2610
    %v2623 = vld [vmem:[#allocation10 + $0x8] sm:$0xf]
    %v2624 = vld [vmem:[#allocation10 + $0xc] sm:$0xf]
    %v2627 = vunpack.c.l.b16 %v2623
    %v2628 = vunpack.c.l.b16 %v2624
    %v2629 = vpack.c.b16 %v2628, %v2627
    %v2632 = vsel %vm1067, %v2615, 0
    %v2635 = vsel %vm1067, %v2616, 0
    %v2638 = vsel %vm1067, %v2617, 0
    %v2641 = vsel %vm1067, %v2618, 0
    %v2644 = vsel %vm1067, %v2619, 0
    %v2647 = vsel %vm1067, %v2620, 0
    %v2650 = vsel %vm1067, %v2621, 0
    %v2653 = vsel %vm1067, %v2622, 0
    %2655 = vmatpush.bf16.msra.mxu0 0
    %2656 = vmatpush.bf16.msra.mxu0 0
    %2657 = vmatpush.bf16.msra.mxu0 0
    %2658 = vmatpush.bf16.msra.mxu0 0
    %2659 = vmatpush.bf16.msra.mxu0 0
    %2660 = vmatpush.bf16.msra.mxu0 0
    %2661 = vmatpush.bf16.msra.mxu0 0
    %2662 = vmatpush.bf16.msra.mxu0 %v2629
    %2663 = vmatmul.bf16.gmra.mxu0 %v2632
    %v2664 = vpop.f32.mrf.mxu0
    %v2665 = vadd.f32 0.0, %v2664
    %v2666 = vpop.f32.mrf.mxu0
    %v2667 = vadd.f32 0.0, %v2666
    %2668 = vmatmul.bf16.gmra.mxu0 %v2635
    %v2669 = vpop.f32.mrf.mxu0
    %v2670 = vadd.f32 0.0, %v2669
    %v2671 = vpop.f32.mrf.mxu0
    %v2672 = vadd.f32 0.0, %v2671
    %2673 = vmatmul.bf16.gmra.mxu0 %v2638
    %v2674 = vpop.f32.mrf.mxu0
    %v2675 = vadd.f32 0.0, %v2674
    %v2676 = vpop.f32.mrf.mxu0
    %v2677 = vadd.f32 0.0, %v2676
    %2678 = vmatmul.bf16.gmra.mxu0 %v2641
    %v2679 = vpop.f32.mrf.mxu0
    %v2680 = vadd.f32 0.0, %v2679
    %v2681 = vpop.f32.mrf.mxu0
    %v2682 = vadd.f32 0.0, %v2681
    %2683 = vmatmul.bf16.gmra.mxu0 %v2644
    %v2684 = vpop.f32.mrf.mxu0
    %v2685 = vadd.f32 0.0, %v2684
    %v2686 = vpop.f32.mrf.mxu0
    %v2687 = vadd.f32 0.0, %v2686
    %2688 = vmatmul.bf16.gmra.mxu0 %v2647
    %v2689 = vpop.f32.mrf.mxu0
    %v2690 = vadd.f32 0.0, %v2689
    %v2691 = vpop.f32.mrf.mxu0
    %v2692 = vadd.f32 0.0, %v2691
    %2693 = vmatmul.bf16.gmra.mxu0 %v2650
    %v2694 = vpop.f32.mrf.mxu0
    %v2695 = vadd.f32 0.0, %v2694
    %v2696 = vpop.f32.mrf.mxu0
    %v2697 = vadd.f32 0.0, %v2696
    %2698 = vmatmul.bf16.gmra.mxu0 %v2653
    %v2699 = vpop.f32.mrf.mxu0
    %v2700 = vadd.f32 0.0, %v2699
    %v2701 = vpop.f32.mrf.mxu0
    %v2702 = vadd.f32 0.0, %v2701
    %2703 = vdwg.mxu0
    %v2706 = vunpack.c.l.b16 %v1845
    %v2707 = vunpack.c.l.b16 %v1846
    %v2708 = vpack.c.b16 %v2707, %v2706
    %v2711 = vsel %vm1067, %v1837, 0
    %v2714 = vsel %vm1067, %v1838, 0
    %v2717 = vsel %vm1067, %v1839, 0
    %v2720 = vsel %vm1067, %v1840, 0
    %v2723 = vsel %vm1067, %v1841, 0
    %v2726 = vsel %vm1067, %v1842, 0
    %v2729 = vsel %vm1067, %v1843, 0
    %v2732 = vsel %vm1067, %v1844, 0
    %2734 = vmatpush.bf16.msra.mxu0 0
    %2735 = vmatpush.bf16.msra.mxu0 0
    %2736 = vmatpush.bf16.msra.mxu0 0
    %2737 = vmatpush.bf16.msra.mxu0 0
    %2738 = vmatpush.bf16.msra.mxu0 0
    %2739 = vmatpush.bf16.msra.mxu0 0
    %2740 = vmatpush.bf16.msra.mxu0 0
    %2741 = vmatpush.bf16.msra.mxu0 %v2708
    %2742 = vmatmul.bf16.gmra.mxu0 %v2711
    %v2743 = vpop.f32.mrf.mxu0
    %v2744 = vadd.f32 %v2665, %v2743
    %v2745 = vpop.f32.mrf.mxu0
    %v2746 = vadd.f32 %v2667, %v2745
    %2747 = vmatmul.bf16.gmra.mxu0 %v2714
    %v2748 = vpop.f32.mrf.mxu0
    %v2749 = vadd.f32 %v2670, %v2748
    %v2750 = vpop.f32.mrf.mxu0
    %v2751 = vadd.f32 %v2672, %v2750
    %2752 = vmatmul.bf16.gmra.mxu0 %v2717
    %v2753 = vpop.f32.mrf.mxu0
    %v2754 = vadd.f32 %v2675, %v2753
    %v2755 = vpop.f32.mrf.mxu0
    %v2756 = vadd.f32 %v2677, %v2755
    %2757 = vmatmul.bf16.gmra.mxu0 %v2720
    %v2758 = vpop.f32.mrf.mxu0
    %v2759 = vadd.f32 %v2680, %v2758
    %v2760 = vpop.f32.mrf.mxu0
    %v2761 = vadd.f32 %v2682, %v2760
    %2762 = vmatmul.bf16.gmra.mxu0 %v2723
    %v2763 = vpop.f32.mrf.mxu0
    %v2764 = vadd.f32 %v2685, %v2763
    %v2765 = vpop.f32.mrf.mxu0
    %v2766 = vadd.f32 %v2687, %v2765
    %2767 = vmatmul.bf16.gmra.mxu0 %v2726
    %v2768 = vpop.f32.mrf.mxu0
    %v2769 = vadd.f32 %v2690, %v2768
    %v2770 = vpop.f32.mrf.mxu0
    %v2771 = vadd.f32 %v2692, %v2770
    %2772 = vmatmul.bf16.gmra.mxu0 %v2729
    %v2773 = vpop.f32.mrf.mxu0
    %v2774 = vadd.f32 %v2695, %v2773
    %v2775 = vpop.f32.mrf.mxu0
    %v2776 = vadd.f32 %v2697, %v2775
    %2777 = vmatmul.bf16.gmra.mxu0 %v2732
    %v2778 = vpop.f32.mrf.mxu0
    %v2779 = vadd.f32 %v2700, %v2778
    %v2780 = vpop.f32.mrf.mxu0
    %v2781 = vadd.f32 %v2702, %v2780
    %2782 = vdwg.mxu0
    %v2783 = vld [vmem:[%s8 + $0x2] sm:$0x1]
    %v2784 = vld [vmem:[%s8 + $0x3] sm:$0x1]
    %v2785 = vld [vmem:[%s8 + $0x4] sm:$0x1]
    %v2786 = vld [vmem:[%s8 + $0x5] sm:$0x1]
    %v2787 = vld [vmem:[%s8 + $0x6] sm:$0x1]
    %v2788 = vld [vmem:[%s8 + $0x7] sm:$0x1]
    %v2789 = vadd.f32 %v918, %v2744
    %v2790 = vadd.f32 %v919, %v2746
    %v2791 = vadd.f32 %v920, %v2749
    %v2792 = vadd.f32 %v921, %v2751
    %v2793 = vadd.f32 %v922, %v2754
    %v2794 = vadd.f32 %v923, %v2756
    %v2795 = vadd.f32 %v924, %v2759
    %v2796 = vadd.f32 %v925, %v2761
    %v2797 = vadd.f32 %v926, %v2764
    %v2798 = vadd.f32 %v927, %v2766
    %v2799 = vadd.f32 %v928, %v2769
    %v2800 = vadd.f32 %v929, %v2771
    %v2801 = vadd.f32 %v930, %v2774
    %v2802 = vadd.f32 %v931, %v2776
    %v2803 = vadd.f32 %v932, %v2779
    %v2804 = vadd.f32 %v933, %v2781
    %v2805 = vperm.slane %v2783, 0
    %v2806 = vadd.f32 %v2789, %v2805
    %v2807 = vadd.f32 %v2790, %v2805
    %v2808 = vadd.f32 %v2791, %v2805
    %v2809 = vadd.f32 %v2792, %v2805
    %v2810 = vadd.f32 %v2793, %v2805
    %v2811 = vadd.f32 %v2794, %v2805
    %v2812 = vadd.f32 %v2795, %v2805
    %v2813 = vadd.f32 %v2796, %v2805
    %v2814 = vadd.f32 %v2797, %v2805
    %v2815 = vadd.f32 %v2798, %v2805
    %v2816 = vadd.f32 %v2799, %v2805
    %v2817 = vadd.f32 %v2800, %v2805
    %v2818 = vadd.f32 %v2801, %v2805
    %v2819 = vadd.f32 %v2802, %v2805
    %v2820 = vadd.f32 %v2803, %v2805
    %v2821 = vadd.f32 %v2804, %v2805
    %v2822 = vsel %vm149, %v2806, 0.0
    %2823 = vadd.xlane.f32.xlu0 %v2822
    %v2824 = vpop.xlane.xlu0 %2823
    %v2825 = vsel %vm149, %v2807, 0.0
    %2826 = vadd.xlane.f32.xlu0 %v2825
    %v2827 = vpop.xlane.xlu0 %2826
    %v2828 = vsel %vm149, %v2808, 0.0
    %2829 = vadd.xlane.f32.xlu0 %v2828
    %v2830 = vpop.xlane.xlu0 %2829
    %v2831 = vsel %vm149, %v2809, 0.0
    %2832 = vadd.xlane.f32.xlu0 %v2831
    %v2833 = vpop.xlane.xlu0 %2832
    %v2834 = vsel %vm149, %v2810, 0.0
    %2835 = vadd.xlane.f32.xlu0 %v2834
    %v2836 = vpop.xlane.xlu0 %2835
    %v2837 = vsel %vm149, %v2811, 0.0
    %2838 = vadd.xlane.f32.xlu0 %v2837
    %v2839 = vpop.xlane.xlu0 %2838
    %v2840 = vsel %vm149, %v2812, 0.0
    %2841 = vadd.xlane.f32.xlu0 %v2840
    %v2842 = vpop.xlane.xlu0 %2841
    %v2843 = vsel %vm149, %v2813, 0.0
    %2844 = vadd.xlane.f32.xlu0 %v2843
    %v2845 = vpop.xlane.xlu0 %2844
    %v2846 = vsel %vm149, %v2814, 0.0
    %2847 = vadd.xlane.f32.xlu0 %v2846
    %v2848 = vpop.xlane.xlu0 %2847
    %v2849 = vsel %vm149, %v2815, 0.0
    %2850 = vadd.xlane.f32.xlu0 %v2849
    %v2851 = vpop.xlane.xlu0 %2850
    %v2852 = vsel %vm149, %v2816, 0.0
    %2853 = vadd.xlane.f32.xlu0 %v2852
    %v2854 = vpop.xlane.xlu0 %2853
    %v2855 = vsel %vm149, %v2817, 0.0
    %2856 = vadd.xlane.f32.xlu0 %v2855
    %v2857 = vpop.xlane.xlu0 %2856
    %v2858 = vsel %vm149, %v2818, 0.0
    %2859 = vadd.xlane.f32.xlu0 %v2858
    %v2860 = vpop.xlane.xlu0 %2859
    %v2861 = vsel %vm149, %v2819, 0.0
    %2862 = vadd.xlane.f32.xlu0 %v2861
    %v2863 = vpop.xlane.xlu0 %2862
    %v2864 = vsel %vm149, %v2820, 0.0
    %2865 = vadd.xlane.f32.xlu0 %v2864
    %v2866 = vpop.xlane.xlu0 %2865
    %v2867 = vsel %vm149, %v2821, 0.0
    %2868 = vadd.xlane.f32.xlu0 %v2867
    %v2869 = vpop.xlane.xlu0 %2868
    %v2870 = vmul.f32 %v2824, %v595
    %v2871 = vmul.f32 %v2827, %v595
    %v2872 = vmul.f32 %v2830, %v595
    %v2873 = vmul.f32 %v2833, %v595
    %v2874 = vmul.f32 %v2836, %v595
    %v2875 = vmul.f32 %v2839, %v595
    %v2876 = vmul.f32 %v2842, %v595
    %v2877 = vmul.f32 %v2845, %v595
    %v2878 = vmul.f32 %v2848, %v595
    %v2879 = vmul.f32 %v2851, %v595
    %v2880 = vmul.f32 %v2854, %v595
    %v2881 = vmul.f32 %v2857, %v595
    %v2882 = vmul.f32 %v2860, %v595
    %v2883 = vmul.f32 %v2863, %v595
    %v2884 = vmul.f32 %v2866, %v595
    %v2885 = vmul.f32 %v2869, %v595
    %v2886 = vsub.f32 %v2806, %v2870
    %v2887 = vsub.f32 %v2807, %v2871
    %v2888 = vsub.f32 %v2808, %v2872
    %v2889 = vsub.f32 %v2809, %v2873
    %v2890 = vsub.f32 %v2810, %v2874
    %v2891 = vsub.f32 %v2811, %v2875
    %v2892 = vsub.f32 %v2812, %v2876
    %v2893 = vsub.f32 %v2813, %v2877
    %v2894 = vsub.f32 %v2814, %v2878
    %v2895 = vsub.f32 %v2815, %v2879
    %v2896 = vsub.f32 %v2816, %v2880
    %v2897 = vsub.f32 %v2817, %v2881
    %v2898 = vsub.f32 %v2818, %v2882
    %v2899 = vsub.f32 %v2819, %v2883
    %v2900 = vsub.f32 %v2820, %v2884
    %v2901 = vsub.f32 %v2821, %v2885
    %v2902 = vmul.f32 %v2886, %v2886
    %v2903 = vmul.f32 %v2887, %v2887
    %v2904 = vmul.f32 %v2888, %v2888
    %v2905 = vmul.f32 %v2889, %v2889
    %v2906 = vmul.f32 %v2890, %v2890
    %v2907 = vmul.f32 %v2891, %v2891
    %v2908 = vmul.f32 %v2892, %v2892
    %v2909 = vmul.f32 %v2893, %v2893
    %v2910 = vmul.f32 %v2894, %v2894
    %v2911 = vmul.f32 %v2895, %v2895
    %v2912 = vmul.f32 %v2896, %v2896
    %v2913 = vmul.f32 %v2897, %v2897
    %v2914 = vmul.f32 %v2898, %v2898
    %v2915 = vmul.f32 %v2899, %v2899
    %v2916 = vmul.f32 %v2900, %v2900
    %v2917 = vmul.f32 %v2901, %v2901
    %v2918 = vsel %vm149, %v2902, 0.0
    %2919 = vadd.xlane.f32.xlu0 %v2918
    %v2920 = vpop.xlane.xlu0 %2919
    %v2921 = vsel %vm149, %v2903, 0.0
    %2922 = vadd.xlane.f32.xlu0 %v2921
    %v2923 = vpop.xlane.xlu0 %2922
    %v2924 = vsel %vm149, %v2904, 0.0
    %2925 = vadd.xlane.f32.xlu0 %v2924
    %v2926 = vpop.xlane.xlu0 %2925
    %v2927 = vsel %vm149, %v2905, 0.0
    %2928 = vadd.xlane.f32.xlu0 %v2927
    %v2929 = vpop.xlane.xlu0 %2928
    %v2930 = vsel %vm149, %v2906, 0.0
    %2931 = vadd.xlane.f32.xlu0 %v2930
    %v2932 = vpop.xlane.xlu0 %2931
    %v2933 = vsel %vm149, %v2907, 0.0
    %2934 = vadd.xlane.f32.xlu0 %v2933
    %v2935 = vpop.xlane.xlu0 %2934
    %v2936 = vsel %vm149, %v2908, 0.0
    %2937 = vadd.xlane.f32.xlu0 %v2936
    %v2938 = vpop.xlane.xlu0 %2937
    %v2939 = vsel %vm149, %v2909, 0.0
    %2940 = vadd.xlane.f32.xlu0 %v2939
    %v2941 = vpop.xlane.xlu0 %2940
    %v2942 = vsel %vm149, %v2910, 0.0
    %2943 = vadd.xlane.f32.xlu0 %v2942
    %v2944 = vpop.xlane.xlu0 %2943
    %v2945 = vsel %vm149, %v2911, 0.0
    %2946 = vadd.xlane.f32.xlu0 %v2945
    %v2947 = vpop.xlane.xlu0 %2946
    %v2948 = vsel %vm149, %v2912, 0.0
    %2949 = vadd.xlane.f32.xlu0 %v2948
    %v2950 = vpop.xlane.xlu0 %2949
    %v2951 = vsel %vm149, %v2913, 0.0
    %2952 = vadd.xlane.f32.xlu0 %v2951
    %v2953 = vpop.xlane.xlu0 %2952
    %v2954 = vsel %vm149, %v2914, 0.0
    %2955 = vadd.xlane.f32.xlu0 %v2954
    %v2956 = vpop.xlane.xlu0 %2955
    %v2957 = vsel %vm149, %v2915, 0.0
    %2958 = vadd.xlane.f32.xlu0 %v2957
    %v2959 = vpop.xlane.xlu0 %2958
    %v2960 = vsel %vm149, %v2916, 0.0
    %2961 = vadd.xlane.f32.xlu0 %v2960
    %v2962 = vpop.xlane.xlu0 %2961
    %v2963 = vsel %vm149, %v2917, 0.0
    %2964 = vadd.xlane.f32.xlu0 %v2963
    %v2965 = vpop.xlane.xlu0 %2964
    %v2966 = vmul.f32 %v2920, %v595
    %v2967 = vmul.f32 %v2923, %v595
    %v2968 = vmul.f32 %v2926, %v595
    %v2969 = vmul.f32 %v2929, %v595
    %v2970 = vmul.f32 %v2932, %v595
    %v2971 = vmul.f32 %v2935, %v595
    %v2972 = vmul.f32 %v2938, %v595
    %v2973 = vmul.f32 %v2941, %v595
    %v2974 = vmul.f32 %v2944, %v595
    %v2975 = vmul.f32 %v2947, %v595
    %v2976 = vmul.f32 %v2950, %v595
    %v2977 = vmul.f32 %v2953, %v595
    %v2978 = vmul.f32 %v2956, %v595
    %v2979 = vmul.f32 %v2959, %v595
    %v2980 = vmul.f32 %v2962, %v595
    %v2981 = vmul.f32 %v2965, %v595
    %v2982 = vadd.f32 %v2966, 1e-12
    %v2983 = vadd.f32 %v2967, 1e-12
    %v2984 = vadd.f32 %v2968, 1e-12
    %v2985 = vadd.f32 %v2969, 1e-12
    %v2986 = vadd.f32 %v2970, 1e-12
    %v2987 = vadd.f32 %v2971, 1e-12
    %v2988 = vadd.f32 %v2972, 1e-12
    %v2989 = vadd.f32 %v2973, 1e-12
    %v2990 = vadd.f32 %v2974, 1e-12
    %v2991 = vadd.f32 %v2975, 1e-12
    %v2992 = vadd.f32 %v2976, 1e-12
    %v2993 = vadd.f32 %v2977, 1e-12
    %v2994 = vadd.f32 %v2978, 1e-12
    %v2995 = vadd.f32 %v2979, 1e-12
    %v2996 = vadd.f32 %v2980, 1e-12
    %v2997 = vadd.f32 %v2981, 1e-12
    %v2998 = vrsqrt.pop %v2982
    %v2999 = vmul.f32 %v2998, %v2982
    %v3000 = vmul.f32 %v2999, %v2998
    %v3001 = vmul.f32 0.5, %v3000
    %v3002 = vsub.f32 1.5, %v3001
    %v3003 = vmul.f32 %v2998, %v3002
    %vm3004 = vweird.f32 %v2982
    %vm3005 = vweird.f32 %v2998
    %vm3006 = vmor %vm3004, %vm3005
    %v3007 = vsel %vm3006, %v2998, %v3003
    %v3008 = vrsqrt.pop %v2983
    %v3009 = vmul.f32 %v3008, %v2983
    %v3010 = vmul.f32 %v3009, %v3008
    %v3011 = vmul.f32 0.5, %v3010
    %v3012 = vsub.f32 1.5, %v3011
    %v3013 = vmul.f32 %v3008, %v3012
    %vm3014 = vweird.f32 %v2983
    %vm3015 = vweird.f32 %v3008
    %vm3016 = vmor %vm3014, %vm3015
    %v3017 = vsel %vm3016, %v3008, %v3013
    %v3018 = vrsqrt.pop %v2984
    %v3019 = vmul.f32 %v3018, %v2984
    %v3020 = vmul.f32 %v3019, %v3018
    %v3021 = vmul.f32 0.5, %v3020
    %v3022 = vsub.f32 1.5, %v3021
    %v3023 = vmul.f32 %v3018, %v3022
    %vm3024 = vweird.f32 %v2984
    %vm3025 = vweird.f32 %v3018
    %vm3026 = vmor %vm3024, %vm3025
    %v3027 = vsel %vm3026, %v3018, %v3023
    %v3028 = vrsqrt.pop %v2985
    %v3029 = vmul.f32 %v3028, %v2985
    %v3030 = vmul.f32 %v3029, %v3028
    %v3031 = vmul.f32 0.5, %v3030
    %v3032 = vsub.f32 1.5, %v3031
    %v3033 = vmul.f32 %v3028, %v3032
    %vm3034 = vweird.f32 %v2985
    %vm3035 = vweird.f32 %v3028
    %vm3036 = vmor %vm3034, %vm3035
    %v3037 = vsel %vm3036, %v3028, %v3033
    %v3038 = vrsqrt.pop %v2986
    %v3039 = vmul.f32 %v3038, %v2986
    %v3040 = vmul.f32 %v3039, %v3038
    %v3041 = vmul.f32 0.5, %v3040
    %v3042 = vsub.f32 1.5, %v3041
    %v3043 = vmul.f32 %v3038, %v3042
    %vm3044 = vweird.f32 %v2986
    %vm3045 = vweird.f32 %v3038
    %vm3046 = vmor %vm3044, %vm3045
    %v3047 = vsel %vm3046, %v3038, %v3043
    %v3048 = vrsqrt.pop %v2987
    %v3049 = vmul.f32 %v3048, %v2987
    %v3050 = vmul.f32 %v3049, %v3048
    %v3051 = vmul.f32 0.5, %v3050
    %v3052 = vsub.f32 1.5, %v3051
    %v3053 = vmul.f32 %v3048, %v3052
    %vm3054 = vweird.f32 %v2987
    %vm3055 = vweird.f32 %v3048
    %vm3056 = vmor %vm3054, %vm3055
    %v3057 = vsel %vm3056, %v3048, %v3053
    %v3058 = vrsqrt.pop %v2988
    %v3059 = vmul.f32 %v3058, %v2988
    %v3060 = vmul.f32 %v3059, %v3058
    %v3061 = vmul.f32 0.5, %v3060
    %v3062 = vsub.f32 1.5, %v3061
    %v3063 = vmul.f32 %v3058, %v3062
    %vm3064 = vweird.f32 %v2988
    %vm3065 = vweird.f32 %v3058
    %vm3066 = vmor %vm3064, %vm3065
    %v3067 = vsel %vm3066, %v3058, %v3063
    %v3068 = vrsqrt.pop %v2989
    %v3069 = vmul.f32 %v3068, %v2989
    %v3070 = vmul.f32 %v3069, %v3068
    %v3071 = vmul.f32 0.5, %v3070
    %v3072 = vsub.f32 1.5, %v3071
    %v3073 = vmul.f32 %v3068, %v3072
    %vm3074 = vweird.f32 %v2989
    %vm3075 = vweird.f32 %v3068
    %vm3076 = vmor %vm3074, %vm3075
    %v3077 = vsel %vm3076, %v3068, %v3073
    %v3078 = vrsqrt.pop %v2990
    %v3079 = vmul.f32 %v3078, %v2990
    %v3080 = vmul.f32 %v3079, %v3078
    %v3081 = vmul.f32 0.5, %v3080
    %v3082 = vsub.f32 1.5, %v3081
    %v3083 = vmul.f32 %v3078, %v3082
    %vm3084 = vweird.f32 %v2990
    %vm3085 = vweird.f32 %v3078
    %vm3086 = vmor %vm3084, %vm3085
    %v3087 = vsel %vm3086, %v3078, %v3083
    %v3088 = vrsqrt.pop %v2991
    %v3089 = vmul.f32 %v3088, %v2991
    %v3090 = vmul.f32 %v3089, %v3088
    %v3091 = vmul.f32 0.5, %v3090
    %v3092 = vsub.f32 1.5, %v3091
    %v3093 = vmul.f32 %v3088, %v3092
    %vm3094 = vweird.f32 %v2991
    %vm3095 = vweird.f32 %v3088
    %vm3096 = vmor %vm3094, %vm3095
    %v3097 = vsel %vm3096, %v3088, %v3093
    %v3098 = vrsqrt.pop %v2992
    %v3099 = vmul.f32 %v3098, %v2992
    %v3100 = vmul.f32 %v3099, %v3098
    %v3101 = vmul.f32 0.5, %v3100
    %v3102 = vsub.f32 1.5, %v3101
    %v3103 = vmul.f32 %v3098, %v3102
    %vm3104 = vweird.f32 %v2992
    %vm3105 = vweird.f32 %v3098
    %vm3106 = vmor %vm3104, %vm3105
    %v3107 = vsel %vm3106, %v3098, %v3103
    %v3108 = vrsqrt.pop %v2993
    %v3109 = vmul.f32 %v3108, %v2993
    %v3110 = vmul.f32 %v3109, %v3108
    %v3111 = vmul.f32 0.5, %v3110
    %v3112 = vsub.f32 1.5, %v3111
    %v3113 = vmul.f32 %v3108, %v3112
    %vm3114 = vweird.f32 %v2993
    %vm3115 = vweird.f32 %v3108
    %vm3116 = vmor %vm3114, %vm3115
    %v3117 = vsel %vm3116, %v3108, %v3113
    %v3118 = vrsqrt.pop %v2994
    %v3119 = vmul.f32 %v3118, %v2994
    %v3120 = vmul.f32 %v3119, %v3118
    %v3121 = vmul.f32 0.5, %v3120
    %v3122 = vsub.f32 1.5, %v3121
    %v3123 = vmul.f32 %v3118, %v3122
    %vm3124 = vweird.f32 %v2994
    %vm3125 = vweird.f32 %v3118
    %vm3126 = vmor %vm3124, %vm3125
    %v3127 = vsel %vm3126, %v3118, %v3123
    %v3128 = vrsqrt.pop %v2995
    %v3129 = vmul.f32 %v3128, %v2995
    %v3130 = vmul.f32 %v3129, %v3128
    %v3131 = vmul.f32 0.5, %v3130
    %v3132 = vsub.f32 1.5, %v3131
    %v3133 = vmul.f32 %v3128, %v3132
    %vm3134 = vweird.f32 %v2995
    %vm3135 = vweird.f32 %v3128
    %vm3136 = vmor %vm3134, %vm3135
    %v3137 = vsel %vm3136, %v3128, %v3133
    %v3138 = vrsqrt.pop %v2996
    %v3139 = vmul.f32 %v3138, %v2996
    %v3140 = vmul.f32 %v3139, %v3138
    %v3141 = vmul.f32 0.5, %v3140
    %v3142 = vsub.f32 1.5, %v3141
    %v3143 = vmul.f32 %v3138, %v3142
    %vm3144 = vweird.f32 %v2996
    %vm3145 = vweird.f32 %v3138
    %vm3146 = vmor %vm3144, %vm3145
    %v3147 = vsel %vm3146, %v3138, %v3143
    %v3148 = vrsqrt.pop %v2997
    %v3149 = vmul.f32 %v3148, %v2997
    %v3150 = vmul.f32 %v3149, %v3148
    %v3151 = vmul.f32 0.5, %v3150
    %v3152 = vsub.f32 1.5, %v3151
    %v3153 = vmul.f32 %v3148, %v3152
    %vm3154 = vweird.f32 %v2997
    %vm3155 = vweird.f32 %v3148
    %vm3156 = vmor %vm3154, %vm3155
    %v3157 = vsel %vm3156, %v3148, %v3153
    %v3158 = vmul.f32 %v2886, %v3007
    %v3159 = vmul.f32 %v2887, %v3017
    %v3160 = vmul.f32 %v2888, %v3027
    %v3161 = vmul.f32 %v2889, %v3037
    %v3162 = vmul.f32 %v2890, %v3047
    %v3163 = vmul.f32 %v2891, %v3057
    %v3164 = vmul.f32 %v2892, %v3067
    %v3165 = vmul.f32 %v2893, %v3077
    %v3166 = vmul.f32 %v2894, %v3087
    %v3167 = vmul.f32 %v2895, %v3097
    %v3168 = vmul.f32 %v2896, %v3107
    %v3169 = vmul.f32 %v2897, %v3117
    %v3170 = vmul.f32 %v2898, %v3127
    %v3171 = vmul.f32 %v2899, %v3137
    %v3172 = vmul.f32 %v2900, %v3147
    %v3173 = vmul.f32 %v2901, %v3157
    %v3174 = vperm.slane %v2784, 0
    %v3175 = vmul.f32 %v3158, %v3174
    %v3176 = vmul.f32 %v3159, %v3174
    %v3177 = vmul.f32 %v3160, %v3174
    %v3178 = vmul.f32 %v3161, %v3174
    %v3179 = vmul.f32 %v3162, %v3174
    %v3180 = vmul.f32 %v3163, %v3174
    %v3181 = vmul.f32 %v3164, %v3174
    %v3182 = vmul.f32 %v3165, %v3174
    %v3183 = vmul.f32 %v3166, %v3174
    %v3184 = vmul.f32 %v3167, %v3174
    %v3185 = vmul.f32 %v3168, %v3174
    %v3186 = vmul.f32 %v3169, %v3174
    %v3187 = vmul.f32 %v3170, %v3174
    %v3188 = vmul.f32 %v3171, %v3174
    %v3189 = vmul.f32 %v3172, %v3174
    %v3190 = vmul.f32 %v3173, %v3174
    %v3191 = vperm.slane %v2785, 0
    %v3192 = vadd.f32 %v3175, %v3191
    %v3193 = vadd.f32 %v3176, %v3191
    %v3194 = vadd.f32 %v3177, %v3191
    %v3195 = vadd.f32 %v3178, %v3191
    %v3196 = vadd.f32 %v3179, %v3191
    %v3197 = vadd.f32 %v3180, %v3191
    %v3198 = vadd.f32 %v3181, %v3191
    %v3199 = vadd.f32 %v3182, %v3191
    %v3200 = vadd.f32 %v3183, %v3191
    %v3201 = vadd.f32 %v3184, %v3191
    %v3202 = vadd.f32 %v3185, %v3191
    %v3203 = vadd.f32 %v3186, %v3191
    %v3204 = vadd.f32 %v3187, %v3191
    %v3205 = vadd.f32 %v3188, %v3191
    %v3206 = vadd.f32 %v3189, %v3191
    %v3207 = vadd.f32 %v3190, %v3191
    %v3208 = vpack.c.bf16 %v3193, %v3192
    %v3209 = vpack.c.bf16 %v3195, %v3194
    %v3210 = vpack.c.bf16 %v3197, %v3196
    %v3211 = vpack.c.bf16 %v3199, %v3198
    %v3212 = vpack.c.bf16 %v3201, %v3200
    %v3213 = vpack.c.bf16 %v3203, %v3202
    %v3214 = vpack.c.bf16 %v3205, %v3204
    %v3215 = vpack.c.bf16 %v3207, %v3206
    %v3216 = vld [vmem:[#allocation12] sm:$0xf]
    %v3217 = vld [vmem:[#allocation12 + $0x4] sm:$0xf]
    %v3218 = vld [vmem:[#allocation12 + $0x8] sm:$0xf]
    %v3219 = vld [vmem:[#allocation12 + $0xc] sm:$0xf]
    %v3220 = vld [vmem:[%s9 + $0x2] sm:$0x1]
    %v3221 = vperm.slane %v3220, 0
    %v3226 = vunpack.c.l.b16 %v3216
    %v3227 = vunpack.c.l.b16 %v3217
    %v3228 = vunpack.c.l.b16 %v3218
    %v3229 = vunpack.c.l.b16 %v3219
    %v3230 = vpack.c.b16 %v3227, %v3226
    %v3231 = vpack.c.b16 %v3229, %v3228
    %v3235 = vsel %vm149, %v3208, 0
    %v3238 = vsel %vm149, %v3209, 0
    %v3241 = vsel %vm149, %v3210, 0
    %v3244 = vsel %vm149, %v3211, 0
    %v3247 = vsel %vm149, %v3212, 0
    %v3250 = vsel %vm149, %v3213, 0
    %v3253 = vsel %vm149, %v3214, 0
    %v3256 = vsel %vm149, %v3215, 0
    %3258 = vmatpush.bf16.msra.mxu0 0
    %3259 = vmatpush.bf16.msra.mxu0 0
    %3260 = vmatpush.bf16.msra.mxu0 0
    %3261 = vmatpush.bf16.msra.mxu0 0
    %3262 = vmatpush.bf16.msra.mxu0 0
    %3263 = vmatpush.bf16.msra.mxu0 0
    %3264 = vmatpush.bf16.msra.mxu0 %v3231
    %3265 = vmatpush.bf16.msra.mxu0 %v3230
    %3266 = vmatmul.bf16.gmra.mxu0 %v3235
    %v3267 = vpop.f32.mrf.mxu0
    %v3268 = vadd.f32 %v3221, %v3267
    %v3269 = vpop.f32.mrf.mxu0
    %v3270 = vadd.f32 %v3221, %v3269
    %3271 = vmatmul.bf16.gmra.mxu0 %v3238
    %v3272 = vpop.f32.mrf.mxu0
    %v3273 = vadd.f32 %v3221, %v3272
    %v3274 = vpop.f32.mrf.mxu0
    %v3275 = vadd.f32 %v3221, %v3274
    %3276 = vmatmul.bf16.gmra.mxu0 %v3241
    %v3277 = vpop.f32.mrf.mxu0
    %v3278 = vadd.f32 %v3221, %v3277
    %v3279 = vpop.f32.mrf.mxu0
    %v3280 = vadd.f32 %v3221, %v3279
    %3281 = vmatmul.bf16.gmra.mxu0 %v3244
    %v3282 = vpop.f32.mrf.mxu0
    %v3283 = vadd.f32 %v3221, %v3282
    %v3284 = vpop.f32.mrf.mxu0
    %v3285 = vadd.f32 %v3221, %v3284
    %3286 = vmatmul.bf16.gmra.mxu0 %v3247
    %v3287 = vpop.f32.mrf.mxu0
    %v3288 = vadd.f32 %v3221, %v3287
    %v3289 = vpop.f32.mrf.mxu0
    %v3290 = vadd.f32 %v3221, %v3289
    %3291 = vmatmul.bf16.gmra.mxu0 %v3250
    %v3292 = vpop.f32.mrf.mxu0
    %v3293 = vadd.f32 %v3221, %v3292
    %v3294 = vpop.f32.mrf.mxu0
    %v3295 = vadd.f32 %v3221, %v3294
    %3296 = vmatmul.bf16.gmra.mxu0 %v3253
    %v3297 = vpop.f32.mrf.mxu0
    %v3298 = vadd.f32 %v3221, %v3297
    %v3299 = vpop.f32.mrf.mxu0
    %v3300 = vadd.f32 %v3221, %v3299
    %3301 = vmatmul.bf16.gmra.mxu0 %v3256
    %v3302 = vpop.f32.mrf.mxu0
    %v3303 = vadd.f32 %v3221, %v3302
    %v3304 = vpop.f32.mrf.mxu0
    %v3305 = vadd.f32 %v3221, %v3304
    %3306 = vdwg.mxu0
    %v3307 = vmul.f32 %v3268, 0.5
    %v3308 = vmul.f32 %v3270, 0.5
    %v3309 = vmul.f32 %v3273, 0.5
    %v3310 = vmul.f32 %v3275, 0.5
    %v3311 = vmul.f32 %v3278, 0.5
    %v3312 = vmul.f32 %v3280, 0.5
    %v3313 = vmul.f32 %v3283, 0.5
    %v3314 = vmul.f32 %v3285, 0.5
    %v3315 = vmul.f32 %v3288, 0.5
    %v3316 = vmul.f32 %v3290, 0.5
    %v3317 = vmul.f32 %v3293, 0.5
    %v3318 = vmul.f32 %v3295, 0.5
    %v3319 = vmul.f32 %v3298, 0.5
    %v3320 = vmul.f32 %v3300, 0.5
    %v3321 = vmul.f32 %v3303, 0.5
    %v3322 = vmul.f32 %v3305, 0.5
    %v3323 = vmul.f32 %v3268, 0.044715
    %v3324 = vmul.f32 %v3270, 0.044715
    %v3325 = vmul.f32 %v3273, 0.044715
    %v3326 = vmul.f32 %v3275, 0.044715
    %v3327 = vmul.f32 %v3278, 0.044715
    %v3328 = vmul.f32 %v3280, 0.044715
    %v3329 = vmul.f32 %v3283, 0.044715
    %v3330 = vmul.f32 %v3285, 0.044715
    %v3331 = vmul.f32 %v3288, 0.044715
    %v3332 = vmul.f32 %v3290, 0.044715
    %v3333 = vmul.f32 %v3293, 0.044715
    %v3334 = vmul.f32 %v3295, 0.044715
    %v3335 = vmul.f32 %v3298, 0.044715
    %v3336 = vmul.f32 %v3300, 0.044715
    %v3337 = vmul.f32 %v3303, 0.044715
    %v3338 = vmul.f32 %v3305, 0.044715
    %v3339 = vmul.f32 %v3323, %v3268
    %v3340 = vmul.f32 %v3324, %v3270
    %v3341 = vmul.f32 %v3325, %v3273
    %v3342 = vmul.f32 %v3326, %v3275
    %v3343 = vmul.f32 %v3327, %v3278
    %v3344 = vmul.f32 %v3328, %v3280
    %v3345 = vmul.f32 %v3329, %v3283
    %v3346 = vmul.f32 %v3330, %v3285
    %v3347 = vmul.f32 %v3331, %v3288
    %v3348 = vmul.f32 %v3332, %v3290
    %v3349 = vmul.f32 %v3333, %v3293
    %v3350 = vmul.f32 %v3334, %v3295
    %v3351 = vmul.f32 %v3335, %v3298
    %v3352 = vmul.f32 %v3336, %v3300
    %v3353 = vmul.f32 %v3337, %v3303
    %v3354 = vmul.f32 %v3338, %v3305
    %v3355 = vmul.f32 %v3339, %v3268
    %v3356 = vmul.f32 %v3340, %v3270
    %v3357 = vmul.f32 %v3341, %v3273
    %v3358 = vmul.f32 %v3342, %v3275
    %v3359 = vmul.f32 %v3343, %v3278
    %v3360 = vmul.f32 %v3344, %v3280
    %v3361 = vmul.f32 %v3345, %v3283
    %v3362 = vmul.f32 %v3346, %v3285
    %v3363 = vmul.f32 %v3347, %v3288
    %v3364 = vmul.f32 %v3348, %v3290
    %v3365 = vmul.f32 %v3349, %v3293
    %v3366 = vmul.f32 %v3350, %v3295
    %v3367 = vmul.f32 %v3351, %v3298
    %v3368 = vmul.f32 %v3352, %v3300
    %v3369 = vmul.f32 %v3353, %v3303
    %v3370 = vmul.f32 %v3354, %v3305
    %v3371 = vadd.f32 %v3268, %v3355
    %v3372 = vadd.f32 %v3270, %v3356
    %v3373 = vadd.f32 %v3273, %v3357
    %v3374 = vadd.f32 %v3275, %v3358
    %v3375 = vadd.f32 %v3278, %v3359
    %v3376 = vadd.f32 %v3280, %v3360
    %v3377 = vadd.f32 %v3283, %v3361
    %v3378 = vadd.f32 %v3285, %v3362
    %v3379 = vadd.f32 %v3288, %v3363
    %v3380 = vadd.f32 %v3290, %v3364
    %v3381 = vadd.f32 %v3293, %v3365
    %v3382 = vadd.f32 %v3295, %v3366
    %v3383 = vadd.f32 %v3298, %v3367
    %v3384 = vadd.f32 %v3300, %v3368
    %v3385 = vadd.f32 %v3303, %v3369
    %v3386 = vadd.f32 %v3305, %v3370
    %v3387 = vmul.f32 %v3371, 0.7978846
    %v3388 = vmul.f32 %v3372, 0.7978846
    %v3389 = vmul.f32 %v3373, 0.7978846
    %v3390 = vmul.f32 %v3374, 0.7978846
    %v3391 = vmul.f32 %v3375, 0.7978846
    %v3392 = vmul.f32 %v3376, 0.7978846
    %v3393 = vmul.f32 %v3377, 0.7978846
    %v3394 = vmul.f32 %v3378, 0.7978846
    %v3395 = vmul.f32 %v3379, 0.7978846
    %v3396 = vmul.f32 %v3380, 0.7978846
    %v3397 = vmul.f32 %v3381, 0.7978846
    %v3398 = vmul.f32 %v3382, 0.7978846
    %v3399 = vmul.f32 %v3383, 0.7978846
    %v3400 = vmul.f32 %v3384, 0.7978846
    %v3401 = vmul.f32 %v3385, 0.7978846
    %v3402 = vmul.f32 %v3386, 0.7978846
    %v3403 = vtanh.pop %v3387
    %v3404 = vtanh.pop %v3388
    %v3405 = vtanh.pop %v3389
    %v3406 = vtanh.pop %v3390
    %v3407 = vtanh.pop %v3391
    %v3408 = vtanh.pop %v3392
    %v3409 = vtanh.pop %v3393
    %v3410 = vtanh.pop %v3394
    %v3411 = vtanh.pop %v3395
    %v3412 = vtanh.pop %v3396
    %v3413 = vtanh.pop %v3397
    %v3414 = vtanh.pop %v3398
    %v3415 = vtanh.pop %v3399
    %v3416 = vtanh.pop %v3400
    %v3417 = vtanh.pop %v3401
    %v3418 = vtanh.pop %v3402
    %v3419 = vadd.f32 %v3403, 1.0
    %v3420 = vadd.f32 %v3404, 1.0
    %v3421 = vadd.f32 %v3405, 1.0
    %v3422 = vadd.f32 %v3406, 1.0
    %v3423 = vadd.f32 %v3407, 1.0
    %v3424 = vadd.f32 %v3408, 1.0
    %v3425 = vadd.f32 %v3409, 1.0
    %v3426 = vadd.f32 %v3410, 1.0
    %v3427 = vadd.f32 %v3411, 1.0
    %v3428 = vadd.f32 %v3412, 1.0
    %v3429 = vadd.f32 %v3413, 1.0
    %v3430 = vadd.f32 %v3414, 1.0
    %v3431 = vadd.f32 %v3415, 1.0
    %v3432 = vadd.f32 %v3416, 1.0
    %v3433 = vadd.f32 %v3417, 1.0
    %v3434 = vadd.f32 %v3418, 1.0
    %v3435 = vmul.f32 %v3307, %v3419
    %v3436 = vmul.f32 %v3308, %v3420
    %v3437 = vmul.f32 %v3309, %v3421
    %v3438 = vmul.f32 %v3310, %v3422
    %v3439 = vmul.f32 %v3311, %v3423
    %v3440 = vmul.f32 %v3312, %v3424
    %v3441 = vmul.f32 %v3313, %v3425
    %v3442 = vmul.f32 %v3314, %v3426
    %v3443 = vmul.f32 %v3315, %v3427
    %v3444 = vmul.f32 %v3316, %v3428
    %v3445 = vmul.f32 %v3317, %v3429
    %v3446 = vmul.f32 %v3318, %v3430
    %v3447 = vmul.f32 %v3319, %v3431
    %v3448 = vmul.f32 %v3320, %v3432
    %v3449 = vmul.f32 %v3321, %v3433
    %v3450 = vmul.f32 %v3322, %v3434
    %v3451 = vpack.c.bf16 %v3436, %v3435
    %v3452 = vpack.c.bf16 %v3438, %v3437
    %v3453 = vpack.c.bf16 %v3440, %v3439
    %v3454 = vpack.c.bf16 %v3442, %v3441
    %v3455 = vpack.c.bf16 %v3444, %v3443
    %v3456 = vpack.c.bf16 %v3446, %v3445
    %v3457 = vpack.c.bf16 %v3448, %v3447
    %v3458 = vpack.c.bf16 %v3450, %v3449
    %v3459 = vld [vmem:[#allocation13] sm:$0xf]
    %v3460 = vld [vmem:[#allocation13 + $0x4] sm:$0xf]
    %v3461 = vld [vmem:[#allocation13 + $0x8] sm:$0xf]
    %v3462 = vld [vmem:[#allocation13 + $0xc] sm:$0xf]
    %v3463 = vld [vmem:[#allocation13 + $0x10] sm:$0xf]
    %v3464 = vld [vmem:[#allocation13 + $0x14] sm:$0xf]
    %v3465 = vld [vmem:[#allocation13 + $0x18] sm:$0xf]
    %v3466 = vld [vmem:[#allocation13 + $0x1c] sm:$0xf]
    %v3467 = vperm.slane %v2786, 0
    %v3476 = vunpack.c.l.b16 %v3459
    %v3477 = vunpack.c.l.b16 %v3460
    %v3478 = vunpack.c.l.b16 %v3461
    %v3479 = vunpack.c.l.b16 %v3462
    %v3480 = vunpack.c.l.b16 %v3463
    %v3481 = vunpack.c.l.b16 %v3464
    %v3482 = vunpack.c.l.b16 %v3465
    %v3483 = vunpack.c.l.b16 %v3466
    %v3484 = vpack.c.b16 %v3477, %v3476
    %v3485 = vpack.c.b16 %v3479, %v3478
    %v3486 = vpack.c.b16 %v3481, %v3480
    %v3487 = vpack.c.b16 %v3483, %v3482
    %vm3492 = vcmask 523264
    %v3494 = vsel %vm3492, %v3451, 0
    %v3497 = vsel %vm3492, %v3452, 0
    %v3500 = vsel %vm3492, %v3453, 0
    %v3503 = vsel %vm3492, %v3454, 0
    %v3506 = vsel %vm3492, %v3455, 0
    %v3509 = vsel %vm3492, %v3456, 0
    %v3512 = vsel %vm3492, %v3457, 0
    %v3515 = vsel %vm3492, %v3458, 0
    %3517 = vmatpush.bf16.msra.mxu0 0
    %3518 = vmatpush.bf16.msra.mxu0 0
    %3519 = vmatpush.bf16.msra.mxu0 0
    %3520 = vmatpush.bf16.msra.mxu0 0
    %3521 = vmatpush.bf16.msra.mxu0 %v3487
    %3522 = vmatpush.bf16.msra.mxu0 %v3486
    %3523 = vmatpush.bf16.msra.mxu0 %v3485
    %3524 = vmatpush.bf16.msra.mxu0 %v3484
    %3525 = vmatmul.bf16.gmra.mxu0 %v3494
    %v3526 = vpop.f32.mrf.mxu0
    %v3527 = vadd.f32 %v3467, %v3526
    %v3528 = vpop.f32.mrf.mxu0
    %v3529 = vadd.f32 %v3467, %v3528
    %3530 = vmatmul.bf16.gmra.mxu0 %v3497
    %v3531 = vpop.f32.mrf.mxu0
    %v3532 = vadd.f32 %v3467, %v3531
    %v3533 = vpop.f32.mrf.mxu0
    %v3534 = vadd.f32 %v3467, %v3533
    %3535 = vmatmul.bf16.gmra.mxu0 %v3500
    %v3536 = vpop.f32.mrf.mxu0
    %v3537 = vadd.f32 %v3467, %v3536
    %v3538 = vpop.f32.mrf.mxu0
    %v3539 = vadd.f32 %v3467, %v3538
    %3540 = vmatmul.bf16.gmra.mxu0 %v3503
    %v3541 = vpop.f32.mrf.mxu0
    %v3542 = vadd.f32 %v3467, %v3541
    %v3543 = vpop.f32.mrf.mxu0
    %v3544 = vadd.f32 %v3467, %v3543
    %3545 = vmatmul.bf16.gmra.mxu0 %v3506
    %v3546 = vpop.f32.mrf.mxu0
    %v3547 = vadd.f32 %v3467, %v3546
    %v3548 = vpop.f32.mrf.mxu0
    %v3549 = vadd.f32 %v3467, %v3548
    %3550 = vmatmul.bf16.gmra.mxu0 %v3509
    %v3551 = vpop.f32.mrf.mxu0
    %v3552 = vadd.f32 %v3467, %v3551
    %v3553 = vpop.f32.mrf.mxu0
    %v3554 = vadd.f32 %v3467, %v3553
    %3555 = vmatmul.bf16.gmra.mxu0 %v3512
    %v3556 = vpop.f32.mrf.mxu0
    %v3557 = vadd.f32 %v3467, %v3556
    %v3558 = vpop.f32.mrf.mxu0
    %v3559 = vadd.f32 %v3467, %v3558
    %3560 = vmatmul.bf16.gmra.mxu0 %v3515
    %v3561 = vpop.f32.mrf.mxu0
    %v3562 = vadd.f32 %v3467, %v3561
    %v3563 = vpop.f32.mrf.mxu0
    %v3564 = vadd.f32 %v3467, %v3563
    %3565 = vdwg.mxu0
    %v3566 = vadd.f32 %v3192, %v3527
    %v3567 = vadd.f32 %v3193, %v3529
    %v3568 = vadd.f32 %v3194, %v3532
    %v3569 = vadd.f32 %v3195, %v3534
    %v3570 = vadd.f32 %v3196, %v3537
    %v3571 = vadd.f32 %v3197, %v3539
    %v3572 = vadd.f32 %v3198, %v3542
    %v3573 = vadd.f32 %v3199, %v3544
    %v3574 = vadd.f32 %v3200, %v3547
    %v3575 = vadd.f32 %v3201, %v3549
    %v3576 = vadd.f32 %v3202, %v3552
    %v3577 = vadd.f32 %v3203, %v3554
    %v3578 = vadd.f32 %v3204, %v3557
    %v3579 = vadd.f32 %v3205, %v3559
    %v3580 = vadd.f32 %v3206, %v3562
    %v3581 = vadd.f32 %v3207, %v3564
    %v3582 = vsel %vm149, %v3566, 0.0
    %3583 = vadd.xlane.f32.xlu0 %v3582
    %v3584 = vpop.xlane.xlu0 %3583
    %v3585 = vsel %vm149, %v3567, 0.0
    %3586 = vadd.xlane.f32.xlu0 %v3585
    %v3587 = vpop.xlane.xlu0 %3586
    %v3588 = vsel %vm149, %v3568, 0.0
    %3589 = vadd.xlane.f32.xlu0 %v3588
    %v3590 = vpop.xlane.xlu0 %3589
    %v3591 = vsel %vm149, %v3569, 0.0
    %3592 = vadd.xlane.f32.xlu0 %v3591
    %v3593 = vpop.xlane.xlu0 %3592
    %v3594 = vsel %vm149, %v3570, 0.0
    %3595 = vadd.xlane.f32.xlu0 %v3594
    %v3596 = vpop.xlane.xlu0 %3595
    %v3597 = vsel %vm149, %v3571, 0.0
    %3598 = vadd.xlane.f32.xlu0 %v3597
    %v3599 = vpop.xlane.xlu0 %3598
    %v3600 = vsel %vm149, %v3572, 0.0
    %3601 = vadd.xlane.f32.xlu0 %v3600
    %v3602 = vpop.xlane.xlu0 %3601
    %v3603 = vsel %vm149, %v3573, 0.0
    %3604 = vadd.xlane.f32.xlu0 %v3603
    %v3605 = vpop.xlane.xlu0 %3604
    %v3606 = vsel %vm149, %v3574, 0.0
    %3607 = vadd.xlane.f32.xlu0 %v3606
    %v3608 = vpop.xlane.xlu0 %3607
    %v3609 = vsel %vm149, %v3575, 0.0
    %3610 = vadd.xlane.f32.xlu0 %v3609
    %v3611 = vpop.xlane.xlu0 %3610
    %v3612 = vsel %vm149, %v3576, 0.0
    %3613 = vadd.xlane.f32.xlu0 %v3612
    %v3614 = vpop.xlane.xlu0 %3613
    %v3615 = vsel %vm149, %v3577, 0.0
    %3616 = vadd.xlane.f32.xlu0 %v3615
    %v3617 = vpop.xlane.xlu0 %3616
    %v3618 = vsel %vm149, %v3578, 0.0
    %3619 = vadd.xlane.f32.xlu0 %v3618
    %v3620 = vpop.xlane.xlu0 %3619
    %v3621 = vsel %vm149, %v3579, 0.0
    %3622 = vadd.xlane.f32.xlu0 %v3621
    %v3623 = vpop.xlane.xlu0 %3622
    %v3624 = vsel %vm149, %v3580, 0.0
    %3625 = vadd.xlane.f32.xlu0 %v3624
    %v3626 = vpop.xlane.xlu0 %3625
    %v3627 = vsel %vm149, %v3581, 0.0
    %3628 = vadd.xlane.f32.xlu0 %v3627
    %v3629 = vpop.xlane.xlu0 %3628
    %v3630 = vmul.f32 %v3584, %v595
    %v3631 = vmul.f32 %v3587, %v595
    %v3632 = vmul.f32 %v3590, %v595
    %v3633 = vmul.f32 %v3593, %v595
    %v3634 = vmul.f32 %v3596, %v595
    %v3635 = vmul.f32 %v3599, %v595
    %v3636 = vmul.f32 %v3602, %v595
    %v3637 = vmul.f32 %v3605, %v595
    %v3638 = vmul.f32 %v3608, %v595
    %v3639 = vmul.f32 %v3611, %v595
    %v3640 = vmul.f32 %v3614, %v595
    %v3641 = vmul.f32 %v3617, %v595
    %v3642 = vmul.f32 %v3620, %v595
    %v3643 = vmul.f32 %v3623, %v595
    %v3644 = vmul.f32 %v3626, %v595
    %v3645 = vmul.f32 %v3629, %v595
    %v3646 = vsub.f32 %v3566, %v3630
    %v3647 = vsub.f32 %v3567, %v3631
    %v3648 = vsub.f32 %v3568, %v3632
    %v3649 = vsub.f32 %v3569, %v3633
    %v3650 = vsub.f32 %v3570, %v3634
    %v3651 = vsub.f32 %v3571, %v3635
    %v3652 = vsub.f32 %v3572, %v3636
    %v3653 = vsub.f32 %v3573, %v3637
    %v3654 = vsub.f32 %v3574, %v3638
    %v3655 = vsub.f32 %v3575, %v3639
    %v3656 = vsub.f32 %v3576, %v3640
    %v3657 = vsub.f32 %v3577, %v3641
    %v3658 = vsub.f32 %v3578, %v3642
    %v3659 = vsub.f32 %v3579, %v3643
    %v3660 = vsub.f32 %v3580, %v3644
    %v3661 = vsub.f32 %v3581, %v3645
    %v3662 = vmul.f32 %v3646, %v3646
    %v3663 = vmul.f32 %v3647, %v3647
    %v3664 = vmul.f32 %v3648, %v3648
    %v3665 = vmul.f32 %v3649, %v3649
    %v3666 = vmul.f32 %v3650, %v3650
    %v3667 = vmul.f32 %v3651, %v3651
    %v3668 = vmul.f32 %v3652, %v3652
    %v3669 = vmul.f32 %v3653, %v3653
    %v3670 = vmul.f32 %v3654, %v3654
    %v3671 = vmul.f32 %v3655, %v3655
    %v3672 = vmul.f32 %v3656, %v3656
    %v3673 = vmul.f32 %v3657, %v3657
    %v3674 = vmul.f32 %v3658, %v3658
    %v3675 = vmul.f32 %v3659, %v3659
    %v3676 = vmul.f32 %v3660, %v3660
    %v3677 = vmul.f32 %v3661, %v3661
    %v3678 = vsel %vm149, %v3662, 0.0
    %3679 = vadd.xlane.f32.xlu0 %v3678
    %v3680 = vpop.xlane.xlu0 %3679
    %v3681 = vsel %vm149, %v3663, 0.0
    %3682 = vadd.xlane.f32.xlu0 %v3681
    %v3683 = vpop.xlane.xlu0 %3682
    %v3684 = vsel %vm149, %v3664, 0.0
    %3685 = vadd.xlane.f32.xlu0 %v3684
    %v3686 = vpop.xlane.xlu0 %3685
    %v3687 = vsel %vm149, %v3665, 0.0
    %3688 = vadd.xlane.f32.xlu0 %v3687
    %v3689 = vpop.xlane.xlu0 %3688
    %v3690 = vsel %vm149, %v3666, 0.0
    %3691 = vadd.xlane.f32.xlu0 %v3690
    %v3692 = vpop.xlane.xlu0 %3691
    %v3693 = vsel %vm149, %v3667, 0.0
    %3694 = vadd.xlane.f32.xlu0 %v3693
    %v3695 = vpop.xlane.xlu0 %3694
    %v3696 = vsel %vm149, %v3668, 0.0
    %3697 = vadd.xlane.f32.xlu0 %v3696
    %v3698 = vpop.xlane.xlu0 %3697
    %v3699 = vsel %vm149, %v3669, 0.0
    %3700 = vadd.xlane.f32.xlu0 %v3699
    %v3701 = vpop.xlane.xlu0 %3700
    %v3702 = vsel %vm149, %v3670, 0.0
    %3703 = vadd.xlane.f32.xlu0 %v3702
    %v3704 = vpop.xlane.xlu0 %3703
    %v3705 = vsel %vm149, %v3671, 0.0
    %3706 = vadd.xlane.f32.xlu0 %v3705
    %v3707 = vpop.xlane.xlu0 %3706
    %v3708 = vsel %vm149, %v3672, 0.0
    %3709 = vadd.xlane.f32.xlu0 %v3708
    %v3710 = vpop.xlane.xlu0 %3709
    %v3711 = vsel %vm149, %v3673, 0.0
    %3712 = vadd.xlane.f32.xlu0 %v3711
    %v3713 = vpop.xlane.xlu0 %3712
    %v3714 = vsel %vm149, %v3674, 0.0
    %3715 = vadd.xlane.f32.xlu0 %v3714
    %v3716 = vpop.xlane.xlu0 %3715
    %v3717 = vsel %vm149, %v3675, 0.0
    %3718 = vadd.xlane.f32.xlu0 %v3717
    %v3719 = vpop.xlane.xlu0 %3718
    %v3720 = vsel %vm149, %v3676, 0.0
    %3721 = vadd.xlane.f32.xlu0 %v3720
    %v3722 = vpop.xlane.xlu0 %3721
    %v3723 = vsel %vm149, %v3677, 0.0
    %3724 = vadd.xlane.f32.xlu0 %v3723
    %v3725 = vpop.xlane.xlu0 %3724
    %v3726 = vmul.f32 %v3680, %v595
    %v3727 = vmul.f32 %v3683, %v595
    %v3728 = vmul.f32 %v3686, %v595
    %v3729 = vmul.f32 %v3689, %v595
    %v3730 = vmul.f32 %v3692, %v595
    %v3731 = vmul.f32 %v3695, %v595
    %v3732 = vmul.f32 %v3698, %v595
    %v3733 = vmul.f32 %v3701, %v595
    %v3734 = vmul.f32 %v3704, %v595
    %v3735 = vmul.f32 %v3707, %v595
    %v3736 = vmul.f32 %v3710, %v595
    %v3737 = vmul.f32 %v3713, %v595
    %v3738 = vmul.f32 %v3716, %v595
    %v3739 = vmul.f32 %v3719, %v595
    %v3740 = vmul.f32 %v3722, %v595
    %v3741 = vmul.f32 %v3725, %v595
    %v3742 = vadd.f32 %v3726, 1e-12
    %v3743 = vadd.f32 %v3727, 1e-12
    %v3744 = vadd.f32 %v3728, 1e-12
    %v3745 = vadd.f32 %v3729, 1e-12
    %v3746 = vadd.f32 %v3730, 1e-12
    %v3747 = vadd.f32 %v3731, 1e-12
    %v3748 = vadd.f32 %v3732, 1e-12
    %v3749 = vadd.f32 %v3733, 1e-12
    %v3750 = vadd.f32 %v3734, 1e-12
    %v3751 = vadd.f32 %v3735, 1e-12
    %v3752 = vadd.f32 %v3736, 1e-12
    %v3753 = vadd.f32 %v3737, 1e-12
    %v3754 = vadd.f32 %v3738, 1e-12
    %v3755 = vadd.f32 %v3739, 1e-12
    %v3756 = vadd.f32 %v3740, 1e-12
    %v3757 = vadd.f32 %v3741, 1e-12
    %v3758 = vrsqrt.pop %v3742
    %v3759 = vmul.f32 %v3758, %v3742
    %v3760 = vmul.f32 %v3759, %v3758
    %v3761 = vmul.f32 0.5, %v3760
    %v3762 = vsub.f32 1.5, %v3761
    %v3763 = vmul.f32 %v3758, %v3762
    %vm3764 = vweird.f32 %v3742
    %vm3765 = vweird.f32 %v3758
    %vm3766 = vmor %vm3764, %vm3765
    %v3767 = vsel %vm3766, %v3758, %v3763
    %v3768 = vrsqrt.pop %v3743
    %v3769 = vmul.f32 %v3768, %v3743
    %v3770 = vmul.f32 %v3769, %v3768
    %v3771 = vmul.f32 0.5, %v3770
    %v3772 = vsub.f32 1.5, %v3771
    %v3773 = vmul.f32 %v3768, %v3772
    %vm3774 = vweird.f32 %v3743
    %vm3775 = vweird.f32 %v3768
    %vm3776 = vmor %vm3774, %vm3775
    %v3777 = vsel %vm3776, %v3768, %v3773
    %v3778 = vrsqrt.pop %v3744
    %v3779 = vmul.f32 %v3778, %v3744
    %v3780 = vmul.f32 %v3779, %v3778
    %v3781 = vmul.f32 0.5, %v3780
    %v3782 = vsub.f32 1.5, %v3781
    %v3783 = vmul.f32 %v3778, %v3782
    %vm3784 = vweird.f32 %v3744
    %vm3785 = vweird.f32 %v3778
    %vm3786 = vmor %vm3784, %vm3785
    %v3787 = vsel %vm3786, %v3778, %v3783
    %v3788 = vrsqrt.pop %v3745
    %v3789 = vmul.f32 %v3788, %v3745
    %v3790 = vmul.f32 %v3789, %v3788
    %v3791 = vmul.f32 0.5, %v3790
    %v3792 = vsub.f32 1.5, %v3791
    %v3793 = vmul.f32 %v3788, %v3792
    %vm3794 = vweird.f32 %v3745
    %vm3795 = vweird.f32 %v3788
    %vm3796 = vmor %vm3794, %vm3795
    %v3797 = vsel %vm3796, %v3788, %v3793
    %v3798 = vrsqrt.pop %v3746
    %v3799 = vmul.f32 %v3798, %v3746
    %v3800 = vmul.f32 %v3799, %v3798
    %v3801 = vmul.f32 0.5, %v3800
    %v3802 = vsub.f32 1.5, %v3801
    %v3803 = vmul.f32 %v3798, %v3802
    %vm3804 = vweird.f32 %v3746
    %vm3805 = vweird.f32 %v3798
    %vm3806 = vmor %vm3804, %vm3805
    %v3807 = vsel %vm3806, %v3798, %v3803
    %v3808 = vrsqrt.pop %v3747
    %v3809 = vmul.f32 %v3808, %v3747
    %v3810 = vmul.f32 %v3809, %v3808
    %v3811 = vmul.f32 0.5, %v3810
    %v3812 = vsub.f32 1.5, %v3811
    %v3813 = vmul.f32 %v3808, %v3812
    %vm3814 = vweird.f32 %v3747
    %vm3815 = vweird.f32 %v3808
    %vm3816 = vmor %vm3814, %vm3815
    %v3817 = vsel %vm3816, %v3808, %v3813
    %v3818 = vrsqrt.pop %v3748
    %v3819 = vmul.f32 %v3818, %v3748
    %v3820 = vmul.f32 %v3819, %v3818
    %v3821 = vmul.f32 0.5, %v3820
    %v3822 = vsub.f32 1.5, %v3821
    %v3823 = vmul.f32 %v3818, %v3822
    %vm3824 = vweird.f32 %v3748
    %vm3825 = vweird.f32 %v3818
    %vm3826 = vmor %vm3824, %vm3825
    %v3827 = vsel %vm3826, %v3818, %v3823
    %v3828 = vrsqrt.pop %v3749
    %v3829 = vmul.f32 %v3828, %v3749
    %v3830 = vmul.f32 %v3829, %v3828
    %v3831 = vmul.f32 0.5, %v3830
    %v3832 = vsub.f32 1.5, %v3831
    %v3833 = vmul.f32 %v3828, %v3832
    %vm3834 = vweird.f32 %v3749
    %vm3835 = vweird.f32 %v3828
    %vm3836 = vmor %vm3834, %vm3835
    %v3837 = vsel %vm3836, %v3828, %v3833
    %v3838 = vrsqrt.pop %v3750
    %v3839 = vmul.f32 %v3838, %v3750
    %v3840 = vmul.f32 %v3839, %v3838
    %v3841 = vmul.f32 0.5, %v3840
    %v3842 = vsub.f32 1.5, %v3841
    %v3843 = vmul.f32 %v3838, %v3842
    %vm3844 = vweird.f32 %v3750
    %vm3845 = vweird.f32 %v3838
    %vm3846 = vmor %vm3844, %vm3845
    %v3847 = vsel %vm3846, %v3838, %v3843
    %v3848 = vrsqrt.pop %v3751
    %v3849 = vmul.f32 %v3848, %v3751
    %v3850 = vmul.f32 %v3849, %v3848
    %v3851 = vmul.f32 0.5, %v3850
    %v3852 = vsub.f32 1.5, %v3851
    %v3853 = vmul.f32 %v3848, %v3852
    %vm3854 = vweird.f32 %v3751
    %vm3855 = vweird.f32 %v3848
    %vm3856 = vmor %vm3854, %vm3855
    %v3857 = vsel %vm3856, %v3848, %v3853
    %v3858 = vrsqrt.pop %v3752
    %v3859 = vmul.f32 %v3858, %v3752
    %v3860 = vmul.f32 %v3859, %v3858
    %v3861 = vmul.f32 0.5, %v3860
    %v3862 = vsub.f32 1.5, %v3861
    %v3863 = vmul.f32 %v3858, %v3862
    %vm3864 = vweird.f32 %v3752
    %vm3865 = vweird.f32 %v3858
    %vm3866 = vmor %vm3864, %vm3865
    %v3867 = vsel %vm3866, %v3858, %v3863
    %v3868 = vrsqrt.pop %v3753
    %v3869 = vmul.f32 %v3868, %v3753
    %v3870 = vmul.f32 %v3869, %v3868
    %v3871 = vmul.f32 0.5, %v3870
    %v3872 = vsub.f32 1.5, %v3871
    %v3873 = vmul.f32 %v3868, %v3872
    %vm3874 = vweird.f32 %v3753
    %vm3875 = vweird.f32 %v3868
    %vm3876 = vmor %vm3874, %vm3875
    %v3877 = vsel %vm3876, %v3868, %v3873
    %v3878 = vrsqrt.pop %v3754
    %v3879 = vmul.f32 %v3878, %v3754
    %v3880 = vmul.f32 %v3879, %v3878
    %v3881 = vmul.f32 0.5, %v3880
    %v3882 = vsub.f32 1.5, %v3881
    %v3883 = vmul.f32 %v3878, %v3882
    %vm3884 = vweird.f32 %v3754
    %vm3885 = vweird.f32 %v3878
    %vm3886 = vmor %vm3884, %vm3885
    %v3887 = vsel %vm3886, %v3878, %v3883
    %v3888 = vrsqrt.pop %v3755
    %v3889 = vmul.f32 %v3888, %v3755
    %v3890 = vmul.f32 %v3889, %v3888
    %v3891 = vmul.f32 0.5, %v3890
    %v3892 = vsub.f32 1.5, %v3891
    %v3893 = vmul.f32 %v3888, %v3892
    %vm3894 = vweird.f32 %v3755
    %vm3895 = vweird.f32 %v3888
    %vm3896 = vmor %vm3894, %vm3895
    %v3897 = vsel %vm3896, %v3888, %v3893
    %v3898 = vrsqrt.pop %v3756
    %v3899 = vmul.f32 %v3898, %v3756
    %v3900 = vmul.f32 %v3899, %v3898
    %v3901 = vmul.f32 0.5, %v3900
    %v3902 = vsub.f32 1.5, %v3901
    %v3903 = vmul.f32 %v3898, %v3902
    %vm3904 = vweird.f32 %v3756
    %vm3905 = vweird.f32 %v3898
    %vm3906 = vmor %vm3904, %vm3905
    %v3907 = vsel %vm3906, %v3898, %v3903
    %v3908 = vrsqrt.pop %v3757
    %v3909 = vmul.f32 %v3908, %v3757
    %v3910 = vmul.f32 %v3909, %v3908
    %v3911 = vmul.f32 0.5, %v3910
    %v3912 = vsub.f32 1.5, %v3911
    %v3913 = vmul.f32 %v3908, %v3912
    %vm3914 = vweird.f32 %v3757
    %vm3915 = vweird.f32 %v3908
    %vm3916 = vmor %vm3914, %vm3915
    %v3917 = vsel %vm3916, %v3908, %v3913
    %v3918 = vmul.f32 %v3646, %v3767
    %v3919 = vmul.f32 %v3647, %v3777
    %v3920 = vmul.f32 %v3648, %v3787
    %v3921 = vmul.f32 %v3649, %v3797
    %v3922 = vmul.f32 %v3650, %v3807
    %v3923 = vmul.f32 %v3651, %v3817
    %v3924 = vmul.f32 %v3652, %v3827
    %v3925 = vmul.f32 %v3653, %v3837
    %v3926 = vmul.f32 %v3654, %v3847
    %v3927 = vmul.f32 %v3655, %v3857
    %v3928 = vmul.f32 %v3656, %v3867
    %v3929 = vmul.f32 %v3657, %v3877
    %v3930 = vmul.f32 %v3658, %v3887
    %v3931 = vmul.f32 %v3659, %v3897
    %v3932 = vmul.f32 %v3660, %v3907
    %v3933 = vmul.f32 %v3661, %v3917
    %v3934 = vperm.slane %v2787, 0
    %v3935 = vmul.f32 %v3918, %v3934
    %v3936 = vmul.f32 %v3919, %v3934
    %v3937 = vmul.f32 %v3920, %v3934
    %v3938 = vmul.f32 %v3921, %v3934
    %v3939 = vmul.f32 %v3922, %v3934
    %v3940 = vmul.f32 %v3923, %v3934
    %v3941 = vmul.f32 %v3924, %v3934
    %v3942 = vmul.f32 %v3925, %v3934
    %v3943 = vmul.f32 %v3926, %v3934
    %v3944 = vmul.f32 %v3927, %v3934
    %v3945 = vmul.f32 %v3928, %v3934
    %v3946 = vmul.f32 %v3929, %v3934
    %v3947 = vmul.f32 %v3930, %v3934
    %v3948 = vmul.f32 %v3931, %v3934
    %v3949 = vmul.f32 %v3932, %v3934
    %v3950 = vmul.f32 %v3933, %v3934
    %v3951 = vperm.slane %v2788, 0
    %v3952 = vadd.f32 %v3935, %v3951
    %v3953 = vadd.f32 %v3936, %v3951
    %v3954 = vadd.f32 %v3937, %v3951
    %v3955 = vadd.f32 %v3938, %v3951
    %v3956 = vadd.f32 %v3939, %v3951
    %v3957 = vadd.f32 %v3940, %v3951
    %v3958 = vadd.f32 %v3941, %v3951
    %v3959 = vadd.f32 %v3942, %v3951
    %v3960 = vadd.f32 %v3943, %v3951
    %v3961 = vadd.f32 %v3944, %v3951
    %v3962 = vadd.f32 %v3945, %v3951
    %v3963 = vadd.f32 %v3946, %v3951
    %v3964 = vadd.f32 %v3947, %v3951
    %v3965 = vadd.f32 %v3948, %v3951
    %v3966 = vadd.f32 %v3949, %v3951
    %v3967 = vadd.f32 %v3950, %v3951
    %v3968 = vpack.c.bf16 %v3953, %v3952
    %v3969 = vpack.c.bf16 %v3955, %v3954
    %v3970 = vpack.c.bf16 %v3957, %v3956
    %v3971 = vpack.c.bf16 %v3959, %v3958
    %v3972 = vpack.c.bf16 %v3961, %v3960
    %v3973 = vpack.c.bf16 %v3963, %v3962
    %v3974 = vpack.c.bf16 %v3965, %v3964
    %v3975 = vpack.c.bf16 %v3967, %v3966
    %s3976 = scalar_lea.vmem [#allocation9], 16
    %v3977 = vld [vmem:[%s3976] sm:$0xf]
    %v3978 = vld [vmem:[%s3976 + $0x4] sm:$0xf]
    %v3979 = vld [vmem:[%s3976 + $0x8] sm:$0xf]
    %v3980 = vld [vmem:[%s3976 + $0xc] sm:$0xf]
    %v3981 = vld [vmem:[%s9 + $0x1] sm:$0x1]
    %v3982 = vperm.slane %v3981, 0
    %v3987 = vunpack.c.l.b16 %v3977
    %v3988 = vunpack.c.l.b16 %v3978
    %v3989 = vunpack.c.l.b16 %v3979
    %v3990 = vunpack.c.l.b16 %v3980
    %v3991 = vpack.c.b16 %v3988, %v3987
    %v3992 = vpack.c.b16 %v3990, %v3989
    %v3996 = vsel %vm149, %v3968, 0
    %v3999 = vsel %vm149, %v3969, 0
    %v4002 = vsel %vm149, %v3970, 0
    %v4005 = vsel %vm149, %v3971, 0
    %v4008 = vsel %vm149, %v3972, 0
    %v4011 = vsel %vm149, %v3973, 0
    %v4014 = vsel %vm149, %v3974, 0
    %v4017 = vsel %vm149, %v3975, 0
    %4019 = vmatpush.bf16.msra.mxu0 0
    %4020 = vmatpush.bf16.msra.mxu0 0
    %4021 = vmatpush.bf16.msra.mxu0 0
    %4022 = vmatpush.bf16.msra.mxu0 0
    %4023 = vmatpush.bf16.msra.mxu0 0
    %4024 = vmatpush.bf16.msra.mxu0 0
    %4025 = vmatpush.bf16.msra.mxu0 %v3992
    %4026 = vmatpush.bf16.msra.mxu0 %v3991
    %4027 = vmatmul.bf16.gmra.mxu0 %v3996
    %v4028 = vpop.f32.mrf.mxu0
    %v4029 = vadd.f32 %v3982, %v4028
    %v4030 = vpop.f32.mrf.mxu0
    %v4031 = vadd.f32 %v3982, %v4030
    %4032 = vmatmul.bf16.gmra.mxu0 %v3999
    %v4033 = vpop.f32.mrf.mxu0
    %v4034 = vadd.f32 %v3982, %v4033
    %v4035 = vpop.f32.mrf.mxu0
    %v4036 = vadd.f32 %v3982, %v4035
    %4037 = vmatmul.bf16.gmra.mxu0 %v4002
    %v4038 = vpop.f32.mrf.mxu0
    %v4039 = vadd.f32 %v3982, %v4038
    %v4040 = vpop.f32.mrf.mxu0
    %v4041 = vadd.f32 %v3982, %v4040
    %4042 = vmatmul.bf16.gmra.mxu0 %v4005
    %v4043 = vpop.f32.mrf.mxu0
    %v4044 = vadd.f32 %v3982, %v4043
    %v4045 = vpop.f32.mrf.mxu0
    %v4046 = vadd.f32 %v3982, %v4045
    %4047 = vmatmul.bf16.gmra.mxu0 %v4008
    %v4048 = vpop.f32.mrf.mxu0
    %v4049 = vadd.f32 %v3982, %v4048
    %v4050 = vpop.f32.mrf.mxu0
    %v4051 = vadd.f32 %v3982, %v4050
    %4052 = vmatmul.bf16.gmra.mxu0 %v4011
    %v4053 = vpop.f32.mrf.mxu0
    %v4054 = vadd.f32 %v3982, %v4053
    %v4055 = vpop.f32.mrf.mxu0
    %v4056 = vadd.f32 %v3982, %v4055
    %4057 = vmatmul.bf16.gmra.mxu0 %v4014
    %v4058 = vpop.f32.mrf.mxu0
    %v4059 = vadd.f32 %v3982, %v4058
    %v4060 = vpop.f32.mrf.mxu0
    %v4061 = vadd.f32 %v3982, %v4060
    %4062 = vmatmul.bf16.gmra.mxu0 %v4017
    %v4063 = vpop.f32.mrf.mxu0
    %v4064 = vadd.f32 %v3982, %v4063
    %v4065 = vpop.f32.mrf.mxu0
    %v4066 = vadd.f32 %v3982, %v4065
    %4067 = vdwg.mxu0
    %v4068 = vmul.f32 %v4029, 0.25
    %v4069 = vmul.f32 %v4031, 0.25
    %v4070 = vmul.f32 %v4034, 0.25
    %v4071 = vmul.f32 %v4036, 0.25
    %v4072 = vmul.f32 %v4039, 0.25
    %v4073 = vmul.f32 %v4041, 0.25
    %v4074 = vmul.f32 %v4044, 0.25
    %v4075 = vmul.f32 %v4046, 0.25
    %v4076 = vmul.f32 %v4049, 0.25
    %v4077 = vmul.f32 %v4051, 0.25
    %v4078 = vmul.f32 %v4054, 0.25
    %v4079 = vmul.f32 %v4056, 0.25
    %v4080 = vmul.f32 %v4059, 0.25
    %v4081 = vmul.f32 %v4061, 0.25
    %v4082 = vmul.f32 %v4064, 0.25
    %v4083 = vmul.f32 %v4066, 0.25
    %4086 = vrot.lane.b32.xlu0 %v4029, 96
    %v4087 = vpop.permute.xlu0 %4086
    %4088 = vrot.lane.b32.xlu0 %v4031, 96
    %v4089 = vpop.permute.xlu0 %4088
    %v4091 = vsel %vm1067, %v4068, 0
    %v4094 = vsel %vm1067, %v4069, 0
    %v4096 = vsel %vm1067, %v4087, 0
    %v4098 = vsel %vm1067, %v4089, 0
    %4100 = vmatpush.xpose.msra.mxu0 0.0
    %4101 = vmatpush.xpose.msra.mxu0 0.0
    %4102 = vmatpush.xpose.msra.mxu0 0.0
    %4103 = vmatpush.xpose.msra.mxu0 0.0
    %4104 = vmatpush.xpose.msra.mxu0 0.0
    %4105 = vmatpush.xpose.msra.mxu0 0.0
    %4106 = vmatpush.xpose.msra.mxu0 0.0
    %4107 = vmatpush.xpose.msra.mxu0 0.0
    %4108 = vmatpush.xpose.msra.mxu0 0.0
    %4109 = vmatpush.xpose.msra.mxu0 0.0
    %4110 = vmatpush.xpose.msra.mxu0 0.0
    %4111 = vmatpush.xpose.msra.mxu0 0.0
    %4112 = vmatpush.xpose.msra.mxu0 0.0
    %4113 = vmatpush.xpose.msra.mxu0 0.0
    %4114 = vmatpush.xpose.msra.mxu0 %v4098
    %4115 = vmatpush.xpose.msra.mxu0 %v4096
    %4116 = vmatmul.f32.gmra.mxu0 %v4091
    %v4117 = vpop.f32.mrf.mxu0
    %v4118 = vadd.f32 %v1060, %v4117
    %4119 = vmatmul.f32.gmra.mxu0 %v4094
    %v4120 = vpop.f32.mrf.mxu0
    %v4121 = vadd.f32 %v1060, %v4120
    %4122 = vdwg.mxu0
    %v4123 = vsel %vm1067, %v4118, -inf
    %4124 = vmax.xlane.f32.xlu0 %v4123
    %v4125 = vpop.xlane.xlu0 %4124
    %v4126 = vsel %vm1067, %v4121, -inf
    %4127 = vmax.xlane.f32.xlu0 %v4126
    %v4128 = vpop.xlane.xlu0 %4127
    %v4129 = vsub.f32 %v4118, %v4125
    %v4130 = vsub.f32 %v4121, %v4128
    %v4131 = vmul.f32 %v4129, 1.442695
    %v4132 = vpow.pop %v4131
    %v4133 = vmul.f32 %v4130, 1.442695
    %v4134 = vpow.pop %v4133
    %v4135 = vsel %vm1067, %v4132, 0.0
    %4136 = vadd.xlane.f32.xlu0 %v4135
    %v4137 = vpop.xlane.xlu0 %4136
    %v4138 = vsel %vm1067, %v4134, 0.0
    %4139 = vadd.xlane.f32.xlu0 %v4138
    %v4140 = vpop.xlane.xlu0 %4139
    %v4141 = vrcp.pop %v4137
    %v4142 = vrcp.pop %v4140
    %v4143 = vmul.f32 %v4132, %v4141
    %v4144 = vmul.f32 %v4134, %v4142
    %4145 = vrot.lane.b32.xlu0 %v4029, 64
    %v4146 = vpop.permute.xlu0 %4145
    %4147 = vrot.lane.b32.xlu0 %v4031, 64
    %v4148 = vpop.permute.xlu0 %4147
    %v4152 = vsel %vm1067, %v4143, 0
    %v4155 = vsel %vm1067, %v4144, 0
    %4157 = vmatpush.msra.mxu0 0.0
    %4158 = vmatpush.msra.mxu0 0.0
    %4159 = vmatpush.msra.mxu0 0.0
    %4160 = vmatpush.msra.mxu0 0.0
    %4161 = vmatpush.msra.mxu0 0.0
    %4162 = vmatpush.msra.mxu0 0.0
    %4163 = vmatpush.msra.mxu0 0.0
    %4164 = vmatpush.msra.mxu0 0.0
    %4165 = vmatpush.msra.mxu0 0.0
    %4166 = vmatpush.msra.mxu0 0.0
    %4167 = vmatpush.msra.mxu0 0.0
    %4168 = vmatpush.msra.mxu0 0.0
    %4169 = vmatpush.msra.mxu0 0.0
    %4170 = vmatpush.msra.mxu0 0.0
    %4171 = vmatpush.msra.mxu0 %v4148
    %4172 = vmatpush.msra.mxu0 %v4146
    %4173 = vmatmul.f32.gmra.mxu0 %v4152
    %v4174 = vpop.f32.mrf.mxu0
    %v4175 = vadd.f32 0.0, %v4174
    %4176 = vmatmul.f32.gmra.mxu0 %v4155
    %v4177 = vpop.f32.mrf.mxu0
    %v4178 = vadd.f32 0.0, %v4177
    %4179 = vdwg.mxu0
    %4182 = vrot.lane.b32.xlu0 %v4034, 96
    %v4183 = vpop.permute.xlu0 %4182
    %4184 = vrot.lane.b32.xlu0 %v4036, 96
    %v4185 = vpop.permute.xlu0 %4184
    %v4187 = vsel %vm1067, %v4070, 0
    %v4190 = vsel %vm1067, %v4071, 0
    %v4192 = vsel %vm1067, %v4183, 0
    %v4194 = vsel %vm1067, %v4185, 0
    %4196 = vmatpush.xpose.msra.mxu0 0.0
    %4197 = vmatpush.xpose.msra.mxu0 0.0
    %4198 = vmatpush.xpose.msra.mxu0 0.0
    %4199 = vmatpush.xpose.msra.mxu0 0.0
    %4200 = vmatpush.xpose.msra.mxu0 0.0
    %4201 = vmatpush.xpose.msra.mxu0 0.0
    %4202 = vmatpush.xpose.msra.mxu0 0.0
    %4203 = vmatpush.xpose.msra.mxu0 0.0
    %4204 = vmatpush.xpose.msra.mxu0 0.0
    %4205 = vmatpush.xpose.msra.mxu0 0.0
    %4206 = vmatpush.xpose.msra.mxu0 0.0
    %4207 = vmatpush.xpose.msra.mxu0 0.0
    %4208 = vmatpush.xpose.msra.mxu0 0.0
    %4209 = vmatpush.xpose.msra.mxu0 0.0
    %4210 = vmatpush.xpose.msra.mxu0 %v4194
    %4211 = vmatpush.xpose.msra.mxu0 %v4192
    %4212 = vmatmul.f32.gmra.mxu0 %v4187
    %v4213 = vpop.f32.mrf.mxu0
    %v4214 = vadd.f32 %v1158, %v4213
    %4215 = vmatmul.f32.gmra.mxu0 %v4190
    %v4216 = vpop.f32.mrf.mxu0
    %v4217 = vadd.f32 %v1158, %v4216
    %4218 = vdwg.mxu0
    %v4219 = vsel %vm1067, %v4214, -inf
    %4220 = vmax.xlane.f32.xlu0 %v4219
    %v4221 = vpop.xlane.xlu0 %4220
    %v4222 = vsel %vm1067, %v4217, -inf
    %4223 = vmax.xlane.f32.xlu0 %v4222
    %v4224 = vpop.xlane.xlu0 %4223
    %v4225 = vsub.f32 %v4214, %v4221
    %v4226 = vsub.f32 %v4217, %v4224
    %v4227 = vmul.f32 %v4225, 1.442695
    %v4228 = vpow.pop %v4227
    %v4229 = vmul.f32 %v4226, 1.442695
    %v4230 = vpow.pop %v4229
    %v4231 = vsel %vm1067, %v4228, 0.0
    %4232 = vadd.xlane.f32.xlu0 %v4231
    %v4233 = vpop.xlane.xlu0 %4232
    %v4234 = vsel %vm1067, %v4230, 0.0
    %4235 = vadd.xlane.f32.xlu0 %v4234
    %v4236 = vpop.xlane.xlu0 %4235
    %v4237 = vrcp.pop %v4233
    %v4238 = vrcp.pop %v4236
    %v4239 = vmul.f32 %v4228, %v4237
    %v4240 = vmul.f32 %v4230, %v4238
    %4241 = vrot.lane.b32.xlu0 %v4034, 64
    %v4242 = vpop.permute.xlu0 %4241
    %4243 = vrot.lane.b32.xlu0 %v4036, 64
    %v4244 = vpop.permute.xlu0 %4243
    %v4248 = vsel %vm1067, %v4239, 0
    %v4251 = vsel %vm1067, %v4240, 0
    %4253 = vmatpush.msra.mxu0 0.0
    %4254 = vmatpush.msra.mxu0 0.0
    %4255 = vmatpush.msra.mxu0 0.0
    %4256 = vmatpush.msra.mxu0 0.0
    %4257 = vmatpush.msra.mxu0 0.0
    %4258 = vmatpush.msra.mxu0 0.0
    %4259 = vmatpush.msra.mxu0 0.0
    %4260 = vmatpush.msra.mxu0 0.0
    %4261 = vmatpush.msra.mxu0 0.0
    %4262 = vmatpush.msra.mxu0 0.0
    %4263 = vmatpush.msra.mxu0 0.0
    %4264 = vmatpush.msra.mxu0 0.0
    %4265 = vmatpush.msra.mxu0 0.0
    %4266 = vmatpush.msra.mxu0 0.0
    %4267 = vmatpush.msra.mxu0 %v4244
    %4268 = vmatpush.msra.mxu0 %v4242
    %4269 = vmatmul.f32.gmra.mxu0 %v4248
    %v4270 = vpop.f32.mrf.mxu0
    %v4271 = vadd.f32 0.0, %v4270
    %4272 = vmatmul.f32.gmra.mxu0 %v4251
    %v4273 = vpop.f32.mrf.mxu0
    %v4274 = vadd.f32 0.0, %v4273
    %4275 = vdwg.mxu0
    %4278 = vrot.lane.b32.xlu0 %v4039, 96
    %v4279 = vpop.permute.xlu0 %4278
    %4280 = vrot.lane.b32.xlu0 %v4041, 96
    %v4281 = vpop.permute.xlu0 %4280
    %v4283 = vsel %vm1067, %v4072, 0
    %v4286 = vsel %vm1067, %v4073, 0
    %v4288 = vsel %vm1067, %v4279, 0
    %v4290 = vsel %vm1067, %v4281, 0
    %4292 = vmatpush.xpose.msra.mxu0 0.0
    %4293 = vmatpush.xpose.msra.mxu0 0.0
    %4294 = vmatpush.xpose.msra.mxu0 0.0
    %4295 = vmatpush.xpose.msra.mxu0 0.0
    %4296 = vmatpush.xpose.msra.mxu0 0.0
    %4297 = vmatpush.xpose.msra.mxu0 0.0
    %4298 = vmatpush.xpose.msra.mxu0 0.0
    %4299 = vmatpush.xpose.msra.mxu0 0.0
    %4300 = vmatpush.xpose.msra.mxu0 0.0
    %4301 = vmatpush.xpose.msra.mxu0 0.0
    %4302 = vmatpush.xpose.msra.mxu0 0.0
    %4303 = vmatpush.xpose.msra.mxu0 0.0
    %4304 = vmatpush.xpose.msra.mxu0 0.0
    %4305 = vmatpush.xpose.msra.mxu0 0.0
    %4306 = vmatpush.xpose.msra.mxu0 %v4290
    %4307 = vmatpush.xpose.msra.mxu0 %v4288
    %4308 = vmatmul.f32.gmra.mxu0 %v4283
    %v4309 = vpop.f32.mrf.mxu0
    %v4310 = vadd.f32 %v1255, %v4309
    %4311 = vmatmul.f32.gmra.mxu0 %v4286
    %v4312 = vpop.f32.mrf.mxu0
    %v4313 = vadd.f32 %v1255, %v4312
    %4314 = vdwg.mxu0
    %v4315 = vsel %vm1067, %v4310, -inf
    %4316 = vmax.xlane.f32.xlu0 %v4315
    %v4317 = vpop.xlane.xlu0 %4316
    %v4318 = vsel %vm1067, %v4313, -inf
    %4319 = vmax.xlane.f32.xlu0 %v4318
    %v4320 = vpop.xlane.xlu0 %4319
    %v4321 = vsub.f32 %v4310, %v4317
    %v4322 = vsub.f32 %v4313, %v4320
    %v4323 = vmul.f32 %v4321, 1.442695
    %v4324 = vpow.pop %v4323
    %v4325 = vmul.f32 %v4322, 1.442695
    %v4326 = vpow.pop %v4325
    %v4327 = vsel %vm1067, %v4324, 0.0
    %4328 = vadd.xlane.f32.xlu0 %v4327
    %v4329 = vpop.xlane.xlu0 %4328
    %v4330 = vsel %vm1067, %v4326, 0.0
    %4331 = vadd.xlane.f32.xlu0 %v4330
    %v4332 = vpop.xlane.xlu0 %4331
    %v4333 = vrcp.pop %v4329
    %v4334 = vrcp.pop %v4332
    %v4335 = vmul.f32 %v4324, %v4333
    %v4336 = vmul.f32 %v4326, %v4334
    %4337 = vrot.lane.b32.xlu0 %v4039, 64
    %v4338 = vpop.permute.xlu0 %4337
    %4339 = vrot.lane.b32.xlu0 %v4041, 64
    %v4340 = vpop.permute.xlu0 %4339
    %v4344 = vsel %vm1067, %v4335, 0
    %v4347 = vsel %vm1067, %v4336, 0
    %4349 = vmatpush.msra.mxu0 0.0
    %4350 = vmatpush.msra.mxu0 0.0
    %4351 = vmatpush.msra.mxu0 0.0
    %4352 = vmatpush.msra.mxu0 0.0
    %4353 = vmatpush.msra.mxu0 0.0
    %4354 = vmatpush.msra.mxu0 0.0
    %4355 = vmatpush.msra.mxu0 0.0
    %4356 = vmatpush.msra.mxu0 0.0
    %4357 = vmatpush.msra.mxu0 0.0
    %4358 = vmatpush.msra.mxu0 0.0
    %4359 = vmatpush.msra.mxu0 0.0
    %4360 = vmatpush.msra.mxu0 0.0
    %4361 = vmatpush.msra.mxu0 0.0
    %4362 = vmatpush.msra.mxu0 0.0
    %4363 = vmatpush.msra.mxu0 %v4340
    %4364 = vmatpush.msra.mxu0 %v4338
    %4365 = vmatmul.f32.gmra.mxu0 %v4344
    %v4366 = vpop.f32.mrf.mxu0
    %v4367 = vadd.f32 0.0, %v4366
    %4368 = vmatmul.f32.gmra.mxu0 %v4347
    %v4369 = vpop.f32.mrf.mxu0
    %v4370 = vadd.f32 0.0, %v4369
    %4371 = vdwg.mxu0
    %4374 = vrot.lane.b32.xlu0 %v4044, 96
    %v4375 = vpop.permute.xlu0 %4374
    %4376 = vrot.lane.b32.xlu0 %v4046, 96
    %v4377 = vpop.permute.xlu0 %4376
    %v4379 = vsel %vm1067, %v4074, 0
    %v4382 = vsel %vm1067, %v4075, 0
    %v4384 = vsel %vm1067, %v4375, 0
    %v4386 = vsel %vm1067, %v4377, 0
    %4388 = vmatpush.xpose.msra.mxu0 0.0
    %4389 = vmatpush.xpose.msra.mxu0 0.0
    %4390 = vmatpush.xpose.msra.mxu0 0.0
    %4391 = vmatpush.xpose.msra.mxu0 0.0
    %4392 = vmatpush.xpose.msra.mxu0 0.0
    %4393 = vmatpush.xpose.msra.mxu0 0.0
    %4394 = vmatpush.xpose.msra.mxu0 0.0
    %4395 = vmatpush.xpose.msra.mxu0 0.0
    %4396 = vmatpush.xpose.msra.mxu0 0.0
    %4397 = vmatpush.xpose.msra.mxu0 0.0
    %4398 = vmatpush.xpose.msra.mxu0 0.0
    %4399 = vmatpush.xpose.msra.mxu0 0.0
    %4400 = vmatpush.xpose.msra.mxu0 0.0
    %4401 = vmatpush.xpose.msra.mxu0 0.0
    %4402 = vmatpush.xpose.msra.mxu0 %v4386
    %4403 = vmatpush.xpose.msra.mxu0 %v4384
    %4404 = vmatmul.f32.gmra.mxu0 %v4379
    %v4405 = vpop.f32.mrf.mxu0
    %v4406 = vadd.f32 %v1352, %v4405
    %4407 = vmatmul.f32.gmra.mxu0 %v4382
    %v4408 = vpop.f32.mrf.mxu0
    %v4409 = vadd.f32 %v1352, %v4408
    %4410 = vdwg.mxu0
    %v4411 = vsel %vm1067, %v4406, -inf
    %4412 = vmax.xlane.f32.xlu0 %v4411
    %v4413 = vpop.xlane.xlu0 %4412
    %v4414 = vsel %vm1067, %v4409, -inf
    %4415 = vmax.xlane.f32.xlu0 %v4414
    %v4416 = vpop.xlane.xlu0 %4415
    %v4417 = vsub.f32 %v4406, %v4413
    %v4418 = vsub.f32 %v4409, %v4416
    %v4419 = vmul.f32 %v4417, 1.442695
    %v4420 = vpow.pop %v4419
    %v4421 = vmul.f32 %v4418, 1.442695
    %v4422 = vpow.pop %v4421
    %v4423 = vsel %vm1067, %v4420, 0.0
    %4424 = vadd.xlane.f32.xlu0 %v4423
    %v4425 = vpop.xlane.xlu0 %4424
    %v4426 = vsel %vm1067, %v4422, 0.0
    %4427 = vadd.xlane.f32.xlu0 %v4426
    %v4428 = vpop.xlane.xlu0 %4427
    %v4429 = vrcp.pop %v4425
    %v4430 = vrcp.pop %v4428
    %v4431 = vmul.f32 %v4420, %v4429
    %v4432 = vmul.f32 %v4422, %v4430
    %4433 = vrot.lane.b32.xlu0 %v4044, 64
    %v4434 = vpop.permute.xlu0 %4433
    %4435 = vrot.lane.b32.xlu0 %v4046, 64
    %v4436 = vpop.permute.xlu0 %4435
    %v4440 = vsel %vm1067, %v4431, 0
    %v4443 = vsel %vm1067, %v4432, 0
    %4445 = vmatpush.msra.mxu0 0.0
    %4446 = vmatpush.msra.mxu0 0.0
    %4447 = vmatpush.msra.mxu0 0.0
    %4448 = vmatpush.msra.mxu0 0.0
    %4449 = vmatpush.msra.mxu0 0.0
    %4450 = vmatpush.msra.mxu0 0.0
    %4451 = vmatpush.msra.mxu0 0.0
    %4452 = vmatpush.msra.mxu0 0.0
    %4453 = vmatpush.msra.mxu0 0.0
    %4454 = vmatpush.msra.mxu0 0.0
    %4455 = vmatpush.msra.mxu0 0.0
    %4456 = vmatpush.msra.mxu0 0.0
    %4457 = vmatpush.msra.mxu0 0.0
    %4458 = vmatpush.msra.mxu0 0.0
    %4459 = vmatpush.msra.mxu0 %v4436
    %4460 = vmatpush.msra.mxu0 %v4434
    %4461 = vmatmul.f32.gmra.mxu0 %v4440
    %v4462 = vpop.f32.mrf.mxu0
    %v4463 = vadd.f32 0.0, %v4462
    %4464 = vmatmul.f32.gmra.mxu0 %v4443
    %v4465 = vpop.f32.mrf.mxu0
    %v4466 = vadd.f32 0.0, %v4465
    %4467 = vdwg.mxu0
    %4470 = vrot.lane.b32.xlu0 %v4049, 96
    %v4471 = vpop.permute.xlu0 %4470
    %4472 = vrot.lane.b32.xlu0 %v4051, 96
    %v4473 = vpop.permute.xlu0 %4472
    %v4475 = vsel %vm1067, %v4076, 0
    %v4478 = vsel %vm1067, %v4077, 0
    %v4480 = vsel %vm1067, %v4471, 0
    %v4482 = vsel %vm1067, %v4473, 0
    %4484 = vmatpush.xpose.msra.mxu0 0.0
    %4485 = vmatpush.xpose.msra.mxu0 0.0
    %4486 = vmatpush.xpose.msra.mxu0 0.0
    %4487 = vmatpush.xpose.msra.mxu0 0.0
    %4488 = vmatpush.xpose.msra.mxu0 0.0
    %4489 = vmatpush.xpose.msra.mxu0 0.0
    %4490 = vmatpush.xpose.msra.mxu0 0.0
    %4491 = vmatpush.xpose.msra.mxu0 0.0
    %4492 = vmatpush.xpose.msra.mxu0 0.0
    %4493 = vmatpush.xpose.msra.mxu0 0.0
    %4494 = vmatpush.xpose.msra.mxu0 0.0
    %4495 = vmatpush.xpose.msra.mxu0 0.0
    %4496 = vmatpush.xpose.msra.mxu0 0.0
    %4497 = vmatpush.xpose.msra.mxu0 0.0
    %4498 = vmatpush.xpose.msra.mxu0 %v4482
    %4499 = vmatpush.xpose.msra.mxu0 %v4480
    %4500 = vmatmul.f32.gmra.mxu0 %v4475
    %v4501 = vpop.f32.mrf.mxu0
    %v4502 = vadd.f32 %v1449, %v4501
    %4503 = vmatmul.f32.gmra.mxu0 %v4478
    %v4504 = vpop.f32.mrf.mxu0
    %v4505 = vadd.f32 %v1449, %v4504
    %4506 = vdwg.mxu0
    %v4507 = vsel %vm1067, %v4502, -inf
    %4508 = vmax.xlane.f32.xlu0 %v4507
    %v4509 = vpop.xlane.xlu0 %4508
    %v4510 = vsel %vm1067, %v4505, -inf
    %4511 = vmax.xlane.f32.xlu0 %v4510
    %v4512 = vpop.xlane.xlu0 %4511
    %v4513 = vsub.f32 %v4502, %v4509
    %v4514 = vsub.f32 %v4505, %v4512
    %v4515 = vmul.f32 %v4513, 1.442695
    %v4516 = vpow.pop %v4515
    %v4517 = vmul.f32 %v4514, 1.442695
    %v4518 = vpow.pop %v4517
    %v4519 = vsel %vm1067, %v4516, 0.0
    %4520 = vadd.xlane.f32.xlu0 %v4519
    %v4521 = vpop.xlane.xlu0 %4520
    %v4522 = vsel %vm1067, %v4518, 0.0
    %4523 = vadd.xlane.f32.xlu0 %v4522
    %v4524 = vpop.xlane.xlu0 %4523
    %v4525 = vrcp.pop %v4521
    %v4526 = vrcp.pop %v4524
    %v4527 = vmul.f32 %v4516, %v4525
    %v4528 = vmul.f32 %v4518, %v4526
    %4529 = vrot.lane.b32.xlu0 %v4049, 64
    %v4530 = vpop.permute.xlu0 %4529
    %4531 = vrot.lane.b32.xlu0 %v4051, 64
    %v4532 = vpop.permute.xlu0 %4531
    %v4536 = vsel %vm1067, %v4527, 0
    %v4539 = vsel %vm1067, %v4528, 0
    %4541 = vmatpush.msra.mxu0 0.0
    %4542 = vmatpush.msra.mxu0 0.0
    %4543 = vmatpush.msra.mxu0 0.0
    %4544 = vmatpush.msra.mxu0 0.0
    %4545 = vmatpush.msra.mxu0 0.0
    %4546 = vmatpush.msra.mxu0 0.0
    %4547 = vmatpush.msra.mxu0 0.0
    %4548 = vmatpush.msra.mxu0 0.0
    %4549 = vmatpush.msra.mxu0 0.0
    %4550 = vmatpush.msra.mxu0 0.0
    %4551 = vmatpush.msra.mxu0 0.0
    %4552 = vmatpush.msra.mxu0 0.0
    %4553 = vmatpush.msra.mxu0 0.0
    %4554 = vmatpush.msra.mxu0 0.0
    %4555 = vmatpush.msra.mxu0 %v4532
    %4556 = vmatpush.msra.mxu0 %v4530
    %4557 = vmatmul.f32.gmra.mxu0 %v4536
    %v4558 = vpop.f32.mrf.mxu0
    %v4559 = vadd.f32 0.0, %v4558
    %4560 = vmatmul.f32.gmra.mxu0 %v4539
    %v4561 = vpop.f32.mrf.mxu0
    %v4562 = vadd.f32 0.0, %v4561
    %4563 = vdwg.mxu0
    %4566 = vrot.lane.b32.xlu0 %v4054, 96
    %v4567 = vpop.permute.xlu0 %4566
    %4568 = vrot.lane.b32.xlu0 %v4056, 96
    %v4569 = vpop.permute.xlu0 %4568
    %v4571 = vsel %vm1067, %v4078, 0
    %v4574 = vsel %vm1067, %v4079, 0
    %v4576 = vsel %vm1067, %v4567, 0
    %v4578 = vsel %vm1067, %v4569, 0
    %4580 = vmatpush.xpose.msra.mxu0 0.0
    %4581 = vmatpush.xpose.msra.mxu0 0.0
    %4582 = vmatpush.xpose.msra.mxu0 0.0
    %4583 = vmatpush.xpose.msra.mxu0 0.0
    %4584 = vmatpush.xpose.msra.mxu0 0.0
    %4585 = vmatpush.xpose.msra.mxu0 0.0
    %4586 = vmatpush.xpose.msra.mxu0 0.0
    %4587 = vmatpush.xpose.msra.mxu0 0.0
    %4588 = vmatpush.xpose.msra.mxu0 0.0
    %4589 = vmatpush.xpose.msra.mxu0 0.0
    %4590 = vmatpush.xpose.msra.mxu0 0.0
    %4591 = vmatpush.xpose.msra.mxu0 0.0
    %4592 = vmatpush.xpose.msra.mxu0 0.0
    %4593 = vmatpush.xpose.msra.mxu0 0.0
    %4594 = vmatpush.xpose.msra.mxu0 %v4578
    %4595 = vmatpush.xpose.msra.mxu0 %v4576
    %4596 = vmatmul.f32.gmra.mxu0 %v4571
    %v4597 = vpop.f32.mrf.mxu0
    %v4598 = vadd.f32 %v1546, %v4597
    %4599 = vmatmul.f32.gmra.mxu0 %v4574
    %v4600 = vpop.f32.mrf.mxu0
    %v4601 = vadd.f32 %v1546, %v4600
    %4602 = vdwg.mxu0
    %v4603 = vsel %vm1067, %v4598, -inf
    %4604 = vmax.xlane.f32.xlu0 %v4603
    %v4605 = vpop.xlane.xlu0 %4604
    %v4606 = vsel %vm1067, %v4601, -inf
    %4607 = vmax.xlane.f32.xlu0 %v4606
    %v4608 = vpop.xlane.xlu0 %4607
    %v4609 = vsub.f32 %v4598, %v4605
    %v4610 = vsub.f32 %v4601, %v4608
    %v4611 = vmul.f32 %v4609, 1.442695
    %v4612 = vpow.pop %v4611
    %v4613 = vmul.f32 %v4610, 1.442695
    %v4614 = vpow.pop %v4613
    %v4615 = vsel %vm1067, %v4612, 0.0
    %4616 = vadd.xlane.f32.xlu0 %v4615
    %v4617 = vpop.xlane.xlu0 %4616
    %v4618 = vsel %vm1067, %v4614, 0.0
    %4619 = vadd.xlane.f32.xlu0 %v4618
    %v4620 = vpop.xlane.xlu0 %4619
    %v4621 = vrcp.pop %v4617
    %v4622 = vrcp.pop %v4620
    %v4623 = vmul.f32 %v4612, %v4621
    %v4624 = vmul.f32 %v4614, %v4622
    %4625 = vrot.lane.b32.xlu0 %v4054, 64
    %v4626 = vpop.permute.xlu0 %4625
    %4627 = vrot.lane.b32.xlu0 %v4056, 64
    %v4628 = vpop.permute.xlu0 %4627
    %v4632 = vsel %vm1067, %v4623, 0
    %v4635 = vsel %vm1067, %v4624, 0
    %4637 = vmatpush.msra.mxu0 0.0
    %4638 = vmatpush.msra.mxu0 0.0
    %4639 = vmatpush.msra.mxu0 0.0
    %4640 = vmatpush.msra.mxu0 0.0
    %4641 = vmatpush.msra.mxu0 0.0
    %4642 = vmatpush.msra.mxu0 0.0
    %4643 = vmatpush.msra.mxu0 0.0
    %4644 = vmatpush.msra.mxu0 0.0
    %4645 = vmatpush.msra.mxu0 0.0
    %4646 = vmatpush.msra.mxu0 0.0
    %4647 = vmatpush.msra.mxu0 0.0
    %4648 = vmatpush.msra.mxu0 0.0
    %4649 = vmatpush.msra.mxu0 0.0
    %4650 = vmatpush.msra.mxu0 0.0
    %4651 = vmatpush.msra.mxu0 %v4628
    %4652 = vmatpush.msra.mxu0 %v4626
    %4653 = vmatmul.f32.gmra.mxu0 %v4632
    %v4654 = vpop.f32.mrf.mxu0
    %v4655 = vadd.f32 0.0, %v4654
    %4656 = vmatmul.f32.gmra.mxu0 %v4635
    %v4657 = vpop.f32.mrf.mxu0
    %v4658 = vadd.f32 0.0, %v4657
    %4659 = vdwg.mxu0
    %4662 = vrot.lane.b32.xlu0 %v4059, 96
    %v4663 = vpop.permute.xlu0 %4662
    %4664 = vrot.lane.b32.xlu0 %v4061, 96
    %v4665 = vpop.permute.xlu0 %4664
    %v4667 = vsel %vm1067, %v4080, 0
    %v4670 = vsel %vm1067, %v4081, 0
    %v4672 = vsel %vm1067, %v4663, 0
    %v4674 = vsel %vm1067, %v4665, 0
    %4676 = vmatpush.xpose.msra.mxu0 0.0
    %4677 = vmatpush.xpose.msra.mxu0 0.0
    %4678 = vmatpush.xpose.msra.mxu0 0.0
    %4679 = vmatpush.xpose.msra.mxu0 0.0
    %4680 = vmatpush.xpose.msra.mxu0 0.0
    %4681 = vmatpush.xpose.msra.mxu0 0.0
    %4682 = vmatpush.xpose.msra.mxu0 0.0
    %4683 = vmatpush.xpose.msra.mxu0 0.0
    %4684 = vmatpush.xpose.msra.mxu0 0.0
    %4685 = vmatpush.xpose.msra.mxu0 0.0
    %4686 = vmatpush.xpose.msra.mxu0 0.0
    %4687 = vmatpush.xpose.msra.mxu0 0.0
    %4688 = vmatpush.xpose.msra.mxu0 0.0
    %4689 = vmatpush.xpose.msra.mxu0 0.0
    %4690 = vmatpush.xpose.msra.mxu0 %v4674
    %4691 = vmatpush.xpose.msra.mxu0 %v4672
    %4692 = vmatmul.f32.gmra.mxu0 %v4667
    %v4693 = vpop.f32.mrf.mxu0
    %v4694 = vadd.f32 %v1643, %v4693
    %4695 = vmatmul.f32.gmra.mxu0 %v4670
    %v4696 = vpop.f32.mrf.mxu0
    %v4697 = vadd.f32 %v1643, %v4696
    %4698 = vdwg.mxu0
    %v4699 = vsel %vm1067, %v4694, -inf
    %4700 = vmax.xlane.f32.xlu0 %v4699
    %v4701 = vpop.xlane.xlu0 %4700
    %v4702 = vsel %vm1067, %v4697, -inf
    %4703 = vmax.xlane.f32.xlu0 %v4702
    %v4704 = vpop.xlane.xlu0 %4703
    %v4705 = vsub.f32 %v4694, %v4701
    %v4706 = vsub.f32 %v4697, %v4704
    %v4707 = vmul.f32 %v4705, 1.442695
    %v4708 = vpow.pop %v4707
    %v4709 = vmul.f32 %v4706, 1.442695
    %v4710 = vpow.pop %v4709
    %v4711 = vsel %vm1067, %v4708, 0.0
    %4712 = vadd.xlane.f32.xlu0 %v4711
    %v4713 = vpop.xlane.xlu0 %4712
    %v4714 = vsel %vm1067, %v4710, 0.0
    %4715 = vadd.xlane.f32.xlu0 %v4714
    %v4716 = vpop.xlane.xlu0 %4715
    %v4717 = vrcp.pop %v4713
    %v4718 = vrcp.pop %v4716
    %v4719 = vmul.f32 %v4708, %v4717
    %v4720 = vmul.f32 %v4710, %v4718
    %4721 = vrot.lane.b32.xlu0 %v4059, 64
    %v4722 = vpop.permute.xlu0 %4721
    %4723 = vrot.lane.b32.xlu0 %v4061, 64
    %v4724 = vpop.permute.xlu0 %4723
    %v4728 = vsel %vm1067, %v4719, 0
    %v4731 = vsel %vm1067, %v4720, 0
    %4733 = vmatpush.msra.mxu0 0.0
    %4734 = vmatpush.msra.mxu0 0.0
    %4735 = vmatpush.msra.mxu0 0.0
    %4736 = vmatpush.msra.mxu0 0.0
    %4737 = vmatpush.msra.mxu0 0.0
    %4738 = vmatpush.msra.mxu0 0.0
    %4739 = vmatpush.msra.mxu0 0.0
    %4740 = vmatpush.msra.mxu0 0.0
    %4741 = vmatpush.msra.mxu0 0.0
    %4742 = vmatpush.msra.mxu0 0.0
    %4743 = vmatpush.msra.mxu0 0.0
    %4744 = vmatpush.msra.mxu0 0.0
    %4745 = vmatpush.msra.mxu0 0.0
    %4746 = vmatpush.msra.mxu0 0.0
    %4747 = vmatpush.msra.mxu0 %v4724
    %4748 = vmatpush.msra.mxu0 %v4722
    %4749 = vmatmul.f32.gmra.mxu0 %v4728
    %v4750 = vpop.f32.mrf.mxu0
    %v4751 = vadd.f32 0.0, %v4750
    %4752 = vmatmul.f32.gmra.mxu0 %v4731
    %v4753 = vpop.f32.mrf.mxu0
    %v4754 = vadd.f32 0.0, %v4753
    %4755 = vdwg.mxu0
    %4758 = vrot.lane.b32.xlu0 %v4064, 96
    %v4759 = vpop.permute.xlu0 %4758
    %4760 = vrot.lane.b32.xlu0 %v4066, 96
    %v4761 = vpop.permute.xlu0 %4760
    %v4763 = vsel %vm1067, %v4082, 0
    %v4766 = vsel %vm1067, %v4083, 0
    %v4768 = vsel %vm1067, %v4759, 0
    %v4770 = vsel %vm1067, %v4761, 0
    %4772 = vmatpush.xpose.msra.mxu0 0.0
    %4773 = vmatpush.xpose.msra.mxu0 0.0
    %4774 = vmatpush.xpose.msra.mxu0 0.0
    %4775 = vmatpush.xpose.msra.mxu0 0.0
    %4776 = vmatpush.xpose.msra.mxu0 0.0
    %4777 = vmatpush.xpose.msra.mxu0 0.0
    %4778 = vmatpush.xpose.msra.mxu0 0.0
    %4779 = vmatpush.xpose.msra.mxu0 0.0
    %4780 = vmatpush.xpose.msra.mxu0 0.0
    %4781 = vmatpush.xpose.msra.mxu0 0.0
    %4782 = vmatpush.xpose.msra.mxu0 0.0
    %4783 = vmatpush.xpose.msra.mxu0 0.0
    %4784 = vmatpush.xpose.msra.mxu0 0.0
    %4785 = vmatpush.xpose.msra.mxu0 0.0
    %4786 = vmatpush.xpose.msra.mxu0 %v4770
    %4787 = vmatpush.xpose.msra.mxu0 %v4768
    %4788 = vmatmul.f32.gmra.mxu0 %v4763
    %v4789 = vpop.f32.mrf.mxu0
    %v4790 = vadd.f32 %v1740, %v4789
    %4791 = vmatmul.f32.gmra.mxu0 %v4766
    %v4792 = vpop.f32.mrf.mxu0
    %v4793 = vadd.f32 %v1740, %v4792
    %4794 = vdwg.mxu0
    %v4795 = vsel %vm1067, %v4790, -inf
    %4796 = vmax.xlane.f32.xlu0 %v4795
    %v4797 = vpop.xlane.xlu0 %4796
    %v4798 = vsel %vm1067, %v4793, -inf
    %4799 = vmax.xlane.f32.xlu0 %v4798
    %v4800 = vpop.xlane.xlu0 %4799
    %v4801 = vsub.f32 %v4790, %v4797
    %v4802 = vsub.f32 %v4793, %v4800
    %v4803 = vmul.f32 %v4801, 1.442695
    %v4804 = vpow.pop %v4803
    %v4805 = vmul.f32 %v4802, 1.442695
    %v4806 = vpow.pop %v4805
    %v4807 = vsel %vm1067, %v4804, 0.0
    %4808 = vadd.xlane.f32.xlu0 %v4807
    %v4809 = vpop.xlane.xlu0 %4808
    %v4810 = vsel %vm1067, %v4806, 0.0
    %4811 = vadd.xlane.f32.xlu0 %v4810
    %v4812 = vpop.xlane.xlu0 %4811
    %v4813 = vrcp.pop %v4809
    %v4814 = vrcp.pop %v4812
    %v4815 = vmul.f32 %v4804, %v4813
    %v4816 = vmul.f32 %v4806, %v4814
    %4817 = vrot.lane.b32.xlu0 %v4064, 64
    %v4818 = vpop.permute.xlu0 %4817
    %4819 = vrot.lane.b32.xlu0 %v4066, 64
    %v4820 = vpop.permute.xlu0 %4819
    %v4824 = vsel %vm1067, %v4815, 0
    %v4827 = vsel %vm1067, %v4816, 0
    %4829 = vmatpush.msra.mxu0 0.0
    %4830 = vmatpush.msra.mxu0 0.0
    %4831 = vmatpush.msra.mxu0 0.0
    %4832 = vmatpush.msra.mxu0 0.0
    %4833 = vmatpush.msra.mxu0 0.0
    %4834 = vmatpush.msra.mxu0 0.0
    %4835 = vmatpush.msra.mxu0 0.0
    %4836 = vmatpush.msra.mxu0 0.0
    %4837 = vmatpush.msra.mxu0 0.0
    %4838 = vmatpush.msra.mxu0 0.0
    %4839 = vmatpush.msra.mxu0 0.0
    %4840 = vmatpush.msra.mxu0 0.0
    %4841 = vmatpush.msra.mxu0 0.0
    %4842 = vmatpush.msra.mxu0 0.0
    %4843 = vmatpush.msra.mxu0 %v4820
    %4844 = vmatpush.msra.mxu0 %v4818
    %4845 = vmatmul.f32.gmra.mxu0 %v4824
    %v4846 = vpop.f32.mrf.mxu0
    %v4847 = vadd.f32 0.0, %v4846
    %4848 = vmatmul.f32.gmra.mxu0 %v4827
    %v4849 = vpop.f32.mrf.mxu0
    %v4850 = vadd.f32 0.0, %v4849
    %4851 = vdwg.mxu0
    %v4852 = vpack.c.bf16 %v4178, %v4175
    %v4853 = vpack.c.bf16 %v4274, %v4271
    %v4854 = vpack.c.bf16 %v4370, %v4367
    %v4855 = vpack.c.bf16 %v4466, %v4463
    %v4856 = vpack.c.bf16 %v4562, %v4559
    %v4857 = vpack.c.bf16 %v4658, %v4655
    %v4858 = vpack.c.bf16 %v4754, %v4751
    %v4859 = vpack.c.bf16 %v4850, %v4847
    %s4860 = scalar_lea.vmem [#allocation10], 16
    %v4861 = vld [vmem:[%s4860] sm:$0xf]
    %v4862 = vld [vmem:[%s4860 + $0x4] sm:$0xf]
    %4863 = vrot.lane.b32.xlu0 %v4068, 112
    %v4864 = vpop.permute.xlu0 %4863
    %4865 = vrot.lane.b32.xlu0 %v4069, 112
    %v4866 = vpop.permute.xlu0 %4865
    %4867 = vrot.lane.b32.xlu0 %v4029, 80
    %v4868 = vpop.permute.xlu0 %4867
    %4869 = vrot.lane.b32.xlu0 %v4031, 80
    %v4870 = vpop.permute.xlu0 %4869
    %v4871 = vsel %vm1067, %v4864, 0
    %v4873 = vsel %vm1067, %v4866, 0
    %v4875 = vsel %vm1067, %v4868, 0
    %v4877 = vsel %vm1067, %v4870, 0
    %4879 = vmatpush.xpose.msra.mxu0 0.0
    %4880 = vmatpush.xpose.msra.mxu0 0.0
    %4881 = vmatpush.xpose.msra.mxu0 0.0
    %4882 = vmatpush.xpose.msra.mxu0 0.0
    %4883 = vmatpush.xpose.msra.mxu0 0.0
    %4884 = vmatpush.xpose.msra.mxu0 0.0
    %4885 = vmatpush.xpose.msra.mxu0 0.0
    %4886 = vmatpush.xpose.msra.mxu0 0.0
    %4887 = vmatpush.xpose.msra.mxu0 0.0
    %4888 = vmatpush.xpose.msra.mxu0 0.0
    %4889 = vmatpush.xpose.msra.mxu0 0.0
    %4890 = vmatpush.xpose.msra.mxu0 0.0
    %4891 = vmatpush.xpose.msra.mxu0 0.0
    %4892 = vmatpush.xpose.msra.mxu0 0.0
    %4893 = vmatpush.xpose.msra.mxu0 %v4877
    %4894 = vmatpush.xpose.msra.mxu0 %v4875
    %4895 = vmatmul.f32.gmra.mxu0 %v4871
    %v4896 = vpop.f32.mrf.mxu0
    %v4897 = vadd.f32 %v1060, %v4896
    %4898 = vmatmul.f32.gmra.mxu0 %v4873
    %v4899 = vpop.f32.mrf.mxu0
    %v4900 = vadd.f32 %v1060, %v4899
    %4901 = vdwg.mxu0
    %v4902 = vsel %vm1067, %v4897, -inf
    %4903 = vmax.xlane.f32.xlu0 %v4902
    %v4904 = vpop.xlane.xlu0 %4903
    %v4905 = vsel %vm1067, %v4900, -inf
    %4906 = vmax.xlane.f32.xlu0 %v4905
    %v4907 = vpop.xlane.xlu0 %4906
    %v4908 = vsub.f32 %v4897, %v4904
    %v4909 = vsub.f32 %v4900, %v4907
    %v4910 = vmul.f32 %v4908, 1.442695
    %v4911 = vpow.pop %v4910
    %v4912 = vmul.f32 %v4909, 1.442695
    %v4913 = vpow.pop %v4912
    %v4914 = vsel %vm1067, %v4911, 0.0
    %4915 = vadd.xlane.f32.xlu0 %v4914
    %v4916 = vpop.xlane.xlu0 %4915
    %v4917 = vsel %vm1067, %v4913, 0.0
    %4918 = vadd.xlane.f32.xlu0 %v4917
    %v4919 = vpop.xlane.xlu0 %4918
    %v4920 = vrcp.pop %v4916
    %v4921 = vrcp.pop %v4919
    %v4922 = vmul.f32 %v4911, %v4920
    %v4923 = vmul.f32 %v4913, %v4921
    %4924 = vrot.lane.b32.xlu0 %v4029, 48
    %v4925 = vpop.permute.xlu0 %4924
    %4926 = vrot.lane.b32.xlu0 %v4031, 48
    %v4927 = vpop.permute.xlu0 %4926
    %v4931 = vsel %vm1067, %v4922, 0
    %v4934 = vsel %vm1067, %v4923, 0
    %4936 = vmatpush.msra.mxu0 0.0
    %4937 = vmatpush.msra.mxu0 0.0
    %4938 = vmatpush.msra.mxu0 0.0
    %4939 = vmatpush.msra.mxu0 0.0
    %4940 = vmatpush.msra.mxu0 0.0
    %4941 = vmatpush.msra.mxu0 0.0
    %4942 = vmatpush.msra.mxu0 0.0
    %4943 = vmatpush.msra.mxu0 0.0
    %4944 = vmatpush.msra.mxu0 0.0
    %4945 = vmatpush.msra.mxu0 0.0
    %4946 = vmatpush.msra.mxu0 0.0
    %4947 = vmatpush.msra.mxu0 0.0
    %4948 = vmatpush.msra.mxu0 0.0
    %4949 = vmatpush.msra.mxu0 0.0
    %4950 = vmatpush.msra.mxu0 %v4927
    %4951 = vmatpush.msra.mxu0 %v4925
    %4952 = vmatmul.f32.gmra.mxu0 %v4931
    %v4953 = vpop.f32.mrf.mxu0
    %v4954 = vadd.f32 0.0, %v4953
    %4955 = vmatmul.f32.gmra.mxu0 %v4934
    %v4956 = vpop.f32.mrf.mxu0
    %v4957 = vadd.f32 0.0, %v4956
    %4958 = vdwg.mxu0
    %4959 = vrot.lane.b32.xlu0 %v4070, 112
    %v4960 = vpop.permute.xlu0 %4959
    %4961 = vrot.lane.b32.xlu0 %v4071, 112
    %v4962 = vpop.permute.xlu0 %4961
    %4963 = vrot.lane.b32.xlu0 %v4034, 80
    %v4964 = vpop.permute.xlu0 %4963
    %4965 = vrot.lane.b32.xlu0 %v4036, 80
    %v4966 = vpop.permute.xlu0 %4965
    %v4967 = vsel %vm1067, %v4960, 0
    %v4969 = vsel %vm1067, %v4962, 0
    %v4971 = vsel %vm1067, %v4964, 0
    %v4973 = vsel %vm1067, %v4966, 0
    %4975 = vmatpush.xpose.msra.mxu0 0.0
    %4976 = vmatpush.xpose.msra.mxu0 0.0
    %4977 = vmatpush.xpose.msra.mxu0 0.0
    %4978 = vmatpush.xpose.msra.mxu0 0.0
    %4979 = vmatpush.xpose.msra.mxu0 0.0
    %4980 = vmatpush.xpose.msra.mxu0 0.0
    %4981 = vmatpush.xpose.msra.mxu0 0.0
    %4982 = vmatpush.xpose.msra.mxu0 0.0
    %4983 = vmatpush.xpose.msra.mxu0 0.0
    %4984 = vmatpush.xpose.msra.mxu0 0.0
    %4985 = vmatpush.xpose.msra.mxu0 0.0
    %4986 = vmatpush.xpose.msra.mxu0 0.0
    %4987 = vmatpush.xpose.msra.mxu0 0.0
    %4988 = vmatpush.xpose.msra.mxu0 0.0
    %4989 = vmatpush.xpose.msra.mxu0 %v4973
    %4990 = vmatpush.xpose.msra.mxu0 %v4971
    %4991 = vmatmul.f32.gmra.mxu0 %v4967
    %v4992 = vpop.f32.mrf.mxu0
    %v4993 = vadd.f32 %v1158, %v4992
    %4994 = vmatmul.f32.gmra.mxu0 %v4969
    %v4995 = vpop.f32.mrf.mxu0
    %v4996 = vadd.f32 %v1158, %v4995
    %4997 = vdwg.mxu0
    %v4998 = vsel %vm1067, %v4993, -inf
    %4999 = vmax.xlane.f32.xlu0 %v4998
    %v5000 = vpop.xlane.xlu0 %4999
    %v5001 = vsel %vm1067, %v4996, -inf
    %5002 = vmax.xlane.f32.xlu0 %v5001
    %v5003 = vpop.xlane.xlu0 %5002
    %v5004 = vsub.f32 %v4993, %v5000
    %v5005 = vsub.f32 %v4996, %v5003
    %v5006 = vmul.f32 %v5004, 1.442695
    %v5007 = vpow.pop %v5006
    %v5008 = vmul.f32 %v5005, 1.442695
    %v5009 = vpow.pop %v5008
    %v5010 = vsel %vm1067, %v5007, 0.0
    %5011 = vadd.xlane.f32.xlu0 %v5010
    %v5012 = vpop.xlane.xlu0 %5011
    %v5013 = vsel %vm1067, %v5009, 0.0
    %5014 = vadd.xlane.f32.xlu0 %v5013
    %v5015 = vpop.xlane.xlu0 %5014
    %v5016 = vrcp.pop %v5012
    %v5017 = vrcp.pop %v5015
    %v5018 = vmul.f32 %v5007, %v5016
    %v5019 = vmul.f32 %v5009, %v5017
    %5020 = vrot.lane.b32.xlu0 %v4034, 48
    %v5021 = vpop.permute.xlu0 %5020
    %5022 = vrot.lane.b32.xlu0 %v4036, 48
    %v5023 = vpop.permute.xlu0 %5022
    %v5027 = vsel %vm1067, %v5018, 0
    %v5030 = vsel %vm1067, %v5019, 0
    %5032 = vmatpush.msra.mxu0 0.0
    %5033 = vmatpush.msra.mxu0 0.0
    %5034 = vmatpush.msra.mxu0 0.0
    %5035 = vmatpush.msra.mxu0 0.0
    %5036 = vmatpush.msra.mxu0 0.0
    %5037 = vmatpush.msra.mxu0 0.0
    %5038 = vmatpush.msra.mxu0 0.0
    %5039 = vmatpush.msra.mxu0 0.0
    %5040 = vmatpush.msra.mxu0 0.0
    %5041 = vmatpush.msra.mxu0 0.0
    %5042 = vmatpush.msra.mxu0 0.0
    %5043 = vmatpush.msra.mxu0 0.0
    %5044 = vmatpush.msra.mxu0 0.0
    %5045 = vmatpush.msra.mxu0 0.0
    %5046 = vmatpush.msra.mxu0 %v5023
    %5047 = vmatpush.msra.mxu0 %v5021
    %5048 = vmatmul.f32.gmra.mxu0 %v5027
    %v5049 = vpop.f32.mrf.mxu0
    %v5050 = vadd.f32 0.0, %v5049
    %5051 = vmatmul.f32.gmra.mxu0 %v5030
    %v5052 = vpop.f32.mrf.mxu0
    %v5053 = vadd.f32 0.0, %v5052
    %5054 = vdwg.mxu0
    %5055 = vrot.lane.b32.xlu0 %v4072, 112
    %v5056 = vpop.permute.xlu0 %5055
    %5057 = vrot.lane.b32.xlu0 %v4073, 112
    %v5058 = vpop.permute.xlu0 %5057
    %5059 = vrot.lane.b32.xlu0 %v4039, 80
    %v5060 = vpop.permute.xlu0 %5059
    %5061 = vrot.lane.b32.xlu0 %v4041, 80
    %v5062 = vpop.permute.xlu0 %5061
    %v5063 = vsel %vm1067, %v5056, 0
    %v5065 = vsel %vm1067, %v5058, 0
    %v5067 = vsel %vm1067, %v5060, 0
    %v5069 = vsel %vm1067, %v5062, 0
    %5071 = vmatpush.xpose.msra.mxu0 0.0
    %5072 = vmatpush.xpose.msra.mxu0 0.0
    %5073 = vmatpush.xpose.msra.mxu0 0.0
    %5074 = vmatpush.xpose.msra.mxu0 0.0
    %5075 = vmatpush.xpose.msra.mxu0 0.0
    %5076 = vmatpush.xpose.msra.mxu0 0.0
    %5077 = vmatpush.xpose.msra.mxu0 0.0
    %5078 = vmatpush.xpose.msra.mxu0 0.0
    %5079 = vmatpush.xpose.msra.mxu0 0.0
    %5080 = vmatpush.xpose.msra.mxu0 0.0
    %5081 = vmatpush.xpose.msra.mxu0 0.0
    %5082 = vmatpush.xpose.msra.mxu0 0.0
    %5083 = vmatpush.xpose.msra.mxu0 0.0
    %5084 = vmatpush.xpose.msra.mxu0 0.0
    %5085 = vmatpush.xpose.msra.mxu0 %v5069
    %5086 = vmatpush.xpose.msra.mxu0 %v5067
    %5087 = vmatmul.f32.gmra.mxu0 %v5063
    %v5088 = vpop.f32.mrf.mxu0
    %v5089 = vadd.f32 %v1255, %v5088
    %5090 = vmatmul.f32.gmra.mxu0 %v5065
    %v5091 = vpop.f32.mrf.mxu0
    %v5092 = vadd.f32 %v1255, %v5091
    %5093 = vdwg.mxu0
    %v5094 = vsel %vm1067, %v5089, -inf
    %5095 = vmax.xlane.f32.xlu0 %v5094
    %v5096 = vpop.xlane.xlu0 %5095
    %v5097 = vsel %vm1067, %v5092, -inf
    %5098 = vmax.xlane.f32.xlu0 %v5097
    %v5099 = vpop.xlane.xlu0 %5098
    %v5100 = vsub.f32 %v5089, %v5096
    %v5101 = vsub.f32 %v5092, %v5099
    %v5102 = vmul.f32 %v5100, 1.442695
    %v5103 = vpow.pop %v5102
    %v5104 = vmul.f32 %v5101, 1.442695
    %v5105 = vpow.pop %v5104
    %v5106 = vsel %vm1067, %v5103, 0.0
    %5107 = vadd.xlane.f32.xlu0 %v5106
    %v5108 = vpop.xlane.xlu0 %5107
    %v5109 = vsel %vm1067, %v5105, 0.0
    %5110 = vadd.xlane.f32.xlu0 %v5109
    %v5111 = vpop.xlane.xlu0 %5110
    %v5112 = vrcp.pop %v5108
    %v5113 = vrcp.pop %v5111
    %v5114 = vmul.f32 %v5103, %v5112
    %v5115 = vmul.f32 %v5105, %v5113
    %5116 = vrot.lane.b32.xlu0 %v4039, 48
    %v5117 = vpop.permute.xlu0 %5116
    %5118 = vrot.lane.b32.xlu0 %v4041, 48
    %v5119 = vpop.permute.xlu0 %5118
    %v5123 = vsel %vm1067, %v5114, 0
    %v5126 = vsel %vm1067, %v5115, 0
    %5128 = vmatpush.msra.mxu0 0.0
    %5129 = vmatpush.msra.mxu0 0.0
    %5130 = vmatpush.msra.mxu0 0.0
    %5131 = vmatpush.msra.mxu0 0.0
    %5132 = vmatpush.msra.mxu0 0.0
    %5133 = vmatpush.msra.mxu0 0.0
    %5134 = vmatpush.msra.mxu0 0.0
    %5135 = vmatpush.msra.mxu0 0.0
    %5136 = vmatpush.msra.mxu0 0.0
    %5137 = vmatpush.msra.mxu0 0.0
    %5138 = vmatpush.msra.mxu0 0.0
    %5139 = vmatpush.msra.mxu0 0.0
    %5140 = vmatpush.msra.mxu0 0.0
    %5141 = vmatpush.msra.mxu0 0.0
    %5142 = vmatpush.msra.mxu0 %v5119
    %5143 = vmatpush.msra.mxu0 %v5117
    %5144 = vmatmul.f32.gmra.mxu0 %v5123
    %v5145 = vpop.f32.mrf.mxu0
    %v5146 = vadd.f32 0.0, %v5145
    %5147 = vmatmul.f32.gmra.mxu0 %v5126
    %v5148 = vpop.f32.mrf.mxu0
    %v5149 = vadd.f32 0.0, %v5148
    %5150 = vdwg.mxu0
    %5151 = vrot.lane.b32.xlu0 %v4074, 112
    %v5152 = vpop.permute.xlu0 %5151
    %5153 = vrot.lane.b32.xlu0 %v4075, 112
    %v5154 = vpop.permute.xlu0 %5153
    %5155 = vrot.lane.b32.xlu0 %v4044, 80
    %v5156 = vpop.permute.xlu0 %5155
    %5157 = vrot.lane.b32.xlu0 %v4046, 80
    %v5158 = vpop.permute.xlu0 %5157
    %v5159 = vsel %vm1067, %v5152, 0
    %v5161 = vsel %vm1067, %v5154, 0
    %v5163 = vsel %vm1067, %v5156, 0
    %v5165 = vsel %vm1067, %v5158, 0
    %5167 = vmatpush.xpose.msra.mxu0 0.0
    %5168 = vmatpush.xpose.msra.mxu0 0.0
    %5169 = vmatpush.xpose.msra.mxu0 0.0
    %5170 = vmatpush.xpose.msra.mxu0 0.0
    %5171 = vmatpush.xpose.msra.mxu0 0.0
    %5172 = vmatpush.xpose.msra.mxu0 0.0
    %5173 = vmatpush.xpose.msra.mxu0 0.0
    %5174 = vmatpush.xpose.msra.mxu0 0.0
    %5175 = vmatpush.xpose.msra.mxu0 0.0
    %5176 = vmatpush.xpose.msra.mxu0 0.0
    %5177 = vmatpush.xpose.msra.mxu0 0.0
    %5178 = vmatpush.xpose.msra.mxu0 0.0
    %5179 = vmatpush.xpose.msra.mxu0 0.0
    %5180 = vmatpush.xpose.msra.mxu0 0.0
    %5181 = vmatpush.xpose.msra.mxu0 %v5165
    %5182 = vmatpush.xpose.msra.mxu0 %v5163
    %5183 = vmatmul.f32.gmra.mxu0 %v5159
    %v5184 = vpop.f32.mrf.mxu0
    %v5185 = vadd.f32 %v1352, %v5184
    %5186 = vmatmul.f32.gmra.mxu0 %v5161
    %v5187 = vpop.f32.mrf.mxu0
    %v5188 = vadd.f32 %v1352, %v5187
    %5189 = vdwg.mxu0
    %v5190 = vsel %vm1067, %v5185, -inf
    %5191 = vmax.xlane.f32.xlu0 %v5190
    %v5192 = vpop.xlane.xlu0 %5191
    %v5193 = vsel %vm1067, %v5188, -inf
    %5194 = vmax.xlane.f32.xlu0 %v5193
    %v5195 = vpop.xlane.xlu0 %5194
    %v5196 = vsub.f32 %v5185, %v5192
    %v5197 = vsub.f32 %v5188, %v5195
    %v5198 = vmul.f32 %v5196, 1.442695
    %v5199 = vpow.pop %v5198
    %v5200 = vmul.f32 %v5197, 1.442695
    %v5201 = vpow.pop %v5200
    %v5202 = vsel %vm1067, %v5199, 0.0
    %5203 = vadd.xlane.f32.xlu0 %v5202
    %v5204 = vpop.xlane.xlu0 %5203
    %v5205 = vsel %vm1067, %v5201, 0.0
    %5206 = vadd.xlane.f32.xlu0 %v5205
    %v5207 = vpop.xlane.xlu0 %5206
    %v5208 = vrcp.pop %v5204
    %v5209 = vrcp.pop %v5207
    %v5210 = vmul.f32 %v5199, %v5208
    %v5211 = vmul.f32 %v5201, %v5209
    %5212 = vrot.lane.b32.xlu0 %v4044, 48
    %v5213 = vpop.permute.xlu0 %5212
    %5214 = vrot.lane.b32.xlu0 %v4046, 48
    %v5215 = vpop.permute.xlu0 %5214
    %v5219 = vsel %vm1067, %v5210, 0
    %v5222 = vsel %vm1067, %v5211, 0
    %5224 = vmatpush.msra.mxu0 0.0
    %5225 = vmatpush.msra.mxu0 0.0
    %5226 = vmatpush.msra.mxu0 0.0
    %5227 = vmatpush.msra.mxu0 0.0
    %5228 = vmatpush.msra.mxu0 0.0
    %5229 = vmatpush.msra.mxu0 0.0
    %5230 = vmatpush.msra.mxu0 0.0
    %5231 = vmatpush.msra.mxu0 0.0
    %5232 = vmatpush.msra.mxu0 0.0
    %5233 = vmatpush.msra.mxu0 0.0
    %5234 = vmatpush.msra.mxu0 0.0
    %5235 = vmatpush.msra.mxu0 0.0
    %5236 = vmatpush.msra.mxu0 0.0
    %5237 = vmatpush.msra.mxu0 0.0
    %5238 = vmatpush.msra.mxu0 %v5215
    %5239 = vmatpush.msra.mxu0 %v5213
    %5240 = vmatmul.f32.gmra.mxu0 %v5219
    %v5241 = vpop.f32.mrf.mxu0
    %v5242 = vadd.f32 0.0, %v5241
    %5243 = vmatmul.f32.gmra.mxu0 %v5222
    %v5244 = vpop.f32.mrf.mxu0
    %v5245 = vadd.f32 0.0, %v5244
    %5246 = vdwg.mxu0
    %5247 = vrot.lane.b32.xlu0 %v4076, 112
    %v5248 = vpop.permute.xlu0 %5247
    %5249 = vrot.lane.b32.xlu0 %v4077, 112
    %v5250 = vpop.permute.xlu0 %5249
    %5251 = vrot.lane.b32.xlu0 %v4049, 80
    %v5252 = vpop.permute.xlu0 %5251
    %5253 = vrot.lane.b32.xlu0 %v4051, 80
    %v5254 = vpop.permute.xlu0 %5253
    %v5255 = vsel %vm1067, %v5248, 0
    %v5257 = vsel %vm1067, %v5250, 0
    %v5259 = vsel %vm1067, %v5252, 0
    %v5261 = vsel %vm1067, %v5254, 0
    %5263 = vmatpush.xpose.msra.mxu0 0.0
    %5264 = vmatpush.xpose.msra.mxu0 0.0
    %5265 = vmatpush.xpose.msra.mxu0 0.0
    %5266 = vmatpush.xpose.msra.mxu0 0.0
    %5267 = vmatpush.xpose.msra.mxu0 0.0
    %5268 = vmatpush.xpose.msra.mxu0 0.0
    %5269 = vmatpush.xpose.msra.mxu0 0.0
    %5270 = vmatpush.xpose.msra.mxu0 0.0
    %5271 = vmatpush.xpose.msra.mxu0 0.0
    %5272 = vmatpush.xpose.msra.mxu0 0.0
    %5273 = vmatpush.xpose.msra.mxu0 0.0
    %5274 = vmatpush.xpose.msra.mxu0 0.0
    %5275 = vmatpush.xpose.msra.mxu0 0.0
    %5276 = vmatpush.xpose.msra.mxu0 0.0
    %5277 = vmatpush.xpose.msra.mxu0 %v5261
    %5278 = vmatpush.xpose.msra.mxu0 %v5259
    %5279 = vmatmul.f32.gmra.mxu0 %v5255
    %v5280 = vpop.f32.mrf.mxu0
    %v5281 = vadd.f32 %v1449, %v5280
    %5282 = vmatmul.f32.gmra.mxu0 %v5257
    %v5283 = vpop.f32.mrf.mxu0
    %v5284 = vadd.f32 %v1449, %v5283
    %5285 = vdwg.mxu0
    %v5286 = vsel %vm1067, %v5281, -inf
    %5287 = vmax.xlane.f32.xlu0 %v5286
    %v5288 = vpop.xlane.xlu0 %5287
    %v5289 = vsel %vm1067, %v5284, -inf
    %5290 = vmax.xlane.f32.xlu0 %v5289
    %v5291 = vpop.xlane.xlu0 %5290
    %v5292 = vsub.f32 %v5281, %v5288
    %v5293 = vsub.f32 %v5284, %v5291
    %v5294 = vmul.f32 %v5292, 1.442695
    %v5295 = vpow.pop %v5294
    %v5296 = vmul.f32 %v5293, 1.442695
    %v5297 = vpow.pop %v5296
    %v5298 = vsel %vm1067, %v5295, 0.0
    %5299 = vadd.xlane.f32.xlu0 %v5298
    %v5300 = vpop.xlane.xlu0 %5299
    %v5301 = vsel %vm1067, %v5297, 0.0
    %5302 = vadd.xlane.f32.xlu0 %v5301
    %v5303 = vpop.xlane.xlu0 %5302
    %v5304 = vrcp.pop %v5300
    %v5305 = vrcp.pop %v5303
    %v5306 = vmul.f32 %v5295, %v5304
    %v5307 = vmul.f32 %v5297, %v5305
    %5308 = vrot.lane.b32.xlu0 %v4049, 48
    %v5309 = vpop.permute.xlu0 %5308
    %5310 = vrot.lane.b32.xlu0 %v4051, 48
    %v5311 = vpop.permute.xlu0 %5310
    %v5315 = vsel %vm1067, %v5306, 0
    %v5318 = vsel %vm1067, %v5307, 0
    %5320 = vmatpush.msra.mxu0 0.0
    %5321 = vmatpush.msra.mxu0 0.0
    %5322 = vmatpush.msra.mxu0 0.0
    %5323 = vmatpush.msra.mxu0 0.0
    %5324 = vmatpush.msra.mxu0 0.0
    %5325 = vmatpush.msra.mxu0 0.0
    %5326 = vmatpush.msra.mxu0 0.0
    %5327 = vmatpush.msra.mxu0 0.0
    %5328 = vmatpush.msra.mxu0 0.0
    %5329 = vmatpush.msra.mxu0 0.0
    %5330 = vmatpush.msra.mxu0 0.0
    %5331 = vmatpush.msra.mxu0 0.0
    %5332 = vmatpush.msra.mxu0 0.0
    %5333 = vmatpush.msra.mxu0 0.0
    %5334 = vmatpush.msra.mxu0 %v5311
    %5335 = vmatpush.msra.mxu0 %v5309
    %5336 = vmatmul.f32.gmra.mxu0 %v5315
    %v5337 = vpop.f32.mrf.mxu0
    %v5338 = vadd.f32 0.0, %v5337
    %5339 = vmatmul.f32.gmra.mxu0 %v5318
    %v5340 = vpop.f32.mrf.mxu0
    %v5341 = vadd.f32 0.0, %v5340
    %5342 = vdwg.mxu0
    %5343 = vrot.lane.b32.xlu0 %v4078, 112
    %v5344 = vpop.permute.xlu0 %5343
    %5345 = vrot.lane.b32.xlu0 %v4079, 112
    %v5346 = vpop.permute.xlu0 %5345
    %5347 = vrot.lane.b32.xlu0 %v4054, 80
    %v5348 = vpop.permute.xlu0 %5347
    %5349 = vrot.lane.b32.xlu0 %v4056, 80
    %v5350 = vpop.permute.xlu0 %5349
    %v5351 = vsel %vm1067, %v5344, 0
    %v5353 = vsel %vm1067, %v5346, 0
    %v5355 = vsel %vm1067, %v5348, 0
    %v5357 = vsel %vm1067, %v5350, 0
    %5359 = vmatpush.xpose.msra.mxu0 0.0
    %5360 = vmatpush.xpose.msra.mxu0 0.0
    %5361 = vmatpush.xpose.msra.mxu0 0.0
    %5362 = vmatpush.xpose.msra.mxu0 0.0
    %5363 = vmatpush.xpose.msra.mxu0 0.0
    %5364 = vmatpush.xpose.msra.mxu0 0.0
    %5365 = vmatpush.xpose.msra.mxu0 0.0
    %5366 = vmatpush.xpose.msra.mxu0 0.0
    %5367 = vmatpush.xpose.msra.mxu0 0.0
    %5368 = vmatpush.xpose.msra.mxu0 0.0
    %5369 = vmatpush.xpose.msra.mxu0 0.0
    %5370 = vmatpush.xpose.msra.mxu0 0.0
    %5371 = vmatpush.xpose.msra.mxu0 0.0
    %5372 = vmatpush.xpose.msra.mxu0 0.0
    %5373 = vmatpush.xpose.msra.mxu0 %v5357
    %5374 = vmatpush.xpose.msra.mxu0 %v5355
    %5375 = vmatmul.f32.gmra.mxu0 %v5351
    %v5376 = vpop.f32.mrf.mxu0
    %v5377 = vadd.f32 %v1546, %v5376
    %5378 = vmatmul.f32.gmra.mxu0 %v5353
    %v5379 = vpop.f32.mrf.mxu0
    %v5380 = vadd.f32 %v1546, %v5379
    %5381 = vdwg.mxu0
    %v5382 = vsel %vm1067, %v5377, -inf
    %5383 = vmax.xlane.f32.xlu0 %v5382
    %v5384 = vpop.xlane.xlu0 %5383
    %v5385 = vsel %vm1067, %v5380, -inf
    %5386 = vmax.xlane.f32.xlu0 %v5385
    %v5387 = vpop.xlane.xlu0 %5386
    %v5388 = vsub.f32 %v5377, %v5384
    %v5389 = vsub.f32 %v5380, %v5387
    %v5390 = vmul.f32 %v5388, 1.442695
    %v5391 = vpow.pop %v5390
    %v5392 = vmul.f32 %v5389, 1.442695
    %v5393 = vpow.pop %v5392
    %v5394 = vsel %vm1067, %v5391, 0.0
    %5395 = vadd.xlane.f32.xlu0 %v5394
    %v5396 = vpop.xlane.xlu0 %5395
    %v5397 = vsel %vm1067, %v5393, 0.0
    %5398 = vadd.xlane.f32.xlu0 %v5397
    %v5399 = vpop.xlane.xlu0 %5398
    %v5400 = vrcp.pop %v5396
    %v5401 = vrcp.pop %v5399
    %v5402 = vmul.f32 %v5391, %v5400
    %v5403 = vmul.f32 %v5393, %v5401
    %5404 = vrot.lane.b32.xlu0 %v4054, 48
    %v5405 = vpop.permute.xlu0 %5404
    %5406 = vrot.lane.b32.xlu0 %v4056, 48
    %v5407 = vpop.permute.xlu0 %5406
    %v5411 = vsel %vm1067, %v5402, 0
    %v5414 = vsel %vm1067, %v5403, 0
    %5416 = vmatpush.msra.mxu0 0.0
    %5417 = vmatpush.msra.mxu0 0.0
    %5418 = vmatpush.msra.mxu0 0.0
    %5419 = vmatpush.msra.mxu0 0.0
    %5420 = vmatpush.msra.mxu0 0.0
    %5421 = vmatpush.msra.mxu0 0.0
    %5422 = vmatpush.msra.mxu0 0.0
    %5423 = vmatpush.msra.mxu0 0.0
    %5424 = vmatpush.msra.mxu0 0.0
    %5425 = vmatpush.msra.mxu0 0.0
    %5426 = vmatpush.msra.mxu0 0.0
    %5427 = vmatpush.msra.mxu0 0.0
    %5428 = vmatpush.msra.mxu0 0.0
    %5429 = vmatpush.msra.mxu0 0.0
    %5430 = vmatpush.msra.mxu0 %v5407
    %5431 = vmatpush.msra.mxu0 %v5405
    %5432 = vmatmul.f32.gmra.mxu0 %v5411
    %v5433 = vpop.f32.mrf.mxu0
    %v5434 = vadd.f32 0.0, %v5433
    %5435 = vmatmul.f32.gmra.mxu0 %v5414
    %v5436 = vpop.f32.mrf.mxu0
    %v5437 = vadd.f32 0.0, %v5436
    %5438 = vdwg.mxu0
    %5439 = vrot.lane.b32.xlu0 %v4080, 112
    %v5440 = vpop.permute.xlu0 %5439
    %5441 = vrot.lane.b32.xlu0 %v4081, 112
    %v5442 = vpop.permute.xlu0 %5441
    %5443 = vrot.lane.b32.xlu0 %v4059, 80
    %v5444 = vpop.permute.xlu0 %5443
    %5445 = vrot.lane.b32.xlu0 %v4061, 80
    %v5446 = vpop.permute.xlu0 %5445
    %v5447 = vsel %vm1067, %v5440, 0
    %v5449 = vsel %vm1067, %v5442, 0
    %v5451 = vsel %vm1067, %v5444, 0
    %v5453 = vsel %vm1067, %v5446, 0
    %5455 = vmatpush.xpose.msra.mxu0 0.0
    %5456 = vmatpush.xpose.msra.mxu0 0.0
    %5457 = vmatpush.xpose.msra.mxu0 0.0
    %5458 = vmatpush.xpose.msra.mxu0 0.0
    %5459 = vmatpush.xpose.msra.mxu0 0.0
    %5460 = vmatpush.xpose.msra.mxu0 0.0
    %5461 = vmatpush.xpose.msra.mxu0 0.0
    %5462 = vmatpush.xpose.msra.mxu0 0.0
    %5463 = vmatpush.xpose.msra.mxu0 0.0
    %5464 = vmatpush.xpose.msra.mxu0 0.0
    %5465 = vmatpush.xpose.msra.mxu0 0.0
    %5466 = vmatpush.xpose.msra.mxu0 0.0
    %5467 = vmatpush.xpose.msra.mxu0 0.0
    %5468 = vmatpush.xpose.msra.mxu0 0.0
    %5469 = vmatpush.xpose.msra.mxu0 %v5453
    %5470 = vmatpush.xpose.msra.mxu0 %v5451
    %5471 = vmatmul.f32.gmra.mxu0 %v5447
    %v5472 = vpop.f32.mrf.mxu0
    %v5473 = vadd.f32 %v1643, %v5472
    %5474 = vmatmul.f32.gmra.mxu0 %v5449
    %v5475 = vpop.f32.mrf.mxu0
    %v5476 = vadd.f32 %v1643, %v5475
    %5477 = vdwg.mxu0
    %v5478 = vsel %vm1067, %v5473, -inf
    %5479 = vmax.xlane.f32.xlu0 %v5478
    %v5480 = vpop.xlane.xlu0 %5479
    %v5481 = vsel %vm1067, %v5476, -inf
    %5482 = vmax.xlane.f32.xlu0 %v5481
    %v5483 = vpop.xlane.xlu0 %5482
    %v5484 = vsub.f32 %v5473, %v5480
    %v5485 = vsub.f32 %v5476, %v5483
    %v5486 = vmul.f32 %v5484, 1.442695
    %v5487 = vpow.pop %v5486
    %v5488 = vmul.f32 %v5485, 1.442695
    %v5489 = vpow.pop %v5488
    %v5490 = vsel %vm1067, %v5487, 0.0
    %5491 = vadd.xlane.f32.xlu0 %v5490
    %v5492 = vpop.xlane.xlu0 %5491
    %v5493 = vsel %vm1067, %v5489, 0.0
    %5494 = vadd.xlane.f32.xlu0 %v5493
    %v5495 = vpop.xlane.xlu0 %5494
    %v5496 = vrcp.pop %v5492
    %v5497 = vrcp.pop %v5495
    %v5498 = vmul.f32 %v5487, %v5496
    %v5499 = vmul.f32 %v5489, %v5497
    %5500 = vrot.lane.b32.xlu0 %v4059, 48
    %v5501 = vpop.permute.xlu0 %5500
    %5502 = vrot.lane.b32.xlu0 %v4061, 48
    %v5503 = vpop.permute.xlu0 %5502
    %v5507 = vsel %vm1067, %v5498, 0
    %v5510 = vsel %vm1067, %v5499, 0
    %5512 = vmatpush.msra.mxu0 0.0
    %5513 = vmatpush.msra.mxu0 0.0
    %5514 = vmatpush.msra.mxu0 0.0
    %5515 = vmatpush.msra.mxu0 0.0
    %5516 = vmatpush.msra.mxu0 0.0
    %5517 = vmatpush.msra.mxu0 0.0
    %5518 = vmatpush.msra.mxu0 0.0
    %5519 = vmatpush.msra.mxu0 0.0
    %5520 = vmatpush.msra.mxu0 0.0
    %5521 = vmatpush.msra.mxu0 0.0
    %5522 = vmatpush.msra.mxu0 0.0
    %5523 = vmatpush.msra.mxu0 0.0
    %5524 = vmatpush.msra.mxu0 0.0
    %5525 = vmatpush.msra.mxu0 0.0
    %5526 = vmatpush.msra.mxu0 %v5503
    %5527 = vmatpush.msra.mxu0 %v5501
    %5528 = vmatmul.f32.gmra.mxu0 %v5507
    %v5529 = vpop.f32.mrf.mxu0
    %v5530 = vadd.f32 0.0, %v5529
    %5531 = vmatmul.f32.gmra.mxu0 %v5510
    %v5532 = vpop.f32.mrf.mxu0
    %v5533 = vadd.f32 0.0, %v5532
    %5534 = vdwg.mxu0
    %5535 = vrot.lane.b32.xlu0 %v4082, 112
    %v5536 = vpop.permute.xlu0 %5535
    %5537 = vrot.lane.b32.xlu0 %v4083, 112
    %v5538 = vpop.permute.xlu0 %5537
    %5539 = vrot.lane.b32.xlu0 %v4064, 80
    %v5540 = vpop.permute.xlu0 %5539
    %5541 = vrot.lane.b32.xlu0 %v4066, 80
    %v5542 = vpop.permute.xlu0 %5541
    %v5543 = vsel %vm1067, %v5536, 0
    %v5545 = vsel %vm1067, %v5538, 0
    %v5547 = vsel %vm1067, %v5540, 0
    %v5549 = vsel %vm1067, %v5542, 0
    %5551 = vmatpush.xpose.msra.mxu0 0.0
    %5552 = vmatpush.xpose.msra.mxu0 0.0
    %5553 = vmatpush.xpose.msra.mxu0 0.0
    %5554 = vmatpush.xpose.msra.mxu0 0.0
    %5555 = vmatpush.xpose.msra.mxu0 0.0
    %5556 = vmatpush.xpose.msra.mxu0 0.0
    %5557 = vmatpush.xpose.msra.mxu0 0.0
    %5558 = vmatpush.xpose.msra.mxu0 0.0
    %5559 = vmatpush.xpose.msra.mxu0 0.0
    %5560 = vmatpush.xpose.msra.mxu0 0.0
    %5561 = vmatpush.xpose.msra.mxu0 0.0
    %5562 = vmatpush.xpose.msra.mxu0 0.0
    %5563 = vmatpush.xpose.msra.mxu0 0.0
    %5564 = vmatpush.xpose.msra.mxu0 0.0
    %5565 = vmatpush.xpose.msra.mxu0 %v5549
    %5566 = vmatpush.xpose.msra.mxu0 %v5547
    %5567 = vmatmul.f32.gmra.mxu0 %v5543
    %v5568 = vpop.f32.mrf.mxu0
    %v5569 = vadd.f32 %v1740, %v5568
    %5570 = vmatmul.f32.gmra.mxu0 %v5545
    %v5571 = vpop.f32.mrf.mxu0
    %v5572 = vadd.f32 %v1740, %v5571
    %5573 = vdwg.mxu0
    %v5574 = vsel %vm1067, %v5569, -inf
    %5575 = vmax.xlane.f32.xlu0 %v5574
    %v5576 = vpop.xlane.xlu0 %5575
    %v5577 = vsel %vm1067, %v5572, -inf
    %5578 = vmax.xlane.f32.xlu0 %v5577
    %v5579 = vpop.xlane.xlu0 %5578
    %v5580 = vsub.f32 %v5569, %v5576
    %v5581 = vsub.f32 %v5572, %v5579
    %v5582 = vmul.f32 %v5580, 1.442695
    %v5583 = vpow.pop %v5582
    %v5584 = vmul.f32 %v5581, 1.442695
    %v5585 = vpow.pop %v5584
    %v5586 = vsel %vm1067, %v5583, 0.0
    %5587 = vadd.xlane.f32.xlu0 %v5586
    %v5588 = vpop.xlane.xlu0 %5587
    %v5589 = vsel %vm1067, %v5585, 0.0
    %5590 = vadd.xlane.f32.xlu0 %v5589
    %v5591 = vpop.xlane.xlu0 %5590
    %v5592 = vrcp.pop %v5588
    %v5593 = vrcp.pop %v5591
    %v5594 = vmul.f32 %v5583, %v5592
    %v5595 = vmul.f32 %v5585, %v5593
    %5596 = vrot.lane.b32.xlu0 %v4064, 48
    %v5597 = vpop.permute.xlu0 %5596
    %5598 = vrot.lane.b32.xlu0 %v4066, 48
    %v5599 = vpop.permute.xlu0 %5598
    %v5603 = vsel %vm1067, %v5594, 0
    %v5606 = vsel %vm1067, %v5595, 0
    %5608 = vmatpush.msra.mxu0 0.0
    %5609 = vmatpush.msra.mxu0 0.0
    %5610 = vmatpush.msra.mxu0 0.0
    %5611 = vmatpush.msra.mxu0 0.0
    %5612 = vmatpush.msra.mxu0 0.0
    %5613 = vmatpush.msra.mxu0 0.0
    %5614 = vmatpush.msra.mxu0 0.0
    %5615 = vmatpush.msra.mxu0 0.0
    %5616 = vmatpush.msra.mxu0 0.0
    %5617 = vmatpush.msra.mxu0 0.0
    %5618 = vmatpush.msra.mxu0 0.0
    %5619 = vmatpush.msra.mxu0 0.0
    %5620 = vmatpush.msra.mxu0 0.0
    %5621 = vmatpush.msra.mxu0 0.0
    %5622 = vmatpush.msra.mxu0 %v5599
    %5623 = vmatpush.msra.mxu0 %v5597
    %5624 = vmatmul.f32.gmra.mxu0 %v5603
    %v5625 = vpop.f32.mrf.mxu0
    %v5626 = vadd.f32 0.0, %v5625
    %5627 = vmatmul.f32.gmra.mxu0 %v5606
    %v5628 = vpop.f32.mrf.mxu0
    %v5629 = vadd.f32 0.0, %v5628
    %5630 = vdwg.mxu0
    %v5631 = vpack.c.bf16 %v4957, %v4954
    %v5632 = vpack.c.bf16 %v5053, %v5050
    %v5633 = vpack.c.bf16 %v5149, %v5146
    %v5634 = vpack.c.bf16 %v5245, %v5242
    %v5635 = vpack.c.bf16 %v5341, %v5338
    %v5636 = vpack.c.bf16 %v5437, %v5434
    %v5637 = vpack.c.bf16 %v5533, %v5530
    %v5638 = vpack.c.bf16 %v5629, %v5626
    %v5639 = vld [vmem:[%s4860 + $0x8] sm:$0xf]
    %v5640 = vld [vmem:[%s4860 + $0xc] sm:$0xf]
    %v5643 = vunpack.c.l.b16 %v5639
    %v5644 = vunpack.c.l.b16 %v5640
    %v5645 = vpack.c.b16 %v5644, %v5643
    %v5648 = vsel %vm1067, %v5631, 0
    %v5651 = vsel %vm1067, %v5632, 0
    %v5654 = vsel %vm1067, %v5633, 0
    %v5657 = vsel %vm1067, %v5634, 0
    %v5660 = vsel %vm1067, %v5635, 0
    %v5663 = vsel %vm1067, %v5636, 0
    %v5666 = vsel %vm1067, %v5637, 0
    %v5669 = vsel %vm1067, %v5638, 0
    %5671 = vmatpush.bf16.msra.mxu0 0
    %5672 = vmatpush.bf16.msra.mxu0 0
    %5673 = vmatpush.bf16.msra.mxu0 0
    %5674 = vmatpush.bf16.msra.mxu0 0
    %5675 = vmatpush.bf16.msra.mxu0 0
    %5676 = vmatpush.bf16.msra.mxu0 0
    %5677 = vmatpush.bf16.msra.mxu0 0
    %5678 = vmatpush.bf16.msra.mxu0 %v5645
    %5679 = vmatmul.bf16.gmra.mxu0 %v5648
    %v5680 = vpop.f32.mrf.mxu0
    %v5681 = vadd.f32 0.0, %v5680
    %v5682 = vpop.f32.mrf.mxu0
    %v5683 = vadd.f32 0.0, %v5682
    %5684 = vmatmul.bf16.gmra.mxu0 %v5651
    %v5685 = vpop.f32.mrf.mxu0
    %v5686 = vadd.f32 0.0, %v5685
    %v5687 = vpop.f32.mrf.mxu0
    %v5688 = vadd.f32 0.0, %v5687
    %5689 = vmatmul.bf16.gmra.mxu0 %v5654
    %v5690 = vpop.f32.mrf.mxu0
    %v5691 = vadd.f32 0.0, %v5690
    %v5692 = vpop.f32.mrf.mxu0
    %v5693 = vadd.f32 0.0, %v5692
    %5694 = vmatmul.bf16.gmra.mxu0 %v5657
    %v5695 = vpop.f32.mrf.mxu0
    %v5696 = vadd.f32 0.0, %v5695
    %v5697 = vpop.f32.mrf.mxu0
    %v5698 = vadd.f32 0.0, %v5697
    %5699 = vmatmul.bf16.gmra.mxu0 %v5660
    %v5700 = vpop.f32.mrf.mxu0
    %v5701 = vadd.f32 0.0, %v5700
    %v5702 = vpop.f32.mrf.mxu0
    %v5703 = vadd.f32 0.0, %v5702
    %5704 = vmatmul.bf16.gmra.mxu0 %v5663
    %v5705 = vpop.f32.mrf.mxu0
    %v5706 = vadd.f32 0.0, %v5705
    %v5707 = vpop.f32.mrf.mxu0
    %v5708 = vadd.f32 0.0, %v5707
    %5709 = vmatmul.bf16.gmra.mxu0 %v5666
    %v5710 = vpop.f32.mrf.mxu0
    %v5711 = vadd.f32 0.0, %v5710
    %v5712 = vpop.f32.mrf.mxu0
    %v5713 = vadd.f32 0.0, %v5712
    %5714 = vmatmul.bf16.gmra.mxu0 %v5669
    %v5715 = vpop.f32.mrf.mxu0
    %v5716 = vadd.f32 0.0, %v5715
    %v5717 = vpop.f32.mrf.mxu0
    %v5718 = vadd.f32 0.0, %v5717
    %5719 = vdwg.mxu0
    %v5722 = vunpack.c.l.b16 %v4861
    %v5723 = vunpack.c.l.b16 %v4862
    %v5724 = vpack.c.b16 %v5723, %v5722
    %v5727 = vsel %vm1067, %v4852, 0
    %v5730 = vsel %vm1067, %v4853, 0
    %v5733 = vsel %vm1067, %v4854, 0
    %v5736 = vsel %vm1067, %v4855, 0
    %v5739 = vsel %vm1067, %v4856, 0
    %v5742 = vsel %vm1067, %v4857, 0
    %v5745 = vsel %vm1067, %v4858, 0
    %v5748 = vsel %vm1067, %v4859, 0
    %5750 = vmatpush.bf16.msra.mxu0 0
    %5751 = vmatpush.bf16.msra.mxu0 0
    %5752 = vmatpush.bf16.msra.mxu0 0
    %5753 = vmatpush.bf16.msra.mxu0 0
    %5754 = vmatpush.bf16.msra.mxu0 0
    %5755 = vmatpush.bf16.msra.mxu0 0
    %5756 = vmatpush.bf16.msra.mxu0 0
    %5757 = vmatpush.bf16.msra.mxu0 %v5724
    %5758 = vmatmul.bf16.gmra.mxu0 %v5727
    %v5759 = vpop.f32.mrf.mxu0
    %v5760 = vadd.f32 %v5681, %v5759
    %v5761 = vpop.f32.mrf.mxu0
    %v5762 = vadd.f32 %v5683, %v5761
    %5763 = vmatmul.bf16.gmra.mxu0 %v5730
    %v5764 = vpop.f32.mrf.mxu0
    %v5765 = vadd.f32 %v5686, %v5764
    %v5766 = vpop.f32.mrf.mxu0
    %v5767 = vadd.f32 %v5688, %v5766
    %5768 = vmatmul.bf16.gmra.mxu0 %v5733
    %v5769 = vpop.f32.mrf.mxu0
    %v5770 = vadd.f32 %v5691, %v5769
    %v5771 = vpop.f32.mrf.mxu0
    %v5772 = vadd.f32 %v5693, %v5771
    %5773 = vmatmul.bf16.gmra.mxu0 %v5736
    %v5774 = vpop.f32.mrf.mxu0
    %v5775 = vadd.f32 %v5696, %v5774
    %v5776 = vpop.f32.mrf.mxu0
    %v5777 = vadd.f32 %v5698, %v5776
    %5778 = vmatmul.bf16.gmra.mxu0 %v5739
    %v5779 = vpop.f32.mrf.mxu0
    %v5780 = vadd.f32 %v5701, %v5779
    %v5781 = vpop.f32.mrf.mxu0
    %v5782 = vadd.f32 %v5703, %v5781
    %5783 = vmatmul.bf16.gmra.mxu0 %v5742
    %v5784 = vpop.f32.mrf.mxu0
    %v5785 = vadd.f32 %v5706, %v5784
    %v5786 = vpop.f32.mrf.mxu0
    %v5787 = vadd.f32 %v5708, %v5786
    %5788 = vmatmul.bf16.gmra.mxu0 %v5745
    %v5789 = vpop.f32.mrf.mxu0
    %v5790 = vadd.f32 %v5711, %v5789
    %v5791 = vpop.f32.mrf.mxu0
    %v5792 = vadd.f32 %v5713, %v5791
    %5793 = vmatmul.bf16.gmra.mxu0 %v5748
    %v5794 = vpop.f32.mrf.mxu0
    %v5795 = vadd.f32 %v5716, %v5794
    %v5796 = vpop.f32.mrf.mxu0
    %v5797 = vadd.f32 %v5718, %v5796
    %5798 = vdwg.mxu0
    %v5799 = vld [vmem:[%s8 + $0x8] sm:$0x1]
    %v5800 = vld [vmem:[%s8 + $0x9] sm:$0x1]
    %v5801 = vld [vmem:[%s8 + $0xa] sm:$0x1]
    %v5802 = vld [vmem:[%s8 + $0xb] sm:$0x1]
    %v5803 = vld [vmem:[%s8 + $0xc] sm:$0x1]
    %v5804 = vld [vmem:[%s8 + $0xd] sm:$0x1]
    %v5805 = vadd.f32 %v3952, %v5760
    %v5806 = vadd.f32 %v3953, %v5762
    %v5807 = vadd.f32 %v3954, %v5765
    %v5808 = vadd.f32 %v3955, %v5767
    %v5809 = vadd.f32 %v3956, %v5770
    %v5810 = vadd.f32 %v3957, %v5772
    %v5811 = vadd.f32 %v3958, %v5775
    %v5812 = vadd.f32 %v3959, %v5777
    %v5813 = vadd.f32 %v3960, %v5780
    %v5814 = vadd.f32 %v3961, %v5782
    %v5815 = vadd.f32 %v3962, %v5785
    %v5816 = vadd.f32 %v3963, %v5787
    %v5817 = vadd.f32 %v3964, %v5790
    %v5818 = vadd.f32 %v3965, %v5792
    %v5819 = vadd.f32 %v3966, %v5795
    %v5820 = vadd.f32 %v3967, %v5797
    %v5821 = vperm.slane %v5799, 0
    %v5822 = vadd.f32 %v5805, %v5821
    %v5823 = vadd.f32 %v5806, %v5821
    %v5824 = vadd.f32 %v5807, %v5821
    %v5825 = vadd.f32 %v5808, %v5821
    %v5826 = vadd.f32 %v5809, %v5821
    %v5827 = vadd.f32 %v5810, %v5821
    %v5828 = vadd.f32 %v5811, %v5821
    %v5829 = vadd.f32 %v5812, %v5821
    %v5830 = vadd.f32 %v5813, %v5821
    %v5831 = vadd.f32 %v5814, %v5821
    %v5832 = vadd.f32 %v5815, %v5821
    %v5833 = vadd.f32 %v5816, %v5821
    %v5834 = vadd.f32 %v5817, %v5821
    %v5835 = vadd.f32 %v5818, %v5821
    %v5836 = vadd.f32 %v5819, %v5821
    %v5837 = vadd.f32 %v5820, %v5821
    %v5838 = vsel %vm149, %v5822, 0.0
    %5839 = vadd.xlane.f32.xlu0 %v5838
    %v5840 = vpop.xlane.xlu0 %5839
    %v5841 = vsel %vm149, %v5823, 0.0
    %5842 = vadd.xlane.f32.xlu0 %v5841
    %v5843 = vpop.xlane.xlu0 %5842
    %v5844 = vsel %vm149, %v5824, 0.0
    %5845 = vadd.xlane.f32.xlu0 %v5844
    %v5846 = vpop.xlane.xlu0 %5845
    %v5847 = vsel %vm149, %v5825, 0.0
    %5848 = vadd.xlane.f32.xlu0 %v5847
    %v5849 = vpop.xlane.xlu0 %5848
    %v5850 = vsel %vm149, %v5826, 0.0
    %5851 = vadd.xlane.f32.xlu0 %v5850
    %v5852 = vpop.xlane.xlu0 %5851
    %v5853 = vsel %vm149, %v5827, 0.0
    %5854 = vadd.xlane.f32.xlu0 %v5853
    %v5855 = vpop.xlane.xlu0 %5854
    %v5856 = vsel %vm149, %v5828, 0.0
    %5857 = vadd.xlane.f32.xlu0 %v5856
    %v5858 = vpop.xlane.xlu0 %5857
    %v5859 = vsel %vm149, %v5829, 0.0
    %5860 = vadd.xlane.f32.xlu0 %v5859
    %v5861 = vpop.xlane.xlu0 %5860
    %v5862 = vsel %vm149, %v5830, 0.0
    %5863 = vadd.xlane.f32.xlu0 %v5862
    %v5864 = vpop.xlane.xlu0 %5863
    %v5865 = vsel %vm149, %v5831, 0.0
    %5866 = vadd.xlane.f32.xlu0 %v5865
    %v5867 = vpop.xlane.xlu0 %5866
    %v5868 = vsel %vm149, %v5832, 0.0
    %5869 = vadd.xlane.f32.xlu0 %v5868
    %v5870 = vpop.xlane.xlu0 %5869
    %v5871 = vsel %vm149, %v5833, 0.0
    %5872 = vadd.xlane.f32.xlu0 %v5871
    %v5873 = vpop.xlane.xlu0 %5872
    %v5874 = vsel %vm149, %v5834, 0.0
    %5875 = vadd.xlane.f32.xlu0 %v5874
    %v5876 = vpop.xlane.xlu0 %5875
    %v5877 = vsel %vm149, %v5835, 0.0
    %5878 = vadd.xlane.f32.xlu0 %v5877
    %v5879 = vpop.xlane.xlu0 %5878
    %v5880 = vsel %vm149, %v5836, 0.0
    %5881 = vadd.xlane.f32.xlu0 %v5880
    %v5882 = vpop.xlane.xlu0 %5881
    %v5883 = vsel %vm149, %v5837, 0.0
    %5884 = vadd.xlane.f32.xlu0 %v5883
    %v5885 = vpop.xlane.xlu0 %5884
    %v5886 = vmul.f32 %v5840, %v595
    %v5887 = vmul.f32 %v5843, %v595
    %v5888 = vmul.f32 %v5846, %v595
    %v5889 = vmul.f32 %v5849, %v595
    %v5890 = vmul.f32 %v5852, %v595
    %v5891 = vmul.f32 %v5855, %v595
    %v5892 = vmul.f32 %v5858, %v595
    %v5893 = vmul.f32 %v5861, %v595
    %v5894 = vmul.f32 %v5864, %v595
    %v5895 = vmul.f32 %v5867, %v595
    %v5896 = vmul.f32 %v5870, %v595
    %v5897 = vmul.f32 %v5873, %v595
    %v5898 = vmul.f32 %v5876, %v595
    %v5899 = vmul.f32 %v5879, %v595
    %v5900 = vmul.f32 %v5882, %v595
    %v5901 = vmul.f32 %v5885, %v595
    %v5902 = vsub.f32 %v5822, %v5886
    %v5903 = vsub.f32 %v5823, %v5887
    %v5904 = vsub.f32 %v5824, %v5888
    %v5905 = vsub.f32 %v5825, %v5889
    %v5906 = vsub.f32 %v5826, %v5890
    %v5907 = vsub.f32 %v5827, %v5891
    %v5908 = vsub.f32 %v5828, %v5892
    %v5909 = vsub.f32 %v5829, %v5893
    %v5910 = vsub.f32 %v5830, %v5894
    %v5911 = vsub.f32 %v5831, %v5895
    %v5912 = vsub.f32 %v5832, %v5896
    %v5913 = vsub.f32 %v5833, %v5897
    %v5914 = vsub.f32 %v5834, %v5898
    %v5915 = vsub.f32 %v5835, %v5899
    %v5916 = vsub.f32 %v5836, %v5900
    %v5917 = vsub.f32 %v5837, %v5901
    %v5918 = vmul.f32 %v5902, %v5902
    %v5919 = vmul.f32 %v5903, %v5903
    %v5920 = vmul.f32 %v5904, %v5904
    %v5921 = vmul.f32 %v5905, %v5905
    %v5922 = vmul.f32 %v5906, %v5906
    %v5923 = vmul.f32 %v5907, %v5907
    %v5924 = vmul.f32 %v5908, %v5908
    %v5925 = vmul.f32 %v5909, %v5909
    %v5926 = vmul.f32 %v5910, %v5910
    %v5927 = vmul.f32 %v5911, %v5911
    %v5928 = vmul.f32 %v5912, %v5912
    %v5929 = vmul.f32 %v5913, %v5913
    %v5930 = vmul.f32 %v5914, %v5914
    %v5931 = vmul.f32 %v5915, %v5915
    %v5932 = vmul.f32 %v5916, %v5916
    %v5933 = vmul.f32 %v5917, %v5917
    %v5934 = vsel %vm149, %v5918, 0.0
    %5935 = vadd.xlane.f32.xlu0 %v5934
    %v5936 = vpop.xlane.xlu0 %5935
    %v5937 = vsel %vm149, %v5919, 0.0
    %5938 = vadd.xlane.f32.xlu0 %v5937
    %v5939 = vpop.xlane.xlu0 %5938
    %v5940 = vsel %vm149, %v5920, 0.0
    %5941 = vadd.xlane.f32.xlu0 %v5940
    %v5942 = vpop.xlane.xlu0 %5941
    %v5943 = vsel %vm149, %v5921, 0.0
    %5944 = vadd.xlane.f32.xlu0 %v5943
    %v5945 = vpop.xlane.xlu0 %5944
    %v5946 = vsel %vm149, %v5922, 0.0
    %5947 = vadd.xlane.f32.xlu0 %v5946
    %v5948 = vpop.xlane.xlu0 %5947
    %v5949 = vsel %vm149, %v5923, 0.0
    %5950 = vadd.xlane.f32.xlu0 %v5949
    %v5951 = vpop.xlane.xlu0 %5950
    %v5952 = vsel %vm149, %v5924, 0.0
    %5953 = vadd.xlane.f32.xlu0 %v5952
    %v5954 = vpop.xlane.xlu0 %5953
    %v5955 = vsel %vm149, %v5925, 0.0
    %5956 = vadd.xlane.f32.xlu0 %v5955
    %v5957 = vpop.xlane.xlu0 %5956
    %v5958 = vsel %vm149, %v5926, 0.0
    %5959 = vadd.xlane.f32.xlu0 %v5958
    %v5960 = vpop.xlane.xlu0 %5959
    %v5961 = vsel %vm149, %v5927, 0.0
    %5962 = vadd.xlane.f32.xlu0 %v5961
    %v5963 = vpop.xlane.xlu0 %5962
    %v5964 = vsel %vm149, %v5928, 0.0
    %5965 = vadd.xlane.f32.xlu0 %v5964
    %v5966 = vpop.xlane.xlu0 %5965
    %v5967 = vsel %vm149, %v5929, 0.0
    %5968 = vadd.xlane.f32.xlu0 %v5967
    %v5969 = vpop.xlane.xlu0 %5968
    %v5970 = vsel %vm149, %v5930, 0.0
    %5971 = vadd.xlane.f32.xlu0 %v5970
    %v5972 = vpop.xlane.xlu0 %5971
    %v5973 = vsel %vm149, %v5931, 0.0
    %5974 = vadd.xlane.f32.xlu0 %v5973
    %v5975 = vpop.xlane.xlu0 %5974
    %v5976 = vsel %vm149, %v5932, 0.0
    %5977 = vadd.xlane.f32.xlu0 %v5976
    %v5978 = vpop.xlane.xlu0 %5977
    %v5979 = vsel %vm149, %v5933, 0.0
    %5980 = vadd.xlane.f32.xlu0 %v5979
    %v5981 = vpop.xlane.xlu0 %5980
    %v5982 = vmul.f32 %v5936, %v595
    %v5983 = vmul.f32 %v5939, %v595
    %v5984 = vmul.f32 %v5942, %v595
    %v5985 = vmul.f32 %v5945, %v595
    %v5986 = vmul.f32 %v5948, %v595
    %v5987 = vmul.f32 %v5951, %v595
    %v5988 = vmul.f32 %v5954, %v595
    %v5989 = vmul.f32 %v5957, %v595
    %v5990 = vmul.f32 %v5960, %v595
    %v5991 = vmul.f32 %v5963, %v595
    %v5992 = vmul.f32 %v5966, %v595
    %v5993 = vmul.f32 %v5969, %v595
    %v5994 = vmul.f32 %v5972, %v595
    %v5995 = vmul.f32 %v5975, %v595
    %v5996 = vmul.f32 %v5978, %v595
    %v5997 = vmul.f32 %v5981, %v595
    %v5998 = vadd.f32 %v5982, 1e-12
    %v5999 = vadd.f32 %v5983, 1e-12
    %v6000 = vadd.f32 %v5984, 1e-12
    %v6001 = vadd.f32 %v5985, 1e-12
    %v6002 = vadd.f32 %v5986, 1e-12
    %v6003 = vadd.f32 %v5987, 1e-12
    %v6004 = vadd.f32 %v5988, 1e-12
    %v6005 = vadd.f32 %v5989, 1e-12
    %v6006 = vadd.f32 %v5990, 1e-12
    %v6007 = vadd.f32 %v5991, 1e-12
    %v6008 = vadd.f32 %v5992, 1e-12
    %v6009 = vadd.f32 %v5993, 1e-12
    %v6010 = vadd.f32 %v5994, 1e-12
    %v6011 = vadd.f32 %v5995, 1e-12
    %v6012 = vadd.f32 %v5996, 1e-12
    %v6013 = vadd.f32 %v5997, 1e-12
    %v6014 = vrsqrt.pop %v5998
    %v6015 = vmul.f32 %v6014, %v5998
    %v6016 = vmul.f32 %v6015, %v6014
    %v6017 = vmul.f32 0.5, %v6016
    %v6018 = vsub.f32 1.5, %v6017
    %v6019 = vmul.f32 %v6014, %v6018
    %vm6020 = vweird.f32 %v5998
    %vm6021 = vweird.f32 %v6014
    %vm6022 = vmor %vm6020, %vm6021
    %v6023 = vsel %vm6022, %v6014, %v6019
    %v6024 = vrsqrt.pop %v5999
    %v6025 = vmul.f32 %v6024, %v5999
    %v6026 = vmul.f32 %v6025, %v6024
    %v6027 = vmul.f32 0.5, %v6026
    %v6028 = vsub.f32 1.5, %v6027
    %v6029 = vmul.f32 %v6024, %v6028
    %vm6030 = vweird.f32 %v5999
    %vm6031 = vweird.f32 %v6024
    %vm6032 = vmor %vm6030, %vm6031
    %v6033 = vsel %vm6032, %v6024, %v6029
    %v6034 = vrsqrt.pop %v6000
    %v6035 = vmul.f32 %v6034, %v6000
    %v6036 = vmul.f32 %v6035, %v6034
    %v6037 = vmul.f32 0.5, %v6036
    %v6038 = vsub.f32 1.5, %v6037
    %v6039 = vmul.f32 %v6034, %v6038
    %vm6040 = vweird.f32 %v6000
    %vm6041 = vweird.f32 %v6034
    %vm6042 = vmor %vm6040, %vm6041
    %v6043 = vsel %vm6042, %v6034, %v6039
    %v6044 = vrsqrt.pop %v6001
    %v6045 = vmul.f32 %v6044, %v6001
    %v6046 = vmul.f32 %v6045, %v6044
    %v6047 = vmul.f32 0.5, %v6046
    %v6048 = vsub.f32 1.5, %v6047
    %v6049 = vmul.f32 %v6044, %v6048
    %vm6050 = vweird.f32 %v6001
    %vm6051 = vweird.f32 %v6044
    %vm6052 = vmor %vm6050, %vm6051
    %v6053 = vsel %vm6052, %v6044, %v6049
    %v6054 = vrsqrt.pop %v6002
    %v6055 = vmul.f32 %v6054, %v6002
    %v6056 = vmul.f32 %v6055, %v6054
    %v6057 = vmul.f32 0.5, %v6056
    %v6058 = vsub.f32 1.5, %v6057
    %v6059 = vmul.f32 %v6054, %v6058
    %vm6060 = vweird.f32 %v6002
    %vm6061 = vweird.f32 %v6054
    %vm6062 = vmor %vm6060, %vm6061
    %v6063 = vsel %vm6062, %v6054, %v6059
    %v6064 = vrsqrt.pop %v6003
    %v6065 = vmul.f32 %v6064, %v6003
    %v6066 = vmul.f32 %v6065, %v6064
    %v6067 = vmul.f32 0.5, %v6066
    %v6068 = vsub.f32 1.5, %v6067
    %v6069 = vmul.f32 %v6064, %v6068
    %vm6070 = vweird.f32 %v6003
    %vm6071 = vweird.f32 %v6064
    %vm6072 = vmor %vm6070, %vm6071
    %v6073 = vsel %vm6072, %v6064, %v6069
    %v6074 = vrsqrt.pop %v6004
    %v6075 = vmul.f32 %v6074, %v6004
    %v6076 = vmul.f32 %v6075, %v6074
    %v6077 = vmul.f32 0.5, %v6076
    %v6078 = vsub.f32 1.5, %v6077
    %v6079 = vmul.f32 %v6074, %v6078
    %vm6080 = vweird.f32 %v6004
    %vm6081 = vweird.f32 %v6074
    %vm6082 = vmor %vm6080, %vm6081
    %v6083 = vsel %vm6082, %v6074, %v6079
    %v6084 = vrsqrt.pop %v6005
    %v6085 = vmul.f32 %v6084, %v6005
    %v6086 = vmul.f32 %v6085, %v6084
    %v6087 = vmul.f32 0.5, %v6086
    %v6088 = vsub.f32 1.5, %v6087
    %v6089 = vmul.f32 %v6084, %v6088
    %vm6090 = vweird.f32 %v6005
    %vm6091 = vweird.f32 %v6084
    %vm6092 = vmor %vm6090, %vm6091
    %v6093 = vsel %vm6092, %v6084, %v6089
    %v6094 = vrsqrt.pop %v6006
    %v6095 = vmul.f32 %v6094, %v6006
    %v6096 = vmul.f32 %v6095, %v6094
    %v6097 = vmul.f32 0.5, %v6096
    %v6098 = vsub.f32 1.5, %v6097
    %v6099 = vmul.f32 %v6094, %v6098
    %vm6100 = vweird.f32 %v6006
    %vm6101 = vweird.f32 %v6094
    %vm6102 = vmor %vm6100, %vm6101
    %v6103 = vsel %vm6102, %v6094, %v6099
    %v6104 = vrsqrt.pop %v6007
    %v6105 = vmul.f32 %v6104, %v6007
    %v6106 = vmul.f32 %v6105, %v6104
    %v6107 = vmul.f32 0.5, %v6106
    %v6108 = vsub.f32 1.5, %v6107
    %v6109 = vmul.f32 %v6104, %v6108
    %vm6110 = vweird.f32 %v6007
    %vm6111 = vweird.f32 %v6104
    %vm6112 = vmor %vm6110, %vm6111
    %v6113 = vsel %vm6112, %v6104, %v6109
    %v6114 = vrsqrt.pop %v6008
    %v6115 = vmul.f32 %v6114, %v6008
    %v6116 = vmul.f32 %v6115, %v6114
    %v6117 = vmul.f32 0.5, %v6116
    %v6118 = vsub.f32 1.5, %v6117
    %v6119 = vmul.f32 %v6114, %v6118
    %vm6120 = vweird.f32 %v6008
    %vm6121 = vweird.f32 %v6114
    %vm6122 = vmor %vm6120, %vm6121
    %v6123 = vsel %vm6122, %v6114, %v6119
    %v6124 = vrsqrt.pop %v6009
    %v6125 = vmul.f32 %v6124, %v6009
    %v6126 = vmul.f32 %v6125, %v6124
    %v6127 = vmul.f32 0.5, %v6126
    %v6128 = vsub.f32 1.5, %v6127
    %v6129 = vmul.f32 %v6124, %v6128
    %vm6130 = vweird.f32 %v6009
    %vm6131 = vweird.f32 %v6124
    %vm6132 = vmor %vm6130, %vm6131
    %v6133 = vsel %vm6132, %v6124, %v6129
    %v6134 = vrsqrt.pop %v6010
    %v6135 = vmul.f32 %v6134, %v6010
    %v6136 = vmul.f32 %v6135, %v6134
    %v6137 = vmul.f32 0.5, %v6136
    %v6138 = vsub.f32 1.5, %v6137
    %v6139 = vmul.f32 %v6134, %v6138
    %vm6140 = vweird.f32 %v6010
    %vm6141 = vweird.f32 %v6134
    %vm6142 = vmor %vm6140, %vm6141
    %v6143 = vsel %vm6142, %v6134, %v6139
    %v6144 = vrsqrt.pop %v6011
    %v6145 = vmul.f32 %v6144, %v6011
    %v6146 = vmul.f32 %v6145, %v6144
    %v6147 = vmul.f32 0.5, %v6146
    %v6148 = vsub.f32 1.5, %v6147
    %v6149 = vmul.f32 %v6144, %v6148
    %vm6150 = vweird.f32 %v6011
    %vm6151 = vweird.f32 %v6144
    %vm6152 = vmor %vm6150, %vm6151
    %v6153 = vsel %vm6152, %v6144, %v6149
    %v6154 = vrsqrt.pop %v6012
    %v6155 = vmul.f32 %v6154, %v6012
    %v6156 = vmul.f32 %v6155, %v6154
    %v6157 = vmul.f32 0.5, %v6156
    %v6158 = vsub.f32 1.5, %v6157
    %v6159 = vmul.f32 %v6154, %v6158
    %vm6160 = vweird.f32 %v6012
    %vm6161 = vweird.f32 %v6154
    %vm6162 = vmor %vm6160, %vm6161
    %v6163 = vsel %vm6162, %v6154, %v6159
    %v6164 = vrsqrt.pop %v6013
    %v6165 = vmul.f32 %v6164, %v6013
    %v6166 = vmul.f32 %v6165, %v6164
    %v6167 = vmul.f32 0.5, %v6166
    %v6168 = vsub.f32 1.5, %v6167
    %v6169 = vmul.f32 %v6164, %v6168
    %vm6170 = vweird.f32 %v6013
    %vm6171 = vweird.f32 %v6164
    %vm6172 = vmor %vm6170, %vm6171
    %v6173 = vsel %vm6172, %v6164, %v6169
    %v6174 = vmul.f32 %v5902, %v6023
    %v6175 = vmul.f32 %v5903, %v6033
    %v6176 = vmul.f32 %v5904, %v6043
    %v6177 = vmul.f32 %v5905, %v6053
    %v6178 = vmul.f32 %v5906, %v6063
    %v6179 = vmul.f32 %v5907, %v6073
    %v6180 = vmul.f32 %v5908, %v6083
    %v6181 = vmul.f32 %v5909, %v6093
    %v6182 = vmul.f32 %v5910, %v6103
    %v6183 = vmul.f32 %v5911, %v6113
    %v6184 = vmul.f32 %v5912, %v6123
    %v6185 = vmul.f32 %v5913, %v6133
    %v6186 = vmul.f32 %v5914, %v6143
    %v6187 = vmul.f32 %v5915, %v6153
    %v6188 = vmul.f32 %v5916, %v6163
    %v6189 = vmul.f32 %v5917, %v6173
    %v6190 = vperm.slane %v5800, 0
    %v6191 = vmul.f32 %v6174, %v6190
    %v6192 = vmul.f32 %v6175, %v6190
    %v6193 = vmul.f32 %v6176, %v6190
    %v6194 = vmul.f32 %v6177, %v6190
    %v6195 = vmul.f32 %v6178, %v6190
    %v6196 = vmul.f32 %v6179, %v6190
    %v6197 = vmul.f32 %v6180, %v6190
    %v6198 = vmul.f32 %v6181, %v6190
    %v6199 = vmul.f32 %v6182, %v6190
    %v6200 = vmul.f32 %v6183, %v6190
    %v6201 = vmul.f32 %v6184, %v6190
    %v6202 = vmul.f32 %v6185, %v6190
    %v6203 = vmul.f32 %v6186, %v6190
    %v6204 = vmul.f32 %v6187, %v6190
    %v6205 = vmul.f32 %v6188, %v6190
    %v6206 = vmul.f32 %v6189, %v6190
    %v6207 = vperm.slane %v5801, 0
    %v6208 = vadd.f32 %v6191, %v6207
    %v6209 = vadd.f32 %v6192, %v6207
    %v6210 = vadd.f32 %v6193, %v6207
    %v6211 = vadd.f32 %v6194, %v6207
    %v6212 = vadd.f32 %v6195, %v6207
    %v6213 = vadd.f32 %v6196, %v6207
    %v6214 = vadd.f32 %v6197, %v6207
    %v6215 = vadd.f32 %v6198, %v6207
    %v6216 = vadd.f32 %v6199, %v6207
    %v6217 = vadd.f32 %v6200, %v6207
    %v6218 = vadd.f32 %v6201, %v6207
    %v6219 = vadd.f32 %v6202, %v6207
    %v6220 = vadd.f32 %v6203, %v6207
    %v6221 = vadd.f32 %v6204, %v6207
    %v6222 = vadd.f32 %v6205, %v6207
    %v6223 = vadd.f32 %v6206, %v6207
    %v6224 = vpack.c.bf16 %v6209, %v6208
    %v6225 = vpack.c.bf16 %v6211, %v6210
    %v6226 = vpack.c.bf16 %v6213, %v6212
    %v6227 = vpack.c.bf16 %v6215, %v6214
    %v6228 = vpack.c.bf16 %v6217, %v6216
    %v6229 = vpack.c.bf16 %v6219, %v6218
    %v6230 = vpack.c.bf16 %v6221, %v6220
    %v6231 = vpack.c.bf16 %v6223, %v6222
    %s6232 = scalar_lea.vmem [#allocation12], 16
    %v6233 = vld [vmem:[%s6232] sm:$0xf]
    %v6234 = vld [vmem:[%s6232 + $0x4] sm:$0xf]
    %v6235 = vld [vmem:[%s6232 + $0x8] sm:$0xf]
    %v6236 = vld [vmem:[%s6232 + $0xc] sm:$0xf]
    %v6237 = vld [vmem:[%s9 + $0x3] sm:$0x1]
    %v6238 = vperm.slane %v6237, 0
    %v6243 = vunpack.c.l.b16 %v6233
    %v6244 = vunpack.c.l.b16 %v6234
    %v6245 = vunpack.c.l.b16 %v6235
    %v6246 = vunpack.c.l.b16 %v6236
    %v6247 = vpack.c.b16 %v6244, %v6243
    %v6248 = vpack.c.b16 %v6246, %v6245
    %v6252 = vsel %vm149, %v6224, 0
    %v6255 = vsel %vm149, %v6225, 0
    %v6258 = vsel %vm149, %v6226, 0
    %v6261 = vsel %vm149, %v6227, 0
    %v6264 = vsel %vm149, %v6228, 0
    %v6267 = vsel %vm149, %v6229, 0
    %v6270 = vsel %vm149, %v6230, 0
    %v6273 = vsel %vm149, %v6231, 0
    %6275 = vmatpush.bf16.msra.mxu0 0
    %6276 = vmatpush.bf16.msra.mxu0 0
    %6277 = vmatpush.bf16.msra.mxu0 0
    %6278 = vmatpush.bf16.msra.mxu0 0
    %6279 = vmatpush.bf16.msra.mxu0 0
    %6280 = vmatpush.bf16.msra.mxu0 0
    %6281 = vmatpush.bf16.msra.mxu0 %v6248
    %6282 = vmatpush.bf16.msra.mxu0 %v6247
    %6283 = vmatmul.bf16.gmra.mxu0 %v6252
    %v6284 = vpop.f32.mrf.mxu0
    %v6285 = vadd.f32 %v6238, %v6284
    %v6286 = vpop.f32.mrf.mxu0
    %v6287 = vadd.f32 %v6238, %v6286
    %6288 = vmatmul.bf16.gmra.mxu0 %v6255
    %v6289 = vpop.f32.mrf.mxu0
    %v6290 = vadd.f32 %v6238, %v6289
    %v6291 = vpop.f32.mrf.mxu0
    %v6292 = vadd.f32 %v6238, %v6291
    %6293 = vmatmul.bf16.gmra.mxu0 %v6258
    %v6294 = vpop.f32.mrf.mxu0
    %v6295 = vadd.f32 %v6238, %v6294
    %v6296 = vpop.f32.mrf.mxu0
    %v6297 = vadd.f32 %v6238, %v6296
    %6298 = vmatmul.bf16.gmra.mxu0 %v6261
    %v6299 = vpop.f32.mrf.mxu0
    %v6300 = vadd.f32 %v6238, %v6299
    %v6301 = vpop.f32.mrf.mxu0
    %v6302 = vadd.f32 %v6238, %v6301
    %6303 = vmatmul.bf16.gmra.mxu0 %v6264
    %v6304 = vpop.f32.mrf.mxu0
    %v6305 = vadd.f32 %v6238, %v6304
    %v6306 = vpop.f32.mrf.mxu0
    %v6307 = vadd.f32 %v6238, %v6306
    %6308 = vmatmul.bf16.gmra.mxu0 %v6267
    %v6309 = vpop.f32.mrf.mxu0
    %v6310 = vadd.f32 %v6238, %v6309
    %v6311 = vpop.f32.mrf.mxu0
    %v6312 = vadd.f32 %v6238, %v6311
    %6313 = vmatmul.bf16.gmra.mxu0 %v6270
    %v6314 = vpop.f32.mrf.mxu0
    %v6315 = vadd.f32 %v6238, %v6314
    %v6316 = vpop.f32.mrf.mxu0
    %v6317 = vadd.f32 %v6238, %v6316
    %6318 = vmatmul.bf16.gmra.mxu0 %v6273
    %v6319 = vpop.f32.mrf.mxu0
    %v6320 = vadd.f32 %v6238, %v6319
    %v6321 = vpop.f32.mrf.mxu0
    %v6322 = vadd.f32 %v6238, %v6321
    %6323 = vdwg.mxu0
    %v6324 = vmul.f32 %v6285, 0.5
    %v6325 = vmul.f32 %v6287, 0.5
    %v6326 = vmul.f32 %v6290, 0.5
    %v6327 = vmul.f32 %v6292, 0.5
    %v6328 = vmul.f32 %v6295, 0.5
    %v6329 = vmul.f32 %v6297, 0.5
    %v6330 = vmul.f32 %v6300, 0.5
    %v6331 = vmul.f32 %v6302, 0.5
    %v6332 = vmul.f32 %v6305, 0.5
    %v6333 = vmul.f32 %v6307, 0.5
    %v6334 = vmul.f32 %v6310, 0.5
    %v6335 = vmul.f32 %v6312, 0.5
    %v6336 = vmul.f32 %v6315, 0.5
    %v6337 = vmul.f32 %v6317, 0.5
    %v6338 = vmul.f32 %v6320, 0.5
    %v6339 = vmul.f32 %v6322, 0.5
    %v6340 = vmul.f32 %v6285, 0.044715
    %v6341 = vmul.f32 %v6287, 0.044715
    %v6342 = vmul.f32 %v6290, 0.044715
    %v6343 = vmul.f32 %v6292, 0.044715
    %v6344 = vmul.f32 %v6295, 0.044715
    %v6345 = vmul.f32 %v6297, 0.044715
    %v6346 = vmul.f32 %v6300, 0.044715
    %v6347 = vmul.f32 %v6302, 0.044715
    %v6348 = vmul.f32 %v6305, 0.044715
    %v6349 = vmul.f32 %v6307, 0.044715
    %v6350 = vmul.f32 %v6310, 0.044715
    %v6351 = vmul.f32 %v6312, 0.044715
    %v6352 = vmul.f32 %v6315, 0.044715
    %v6353 = vmul.f32 %v6317, 0.044715
    %v6354 = vmul.f32 %v6320, 0.044715
    %v6355 = vmul.f32 %v6322, 0.044715
    %v6356 = vmul.f32 %v6340, %v6285
    %v6357 = vmul.f32 %v6341, %v6287
    %v6358 = vmul.f32 %v6342, %v6290
    %v6359 = vmul.f32 %v6343, %v6292
    %v6360 = vmul.f32 %v6344, %v6295
    %v6361 = vmul.f32 %v6345, %v6297
    %v6362 = vmul.f32 %v6346, %v6300
    %v6363 = vmul.f32 %v6347, %v6302
    %v6364 = vmul.f32 %v6348, %v6305
    %v6365 = vmul.f32 %v6349, %v6307
    %v6366 = vmul.f32 %v6350, %v6310
    %v6367 = vmul.f32 %v6351, %v6312
    %v6368 = vmul.f32 %v6352, %v6315
    %v6369 = vmul.f32 %v6353, %v6317
    %v6370 = vmul.f32 %v6354, %v6320
    %v6371 = vmul.f32 %v6355, %v6322
    %v6372 = vmul.f32 %v6356, %v6285
    %v6373 = vmul.f32 %v6357, %v6287
    %v6374 = vmul.f32 %v6358, %v6290
    %v6375 = vmul.f32 %v6359, %v6292
    %v6376 = vmul.f32 %v6360, %v6295
    %v6377 = vmul.f32 %v6361, %v6297
    %v6378 = vmul.f32 %v6362, %v6300
    %v6379 = vmul.f32 %v6363, %v6302
    %v6380 = vmul.f32 %v6364, %v6305
    %v6381 = vmul.f32 %v6365, %v6307
    %v6382 = vmul.f32 %v6366, %v6310
    %v6383 = vmul.f32 %v6367, %v6312
    %v6384 = vmul.f32 %v6368, %v6315
    %v6385 = vmul.f32 %v6369, %v6317
    %v6386 = vmul.f32 %v6370, %v6320
    %v6387 = vmul.f32 %v6371, %v6322
    %v6388 = vadd.f32 %v6285, %v6372
    %v6389 = vadd.f32 %v6287, %v6373
    %v6390 = vadd.f32 %v6290, %v6374
    %v6391 = vadd.f32 %v6292, %v6375
    %v6392 = vadd.f32 %v6295, %v6376
    %v6393 = vadd.f32 %v6297, %v6377
    %v6394 = vadd.f32 %v6300, %v6378
    %v6395 = vadd.f32 %v6302, %v6379
    %v6396 = vadd.f32 %v6305, %v6380
    %v6397 = vadd.f32 %v6307, %v6381
    %v6398 = vadd.f32 %v6310, %v6382
    %v6399 = vadd.f32 %v6312, %v6383
    %v6400 = vadd.f32 %v6315, %v6384
    %v6401 = vadd.f32 %v6317, %v6385
    %v6402 = vadd.f32 %v6320, %v6386
    %v6403 = vadd.f32 %v6322, %v6387
    %v6404 = vmul.f32 %v6388, 0.7978846
    %v6405 = vmul.f32 %v6389, 0.7978846
    %v6406 = vmul.f32 %v6390, 0.7978846
    %v6407 = vmul.f32 %v6391, 0.7978846
    %v6408 = vmul.f32 %v6392, 0.7978846
    %v6409 = vmul.f32 %v6393, 0.7978846
    %v6410 = vmul.f32 %v6394, 0.7978846
    %v6411 = vmul.f32 %v6395, 0.7978846
    %v6412 = vmul.f32 %v6396, 0.7978846
    %v6413 = vmul.f32 %v6397, 0.7978846
    %v6414 = vmul.f32 %v6398, 0.7978846
    %v6415 = vmul.f32 %v6399, 0.7978846
    %v6416 = vmul.f32 %v6400, 0.7978846
    %v6417 = vmul.f32 %v6401, 0.7978846
    %v6418 = vmul.f32 %v6402, 0.7978846
    %v6419 = vmul.f32 %v6403, 0.7978846
    %v6420 = vtanh.pop %v6404
    %v6421 = vtanh.pop %v6405
    %v6422 = vtanh.pop %v6406
    %v6423 = vtanh.pop %v6407
    %v6424 = vtanh.pop %v6408
    %v6425 = vtanh.pop %v6409
    %v6426 = vtanh.pop %v6410
    %v6427 = vtanh.pop %v6411
    %v6428 = vtanh.pop %v6412
    %v6429 = vtanh.pop %v6413
    %v6430 = vtanh.pop %v6414
    %v6431 = vtanh.pop %v6415
    %v6432 = vtanh.pop %v6416
    %v6433 = vtanh.pop %v6417
    %v6434 = vtanh.pop %v6418
    %v6435 = vtanh.pop %v6419
    %v6436 = vadd.f32 %v6420, 1.0
    %v6437 = vadd.f32 %v6421, 1.0
    %v6438 = vadd.f32 %v6422, 1.0
    %v6439 = vadd.f32 %v6423, 1.0
    %v6440 = vadd.f32 %v6424, 1.0
    %v6441 = vadd.f32 %v6425, 1.0
    %v6442 = vadd.f32 %v6426, 1.0
    %v6443 = vadd.f32 %v6427, 1.0
    %v6444 = vadd.f32 %v6428, 1.0
    %v6445 = vadd.f32 %v6429, 1.0
    %v6446 = vadd.f32 %v6430, 1.0
    %v6447 = vadd.f32 %v6431, 1.0
    %v6448 = vadd.f32 %v6432, 1.0
    %v6449 = vadd.f32 %v6433, 1.0
    %v6450 = vadd.f32 %v6434, 1.0
    %v6451 = vadd.f32 %v6435, 1.0
    %v6452 = vmul.f32 %v6324, %v6436
    %v6453 = vmul.f32 %v6325, %v6437
    %v6454 = vmul.f32 %v6326, %v6438
    %v6455 = vmul.f32 %v6327, %v6439
    %v6456 = vmul.f32 %v6328, %v6440
    %v6457 = vmul.f32 %v6329, %v6441
    %v6458 = vmul.f32 %v6330, %v6442
    %v6459 = vmul.f32 %v6331, %v6443
    %v6460 = vmul.f32 %v6332, %v6444
    %v6461 = vmul.f32 %v6333, %v6445
    %v6462 = vmul.f32 %v6334, %v6446
    %v6463 = vmul.f32 %v6335, %v6447
    %v6464 = vmul.f32 %v6336, %v6448
    %v6465 = vmul.f32 %v6337, %v6449
    %v6466 = vmul.f32 %v6338, %v6450
    %v6467 = vmul.f32 %v6339, %v6451
    %v6468 = vpack.c.bf16 %v6453, %v6452
    %v6469 = vpack.c.bf16 %v6455, %v6454
    %v6470 = vpack.c.bf16 %v6457, %v6456
    %v6471 = vpack.c.bf16 %v6459, %v6458
    %v6472 = vpack.c.bf16 %v6461, %v6460
    %v6473 = vpack.c.bf16 %v6463, %v6462
    %v6474 = vpack.c.bf16 %v6465, %v6464
    %v6475 = vpack.c.bf16 %v6467, %v6466
    %s6476 = scalar_lea.vmem [#allocation13], 32
    %v6477 = vld [vmem:[%s6476] sm:$0xf]
    %v6478 = vld [vmem:[%s6476 + $0x4] sm:$0xf]
    %v6479 = vld [vmem:[%s6476 + $0x8] sm:$0xf]
    %v6480 = vld [vmem:[%s6476 + $0xc] sm:$0xf]
    %v6481 = vld [vmem:[%s6476 + $0x10] sm:$0xf]
    %v6482 = vld [vmem:[%s6476 + $0x14] sm:$0xf]
    %v6483 = vld [vmem:[%s6476 + $0x18] sm:$0xf]
    %v6484 = vld [vmem:[%s6476 + $0x1c] sm:$0xf]
    %v6485 = vperm.slane %v5802, 0
    %v6494 = vunpack.c.l.b16 %v6477
    %v6495 = vunpack.c.l.b16 %v6478
    %v6496 = vunpack.c.l.b16 %v6479
    %v6497 = vunpack.c.l.b16 %v6480
    %v6498 = vunpack.c.l.b16 %v6481
    %v6499 = vunpack.c.l.b16 %v6482
    %v6500 = vunpack.c.l.b16 %v6483
    %v6501 = vunpack.c.l.b16 %v6484
    %v6502 = vpack.c.b16 %v6495, %v6494
    %v6503 = vpack.c.b16 %v6497, %v6496
    %v6504 = vpack.c.b16 %v6499, %v6498
    %v6505 = vpack.c.b16 %v6501, %v6500
    %v6511 = vsel %vm3492, %v6468, 0
    %v6514 = vsel %vm3492, %v6469, 0
    %v6517 = vsel %vm3492, %v6470, 0
    %v6520 = vsel %vm3492, %v6471, 0
    %v6523 = vsel %vm3492, %v6472, 0
    %v6526 = vsel %vm3492, %v6473, 0
    %v6529 = vsel %vm3492, %v6474, 0
    %v6532 = vsel %vm3492, %v6475, 0
    %6534 = vmatpush.bf16.msra.mxu0 0
    %6535 = vmatpush.bf16.msra.mxu0 0
    %6536 = vmatpush.bf16.msra.mxu0 0
    %6537 = vmatpush.bf16.msra.mxu0 0
    %6538 = vmatpush.bf16.msra.mxu0 %v6505
    %6539 = vmatpush.bf16.msra.mxu0 %v6504
    %6540 = vmatpush.bf16.msra.mxu0 %v6503
    %6541 = vmatpush.bf16.msra.mxu0 %v6502
    %6542 = vmatmul.bf16.gmra.mxu0 %v6511
    %v6543 = vpop.f32.mrf.mxu0
    %v6544 = vadd.f32 %v6485, %v6543
    %v6545 = vpop.f32.mrf.mxu0
    %6546 = vmatmul.bf16.gmra.mxu0 %v6514
    %v6547 = vpop.f32.mrf.mxu0
    %v6548 = vadd.f32 %v6485, %v6547
    %v6549 = vpop.f32.mrf.mxu0
    %6550 = vmatmul.bf16.gmra.mxu0 %v6517
    %v6551 = vpop.f32.mrf.mxu0
    %v6552 = vadd.f32 %v6485, %v6551
    %v6553 = vpop.f32.mrf.mxu0
    %6554 = vmatmul.bf16.gmra.mxu0 %v6520
    %v6555 = vpop.f32.mrf.mxu0
    %v6556 = vadd.f32 %v6485, %v6555
    %v6557 = vpop.f32.mrf.mxu0
    %6558 = vmatmul.bf16.gmra.mxu0 %v6523
    %v6559 = vpop.f32.mrf.mxu0
    %v6560 = vadd.f32 %v6485, %v6559
    %v6561 = vpop.f32.mrf.mxu0
    %6562 = vmatmul.bf16.gmra.mxu0 %v6526
    %v6563 = vpop.f32.mrf.mxu0
    %v6564 = vadd.f32 %v6485, %v6563
    %v6565 = vpop.f32.mrf.mxu0
    %6566 = vmatmul.bf16.gmra.mxu0 %v6529
    %v6567 = vpop.f32.mrf.mxu0
    %v6568 = vadd.f32 %v6485, %v6567
    %v6569 = vpop.f32.mrf.mxu0
    %6570 = vmatmul.bf16.gmra.mxu0 %v6532
    %v6571 = vpop.f32.mrf.mxu0
    %v6572 = vadd.f32 %v6485, %v6571
    %v6573 = vpop.f32.mrf.mxu0
    %6574 = vdwg.mxu0
    %v6575 = vadd.f32 %v6208, %v6544
    %v6576 = vadd.f32 %v6210, %v6548
    %v6577 = vadd.f32 %v6212, %v6552
    %v6578 = vadd.f32 %v6214, %v6556
    %v6579 = vadd.f32 %v6216, %v6560
    %v6580 = vadd.f32 %v6218, %v6564
    %v6581 = vadd.f32 %v6220, %v6568
    %v6582 = vadd.f32 %v6222, %v6572
    %v6583 = vsel %vm149, %v6575, 0.0
    %6584 = vadd.xlane.f32.xlu0 %v6583
    %v6585 = vpop.xlane.xlu0 %6584
    %v6586 = vsel %vm149, %v6576, 0.0
    %6587 = vadd.xlane.f32.xlu0 %v6586
    %v6588 = vpop.xlane.xlu0 %6587
    %v6589 = vsel %vm149, %v6577, 0.0
    %6590 = vadd.xlane.f32.xlu0 %v6589
    %v6591 = vpop.xlane.xlu0 %6590
    %v6592 = vsel %vm149, %v6578, 0.0
    %6593 = vadd.xlane.f32.xlu0 %v6592
    %v6594 = vpop.xlane.xlu0 %6593
    %v6595 = vsel %vm149, %v6579, 0.0
    %6596 = vadd.xlane.f32.xlu0 %v6595
    %v6597 = vpop.xlane.xlu0 %6596
    %v6598 = vsel %vm149, %v6580, 0.0
    %6599 = vadd.xlane.f32.xlu0 %v6598
    %v6600 = vpop.xlane.xlu0 %6599
    %v6601 = vsel %vm149, %v6581, 0.0
    %6602 = vadd.xlane.f32.xlu0 %v6601
    %v6603 = vpop.xlane.xlu0 %6602
    %v6604 = vsel %vm149, %v6582, 0.0
    %6605 = vadd.xlane.f32.xlu0 %v6604
    %v6606 = vpop.xlane.xlu0 %6605
    %v6607 = vmul.f32 %v6585, %v595
    %v6608 = vmul.f32 %v6588, %v595
    %v6609 = vmul.f32 %v6591, %v595
    %v6610 = vmul.f32 %v6594, %v595
    %v6611 = vmul.f32 %v6597, %v595
    %v6612 = vmul.f32 %v6600, %v595
    %v6613 = vmul.f32 %v6603, %v595
    %v6614 = vmul.f32 %v6606, %v595
    %v6615 = vsub.f32 %v6575, %v6607
    %v6616 = vsub.f32 %v6576, %v6608
    %v6617 = vsub.f32 %v6577, %v6609
    %v6618 = vsub.f32 %v6578, %v6610
    %v6619 = vsub.f32 %v6579, %v6611
    %v6620 = vsub.f32 %v6580, %v6612
    %v6621 = vsub.f32 %v6581, %v6613
    %v6622 = vsub.f32 %v6582, %v6614
    %v6623 = vmul.f32 %v6615, %v6615
    %v6624 = vmul.f32 %v6616, %v6616
    %v6625 = vmul.f32 %v6617, %v6617
    %v6626 = vmul.f32 %v6618, %v6618
    %v6627 = vmul.f32 %v6619, %v6619
    %v6628 = vmul.f32 %v6620, %v6620
    %v6629 = vmul.f32 %v6621, %v6621
    %v6630 = vmul.f32 %v6622, %v6622
    %v6631 = vsel %vm149, %v6623, 0.0
    %6632 = vadd.xlane.f32.xlu0 %v6631
    %v6633 = vpop.xlane.xlu0 %6632
    %v6634 = vsel %vm149, %v6624, 0.0
    %6635 = vadd.xlane.f32.xlu0 %v6634
    %v6636 = vpop.xlane.xlu0 %6635
    %v6637 = vsel %vm149, %v6625, 0.0
    %6638 = vadd.xlane.f32.xlu0 %v6637
    %v6639 = vpop.xlane.xlu0 %6638
    %v6640 = vsel %vm149, %v6626, 0.0
    %6641 = vadd.xlane.f32.xlu0 %v6640
    %v6642 = vpop.xlane.xlu0 %6641
    %v6643 = vsel %vm149, %v6627, 0.0
    %6644 = vadd.xlane.f32.xlu0 %v6643
    %v6645 = vpop.xlane.xlu0 %6644
    %v6646 = vsel %vm149, %v6628, 0.0
    %6647 = vadd.xlane.f32.xlu0 %v6646
    %v6648 = vpop.xlane.xlu0 %6647
    %v6649 = vsel %vm149, %v6629, 0.0
    %6650 = vadd.xlane.f32.xlu0 %v6649
    %v6651 = vpop.xlane.xlu0 %6650
    %v6652 = vsel %vm149, %v6630, 0.0
    %6653 = vadd.xlane.f32.xlu0 %v6652
    %v6654 = vpop.xlane.xlu0 %6653
    %v6655 = vmul.f32 %v6633, %v595
    %v6656 = vmul.f32 %v6636, %v595
    %v6657 = vmul.f32 %v6639, %v595
    %v6658 = vmul.f32 %v6642, %v595
    %v6659 = vmul.f32 %v6645, %v595
    %v6660 = vmul.f32 %v6648, %v595
    %v6661 = vmul.f32 %v6651, %v595
    %v6662 = vmul.f32 %v6654, %v595
    %v6663 = vadd.f32 %v6655, 1e-12
    %v6664 = vadd.f32 %v6656, 1e-12
    %v6665 = vadd.f32 %v6657, 1e-12
    %v6666 = vadd.f32 %v6658, 1e-12
    %v6667 = vadd.f32 %v6659, 1e-12
    %v6668 = vadd.f32 %v6660, 1e-12
    %v6669 = vadd.f32 %v6661, 1e-12
    %v6670 = vadd.f32 %v6662, 1e-12
    %v6671 = vrsqrt.pop %v6663
    %v6672 = vmul.f32 %v6671, %v6663
    %v6673 = vmul.f32 %v6672, %v6671
    %v6674 = vmul.f32 0.5, %v6673
    %v6675 = vsub.f32 1.5, %v6674
    %v6676 = vmul.f32 %v6671, %v6675
    %vm6677 = vweird.f32 %v6663
    %vm6678 = vweird.f32 %v6671
    %vm6679 = vmor %vm6677, %vm6678
    %v6680 = vsel %vm6679, %v6671, %v6676
    %v6681 = vrsqrt.pop %v6664
    %v6682 = vmul.f32 %v6681, %v6664
    %v6683 = vmul.f32 %v6682, %v6681
    %v6684 = vmul.f32 0.5, %v6683
    %v6685 = vsub.f32 1.5, %v6684
    %v6686 = vmul.f32 %v6681, %v6685
    %vm6687 = vweird.f32 %v6664
    %vm6688 = vweird.f32 %v6681
    %vm6689 = vmor %vm6687, %vm6688
    %v6690 = vsel %vm6689, %v6681, %v6686
    %v6691 = vrsqrt.pop %v6665
    %v6692 = vmul.f32 %v6691, %v6665
    %v6693 = vmul.f32 %v6692, %v6691
    %v6694 = vmul.f32 0.5, %v6693
    %v6695 = vsub.f32 1.5, %v6694
    %v6696 = vmul.f32 %v6691, %v6695
    %vm6697 = vweird.f32 %v6665
    %vm6698 = vweird.f32 %v6691
    %vm6699 = vmor %vm6697, %vm6698
    %v6700 = vsel %vm6699, %v6691, %v6696
    %v6701 = vrsqrt.pop %v6666
    %v6702 = vmul.f32 %v6701, %v6666
    %v6703 = vmul.f32 %v6702, %v6701
    %v6704 = vmul.f32 0.5, %v6703
    %v6705 = vsub.f32 1.5, %v6704
    %v6706 = vmul.f32 %v6701, %v6705
    %vm6707 = vweird.f32 %v6666
    %vm6708 = vweird.f32 %v6701
    %vm6709 = vmor %vm6707, %vm6708
    %v6710 = vsel %vm6709, %v6701, %v6706
    %v6711 = vrsqrt.pop %v6667
    %v6712 = vmul.f32 %v6711, %v6667
    %v6713 = vmul.f32 %v6712, %v6711
    %v6714 = vmul.f32 0.5, %v6713
    %v6715 = vsub.f32 1.5, %v6714
    %v6716 = vmul.f32 %v6711, %v6715
    %vm6717 = vweird.f32 %v6667
    %vm6718 = vweird.f32 %v6711
    %vm6719 = vmor %vm6717, %vm6718
    %v6720 = vsel %vm6719, %v6711, %v6716
    %v6721 = vrsqrt.pop %v6668
    %v6722 = vmul.f32 %v6721, %v6668
    %v6723 = vmul.f32 %v6722, %v6721
    %v6724 = vmul.f32 0.5, %v6723
    %v6725 = vsub.f32 1.5, %v6724
    %v6726 = vmul.f32 %v6721, %v6725
    %vm6727 = vweird.f32 %v6668
    %vm6728 = vweird.f32 %v6721
    %vm6729 = vmor %vm6727, %vm6728
    %v6730 = vsel %vm6729, %v6721, %v6726
    %v6731 = vrsqrt.pop %v6669
    %v6732 = vmul.f32 %v6731, %v6669
    %v6733 = vmul.f32 %v6732, %v6731
    %v6734 = vmul.f32 0.5, %v6733
    %v6735 = vsub.f32 1.5, %v6734
    %v6736 = vmul.f32 %v6731, %v6735
    %vm6737 = vweird.f32 %v6669
    %vm6738 = vweird.f32 %v6731
    %vm6739 = vmor %vm6737, %vm6738
    %v6740 = vsel %vm6739, %v6731, %v6736
    %v6741 = vrsqrt.pop %v6670
    %v6742 = vmul.f32 %v6741, %v6670
    %v6743 = vmul.f32 %v6742, %v6741
    %v6744 = vmul.f32 0.5, %v6743
    %v6745 = vsub.f32 1.5, %v6744
    %v6746 = vmul.f32 %v6741, %v6745
    %vm6747 = vweird.f32 %v6670
    %vm6748 = vweird.f32 %v6741
    %vm6749 = vmor %vm6747, %vm6748
    %v6750 = vsel %vm6749, %v6741, %v6746
    %v6751 = vmul.f32 %v6615, %v6680
    %v6752 = vmul.f32 %v6616, %v6690
    %v6753 = vmul.f32 %v6617, %v6700
    %v6754 = vmul.f32 %v6618, %v6710
    %v6755 = vmul.f32 %v6619, %v6720
    %v6756 = vmul.f32 %v6620, %v6730
    %v6757 = vmul.f32 %v6621, %v6740
    %v6758 = vmul.f32 %v6622, %v6750
    %v6759 = vperm.slane %v5803, 0
    %v6760 = vmul.f32 %v6751, %v6759
    %v6761 = vmul.f32 %v6752, %v6759
    %v6762 = vmul.f32 %v6753, %v6759
    %v6763 = vmul.f32 %v6754, %v6759
    %v6764 = vmul.f32 %v6755, %v6759
    %v6765 = vmul.f32 %v6756, %v6759
    %v6766 = vmul.f32 %v6757, %v6759
    %v6767 = vmul.f32 %v6758, %v6759
    %v6768 = vperm.slane %v5804, 0
    %v6769 = vadd.f32 %v6760, %v6768
    %v6770 = vadd.f32 %v6761, %v6768
    %v6771 = vadd.f32 %v6762, %v6768
    %v6772 = vadd.f32 %v6763, %v6768
    %v6773 = vadd.f32 %v6764, %v6768
    %v6774 = vadd.f32 %v6765, %v6768
    %v6775 = vadd.f32 %v6766, %v6768
    %v6776 = vadd.f32 %v6767, %v6768
    %v6778 = vrot.slane %v6770, 7
    %v6781 = vrot.slane %v6771, 6
    %v6784 = vrot.slane %v6772, 5
    %v6787 = vrot.slane %v6773, 4
    %v6790 = vrot.slane %v6774, 3
    %v6793 = vrot.slane %v6775, 2
    %v6796 = vrot.slane %v6776, 1
    %vm6798 = vcmask 1040384
    %v6799 = vsel %vm6798, %v6769, %v6778
    %vm6800 = vcmask 1041408
    %v6801 = vsel %vm6800, %v6799, %v6781
    %vm6802 = vcmask 1042432
    %v6803 = vsel %vm6802, %v6801, %v6784
    %vm6804 = vcmask 1043456
    %v6805 = vsel %vm6804, %v6803, %v6787
    %vm6806 = vcmask 1044480
    %v6807 = vsel %vm6806, %v6805, %v6790
    %vm6808 = vcmask 1045504
    %v6809 = vsel %vm6808, %v6807, %v6793
    %vm6810 = vcmask 1046528
    %v6811 = vsel %vm6810, %v6809, %v6796
    %v6812 = vpack.c.bf16 %v6811, %v6811
    %v6813 = vld [vmem:[#allocation15] sm:$0xf]
    %v6814 = vld [vmem:[#allocation15 + $0x4] sm:$0xf]
    %v6815 = vld [vmem:[#allocation15 + $0x8] sm:$0xf]
    %v6816 = vld [vmem:[#allocation15 + $0xc] sm:$0xf]
    %v6817 = vld [vmem:[%s9 + $0x4] sm:$0x1]
    %v6818 = vperm.slane %v6817, 0
    %v6823 = vunpack.c.l.b16 %v6813
    %v6824 = vunpack.c.l.b16 %v6814
    %v6825 = vunpack.c.l.b16 %v6815
    %v6826 = vunpack.c.l.b16 %v6816
    %v6827 = vpack.c.b16 %v6824, %v6823
    %v6828 = vpack.c.b16 %v6826, %v6825
    %v6832 = vsel %vm149, %v6812, 0
    %6834 = vmatpush.bf16.msra.mxu0 0
    %6835 = vmatpush.bf16.msra.mxu0 0
    %6836 = vmatpush.bf16.msra.mxu0 0
    %6837 = vmatpush.bf16.msra.mxu0 0
    %6838 = vmatpush.bf16.msra.mxu0 0
    %6839 = vmatpush.bf16.msra.mxu0 0
    %6840 = vmatpush.bf16.msra.mxu0 %v6828
    %6841 = vmatpush.bf16.msra.mxu0 %v6827
    %6842 = vmatmul.bf16.gmra.mxu0 %v6832
    %v6843 = vpop.f32.mrf.mxu0
    %v6844 = vadd.f32 %v6818, %v6843
    %v6845 = vpop.f32.mrf.mxu0
    %6846 = vdwg.mxu0
    %6847 = vst [vmem:[%s10] sm:$0xff] %v6844
    // Predicated region
    $region66: #{_lambda_.1} parent=1 // pred_check
      _
    $region67: #{_lambda_.1} parent=1 // pred_check_branch
      %6849 = sbr.rel (0) target = $region69
    $region68: #{_lambda_.1} parent=1 // pred_region
      _
    $region69: #{_lambda_.1} parent=1 // pred_fallthru
      _
    // Predicated region
    $region70: #{_lambda_.1} parent=1 // pred_check
      _
    $region71: #{_lambda_.1} parent=1 // pred_check_branch
      %6851 = sbr.rel (0) target = $region73
    $region72: #{_lambda_.1} parent=1 // pred_region
      _
    $region73: #{_lambda_.1} parent=1 // pred_fallthru
      _
    %6852 = vsyncpa [#allocation6], 1
    %6853 = vsyncpa [#allocation8], 1
    %6854 = vsyncpa [#allocation11], 1
    %6855 = vsyncpa [#allocation14], 1

</llo_original>
